<compile_context>
chip_gen: v7x
topology: tpu7x:2x2x1
jax: 0.10.0
libtpu: 0.0.40
codegen_flags: <defaults>
</compile_context>

<pallas_src>
import math
import functools

import jax
import jax.numpy as jnp
from jax import lax
from jax.experimental import pallas as pl
from jax.experimental.pallas import tpu as pltpu


# ----------------------------- in-kernel helpers ----------------------------

def _layernorm(x, g, b, eps):
    # torch.nn.LayerNorm semantics (biased variance over last dim, affine).
    mu = jnp.mean(x, axis=-1, keepdims=True)
    xc = x - mu
    var = jnp.mean(xc * xc, axis=-1, keepdims=True)
    return xc * lax.rsqrt(var + eps) * g + b


def _head_layernorm(x, mavg, g, b, eps):
    # Per-head LayerNorm over head_dim segments of the last axis, for ALL
    # heads at once.  `mavg` is a block-diagonal (width, width) matrix whose
    # diagonal blocks are filled with 1/head_dim, so `x @ mavg` broadcasts
    # each head's mean to every column of that head.  Avoids per-head lane
    # slicing / reshapes; the two stat matmuls run in f32 on the MXU.
    mu = jnp.dot(x, mavg, preferred_element_type=jnp.float32)
    xc = x - mu
    var = jnp.dot(xc * xc, mavg, preferred_element_type=jnp.float32)
    return xc * lax.rsqrt(var + eps) * g + b


def _gelu_exact(x):
    # torch.nn.GELU() default is the exact erf formulation.
    return 0.5 * x * (1.0 + lax.erf(x * (1.0 / math.sqrt(2.0))))


def _softmax(x):
    m = jnp.max(x, axis=-1, keepdims=True)
    e = jnp.exp(x - m)
    return e * pl.reciprocal(jnp.sum(e, axis=-1, keepdims=True), approx=True)


# ------------------------------- the kernel --------------------------------

def decoder_kernel(heads, head_dim,
                   emb_ref, lat_ref,
                   wqp_ref, bqp_ref, ln1g_ref, ln1b_ref, ln2g_ref, ln2b_ref,
                   wq_ref, wk_ref, wv_ref, mavg_ref,
                   qng_ref, qnb_ref, kng_ref, knb_ref,
                   wo_ref, bo_ref, ln3g_ref, ln3b_ref,
                   wfc_ref, bfc_ref, wpr_ref, bpr_ref,
                   lnpg_ref, lnpb_ref, woutT_ref, boutT_ref,
                   out_ref, kn_sc, v_sc):
    f32 = jnp.float32
    bf16 = jnp.bfloat16
    qt = pl.program_id(1)

    # ---- K/V path: depends only on latents; recompute only at q-tile 0 ----
    @pl.when(qt == 0)
    def _():
        lat = lat_ref[0]                                           # (n_data, dw) f32
        dn = _layernorm(lat, ln2g_ref[...], ln2b_ref[...], 1e-6)   # ln_2
        dnb = dn.astype(bf16)
        k = jnp.dot(dnb, wk_ref[...], preferred_element_type=f32)  # c_kv (K half)
        v = jnp.dot(dnb, wv_ref[...], preferred_element_type=f32)  # c_kv (V half)
        kn = _head_layernorm(k, mavg_ref[...], kng_ref[...], knb_ref[...], 1e-6)
        kn_sc[...] = kn.astype(bf16)                               # cached k_norm(K)
        v_sc[...] = v.astype(bf16)                                 # cached V

    # ---- query path for this q-tile ----
    e = emb_ref[0]                                                 # (TQ, fd_pad) f32
    x = jnp.dot(e.astype(bf16), wqp_ref[...],
                preferred_element_type=f32) + bqp_ref[...]         # query_proj

    xn = _layernorm(x, ln1g_ref[...], ln1b_ref[...], 1e-6)         # ln_1
    q = jnp.dot(xn.astype(bf16), wq_ref[...],
                preferred_element_type=f32)                        # c_q (no bias)
    # q_norm for all heads at once; 1/sqrt(head_dim) is folded into gamma/beta.
    qn = _head_layernorm(q, mavg_ref[...], qng_ref[...], qnb_ref[...], 1e-6)
    qn = qn.astype(bf16)

    kn = kn_sc[...]                                                # (n_data, width) bf16
    v = v_sc[...]                                                  # (n_data, width) bf16

    # per-head attention; outputs accumulated straight through c_proj columns
    acc = jnp.zeros(q.shape, f32)
    for h in range(heads):
        lo = h * head_dim
        hi = lo + head_dim
        qh = qn[:, lo:hi]
        kh = kn[:, lo:hi]
        vh = v[:, lo:hi]
        s = lax.dot_general(qh, kh, (((1,), (1,)), ((), ())),
                            preferred_element_type=f32)            # (TQ, n_data)
        p = _softmax(s)
        ho = jnp.dot(p.astype(bf16), vh, preferred_element_type=f32)
        acc = acc + jnp.dot(ho.astype(bf16), wo_ref[lo:hi, :],
                            preferred_element_type=f32)            # c_proj slice
    x = x + acc + bo_ref[...]                                      # residual + c_proj bias

    # ---- MLP branch ----
    xn3 = _layernorm(x, ln3g_ref[...], ln3b_ref[...], 1e-6)        # ln_3
    h1 = jnp.dot(xn3.astype(bf16), wfc_ref[...],
                 preferred_element_type=f32) + bfc_ref[...]
    h1 = _gelu_exact(h1)
    x = x + jnp.dot(h1.astype(bf16), wpr_ref[...],
                    preferred_element_type=f32) + bpr_ref[...]

    # ---- ln_post + output_proj (lane-dense, transposed store) ----
    xp = _layernorm(x, lnpg_ref[...], lnpb_ref[...], 1e-5)         # ln_post (default eps)
    occ_t = lax.dot_general(woutT_ref[...], xp.astype(bf16),
                            (((1,), (1,)), ((), ())),
                            preferred_element_type=f32) + boutT_ref[...]
    out_ref[0] = occ_t.astype(out_ref.dtype)                       # (out_ch, TQ)


# ------------------------------ host wrapper --------------------------------

KP_NAMES = ('wqp', 'bqp', 'ln1g', 'ln1b', 'ln2g', 'ln2b', 'wq', 'wk', 'wv',
            'mavg', 'qng', 'qnb', 'kng', 'knb', 'wo', 'bo', 'ln3g', 'ln3b',
            'wfc', 'bfc', 'wpr', 'bpr', 'lnpg', 'lnpb', 'woutT', 'boutT')


def fourier_embed(x, num_freqs=8):
    # FourierEmbedder.forward (elementwise glue, plain JAX, kept in f32).
    freqs = 2.0 ** jnp.arange(num_freqs, dtype=jnp.float32)
    embed = (x[..., None] * freqs).reshape(*x.shape[:-1], -1)
    return jnp.concatenate([x, jnp.sin(embed), jnp.cos(embed)], axis=-1)


@functools.partial(jax.jit, static_argnames=('heads', 'tq'))
def cross_attention_decoder(queries, latents, kparams, *, heads, tq=128):
    B, n_ctx, _ = queries.shape
    _, n_data, dw = latents.shape
    width = kparams['wq'].shape[1]
    head_dim = width // heads
    out_ch = kparams['woutT'].shape[0]
    fd_pad = kparams['wqp'].shape[0]

    emb = fourier_embed(queries)                       # (B, n_ctx, 51) f32
    fd = emb.shape[-1]

    # Pad the fourier dim to the (pre-padded) query_proj rows and n_ctx to a
    # multiple of the q-tile.  Zero padding is exact; padded rows are dropped.
    n_tiles = -(-n_ctx // tq)
    n_ctx_pad = n_tiles * tq
    emb = jnp.pad(emb, ((0, 0), (0, n_ctx_pad - n_ctx), (0, fd_pad - fd)))

    weights = [kparams[n] for n in KP_NAMES]

    in_specs = [
        pl.BlockSpec((1, tq, fd_pad), lambda b, qt: (b, qt, 0)),   # emb q-tile
        pl.BlockSpec((1, n_data, dw), lambda b, qt: (b, 0, 0)),    # latents (per batch)
    ]
    # every weight is 2D and passed un-tiled (constant block index -> no re-DMA)
    in_specs += [pl.BlockSpec(w.shape, lambda b, qt: (0, 0)) for w in weights]
    # TODO(synk): at production widths (e.g. 1024, hidden 4096) keep wfc/wpr in
    # HBM (memory_space=pl.ANY) and pipeline the MLP over the hidden dim.

    out_t = pl.pallas_call(
        functools.partial(decoder_kernel, heads, head_dim),
        out_shape=jax.ShapeDtypeStruct((B, out_ch, n_ctx_pad), jnp.float32),
        grid_spec=pltpu.PrefetchScalarGridSpec(
            num_scalar_prefetch=0,
            grid=(B, n_tiles),
            in_specs=in_specs,
            out_specs=pl.BlockSpec((1, out_ch, tq), lambda b, qt: (b, 0, qt)),
            scratch_shapes=[
                pltpu.VMEM((n_data, width), jnp.bfloat16),   # cached k_norm(K)
                pltpu.VMEM((n_data, width), jnp.bfloat16),   # cached V
            ]),
        compiler_params=pltpu.CompilerParams(
            dimension_semantics=("parallel", "arbitrary"),
            vmem_limit_bytes=48 * 1024 * 1024),
    )(emb, latents, *weights)

    # back to the PyTorch output layout (B, n_ctx, out_ch)
    return jnp.swapaxes(out_t, 1, 2)[:, :n_ctx, :]


# --------------------- parameters (torch layout + prep) ---------------------

def init_params(key, *, width, heads, data_width, out_channels,
                mlp_expand_ratio, num_freqs=8, input_dim=3):
    # "PyTorch layout": Linear weights as [in, out] (== torch_weight.T),
    # biases / LayerNorm affines as 1D vectors.
    fd = input_dim * (num_freqs * 2 + 1)
    hd = width // heads
    hidden = width * mlp_expand_ratio
    ks = iter(jax.random.split(key, 32))

    def dense(fan_in, fan_out):
        return (1.0 / math.sqrt(fan_in)) * jax.random.normal(
            next(ks), (fan_in, fan_out), jnp.float32)

    def vec(n, scale=0.1):
        return scale * jax.random.normal(next(ks), (n,), jnp.float32)

    def ln_gamma(n):
        return 1.0 + 0.05 * jax.random.normal(next(ks), (n,), jnp.float32)

    p = {}
    p['wqp'], p['bqp'] = dense(fd, width), vec(width)               # query_proj
    p['ln1g'], p['ln1b'] = ln_gamma(width), vec(width)              # ln_1
    p['ln2g'], p['ln2b'] = ln_gamma(data_width), vec(data_width)    # ln_2
    p['wq'] = dense(width, width)                                   # c_q (no bias)
    p['wkv'] = dense(data_width, 2 * width)                         # c_kv (no bias)
    p['qng'], p['qnb'] = ln_gamma(hd), vec(hd)                      # q_norm
    p['kng'], p['knb'] = ln_gamma(hd), vec(hd)                      # k_norm
    p['wo'], p['bo'] = dense(width, width), vec(width)              # c_proj
    p['ln3g'], p['ln3b'] = ln_gamma(width), vec(width)              # ln_3
    p['wfc'], p['bfc'] = dense(width, hidden), vec(hidden)          # mlp.c_fc
    p['wpr'], p['bpr'] = dense(hidden, width), vec(width)           # mlp.c_proj
    p['lnpg'], p['lnpb'] = ln_gamma(width), vec(width)              # ln_post
    p['wout'], p['bout'] = dense(width, out_channels), vec(out_channels)  # output_proj
    return p


def prepare_kernel_params(p, *, heads):
    """Host-side re-layout into the kernel layout:
      - split the interleaved c_kv weight into contiguous K / V halves,
      - tile q_norm/k_norm affines across heads; fold 1/sqrt(head_dim) into q_norm,
      - build the block-diagonal head-averaging matrix for the per-head norms,
      - transpose output_proj for a lane-dense (out_ch, n_ctx) store,
      - zero-pad the fourier dim of query_proj to a multiple of 64,
      - cast matmul weights to bf16 (f32 accumulation happens in-kernel)."""
    f32, bf16 = jnp.float32, jnp.bfloat16
    width = p['wq'].shape[1]
    dw = p['wkv'].shape[0]
    hd = width // heads
    scale = 1.0 / math.sqrt(hd)

    def row(v):
        return jnp.asarray(v, f32).reshape(1, -1)

    # interleaved per-head [K(hd) | V(hd)] columns -> contiguous K and V halves
    wkv = p['wkv'].reshape(dw, heads, 2, hd)
    wk = wkv[:, :, 0, :].reshape(dw, width)
    wv = wkv[:, :, 1, :].reshape(dw, width)

    fd = p['wqp'].shape[0]
    fd_pad = -(-fd // 64) * 64
    wqp = jnp.pad(p['wqp'], ((0, fd_pad - fd), (0, 0)))

    mavg = jnp.kron(jnp.eye(heads, dtype=f32),
                    jnp.full((hd, hd), 1.0 / hd, dtype=f32))        # (width, width)

    return {
        'wqp': wqp.astype(bf16), 'bqp': row(p['bqp']),
        'ln1g': row(p['ln1g']), 'ln1b': row(p['ln1b']),
        'ln2g': row(p['ln2g']), 'ln2b': row(p['ln2b']),
        'wq': p['wq'].astype(bf16),
        'wk': wk.astype(bf16), 'wv': wv.astype(bf16),
        'mavg': mavg,
        'qng': row(jnp.tile(p['qng'], heads) * scale),
        'qnb': row(jnp.tile(p['qnb'], heads) * scale),
        'kng': row(jnp.tile(p['kng'], heads)),
        'knb': row(jnp.tile(p['knb'], heads)),
        'wo': p['wo'].astype(bf16), 'bo': row(p['bo']),
        'ln3g': row(p['ln3g']), 'ln3b': row(p['ln3b']),
        'wfc': p['wfc'].astype(bf16), 'bfc': row(p['bfc']),
        'wpr': p['wpr'].astype(bf16), 'bpr': row(p['bpr']),
        'lnpg': row(p['lnpg']), 'lnpb': row(p['lnpb']),
        'woutT': p['wout'].T.astype(bf16),
        'boutT': jnp.asarray(p['bout'], f32).reshape(-1, 1),
    }


# ----------------------------------- main -----------------------------------

if __name__ == "__main__":
    B, N_CTX, N_DATA = 2, 256, 64
    WIDTH, HEADS, OUT_CH, EXPAND = 64, 4, 1, 4
    DATA_W = WIDTH   # small synthetic config: data_width == width

    key = jax.random.PRNGKey(0)
    kq, kl, kparam = jax.random.split(key, 3)
    queries = jax.random.normal(kq, (B, N_CTX, 3), jnp.float32)
    latents = jax.random.normal(kl, (B, N_DATA, DATA_W), jnp.float32)
    raw_params = init_params(kparam, width=WIDTH, heads=HEADS, data_width=DATA_W,
                             out_channels=OUT_CH, mlp_expand_ratio=EXPAND)
    kparams = prepare_kernel_params(raw_params, heads=HEADS)

    occ = cross_attention_decoder(queries, latents, kparams, heads=HEADS)
    jax.block_until_ready(occ)
    assert occ.shape == (B, N_CTX, OUT_CH) and occ.dtype == jnp.float32
    assert bool(jnp.all(jnp.isfinite(occ)))
    print("KERNEL_OK")
</pallas_src>

<mosaic_0001>
module attributes {stable_mosaic.version = 11 : i64} {
  func.func @decoder_kernel(%arg0: i32, %arg1: i32, %arg2: memref<1x128x64xf32, #tpu.memory_space<vmem>>, %arg3: memref<1x64x64xf32, #tpu.memory_space<vmem>>, %arg4: memref<64x64xbf16, #tpu.memory_space<vmem>>, %arg5: memref<1x64xf32, #tpu.memory_space<vmem>>, %arg6: memref<1x64xf32, #tpu.memory_space<vmem>>, %arg7: memref<1x64xf32, #tpu.memory_space<vmem>>, %arg8: memref<1x64xf32, #tpu.memory_space<vmem>>, %arg9: memref<1x64xf32, #tpu.memory_space<vmem>>, %arg10: memref<64x64xbf16, #tpu.memory_space<vmem>>, %arg11: memref<64x64xbf16, #tpu.memory_space<vmem>>, %arg12: memref<64x64xbf16, #tpu.memory_space<vmem>>, %arg13: memref<64x64xf32, #tpu.memory_space<vmem>>, %arg14: memref<1x64xf32, #tpu.memory_space<vmem>>, %arg15: memref<1x64xf32, #tpu.memory_space<vmem>>, %arg16: memref<1x64xf32, #tpu.memory_space<vmem>>, %arg17: memref<1x64xf32, #tpu.memory_space<vmem>>, %arg18: memref<64x64xbf16, #tpu.memory_space<vmem>>, %arg19: memref<1x64xf32, #tpu.memory_space<vmem>>, %arg20: memref<1x64xf32, #tpu.memory_space<vmem>>, %arg21: memref<1x64xf32, #tpu.memory_space<vmem>>, %arg22: memref<64x256xbf16, #tpu.memory_space<vmem>>, %arg23: memref<1x256xf32, #tpu.memory_space<vmem>>, %arg24: memref<256x64xbf16, #tpu.memory_space<vmem>>, %arg25: memref<1x64xf32, #tpu.memory_space<vmem>>, %arg26: memref<1x64xf32, #tpu.memory_space<vmem>>, %arg27: memref<1x64xf32, #tpu.memory_space<vmem>>, %arg28: memref<1x64xbf16, #tpu.memory_space<vmem>>, %arg29: memref<1x1xf32, #tpu.memory_space<vmem>>, %arg30: memref<1x1x128xf32, #tpu.memory_space<vmem>>, %arg31: memref<64x64xbf16, #tpu.memory_space<vmem>>, %arg32: memref<64x64xbf16, #tpu.memory_space<vmem>>) attributes {dimension_semantics = [#tpu.dimension_semantics<parallel>, #tpu.dimension_semantics<arbitrary>], iteration_bounds = array<i64: 2, 2>, scalar_prefetch = 0 : i64, scratch_operands = 2 : i64, tpu.core_type = #tpu.core_type<tc>, window_params = [{transform_indices = @transform_0, window_bounds = array<i64: 1, 128, 64>}, {transform_indices = @transform_1, window_bounds = array<i64: 1, 64, 64>}, {pipeline_mode = #tpu.pipeline_mode<synchronous>, transform_indices = @transform_2, window_bounds = array<i64: 64, 64>}, {pipeline_mode = #tpu.pipeline_mode<synchronous>, transform_indices = @transform_3, window_bounds = array<i64: 1, 64>}, {pipeline_mode = #tpu.pipeline_mode<synchronous>, transform_indices = @transform_4, window_bounds = array<i64: 1, 64>}, {pipeline_mode = #tpu.pipeline_mode<synchronous>, transform_indices = @transform_5, window_bounds = array<i64: 1, 64>}, {pipeline_mode = #tpu.pipeline_mode<synchronous>, transform_indices = @transform_6, window_bounds = array<i64: 1, 64>}, {pipeline_mode = #tpu.pipeline_mode<synchronous>, transform_indices = @transform_7, window_bounds = array<i64: 1, 64>}, {pipeline_mode = #tpu.pipeline_mode<synchronous>, transform_indices = @transform_8, window_bounds = array<i64: 64, 64>}, {pipeline_mode = #tpu.pipeline_mode<synchronous>, transform_indices = @transform_9, window_bounds = array<i64: 64, 64>}, {pipeline_mode = #tpu.pipeline_mode<synchronous>, transform_indices = @transform_10, window_bounds = array<i64: 64, 64>}, {pipeline_mode = #tpu.pipeline_mode<synchronous>, transform_indices = @transform_11, window_bounds = array<i64: 64, 64>}, {pipeline_mode = #tpu.pipeline_mode<synchronous>, transform_indices = @transform_12, window_bounds = array<i64: 1, 64>}, {pipeline_mode = #tpu.pipeline_mode<synchronous>, transform_indices = @transform_13, window_bounds = array<i64: 1, 64>}, {pipeline_mode = #tpu.pipeline_mode<synchronous>, transform_indices = @transform_14, window_bounds = array<i64: 1, 64>}, {pipeline_mode = #tpu.pipeline_mode<synchronous>, transform_indices = @transform_15, window_bounds = array<i64: 1, 64>}, {pipeline_mode = #tpu.pipeline_mode<synchronous>, transform_indices = @transform_16, window_bounds = array<i64: 64, 64>}, {pipeline_mode = #tpu.pipeline_mode<synchronous>, transform_indices = @transform_17, window_bounds = array<i64: 1, 64>}, {pipeline_mode = #tpu.pipeline_mode<synchronous>, transform_indices = @transform_18, window_bounds = array<i64: 1, 64>}, {pipeline_mode = #tpu.pipeline_mode<synchronous>, transform_indices = @transform_19, window_bounds = array<i64: 1, 64>}, {pipeline_mode = #tpu.pipeline_mode<synchronous>, transform_indices = @transform_20, window_bounds = array<i64: 64, 256>}, {pipeline_mode = #tpu.pipeline_mode<synchronous>, transform_indices = @transform_21, window_bounds = array<i64: 1, 256>}, {pipeline_mode = #tpu.pipeline_mode<synchronous>, transform_indices = @transform_22, window_bounds = array<i64: 256, 64>}, {pipeline_mode = #tpu.pipeline_mode<synchronous>, transform_indices = @transform_23, window_bounds = array<i64: 1, 64>}, {pipeline_mode = #tpu.pipeline_mode<synchronous>, transform_indices = @transform_24, window_bounds = array<i64: 1, 64>}, {pipeline_mode = #tpu.pipeline_mode<synchronous>, transform_indices = @transform_25, window_bounds = array<i64: 1, 64>}, {pipeline_mode = #tpu.pipeline_mode<synchronous>, transform_indices = @transform_26, window_bounds = array<i64: 1, 64>}, {pipeline_mode = #tpu.pipeline_mode<synchronous>, transform_indices = @transform_27, window_bounds = array<i64: 1, 1>}, {transform_indices = @transform_28, window_bounds = array<i64: 1, 1, 128>}]} {
    %c0_i32 = arith.constant 0 : i32
    %0 = arith.cmpi eq, %arg1, %c0_i32 : i32
    %1 = arith.extui %0 : i1 to i32
    %c0_i32_0 = arith.constant 0 : i32
    %2 = arith.cmpi ne, %1, %c0_i32_0 : i32
    scf.if %2 {
      %c0_99 = arith.constant 0 : index
      %c0_100 = arith.constant 0 : index
      %c0_101 = arith.constant 0 : index
      %213 = vector.load %arg3[%c0_99, %c0_100, %c0_101] : memref<1x64x64xf32, #tpu.memory_space<vmem>>, vector<1x64x64xf32>
      %214 = vector.shape_cast %213 : vector<1x64x64xf32> to vector<64x64xf32>
      %c0_102 = arith.constant 0 : index
      %c0_103 = arith.constant 0 : index
      %215 = vector.load %arg8[%c0_102, %c0_103] : memref<1x64xf32, #tpu.memory_space<vmem>>, vector<1x64xf32>
      %c0_104 = arith.constant 0 : index
      %c0_105 = arith.constant 0 : index
      %216 = vector.load %arg9[%c0_104, %c0_105] : memref<1x64xf32, #tpu.memory_space<vmem>>, vector<1x64xf32>
      %cst_106 = arith.constant dense<0.000000e+00> : vector<64xf32>
      %217 = vector.multi_reduction <add>, %214, %cst_106 [1] : vector<64x64xf32> to vector<64xf32>
      %218 = vector.shape_cast %217 : vector<64xf32> to vector<64x1xf32>
      %cst_107 = arith.constant 6.400000e+01 : f32
      %219 = vector.broadcast %cst_107 : f32 to vector<64x1xf32>
      %220 = arith.divf %218, %219 : vector<64x1xf32>
      %221 = vector.broadcast %220 : vector<64x1xf32> to vector<64x64xf32>
      %222 = arith.subf %214, %221 : vector<64x64xf32>
      %223 = arith.mulf %222, %222 : vector<64x64xf32>
      %cst_108 = arith.constant dense<0.000000e+00> : vector<64xf32>
      %224 = vector.multi_reduction <add>, %223, %cst_108 [1] : vector<64x64xf32> to vector<64xf32>
      %225 = vector.shape_cast %224 : vector<64xf32> to vector<64x1xf32>
      %cst_109 = arith.constant 6.400000e+01 : f32
      %226 = vector.broadcast %cst_109 : f32 to vector<64x1xf32>
      %227 = arith.divf %225, %226 : vector<64x1xf32>
      %cst_110 = arith.constant 9.99999997E-7 : f32
      %228 = vector.broadcast %cst_110 : f32 to vector<64x1xf32>
      %229 = arith.addf %227, %228 : vector<64x1xf32>
      %230 = math.rsqrt %229 : vector<64x1xf32>
      %231 = vector.broadcast %230 : vector<64x1xf32> to vector<64x64xf32>
      %232 = arith.mulf %222, %231 : vector<64x64xf32>
      %233 = vector.broadcast %215 : vector<1x64xf32> to vector<64x64xf32>
      %234 = arith.mulf %232, %233 : vector<64x64xf32>
      %235 = vector.broadcast %216 : vector<1x64xf32> to vector<64x64xf32>
      %236 = arith.addf %234, %235 : vector<64x64xf32>
      %237 = arith.truncf %236 : vector<64x64xf32> to vector<64x64xbf16>
      %c0_111 = arith.constant 0 : index
      %c0_112 = arith.constant 0 : index
      %238 = vector.load %arg11[%c0_111, %c0_112] : memref<64x64xbf16, #tpu.memory_space<vmem>>, vector<64x64xbf16>
      %cst_113 = arith.constant dense<0.000000e+00> : vector<64x64xf32>
      %239 = tpu.matmul %237, %238, %cst_113 {dimension_numbers = #tpu.dot_dimension_numbers<[1], [0], [0], [1], [0, 0, 1, 1], [], []>} : vector<64x64xbf16>, vector<64x64xbf16>, vector<64x64xf32> -> vector<64x64xf32>
      %c0_114 = arith.constant 0 : index
      %c0_115 = arith.constant 0 : index
      %240 = vector.load %arg12[%c0_114, %c0_115] : memref<64x64xbf16, #tpu.memory_space<vmem>>, vector<64x64xbf16>
      %cst_116 = arith.constant dense<0.000000e+00> : vector<64x64xf32>
      %241 = tpu.matmul %237, %240, %cst_116 {dimension_numbers = #tpu.dot_dimension_numbers<[1], [0], [0], [1], [0, 0, 1, 1], [], []>} : vector<64x64xbf16>, vector<64x64xbf16>, vector<64x64xf32> -> vector<64x64xf32>
      %c0_117 = arith.constant 0 : index
      %c0_118 = arith.constant 0 : index
      %242 = vector.load %arg13[%c0_117, %c0_118] : memref<64x64xf32, #tpu.memory_space<vmem>>, vector<64x64xf32>
      %c0_119 = arith.constant 0 : index
      %c0_120 = arith.constant 0 : index
      %243 = vector.load %arg16[%c0_119, %c0_120] : memref<1x64xf32, #tpu.memory_space<vmem>>, vector<1x64xf32>
      %c0_121 = arith.constant 0 : index
      %c0_122 = arith.constant 0 : index
      %244 = vector.load %arg17[%c0_121, %c0_122] : memref<1x64xf32, #tpu.memory_space<vmem>>, vector<1x64xf32>
      %cst_123 = arith.constant dense<0.000000e+00> : vector<64x64xf32>
      %245 = tpu.matmul %239, %242, %cst_123 {dimension_numbers = #tpu.dot_dimension_numbers<[1], [0], [0], [1], [0, 0, 1, 1], [], []>} : vector<64x64xf32>, vector<64x64xf32>, vector<64x64xf32> -> vector<64x64xf32>
      %246 = arith.subf %239, %245 : vector<64x64xf32>
      %247 = arith.mulf %246, %246 : vector<64x64xf32>
      %cst_124 = arith.constant dense<0.000000e+00> : vector<64x64xf32>
      %248 = tpu.matmul %247, %242, %cst_124 {dimension_numbers = #tpu.dot_dimension_numbers<[1], [0], [0], [1], [0, 0, 1, 1], [], []>} : vector<64x64xf32>, vector<64x64xf32>, vector<64x64xf32> -> vector<64x64xf32>
      %cst_125 = arith.constant 9.99999997E-7 : f32
      %249 = vector.broadcast %cst_125 : f32 to vector<64x64xf32>
      %250 = arith.addf %248, %249 : vector<64x64xf32>
      %251 = math.rsqrt %250 : vector<64x64xf32>
      %252 = arith.mulf %246, %251 : vector<64x64xf32>
      %253 = vector.broadcast %243 : vector<1x64xf32> to vector<64x64xf32>
      %254 = arith.mulf %252, %253 : vector<64x64xf32>
      %255 = vector.broadcast %244 : vector<1x64xf32> to vector<64x64xf32>
      %256 = arith.addf %254, %255 : vector<64x64xf32>
      %257 = arith.truncf %256 : vector<64x64xf32> to vector<64x64xbf16>
      %c0_126 = arith.constant 0 : index
      %c0_127 = arith.constant 0 : index
      %258 = vector.load %arg31[%c0_126, %c0_127] : memref<64x64xbf16, #tpu.memory_space<vmem>>, vector<64x64xbf16>
      tpu.vector_store %arg31[%c0_126, %c0_127], %257 {strides = array<i32>} : memref<64x64xbf16, #tpu.memory_space<vmem>>, vector<64x64xbf16>,
      %259 = arith.truncf %241 : vector<64x64xf32> to vector<64x64xbf16>
      %c0_128 = arith.constant 0 : index
      %c0_129 = arith.constant 0 : index
      %260 = vector.load %arg32[%c0_128, %c0_129] : memref<64x64xbf16, #tpu.memory_space<vmem>>, vector<64x64xbf16>
      tpu.vector_store %arg32[%c0_128, %c0_129], %259 {strides = array<i32>} : memref<64x64xbf16, #tpu.memory_space<vmem>>, vector<64x64xbf16>,
    } else {
    }
    %c0 = arith.constant 0 : index
    %c0_1 = arith.constant 0 : index
    %c0_2 = arith.constant 0 : index
    %3 = vector.load %arg2[%c0, %c0_1, %c0_2] : memref<1x128x64xf32, #tpu.memory_space<vmem>>, vector<1x128x64xf32>
    %4 = vector.shape_cast %3 : vector<1x128x64xf32> to vector<128x64xf32>
    %5 = arith.truncf %4 : vector<128x64xf32> to vector<128x64xbf16>
    %c0_3 = arith.constant 0 : index
    %c0_4 = arith.constant 0 : index
    %6 = vector.load %arg4[%c0_3, %c0_4] : memref<64x64xbf16, #tpu.memory_space<vmem>>, vector<64x64xbf16>
    %cst = arith.constant dense<0.000000e+00> : vector<128x64xf32>
    %7 = tpu.matmul %5, %6, %cst {dimension_numbers = #tpu.dot_dimension_numbers<[1], [0], [0], [1], [0, 0, 1, 1], [], []>} : vector<128x64xbf16>, vector<64x64xbf16>, vector<128x64xf32> -> vector<128x64xf32>
    %c0_5 = arith.constant 0 : index
    %c0_6 = arith.constant 0 : index
    %8 = vector.load %arg5[%c0_5, %c0_6] : memref<1x64xf32, #tpu.memory_space<vmem>>, vector<1x64xf32>
    %9 = vector.broadcast %8 : vector<1x64xf32> to vector<128x64xf32>
    %10 = arith.addf %7, %9 : vector<128x64xf32>
    %c0_7 = arith.constant 0 : index
    %c0_8 = arith.constant 0 : index
    %11 = vector.load %arg6[%c0_7, %c0_8] : memref<1x64xf32, #tpu.memory_space<vmem>>, vector<1x64xf32>
    %c0_9 = arith.constant 0 : index
    %c0_10 = arith.constant 0 : index
    %12 = vector.load %arg7[%c0_9, %c0_10] : memref<1x64xf32, #tpu.memory_space<vmem>>, vector<1x64xf32>
    %cst_11 = arith.constant dense<0.000000e+00> : vector<128xf32>
    %13 = vector.multi_reduction <add>, %10, %cst_11 [1] : vector<128x64xf32> to vector<128xf32>
    %14 = vector.shape_cast %13 : vector<128xf32> to vector<128x1xf32>
    %cst_12 = arith.constant 6.400000e+01 : f32
    %15 = vector.broadcast %cst_12 : f32 to vector<128x1xf32>
    %16 = arith.divf %14, %15 : vector<128x1xf32>
    %17 = vector.broadcast %16 : vector<128x1xf32> to vector<128x64xf32>
    %18 = arith.subf %10, %17 : vector<128x64xf32>
    %19 = arith.mulf %18, %18 : vector<128x64xf32>
    %cst_13 = arith.constant dense<0.000000e+00> : vector<128xf32>
    %20 = vector.multi_reduction <add>, %19, %cst_13 [1] : vector<128x64xf32> to vector<128xf32>
    %21 = vector.shape_cast %20 : vector<128xf32> to vector<128x1xf32>
    %cst_14 = arith.constant 6.400000e+01 : f32
    %22 = vector.broadcast %cst_14 : f32 to vector<128x1xf32>
    %23 = arith.divf %21, %22 : vector<128x1xf32>
    %cst_15 = arith.constant 9.99999997E-7 : f32
    %24 = vector.broadcast %cst_15 : f32 to vector<128x1xf32>
    %25 = arith.addf %23, %24 : vector<128x1xf32>
    %26 = math.rsqrt %25 : vector<128x1xf32>
    %27 = vector.broadcast %26 : vector<128x1xf32> to vector<128x64xf32>
    %28 = arith.mulf %18, %27 : vector<128x64xf32>
    %29 = vector.broadcast %11 : vector<1x64xf32> to vector<128x64xf32>
    %30 = arith.mulf %28, %29 : vector<128x64xf32>
    %31 = vector.broadcast %12 : vector<1x64xf32> to vector<128x64xf32>
    %32 = arith.addf %30, %31 : vector<128x64xf32>
    %33 = arith.truncf %32 : vector<128x64xf32> to vector<128x64xbf16>
    %c0_16 = arith.constant 0 : index
    %c0_17 = arith.constant 0 : index
    %34 = vector.load %arg10[%c0_16, %c0_17] : memref<64x64xbf16, #tpu.memory_space<vmem>>, vector<64x64xbf16>
    %cst_18 = arith.constant dense<0.000000e+00> : vector<128x64xf32>
    %35 = tpu.matmul %33, %34, %cst_18 {dimension_numbers = #tpu.dot_dimension_numbers<[1], [0], [0], [1], [0, 0, 1, 1], [], []>} : vector<128x64xbf16>, vector<64x64xbf16>, vector<128x64xf32> -> vector<128x64xf32>
    %c0_19 = arith.constant 0 : index
    %c0_20 = arith.constant 0 : index
    %36 = vector.load %arg13[%c0_19, %c0_20] : memref<64x64xf32, #tpu.memory_space<vmem>>, vector<64x64xf32>
    %c0_21 = arith.constant 0 : index
    %c0_22 = arith.constant 0 : index
    %37 = vector.load %arg14[%c0_21, %c0_22] : memref<1x64xf32, #tpu.memory_space<vmem>>, vector<1x64xf32>
    %c0_23 = arith.constant 0 : index
    %c0_24 = arith.constant 0 : index
    %38 = vector.load %arg15[%c0_23, %c0_24] : memref<1x64xf32, #tpu.memory_space<vmem>>, vector<1x64xf32>
    %cst_25 = arith.constant dense<0.000000e+00> : vector<128x64xf32>
    %39 = tpu.matmul %35, %36, %cst_25 {dimension_numbers = #tpu.dot_dimension_numbers<[1], [0], [0], [1], [0, 0, 1, 1], [], []>} : vector<128x64xf32>, vector<64x64xf32>, vector<128x64xf32> -> vector<128x64xf32>
    %40 = arith.subf %35, %39 : vector<128x64xf32>
    %41 = arith.mulf %40, %40 : vector<128x64xf32>
    %cst_26 = arith.constant dense<0.000000e+00> : vector<128x64xf32>
    %42 = tpu.matmul %41, %36, %cst_26 {dimension_numbers = #tpu.dot_dimension_numbers<[1], [0], [0], [1], [0, 0, 1, 1], [], []>} : vector<128x64xf32>, vector<64x64xf32>, vector<128x64xf32> -> vector<128x64xf32>
    %cst_27 = arith.constant 9.99999997E-7 : f32
    %43 = vector.broadcast %cst_27 : f32 to vector<128x64xf32>
    %44 = arith.addf %42, %43 : vector<128x64xf32>
    %45 = math.rsqrt %44 : vector<128x64xf32>
    %46 = arith.mulf %40, %45 : vector<128x64xf32>
    %47 = vector.broadcast %37 : vector<1x64xf32> to vector<128x64xf32>
    %48 = arith.mulf %46, %47 : vector<128x64xf32>
    %49 = vector.broadcast %38 : vector<1x64xf32> to vector<128x64xf32>
    %50 = arith.addf %48, %49 : vector<128x64xf32>
    %51 = arith.truncf %50 : vector<128x64xf32> to vector<128x64xbf16>
    %c0_28 = arith.constant 0 : index
    %c0_29 = arith.constant 0 : index
    %52 = vector.load %arg31[%c0_28, %c0_29] : memref<64x64xbf16, #tpu.memory_space<vmem>>, vector<64x64xbf16>
    %c0_30 = arith.constant 0 : index
    %c0_31 = arith.constant 0 : index
    %53 = vector.load %arg32[%c0_30, %c0_31] : memref<64x64xbf16, #tpu.memory_space<vmem>>, vector<64x64xbf16>
    %cst_32 = arith.constant 0.000000e+00 : f32
    %54 = vector.broadcast %cst_32 : f32 to vector<128x64xf32>
    %55 = vector.extract_strided_slice %51 {offsets = [0, 0], sizes = [128, 16], strides = [1, 1]} : vector<128x64xbf16> to vector<128x16xbf16>
    %56 = vector.extract_strided_slice %52 {offsets = [0, 0], sizes = [64, 16], strides = [1, 1]} : vector<64x64xbf16> to vector<64x16xbf16>
    %57 = vector.extract_strided_slice %53 {offsets = [0, 0], sizes = [64, 16], strides = [1, 1]} : vector<64x64xbf16> to vector<64x16xbf16>
    %cst_33 = arith.constant dense<0.000000e+00> : vector<128x64xf32>
    %58 = tpu.matmul %55, %56, %cst_33 {dimension_numbers = #tpu.dot_dimension_numbers<[1], [1], [0], [0], [0, 0, 1, 0], [], []>} : vector<128x16xbf16>, vector<64x16xbf16>, vector<128x64xf32> -> vector<128x64xf32>
    %cst_34 = arith.constant dense<0xFF800000> : vector<128xf32>
    %59 = vector.multi_reduction <maximumf>, %58, %cst_34 [1] : vector<128x64xf32> to vector<128xf32>
    %60 = vector.shape_cast %59 : vector<128xf32> to vector<128x1xf32>
    %61 = vector.broadcast %60 : vector<128x1xf32> to vector<128x64xf32>
    %62 = arith.subf %58, %61 : vector<128x64xf32>
    %63 = math.exp %62 : vector<128x64xf32>
    %cst_35 = arith.constant dense<0.000000e+00> : vector<128xf32>
    %64 = vector.multi_reduction <add>, %63, %cst_35 [1] : vector<128x64xf32> to vector<128xf32>
    %65 = vector.shape_cast %64 : vector<128xf32> to vector<128x1xf32>
    %66 = tpu.reciprocal %65 {approx = true} : vector<128x1xf32> -> vector<128x1xf32>
    %67 = vector.broadcast %66 : vector<128x1xf32> to vector<128x64xf32>
    %68 = arith.mulf %63, %67 : vector<128x64xf32>
    %69 = arith.truncf %68 : vector<128x64xf32> to vector<128x64xbf16>
    %cst_36 = arith.constant dense<0.000000e+00> : vector<128x16xf32>
    %70 = tpu.matmul %69, %57, %cst_36 {dimension_numbers = #tpu.dot_dimension_numbers<[1], [0], [0], [1], [0, 0, 1, 1], [], []>} : vector<128x64xbf16>, vector<64x16xbf16>, vector<128x16xf32> -> vector<128x16xf32>
    %71 = arith.truncf %70 : vector<128x16xf32> to vector<128x16xbf16>
    %c0_37 = arith.constant 0 : index
    %c0_38 = arith.constant 0 : index
    %72 = vector.load %arg18[%c0_37, %c0_38] : memref<64x64xbf16, #tpu.memory_space<vmem>>, vector<16x64xbf16>
    %cst_39 = arith.constant dense<0.000000e+00> : vector<128x64xf32>
    %73 = tpu.matmul %71, %72, %cst_39 {dimension_numbers = #tpu.dot_dimension_numbers<[1], [0], [0], [1], [0, 0, 1, 1], [], []>} : vector<128x16xbf16>, vector<16x64xbf16>, vector<128x64xf32> -> vector<128x64xf32>
    %74 = arith.addf %54, %73 : vector<128x64xf32>
    %75 = vector.extract_strided_slice %51 {offsets = [0, 16], sizes = [128, 16], strides = [1, 1]} : vector<128x64xbf16> to vector<128x16xbf16>
    %76 = vector.extract_strided_slice %52 {offsets = [0, 16], sizes = [64, 16], strides = [1, 1]} : vector<64x64xbf16> to vector<64x16xbf16>
    %77 = vector.extract_strided_slice %53 {offsets = [0, 16], sizes = [64, 16], strides = [1, 1]} : vector<64x64xbf16> to vector<64x16xbf16>
    %cst_40 = arith.constant dense<0.000000e+00> : vector<128x64xf32>
    %78 = tpu.matmul %75, %76, %cst_40 {dimension_numbers = #tpu.dot_dimension_numbers<[1], [1], [0], [0], [0, 0, 1, 0], [], []>} : vector<128x16xbf16>, vector<64x16xbf16>, vector<128x64xf32> -> vector<128x64xf32>
    %cst_41 = arith.constant dense<0xFF800000> : vector<128xf32>
    %79 = vector.multi_reduction <maximumf>, %78, %cst_41 [1] : vector<128x64xf32> to vector<128xf32>
    %80 = vector.shape_cast %79 : vector<128xf32> to vector<128x1xf32>
    %81 = vector.broadcast %80 : vector<128x1xf32> to vector<128x64xf32>
    %82 = arith.subf %78, %81 : vector<128x64xf32>
    %83 = math.exp %82 : vector<128x64xf32>
    %cst_42 = arith.constant dense<0.000000e+00> : vector<128xf32>
    %84 = vector.multi_reduction <add>, %83, %cst_42 [1] : vector<128x64xf32> to vector<128xf32>
    %85 = vector.shape_cast %84 : vector<128xf32> to vector<128x1xf32>
    %86 = tpu.reciprocal %85 {approx = true} : vector<128x1xf32> -> vector<128x1xf32>
    %87 = vector.broadcast %86 : vector<128x1xf32> to vector<128x64xf32>
    %88 = arith.mulf %83, %87 : vector<128x64xf32>
    %89 = arith.truncf %88 : vector<128x64xf32> to vector<128x64xbf16>
    %cst_43 = arith.constant dense<0.000000e+00> : vector<128x16xf32>
    %90 = tpu.matmul %89, %77, %cst_43 {dimension_numbers = #tpu.dot_dimension_numbers<[1], [0], [0], [1], [0, 0, 1, 1], [], []>} : vector<128x64xbf16>, vector<64x16xbf16>, vector<128x16xf32> -> vector<128x16xf32>
    %91 = arith.truncf %90 : vector<128x16xf32> to vector<128x16xbf16>
    %c16 = arith.constant 16 : index
    %c0_44 = arith.constant 0 : index
    %92 = vector.load %arg18[%c16, %c0_44] : memref<64x64xbf16, #tpu.memory_space<vmem>>, vector<16x64xbf16>
    %cst_45 = arith.constant dense<0.000000e+00> : vector<128x64xf32>
    %93 = tpu.matmul %91, %92, %cst_45 {dimension_numbers = #tpu.dot_dimension_numbers<[1], [0], [0], [1], [0, 0, 1, 1], [], []>} : vector<128x16xbf16>, vector<16x64xbf16>, vector<128x64xf32> -> vector<128x64xf32>
    %94 = arith.addf %74, %93 : vector<128x64xf32>
    %95 = vector.extract_strided_slice %51 {offsets = [0, 32], sizes = [128, 16], strides = [1, 1]} : vector<128x64xbf16> to vector<128x16xbf16>
    %96 = vector.extract_strided_slice %52 {offsets = [0, 32], sizes = [64, 16], strides = [1, 1]} : vector<64x64xbf16> to vector<64x16xbf16>
    %97 = vector.extract_strided_slice %53 {offsets = [0, 32], sizes = [64, 16], strides = [1, 1]} : vector<64x64xbf16> to vector<64x16xbf16>
    %cst_46 = arith.constant dense<0.000000e+00> : vector<128x64xf32>
    %98 = tpu.matmul %95, %96, %cst_46 {dimension_numbers = #tpu.dot_dimension_numbers<[1], [1], [0], [0], [0, 0, 1, 0], [], []>} : vector<128x16xbf16>, vector<64x16xbf16>, vector<128x64xf32> -> vector<128x64xf32>
    %cst_47 = arith.constant dense<0xFF800000> : vector<128xf32>
    %99 = vector.multi_reduction <maximumf>, %98, %cst_47 [1] : vector<128x64xf32> to vector<128xf32>
    %100 = vector.shape_cast %99 : vector<128xf32> to vector<128x1xf32>
    %101 = vector.broadcast %100 : vector<128x1xf32> to vector<128x64xf32>
    %102 = arith.subf %98, %101 : vector<128x64xf32>
    %103 = math.exp %102 : vector<128x64xf32>
    %cst_48 = arith.constant dense<0.000000e+00> : vector<128xf32>
    %104 = vector.multi_reduction <add>, %103, %cst_48 [1] : vector<128x64xf32> to vector<128xf32>
    %105 = vector.shape_cast %104 : vector<128xf32> to vector<128x1xf32>
    %106 = tpu.reciprocal %105 {approx = true} : vector<128x1xf32> -> vector<128x1xf32>
    %107 = vector.broadcast %106 : vector<128x1xf32> to vector<128x64xf32>
    %108 = arith.mulf %103, %107 : vector<128x64xf32>
    %109 = arith.truncf %108 : vector<128x64xf32> to vector<128x64xbf16>
    %cst_49 = arith.constant dense<0.000000e+00> : vector<128x16xf32>
    %110 = tpu.matmul %109, %97, %cst_49 {dimension_numbers = #tpu.dot_dimension_numbers<[1], [0], [0], [1], [0, 0, 1, 1], [], []>} : vector<128x64xbf16>, vector<64x16xbf16>, vector<128x16xf32> -> vector<128x16xf32>
    %111 = arith.truncf %110 : vector<128x16xf32> to vector<128x16xbf16>
    %c32 = arith.constant 32 : index
    %c0_50 = arith.constant 0 : index
    %112 = vector.load %arg18[%c32, %c0_50] : memref<64x64xbf16, #tpu.memory_space<vmem>>, vector<16x64xbf16>
    %cst_51 = arith.constant dense<0.000000e+00> : vector<128x64xf32>
    %113 = tpu.matmul %111, %112, %cst_51 {dimension_numbers = #tpu.dot_dimension_numbers<[1], [0], [0], [1], [0, 0, 1, 1], [], []>} : vector<128x16xbf16>, vector<16x64xbf16>, vector<128x64xf32> -> vector<128x64xf32>
    %114 = arith.addf %94, %113 : vector<128x64xf32>
    %115 = vector.extract_strided_slice %51 {offsets = [0, 48], sizes = [128, 16], strides = [1, 1]} : vector<128x64xbf16> to vector<128x16xbf16>
    %116 = vector.extract_strided_slice %52 {offsets = [0, 48], sizes = [64, 16], strides = [1, 1]} : vector<64x64xbf16> to vector<64x16xbf16>
    %117 = vector.extract_strided_slice %53 {offsets = [0, 48], sizes = [64, 16], strides = [1, 1]} : vector<64x64xbf16> to vector<64x16xbf16>
    %cst_52 = arith.constant dense<0.000000e+00> : vector<128x64xf32>
    %118 = tpu.matmul %115, %116, %cst_52 {dimension_numbers = #tpu.dot_dimension_numbers<[1], [1], [0], [0], [0, 0, 1, 0], [], []>} : vector<128x16xbf16>, vector<64x16xbf16>, vector<128x64xf32> -> vector<128x64xf32>
    %cst_53 = arith.constant dense<0xFF800000> : vector<128xf32>
    %119 = vector.multi_reduction <maximumf>, %118, %cst_53 [1] : vector<128x64xf32> to vector<128xf32>
    %120 = vector.shape_cast %119 : vector<128xf32> to vector<128x1xf32>
    %121 = vector.broadcast %120 : vector<128x1xf32> to vector<128x64xf32>
    %122 = arith.subf %118, %121 : vector<128x64xf32>
    %123 = math.exp %122 : vector<128x64xf32>
    %cst_54 = arith.constant dense<0.000000e+00> : vector<128xf32>
    %124 = vector.multi_reduction <add>, %123, %cst_54 [1] : vector<128x64xf32> to vector<128xf32>
    %125 = vector.shape_cast %124 : vector<128xf32> to vector<128x1xf32>
    %126 = tpu.reciprocal %125 {approx = true} : vector<128x1xf32> -> vector<128x1xf32>
    %127 = vector.broadcast %126 : vector<128x1xf32> to vector<128x64xf32>
    %128 = arith.mulf %123, %127 : vector<128x64xf32>
    %129 = arith.truncf %128 : vector<128x64xf32> to vector<128x64xbf16>
    %cst_55 = arith.constant dense<0.000000e+00> : vector<128x16xf32>
    %130 = tpu.matmul %129, %117, %cst_55 {dimension_numbers = #tpu.dot_dimension_numbers<[1], [0], [0], [1], [0, 0, 1, 1], [], []>} : vector<128x64xbf16>, vector<64x16xbf16>, vector<128x16xf32> -> vector<128x16xf32>
    %131 = arith.truncf %130 : vector<128x16xf32> to vector<128x16xbf16>
    %c48 = arith.constant 48 : index
    %c0_56 = arith.constant 0 : index
    %132 = vector.load %arg18[%c48, %c0_56] : memref<64x64xbf16, #tpu.memory_space<vmem>>, vector<16x64xbf16>
    %cst_57 = arith.constant dense<0.000000e+00> : vector<128x64xf32>
    %133 = tpu.matmul %131, %132, %cst_57 {dimension_numbers = #tpu.dot_dimension_numbers<[1], [0], [0], [1], [0, 0, 1, 1], [], []>} : vector<128x16xbf16>, vector<16x64xbf16>, vector<128x64xf32> -> vector<128x64xf32>
    %134 = arith.addf %114, %133 : vector<128x64xf32>
    %135 = arith.addf %10, %134 : vector<128x64xf32>
    %c0_58 = arith.constant 0 : index
    %c0_59 = arith.constant 0 : index
    %136 = vector.load %arg19[%c0_58, %c0_59] : memref<1x64xf32, #tpu.memory_space<vmem>>, vector<1x64xf32>
    %137 = vector.broadcast %136 : vector<1x64xf32> to vector<128x64xf32>
    %138 = arith.addf %135, %137 : vector<128x64xf32>
    %c0_60 = arith.constant 0 : index
    %c0_61 = arith.constant 0 : index
    %139 = vector.load %arg20[%c0_60, %c0_61] : memref<1x64xf32, #tpu.memory_space<vmem>>, vector<1x64xf32>
    %c0_62 = arith.constant 0 : index
    %c0_63 = arith.constant 0 : index
    %140 = vector.load %arg21[%c0_62, %c0_63] : memref<1x64xf32, #tpu.memory_space<vmem>>, vector<1x64xf32>
    %cst_64 = arith.constant dense<0.000000e+00> : vector<128xf32>
    %141 = vector.multi_reduction <add>, %138, %cst_64 [1] : vector<128x64xf32> to vector<128xf32>
    %142 = vector.shape_cast %141 : vector<128xf32> to vector<128x1xf32>
    %cst_65 = arith.constant 6.400000e+01 : f32
    %143 = vector.broadcast %cst_65 : f32 to vector<128x1xf32>
    %144 = arith.divf %142, %143 : vector<128x1xf32>
    %145 = vector.broadcast %144 : vector<128x1xf32> to vector<128x64xf32>
    %146 = arith.subf %138, %145 : vector<128x64xf32>
    %147 = arith.mulf %146, %146 : vector<128x64xf32>
    %cst_66 = arith.constant dense<0.000000e+00> : vector<128xf32>
    %148 = vector.multi_reduction <add>, %147, %cst_66 [1] : vector<128x64xf32> to vector<128xf32>
    %149 = vector.shape_cast %148 : vector<128xf32> to vector<128x1xf32>
    %cst_67 = arith.constant 6.400000e+01 : f32
    %150 = vector.broadcast %cst_67 : f32 to vector<128x1xf32>
    %151 = arith.divf %149, %150 : vector<128x1xf32>
    %cst_68 = arith.constant 9.99999997E-7 : f32
    %152 = vector.broadcast %cst_68 : f32 to vector<128x1xf32>
    %153 = arith.addf %151, %152 : vector<128x1xf32>
    %154 = math.rsqrt %153 : vector<128x1xf32>
    %155 = vector.broadcast %154 : vector<128x1xf32> to vector<128x64xf32>
    %156 = arith.mulf %146, %155 : vector<128x64xf32>
    %157 = vector.broadcast %139 : vector<1x64xf32> to vector<128x64xf32>
    %158 = arith.mulf %156, %157 : vector<128x64xf32>
    %159 = vector.broadcast %140 : vector<1x64xf32> to vector<128x64xf32>
    %160 = arith.addf %158, %159 : vector<128x64xf32>
    %161 = arith.truncf %160 : vector<128x64xf32> to vector<128x64xbf16>
    %c0_69 = arith.constant 0 : index
    %c0_70 = arith.constant 0 : index
    %162 = vector.load %arg22[%c0_69, %c0_70] : memref<64x256xbf16, #tpu.memory_space<vmem>>, vector<64x256xbf16>
    %cst_71 = arith.constant dense<0.000000e+00> : vector<128x256xf32>
    %163 = tpu.matmul %161, %162, %cst_71 {dimension_numbers = #tpu.dot_dimension_numbers<[1], [0], [0], [1], [0, 0, 1, 1], [], []>} : vector<128x64xbf16>, vector<64x256xbf16>, vector<128x256xf32> -> vector<128x256xf32>
    %c0_72 = arith.constant 0 : index
    %c0_73 = arith.constant 0 : index
    %164 = vector.load %arg23[%c0_72, %c0_73] : memref<1x256xf32, #tpu.memory_space<vmem>>, vector<1x256xf32>
    %165 = vector.broadcast %164 : vector<1x256xf32> to vector<128x256xf32>
    %166 = arith.addf %163, %165 : vector<128x256xf32>
    %cst_74 = arith.constant 5.000000e-01 : f32
    %167 = vector.broadcast %cst_74 : f32 to vector<128x256xf32>
    %168 = arith.mulf %167, %166 : vector<128x256xf32>
    %cst_75 = arith.constant 0.707106769 : f32
    %169 = vector.broadcast %cst_75 : f32 to vector<128x256xf32>
    %170 = arith.mulf %166, %169 : vector<128x256xf32>
    %171 = math.erf %170 : vector<128x256xf32>
    %cst_76 = arith.constant 1.000000e+00 : f32
    %172 = vector.broadcast %cst_76 : f32 to vector<128x256xf32>
    %173 = arith.addf %172, %171 : vector<128x256xf32>
    %174 = arith.mulf %168, %173 : vector<128x256xf32>
    %175 = arith.truncf %174 : vector<128x256xf32> to vector<128x256xbf16>
    %c0_77 = arith.constant 0 : index
    %c0_78 = arith.constant 0 : index
    %176 = vector.load %arg24[%c0_77, %c0_78] : memref<256x64xbf16, #tpu.memory_space<vmem>>, vector<256x64xbf16>
    %cst_79 = arith.constant dense<0.000000e+00> : vector<128x64xf32>
    %177 = tpu.matmul %175, %176, %cst_79 {dimension_numbers = #tpu.dot_dimension_numbers<[1], [0], [0], [1], [0, 0, 1, 1], [], []>} : vector<128x256xbf16>, vector<256x64xbf16>, vector<128x64xf32> -> vector<128x64xf32>
    %178 = arith.addf %138, %177 : vector<128x64xf32>
    %c0_80 = arith.constant 0 : index
    %c0_81 = arith.constant 0 : index
    %179 = vector.load %arg25[%c0_80, %c0_81] : memref<1x64xf32, #tpu.memory_space<vmem>>, vector<1x64xf32>
    %180 = vector.broadcast %179 : vector<1x64xf32> to vector<128x64xf32>
    %181 = arith.addf %178, %180 : vector<128x64xf32>
    %c0_82 = arith.constant 0 : index
    %c0_83 = arith.constant 0 : index
    %182 = vector.load %arg26[%c0_82, %c0_83] : memref<1x64xf32, #tpu.memory_space<vmem>>, vector<1x64xf32>
    %c0_84 = arith.constant 0 : index
    %c0_85 = arith.constant 0 : index
    %183 = vector.load %arg27[%c0_84, %c0_85] : memref<1x64xf32, #tpu.memory_space<vmem>>, vector<1x64xf32>
    %cst_86 = arith.constant dense<0.000000e+00> : vector<128xf32>
    %184 = vector.multi_reduction <add>, %181, %cst_86 [1] : vector<128x64xf32> to vector<128xf32>
    %185 = vector.shape_cast %184 : vector<128xf32> to vector<128x1xf32>
    %cst_87 = arith.constant 6.400000e+01 : f32
    %186 = vector.broadcast %cst_87 : f32 to vector<128x1xf32>
    %187 = arith.divf %185, %186 : vector<128x1xf32>
    %188 = vector.broadcast %187 : vector<128x1xf32> to vector<128x64xf32>
    %189 = arith.subf %181, %188 : vector<128x64xf32>
    %190 = arith.mulf %189, %189 : vector<128x64xf32>
    %cst_88 = arith.constant dense<0.000000e+00> : vector<128xf32>
    %191 = vector.multi_reduction <add>, %190, %cst_88 [1] : vector<128x64xf32> to vector<128xf32>
    %192 = vector.shape_cast %191 : vector<128xf32> to vector<128x1xf32>
    %cst_89 = arith.constant 6.400000e+01 : f32
    %193 = vector.broadcast %cst_89 : f32 to vector<128x1xf32>
    %194 = arith.divf %192, %193 : vector<128x1xf32>
    %cst_90 = arith.constant 9.99999974E-6 : f32
    %195 = vector.broadcast %cst_90 : f32 to vector<128x1xf32>
    %196 = arith.addf %194, %195 : vector<128x1xf32>
    %197 = math.rsqrt %196 : vector<128x1xf32>
    %198 = vector.broadcast %197 : vector<128x1xf32> to vector<128x64xf32>
    %199 = arith.mulf %189, %198 : vector<128x64xf32>
    %200 = vector.broadcast %182 : vector<1x64xf32> to vector<128x64xf32>
    %201 = arith.mulf %199, %200 : vector<128x64xf32>
    %202 = vector.broadcast %183 : vector<1x64xf32> to vector<128x64xf32>
    %203 = arith.addf %201, %202 : vector<128x64xf32>
    %c0_91 = arith.constant 0 : index
    %c0_92 = arith.constant 0 : index
    %204 = vector.load %arg28[%c0_91, %c0_92] : memref<1x64xbf16, #tpu.memory_space<vmem>>, vector<1x64xbf16>
    %205 = arith.truncf %203 : vector<128x64xf32> to vector<128x64xbf16>
    %cst_93 = arith.constant dense<0.000000e+00> : vector<1x128xf32>
    %206 = tpu.matmul %204, %205, %cst_93 {dimension_numbers = #tpu.dot_dimension_numbers<[1], [1], [0], [0], [0, 0, 1, 0], [], []>} : vector<1x64xbf16>, vector<128x64xbf16>, vector<1x128xf32> -> vector<1x128xf32>
    %c0_94 = arith.constant 0 : index
    %c0_95 = arith.constant 0 : index
    %207 = vector.load %arg29[%c0_94, %c0_95] : memref<1x1xf32, #tpu.memory_space<vmem>>, vector<1x1xf32>
    %208 = vector.broadcast %207 : vector<1x1xf32> to vector<1x128xf32>
    %209 = arith.addf %206, %208 : vector<1x128xf32>
    %c0_96 = arith.constant 0 : index
    %c0_97 = arith.constant 0 : index
    %c0_98 = arith.constant 0 : index
    %210 = vector.load %arg30[%c0_96, %c0_97, %c0_98] : memref<1x1x128xf32, #tpu.memory_space<vmem>>, vector<1x1x128xf32>
    %211 = vector.shape_cast %210 : vector<1x1x128xf32> to vector<1x128xf32>
    %212 = vector.shape_cast %209 : vector<1x128xf32> to vector<1x1x128xf32>
    tpu.vector_store %arg30[%c0_96, %c0_97, %c0_98], %212 {strides = array<i32>} : memref<1x1x128xf32, #tpu.memory_space<vmem>>, vector<1x1x128xf32>,
    return
  }
  func.func @transform_0(%arg0: i32, %arg1: i32) -> (i32, i32, i32) {
    %c0_i32 = arith.constant 0 : i32
    %c0_i32_0 = arith.constant 0 : i32
    return %arg0, %arg1, %c0_i32 : i32, i32, i32
  }
  func.func @transform_1(%arg0: i32, %arg1: i32) -> (i32, i32, i32) {
    %c0_i32 = arith.constant 0 : i32
    %c0_i32_0 = arith.constant 0 : i32
    %c0_i32_1 = arith.constant 0 : i32
    return %arg0, %c0_i32, %c0_i32_0 : i32, i32, i32
  }
  func.func @transform_2(%arg0: i32, %arg1: i32) -> (i32, i32) {
    %c0_i32 = arith.constant 0 : i32
    %c0_i32_0 = arith.constant 0 : i32
    %c0_i32_1 = arith.constant 0 : i32
    return %c0_i32, %c0_i32_0 : i32, i32
  }
  func.func @transform_3(%arg0: i32, %arg1: i32) -> (i32, i32) {
    %c0_i32 = arith.constant 0 : i32
    %c0_i32_0 = arith.constant 0 : i32
    %c0_i32_1 = arith.constant 0 : i32
    return %c0_i32, %c0_i32_0 : i32, i32
  }
  func.func @transform_4(%arg0: i32, %arg1: i32) -> (i32, i32) {
    %c0_i32 = arith.constant 0 : i32
    %c0_i32_0 = arith.constant 0 : i32
    %c0_i32_1 = arith.constant 0 : i32
    return %c0_i32, %c0_i32_0 : i32, i32
  }
  func.func @transform_5(%arg0: i32, %arg1: i32) -> (i32, i32) {
    %c0_i32 = arith.constant 0 : i32
    %c0_i32_0 = arith.constant 0 : i32
    %c0_i32_1 = arith.constant 0 : i32
    return %c0_i32, %c0_i32_0 : i32, i32
  }
  func.func @transform_6(%arg0: i32, %arg1: i32) -> (i32, i32) {
    %c0_i32 = arith.constant 0 : i32
    %c0_i32_0 = arith.constant 0 : i32
    %c0_i32_1 = arith.constant 0 : i32
    return %c0_i32, %c0_i32_0 : i32, i32
  }
  func.func @transform_7(%arg0: i32, %arg1: i32) -> (i32, i32) {
    %c0_i32 = arith.constant 0 : i32
    %c0_i32_0 = arith.constant 0 : i32
    %c0_i32_1 = arith.constant 0 : i32
    return %c0_i32, %c0_i32_0 : i32, i32
  }
  func.func @transform_8(%arg0: i32, %arg1: i32) -> (i32, i32) {
    %c0_i32 = arith.constant 0 : i32
    %c0_i32_0 = arith.constant 0 : i32
    %c0_i32_1 = arith.constant 0 : i32
    return %c0_i32, %c0_i32_0 : i32, i32
  }
  func.func @transform_9(%arg0: i32, %arg1: i32) -> (i32, i32) {
    %c0_i32 = arith.constant 0 : i32
    %c0_i32_0 = arith.constant 0 : i32
    %c0_i32_1 = arith.constant 0 : i32
    return %c0_i32, %c0_i32_0 : i32, i32
  }
  func.func @transform_10(%arg0: i32, %arg1: i32) -> (i32, i32) {
    %c0_i32 = arith.constant 0 : i32
    %c0_i32_0 = arith.constant 0 : i32
    %c0_i32_1 = arith.constant 0 : i32
    return %c0_i32, %c0_i32_0 : i32, i32
  }
  func.func @transform_11(%arg0: i32, %arg1: i32) -> (i32, i32) {
    %c0_i32 = arith.constant 0 : i32
    %c0_i32_0 = arith.constant 0 : i32
    %c0_i32_1 = arith.constant 0 : i32
    return %c0_i32, %c0_i32_0 : i32, i32
  }
  func.func @transform_12(%arg0: i32, %arg1: i32) -> (i32, i32) {
    %c0_i32 = arith.constant 0 : i32
    %c0_i32_0 = arith.constant 0 : i32
    %c0_i32_1 = arith.constant 0 : i32
    return %c0_i32, %c0_i32_0 : i32, i32
  }
  func.func @transform_13(%arg0: i32, %arg1: i32) -> (i32, i32) {
    %c0_i32 = arith.constant 0 : i32
    %c0_i32_0 = arith.constant 0 : i32
    %c0_i32_1 = arith.constant 0 : i32
    return %c0_i32, %c0_i32_0 : i32, i32
  }
  func.func @transform_14(%arg0: i32, %arg1: i32) -> (i32, i32) {
    %c0_i32 = arith.constant 0 : i32
    %c0_i32_0 = arith.constant 0 : i32
    %c0_i32_1 = arith.constant 0 : i32
    return %c0_i32, %c0_i32_0 : i32, i32
  }
  func.func @transform_15(%arg0: i32, %arg1: i32) -> (i32, i32) {
    %c0_i32 = arith.constant 0 : i32
    %c0_i32_0 = arith.constant 0 : i32
    %c0_i32_1 = arith.constant 0 : i32
    return %c0_i32, %c0_i32_0 : i32, i32
  }
  func.func @transform_16(%arg0: i32, %arg1: i32) -> (i32, i32) {
    %c0_i32 = arith.constant 0 : i32
    %c0_i32_0 = arith.constant 0 : i32
    %c0_i32_1 = arith.constant 0 : i32
    return %c0_i32, %c0_i32_0 : i32, i32
  }
  func.func @transform_17(%arg0: i32, %arg1: i32) -> (i32, i32) {
    %c0_i32 = arith.constant 0 : i32
    %c0_i32_0 = arith.constant 0 : i32
    %c0_i32_1 = arith.constant 0 : i32
    return %c0_i32, %c0_i32_0 : i32, i32
  }
  func.func @transform_18(%arg0: i32, %arg1: i32) -> (i32, i32) {
    %c0_i32 = arith.constant 0 : i32
    %c0_i32_0 = arith.constant 0 : i32
    %c0_i32_1 = arith.constant 0 : i32
    return %c0_i32, %c0_i32_0 : i32, i32
  }
  func.func @transform_19(%arg0: i32, %arg1: i32) -> (i32, i32) {
    %c0_i32 = arith.constant 0 : i32
    %c0_i32_0 = arith.constant 0 : i32
    %c0_i32_1 = arith.constant 0 : i32
    return %c0_i32, %c0_i32_0 : i32, i32
  }
  func.func @transform_20(%arg0: i32, %arg1: i32) -> (i32, i32) {
    %c0_i32 = arith.constant 0 : i32
    %c0_i32_0 = arith.constant 0 : i32
    %c0_i32_1 = arith.constant 0 : i32
    return %c0_i32, %c0_i32_0 : i32, i32
  }
  func.func @transform_21(%arg0: i32, %arg1: i32) -> (i32, i32) {
    %c0_i32 = arith.constant 0 : i32
    %c0_i32_0 = arith.constant 0 : i32
    %c0_i32_1 = arith.constant 0 : i32
    return %c0_i32, %c0_i32_0 : i32, i32
  }
  func.func @transform_22(%arg0: i32, %arg1: i32) -> (i32, i32) {
    %c0_i32 = arith.constant 0 : i32
    %c0_i32_0 = arith.constant 0 : i32
    %c0_i32_1 = arith.constant 0 : i32
    return %c0_i32, %c0_i32_0 : i32, i32
  }
  func.func @transform_23(%arg0: i32, %arg1: i32) -> (i32, i32) {
    %c0_i32 = arith.constant 0 : i32
    %c0_i32_0 = arith.constant 0 : i32
    %c0_i32_1 = arith.constant 0 : i32
    return %c0_i32, %c0_i32_0 : i32, i32
  }
  func.func @transform_24(%arg0: i32, %arg1: i32) -> (i32, i32) {
    %c0_i32 = arith.constant 0 : i32
    %c0_i32_0 = arith.constant 0 : i32
    %c0_i32_1 = arith.constant 0 : i32
    return %c0_i32, %c0_i32_0 : i32, i32
  }
  func.func @transform_25(%arg0: i32, %arg1: i32) -> (i32, i32) {
    %c0_i32 = arith.constant 0 : i32
    %c0_i32_0 = arith.constant 0 : i32
    %c0_i32_1 = arith.constant 0 : i32
    return %c0_i32, %c0_i32_0 : i32, i32
  }
  func.func @transform_26(%arg0: i32, %arg1: i32) -> (i32, i32) {
    %c0_i32 = arith.constant 0 : i32
    %c0_i32_0 = arith.constant 0 : i32
    %c0_i32_1 = arith.constant 0 : i32
    return %c0_i32, %c0_i32_0 : i32, i32
  }
  func.func @transform_27(%arg0: i32, %arg1: i32) -> (i32, i32) {
    %c0_i32 = arith.constant 0 : i32
    %c0_i32_0 = arith.constant 0 : i32
    %c0_i32_1 = arith.constant 0 : i32
    return %c0_i32, %c0_i32_0 : i32, i32
  }
  func.func @transform_28(%arg0: i32, %arg1: i32) -> (i32, i32, i32) {
    %c0_i32 = arith.constant 0 : i32
    %c0_i32_0 = arith.constant 0 : i32
    return %arg0, %c0_i32, %arg1 : i32, i32, i32
  }
}

</mosaic_0001>

<llo_original>
// kernel: cross_attention_decoder.1
$region0: #{cross_attention_decoder.1}
  #allocation0 [shape = 'u32[]', space=smem, size = 0x4, offset = 0x4, fixed_abs, tag = 'smem constant byte address 0x4 - core index']
  #allocation1 [shape = 'u32[144,128]{1,0:T(1,128)}', space=vmem, size = 0x12000, scoped, tag = 'internal scratch']
  #allocation2 [shape = 'bf16[64,64]{1,0:T(16,128)(2,1)}', space=vmem, size = 0x4000, scoped, tag = 'scratch operand']
  #allocation3 [shape = 'bf16[64,64]{1,0:T(16,128)(2,1)}', space=vmem, size = 0x4000, scoped, tag = 'scratch operand']
  #allocation4 [shape = 'f32[1,1]{1,0:T(1,128)S(1)}', space=vmem, size = 0x200, scoped, tag = 'scoped memory for cross_attention_decoder.1']
  %s0 = inlined_call_operand.vmem [shape: f32[2,256,64], index: 0, kind: input, shape index: {}]
  %s1 = inlined_call_operand.vmem [shape: f32[2,64,64], index: 1, kind: input, shape index: {}]
  %s2 = inlined_call_operand.vmem [shape: bf16[64,64], index: 2, kind: input, shape index: {}]
  %s3 = inlined_call_operand.vmem [shape: f32[1,64], index: 3, kind: input, shape index: {}]
  %s4 = inlined_call_operand.vmem [shape: f32[1,64], index: 4, kind: input, shape index: {}]
  %s5 = inlined_call_operand.vmem [shape: f32[1,64], index: 5, kind: input, shape index: {}]
  %s6 = inlined_call_operand.vmem [shape: f32[1,64], index: 6, kind: input, shape index: {}]
  %s7 = inlined_call_operand.vmem [shape: f32[1,64], index: 7, kind: input, shape index: {}]
  %s8 = inlined_call_operand.vmem [shape: bf16[64,64], index: 8, kind: input, shape index: {}]
  %s9 = inlined_call_operand.vmem [shape: bf16[64,64], index: 9, kind: input, shape index: {}]
  %s10 = inlined_call_operand.vmem [shape: bf16[64,64], index: 10, kind: input, shape index: {}]
  %s11 = inlined_call_operand.vmem [shape: f32[64,64], index: 11, kind: input, shape index: {}]
  %s12 = inlined_call_operand.vmem [shape: f32[1,64], index: 12, kind: input, shape index: {}]
  %s13 = inlined_call_operand.vmem [shape: f32[1,64], index: 13, kind: input, shape index: {}]
  %s14 = inlined_call_operand.vmem [shape: f32[1,64], index: 14, kind: input, shape index: {}]
  %s15 = inlined_call_operand.vmem [shape: f32[1,64], index: 15, kind: input, shape index: {}]
  %s16 = inlined_call_operand.vmem [shape: bf16[64,64], index: 16, kind: input, shape index: {}]
  %s17 = inlined_call_operand.vmem [shape: f32[1,64], index: 17, kind: input, shape index: {}]
  %s18 = inlined_call_operand.vmem [shape: f32[1,64], index: 18, kind: input, shape index: {}]
  %s19 = inlined_call_operand.vmem [shape: f32[1,64], index: 19, kind: input, shape index: {}]
  %s20 = inlined_call_operand.vmem [shape: bf16[64,256], index: 20, kind: input, shape index: {}]
  %s21 = inlined_call_operand.vmem [shape: f32[1,256], index: 21, kind: input, shape index: {}]
  %s22 = inlined_call_operand.vmem [shape: bf16[256,64], index: 22, kind: input, shape index: {}]
  %s23 = inlined_call_operand.vmem [shape: f32[1,64], index: 23, kind: input, shape index: {}]
  %s24 = inlined_call_operand.vmem [shape: f32[1,64], index: 24, kind: input, shape index: {}]
  %s25 = inlined_call_operand.vmem [shape: f32[1,64], index: 25, kind: input, shape index: {}]
  %s26 = inlined_call_operand.vmem [shape: bf16[1,64], index: 26, kind: input, shape index: {}]
  %s27 = inlined_call_operand.<no memory space> [shape: f32[1,1], index: 27, kind: input, shape index: {}]
  %s28 = inlined_call_operand.hbm [shape: f32[2,1,256], index: 28, kind: output, shape index: {}]
  %s29 = sld [smem:[#allocation0]]
  $region149: #{cross_attention_decoder.1} parent=0
    _
  %s31 = ssub.s32 1, %s29
  %s32 = scalar_select 0, %s31, %s29
  %v33 = vstv %s27
  %34 = vst [vmem:[#allocation4] sm:$0x1] %v33
  $region1: #{cross_attention_decoder.1} parent=0
    #allocation5 [shape = 'u8[1024]{0}', space=vmem, size = 0x400, scoped, tag = 'output window, operand 0']
    #allocation6 [shape = 's32[2]{0}', space=sflag, size = 0x8, scoped, tag = 'scoped memory for cross_attention_decoder.1']
    %35 = vsyncpa [#allocation6], 0
    %s36 = scalar_lea.sflag [#allocation6], 1
    %37 = vsyncpa %s36, 0
    loop: start=0, step=1, limit=6
    $region2: #{cross_attention_decoder.1} parent=1 // loop_pre_header
      _
    $region3: #{cross_attention_decoder.1} parent=1 // loop_header
      %s39 = sphi 0, %s43
      %p40 = scmp.ge.s32.totalorder %s39, 6
      %s46 = sphi 0, %s58
      %s47 = sphi 0, %s54
      %s48 = sphi 0, %s46
      %s49 = sphi 0, %s47
      %s50 = sphi 0, %s48
      %s51 = sphi 0, %s49
      %s63 = sphi 0, %s65
      %s66 = sphi 0, %s63
      %s67 = sphi 0, %s66
      %s83 = sphi 0, %s67
      %s89 = sphi 0, %s91
      %s92 = sphi 0, %s89
      %s93 = sphi 0, %s92
      %s109 = sphi 0, %s93
      %s113 = sphi 0, %s113
      %s115 = sphi 0, %s113
      %s116 = sphi 0, %s115
      %s130 = sphi 0, %s116
      %s134 = sphi 0, %s134
      %s136 = sphi 0, %s134
      %s137 = sphi 0, %s136
      %s151 = sphi 0, %s137
      %s155 = sphi 0, %s155
      %s157 = sphi 0, %s155
      %s158 = sphi 0, %s157
      %s172 = sphi 0, %s158
      %s176 = sphi 0, %s176
      %s178 = sphi 0, %s176
      %s179 = sphi 0, %s178
      %s193 = sphi 0, %s179
      %s197 = sphi 0, %s197
      %s199 = sphi 0, %s197
      %s200 = sphi 0, %s199
      %s214 = sphi 0, %s200
      %s218 = sphi 0, %s218
      %s220 = sphi 0, %s218
      %s221 = sphi 0, %s220
      %s235 = sphi 0, %s221
      %s239 = sphi 0, %s239
      %s241 = sphi 0, %s239
      %s242 = sphi 0, %s241
      %s256 = sphi 0, %s242
      %s260 = sphi 0, %s260
      %s262 = sphi 0, %s260
      %s263 = sphi 0, %s262
      %s277 = sphi 0, %s263
      %s281 = sphi 0, %s281
      %s283 = sphi 0, %s281
      %s284 = sphi 0, %s283
      %s298 = sphi 0, %s284
      %s302 = sphi 0, %s302
      %s304 = sphi 0, %s302
      %s305 = sphi 0, %s304
      %s319 = sphi 0, %s305
      %s323 = sphi 0, %s323
      %s325 = sphi 0, %s323
      %s326 = sphi 0, %s325
      %s340 = sphi 0, %s326
      %s344 = sphi 0, %s344
      %s346 = sphi 0, %s344
      %s347 = sphi 0, %s346
      %s361 = sphi 0, %s347
      %s365 = sphi 0, %s365
      %s367 = sphi 0, %s365
      %s368 = sphi 0, %s367
      %s382 = sphi 0, %s368
      %s386 = sphi 0, %s386
      %s388 = sphi 0, %s386
      %s389 = sphi 0, %s388
      %s403 = sphi 0, %s389
      %s407 = sphi 0, %s407
      %s409 = sphi 0, %s407
      %s410 = sphi 0, %s409
      %s424 = sphi 0, %s410
      %s428 = sphi 0, %s428
      %s430 = sphi 0, %s428
      %s431 = sphi 0, %s430
      %s445 = sphi 0, %s431
      %s449 = sphi 0, %s449
      %s451 = sphi 0, %s449
      %s452 = sphi 0, %s451
      %s466 = sphi 0, %s452
      %s470 = sphi 0, %s470
      %s472 = sphi 0, %s470
      %s473 = sphi 0, %s472
      %s487 = sphi 0, %s473
      %s491 = sphi 0, %s491
      %s493 = sphi 0, %s491
      %s494 = sphi 0, %s493
      %s508 = sphi 0, %s494
      %s512 = sphi 0, %s512
      %s514 = sphi 0, %s512
      %s515 = sphi 0, %s514
      %s529 = sphi 0, %s515
      %s533 = sphi 0, %s533
      %s535 = sphi 0, %s533
      %s536 = sphi 0, %s535
      %s550 = sphi 0, %s536
      %s554 = sphi 0, %s554
      %s556 = sphi 0, %s554
      %s557 = sphi 0, %s556
      %s571 = sphi 0, %s557
      %s575 = sphi 0, %s575
      %s577 = sphi 0, %s575
      %s578 = sphi 0, %s577
      %s592 = sphi 0, %s578
      %s596 = sphi 0, %s596
      %s598 = sphi 0, %s596
      %s599 = sphi 0, %s598
      %s613 = sphi 0, %s599
      %s617 = sphi 0, %s617
      %s619 = sphi 0, %s617
      %s620 = sphi 0, %s619
      %s634 = sphi 0, %s620
      %s638 = sphi 0, %s638
      %s640 = sphi 0, %s638
      %s641 = sphi 0, %s640
      %s655 = sphi 0, %s641
      %s663 = sphi 0, %s665
      %s666 = sphi 0, %s663
      %s667 = sphi 0, %s666
      %s683 = sphi 0, %s667
    $region4: #{cross_attention_decoder.1} parent=1 // loop_header_branch
      %42 = sbr.rel (%p40) target = $region8
    $region5: #{cross_attention_decoder.1} parent=1 // loop_body
      %s44 = ssub.s32 %s39, 1
      %s45 = ssub.s32 %s39, 2
      %s52 = sadd.s32 1, %s47
      %p53 = scmp.ge.s32.totalorder %s52, 2
      %s54 = scalar_select %p53, 0, %s52
      %s55 = sadd.s32 1, %s46
      %s56 = scalar_select %p53, %s55, %s46
      %p57 = scmp.ge.s32.totalorder %s56, 2
      %s58 = scalar_select %p57, 0, %s56
      %s59 = ssub.s32 %s46, %s58
      %s60 = ssub.s32 %s47, %s54
      %s61 = sor.u32 %s59, %s60
      %p62 = scmp.eq.s32.totalorder %s61, 0
      %s64 = sadd.s32 %s63, 1
      %s65 = scalar_select %p62, %s63, %s64
      %p68 = pneg %p62
      %p69 = scmp.eq.s32.totalorder %s39, 3
      %p70 = por %p68, %p69
      %p71 = scmp.ne.s32.totalorder %s63, %s66
      %p72 = scmp.eq.s32.totalorder %s39, 0
      %p73 = por %p71, %p72
      %p74 = scmp.ne.s32.totalorder %s63, %s66
      %p75 = scmp.eq.s32.totalorder %s44, 3
      %p76 = por %p74, %p75
      %p77 = scmp.ne.s32.totalorder %s66, %s67
      %p78 = scmp.eq.s32.totalorder %s44, 0
      %p79 = por %p77, %p78
      %p80 = scmp.ne.s32.totalorder %s66, %s67
      %p81 = scmp.eq.s32.totalorder %s45, 3
      %p82 = por %p80, %p81
      %p84 = scmp.ne.s32.totalorder %s67, %s83
      %p85 = scmp.eq.s32.totalorder %s45, 0
      %p86 = por %p84, %p85
      %s87 = ssub.s32 %s46, %s58
      %p88 = scmp.eq.s32.totalorder %s87, 0
      %s90 = sadd.s32 %s89, 1
      %s91 = scalar_select %p88, %s89, %s90
      %p94 = pneg %p88
      %p95 = scmp.eq.s32.totalorder %s39, 3
      %p96 = por %p94, %p95
      %p97 = scmp.ne.s32.totalorder %s89, %s92
      %p98 = scmp.eq.s32.totalorder %s39, 0
      %p99 = por %p97, %p98
      %p100 = scmp.ne.s32.totalorder %s89, %s92
      %p101 = scmp.eq.s32.totalorder %s44, 3
      %p102 = por %p100, %p101
      %p103 = scmp.ne.s32.totalorder %s92, %s93
      %p104 = scmp.eq.s32.totalorder %s44, 0
      %p105 = por %p103, %p104
      %p106 = scmp.ne.s32.totalorder %s92, %s93
      %p107 = scmp.eq.s32.totalorder %s45, 3
      %p108 = por %p106, %p107
      %p110 = scmp.ne.s32.totalorder %s93, %s109
      %p111 = scmp.eq.s32.totalorder %s45, 0
      %p112 = por %p110, %p111
      %s114 = sadd.s32 %s113, 1
      %p117 = scmp.eq.s32.totalorder %s39, 3
      %p118 = scmp.ne.s32.totalorder %s113, %s115
      %p119 = scmp.eq.s32.totalorder %s39, 0
      %p120 = por %p118, %p119
      %p121 = scmp.ne.s32.totalorder %s113, %s115
      %p122 = scmp.eq.s32.totalorder %s44, 3
      %p123 = por %p121, %p122
      %p124 = scmp.ne.s32.totalorder %s115, %s116
      %p125 = scmp.eq.s32.totalorder %s44, 0
      %p126 = por %p124, %p125
      %p127 = scmp.ne.s32.totalorder %s115, %s116
      %p128 = scmp.eq.s32.totalorder %s45, 3
      %p129 = por %p127, %p128
      %p131 = scmp.ne.s32.totalorder %s116, %s130
      %p132 = scmp.eq.s32.totalorder %s45, 0
      %p133 = por %p131, %p132
      %s135 = sadd.s32 %s134, 1
      %p138 = scmp.eq.s32.totalorder %s39, 3
      %p139 = scmp.ne.s32.totalorder %s134, %s136
      %p140 = scmp.eq.s32.totalorder %s39, 0
      %p141 = por %p139, %p140
      %p142 = scmp.ne.s32.totalorder %s134, %s136
      %p143 = scmp.eq.s32.totalorder %s44, 3
      %p144 = por %p142, %p143
      %p145 = scmp.ne.s32.totalorder %s136, %s137
      %p146 = scmp.eq.s32.totalorder %s44, 0
      %p147 = por %p145, %p146
      %p148 = scmp.ne.s32.totalorder %s136, %s137
      %p149 = scmp.eq.s32.totalorder %s45, 3
      %p150 = por %p148, %p149
      %p152 = scmp.ne.s32.totalorder %s137, %s151
      %p153 = scmp.eq.s32.totalorder %s45, 0
      %p154 = por %p152, %p153
      %s156 = sadd.s32 %s155, 1
      %p159 = scmp.eq.s32.totalorder %s39, 3
      %p160 = scmp.ne.s32.totalorder %s155, %s157
      %p161 = scmp.eq.s32.totalorder %s39, 0
      %p162 = por %p160, %p161
      %p163 = scmp.ne.s32.totalorder %s155, %s157
      %p164 = scmp.eq.s32.totalorder %s44, 3
      %p165 = por %p163, %p164
      %p166 = scmp.ne.s32.totalorder %s157, %s158
      %p167 = scmp.eq.s32.totalorder %s44, 0
      %p168 = por %p166, %p167
      %p169 = scmp.ne.s32.totalorder %s157, %s158
      %p170 = scmp.eq.s32.totalorder %s45, 3
      %p171 = por %p169, %p170
      %p173 = scmp.ne.s32.totalorder %s158, %s172
      %p174 = scmp.eq.s32.totalorder %s45, 0
      %p175 = por %p173, %p174
      %s177 = sadd.s32 %s176, 1
      %p180 = scmp.eq.s32.totalorder %s39, 3
      %p181 = scmp.ne.s32.totalorder %s176, %s178
      %p182 = scmp.eq.s32.totalorder %s39, 0
      %p183 = por %p181, %p182
      %p184 = scmp.ne.s32.totalorder %s176, %s178
      %p185 = scmp.eq.s32.totalorder %s44, 3
      %p186 = por %p184, %p185
      %p187 = scmp.ne.s32.totalorder %s178, %s179
      %p188 = scmp.eq.s32.totalorder %s44, 0
      %p189 = por %p187, %p188
      %p190 = scmp.ne.s32.totalorder %s178, %s179
      %p191 = scmp.eq.s32.totalorder %s45, 3
      %p192 = por %p190, %p191
      %p194 = scmp.ne.s32.totalorder %s179, %s193
      %p195 = scmp.eq.s32.totalorder %s45, 0
      %p196 = por %p194, %p195
      %s198 = sadd.s32 %s197, 1
      %p201 = scmp.eq.s32.totalorder %s39, 3
      %p202 = scmp.ne.s32.totalorder %s197, %s199
      %p203 = scmp.eq.s32.totalorder %s39, 0
      %p204 = por %p202, %p203
      %p205 = scmp.ne.s32.totalorder %s197, %s199
      %p206 = scmp.eq.s32.totalorder %s44, 3
      %p207 = por %p205, %p206
      %p208 = scmp.ne.s32.totalorder %s199, %s200
      %p209 = scmp.eq.s32.totalorder %s44, 0
      %p210 = por %p208, %p209
      %p211 = scmp.ne.s32.totalorder %s199, %s200
      %p212 = scmp.eq.s32.totalorder %s45, 3
      %p213 = por %p211, %p212
      %p215 = scmp.ne.s32.totalorder %s200, %s214
      %p216 = scmp.eq.s32.totalorder %s45, 0
      %p217 = por %p215, %p216
      %s219 = sadd.s32 %s218, 1
      %p222 = scmp.eq.s32.totalorder %s39, 3
      %p223 = scmp.ne.s32.totalorder %s218, %s220
      %p224 = scmp.eq.s32.totalorder %s39, 0
      %p225 = por %p223, %p224
      %p226 = scmp.ne.s32.totalorder %s218, %s220
      %p227 = scmp.eq.s32.totalorder %s44, 3
      %p228 = por %p226, %p227
      %p229 = scmp.ne.s32.totalorder %s220, %s221
      %p230 = scmp.eq.s32.totalorder %s44, 0
      %p231 = por %p229, %p230
      %p232 = scmp.ne.s32.totalorder %s220, %s221
      %p233 = scmp.eq.s32.totalorder %s45, 3
      %p234 = por %p232, %p233
      %p236 = scmp.ne.s32.totalorder %s221, %s235
      %p237 = scmp.eq.s32.totalorder %s45, 0
      %p238 = por %p236, %p237
      %s240 = sadd.s32 %s239, 1
      %p243 = scmp.eq.s32.totalorder %s39, 3
      %p244 = scmp.ne.s32.totalorder %s239, %s241
      %p245 = scmp.eq.s32.totalorder %s39, 0
      %p246 = por %p244, %p245
      %p247 = scmp.ne.s32.totalorder %s239, %s241
      %p248 = scmp.eq.s32.totalorder %s44, 3
      %p249 = por %p247, %p248
      %p250 = scmp.ne.s32.totalorder %s241, %s242
      %p251 = scmp.eq.s32.totalorder %s44, 0
      %p252 = por %p250, %p251
      %p253 = scmp.ne.s32.totalorder %s241, %s242
      %p254 = scmp.eq.s32.totalorder %s45, 3
      %p255 = por %p253, %p254
      %p257 = scmp.ne.s32.totalorder %s242, %s256
      %p258 = scmp.eq.s32.totalorder %s45, 0
      %p259 = por %p257, %p258
      %s261 = sadd.s32 %s260, 1
      %p264 = scmp.eq.s32.totalorder %s39, 3
      %p265 = scmp.ne.s32.totalorder %s260, %s262
      %p266 = scmp.eq.s32.totalorder %s39, 0
      %p267 = por %p265, %p266
      %p268 = scmp.ne.s32.totalorder %s260, %s262
      %p269 = scmp.eq.s32.totalorder %s44, 3
      %p270 = por %p268, %p269
      %p271 = scmp.ne.s32.totalorder %s262, %s263
      %p272 = scmp.eq.s32.totalorder %s44, 0
      %p273 = por %p271, %p272
      %p274 = scmp.ne.s32.totalorder %s262, %s263
      %p275 = scmp.eq.s32.totalorder %s45, 3
      %p276 = por %p274, %p275
      %p278 = scmp.ne.s32.totalorder %s263, %s277
      %p279 = scmp.eq.s32.totalorder %s45, 0
      %p280 = por %p278, %p279
      %s282 = sadd.s32 %s281, 1
      %p285 = scmp.eq.s32.totalorder %s39, 3
      %p286 = scmp.ne.s32.totalorder %s281, %s283
      %p287 = scmp.eq.s32.totalorder %s39, 0
      %p288 = por %p286, %p287
      %p289 = scmp.ne.s32.totalorder %s281, %s283
      %p290 = scmp.eq.s32.totalorder %s44, 3
      %p291 = por %p289, %p290
      %p292 = scmp.ne.s32.totalorder %s283, %s284
      %p293 = scmp.eq.s32.totalorder %s44, 0
      %p294 = por %p292, %p293
      %p295 = scmp.ne.s32.totalorder %s283, %s284
      %p296 = scmp.eq.s32.totalorder %s45, 3
      %p297 = por %p295, %p296
      %p299 = scmp.ne.s32.totalorder %s284, %s298
      %p300 = scmp.eq.s32.totalorder %s45, 0
      %p301 = por %p299, %p300
      %s303 = sadd.s32 %s302, 1
      %p306 = scmp.eq.s32.totalorder %s39, 3
      %p307 = scmp.ne.s32.totalorder %s302, %s304
      %p308 = scmp.eq.s32.totalorder %s39, 0
      %p309 = por %p307, %p308
      %p310 = scmp.ne.s32.totalorder %s302, %s304
      %p311 = scmp.eq.s32.totalorder %s44, 3
      %p312 = por %p310, %p311
      %p313 = scmp.ne.s32.totalorder %s304, %s305
      %p314 = scmp.eq.s32.totalorder %s44, 0
      %p315 = por %p313, %p314
      %p316 = scmp.ne.s32.totalorder %s304, %s305
      %p317 = scmp.eq.s32.totalorder %s45, 3
      %p318 = por %p316, %p317
      %p320 = scmp.ne.s32.totalorder %s305, %s319
      %p321 = scmp.eq.s32.totalorder %s45, 0
      %p322 = por %p320, %p321
      %s324 = sadd.s32 %s323, 1
      %p327 = scmp.eq.s32.totalorder %s39, 3
      %p328 = scmp.ne.s32.totalorder %s323, %s325
      %p329 = scmp.eq.s32.totalorder %s39, 0
      %p330 = por %p328, %p329
      %p331 = scmp.ne.s32.totalorder %s323, %s325
      %p332 = scmp.eq.s32.totalorder %s44, 3
      %p333 = por %p331, %p332
      %p334 = scmp.ne.s32.totalorder %s325, %s326
      %p335 = scmp.eq.s32.totalorder %s44, 0
      %p336 = por %p334, %p335
      %p337 = scmp.ne.s32.totalorder %s325, %s326
      %p338 = scmp.eq.s32.totalorder %s45, 3
      %p339 = por %p337, %p338
      %p341 = scmp.ne.s32.totalorder %s326, %s340
      %p342 = scmp.eq.s32.totalorder %s45, 0
      %p343 = por %p341, %p342
      %s345 = sadd.s32 %s344, 1
      %p348 = scmp.eq.s32.totalorder %s39, 3
      %p349 = scmp.ne.s32.totalorder %s344, %s346
      %p350 = scmp.eq.s32.totalorder %s39, 0
      %p351 = por %p349, %p350
      %p352 = scmp.ne.s32.totalorder %s344, %s346
      %p353 = scmp.eq.s32.totalorder %s44, 3
      %p354 = por %p352, %p353
      %p355 = scmp.ne.s32.totalorder %s346, %s347
      %p356 = scmp.eq.s32.totalorder %s44, 0
      %p357 = por %p355, %p356
      %p358 = scmp.ne.s32.totalorder %s346, %s347
      %p359 = scmp.eq.s32.totalorder %s45, 3
      %p360 = por %p358, %p359
      %p362 = scmp.ne.s32.totalorder %s347, %s361
      %p363 = scmp.eq.s32.totalorder %s45, 0
      %p364 = por %p362, %p363
      %s366 = sadd.s32 %s365, 1
      %p369 = scmp.eq.s32.totalorder %s39, 3
      %p370 = scmp.ne.s32.totalorder %s365, %s367
      %p371 = scmp.eq.s32.totalorder %s39, 0
      %p372 = por %p370, %p371
      %p373 = scmp.ne.s32.totalorder %s365, %s367
      %p374 = scmp.eq.s32.totalorder %s44, 3
      %p375 = por %p373, %p374
      %p376 = scmp.ne.s32.totalorder %s367, %s368
      %p377 = scmp.eq.s32.totalorder %s44, 0
      %p378 = por %p376, %p377
      %p379 = scmp.ne.s32.totalorder %s367, %s368
      %p380 = scmp.eq.s32.totalorder %s45, 3
      %p381 = por %p379, %p380
      %p383 = scmp.ne.s32.totalorder %s368, %s382
      %p384 = scmp.eq.s32.totalorder %s45, 0
      %p385 = por %p383, %p384
      %s387 = sadd.s32 %s386, 1
      %p390 = scmp.eq.s32.totalorder %s39, 3
      %p391 = scmp.ne.s32.totalorder %s386, %s388
      %p392 = scmp.eq.s32.totalorder %s39, 0
      %p393 = por %p391, %p392
      %p394 = scmp.ne.s32.totalorder %s386, %s388
      %p395 = scmp.eq.s32.totalorder %s44, 3
      %p396 = por %p394, %p395
      %p397 = scmp.ne.s32.totalorder %s388, %s389
      %p398 = scmp.eq.s32.totalorder %s44, 0
      %p399 = por %p397, %p398
      %p400 = scmp.ne.s32.totalorder %s388, %s389
      %p401 = scmp.eq.s32.totalorder %s45, 3
      %p402 = por %p400, %p401
      %p404 = scmp.ne.s32.totalorder %s389, %s403
      %p405 = scmp.eq.s32.totalorder %s45, 0
      %p406 = por %p404, %p405
      %s408 = sadd.s32 %s407, 1
      %p411 = scmp.eq.s32.totalorder %s39, 3
      %p412 = scmp.ne.s32.totalorder %s407, %s409
      %p413 = scmp.eq.s32.totalorder %s39, 0
      %p414 = por %p412, %p413
      %p415 = scmp.ne.s32.totalorder %s407, %s409
      %p416 = scmp.eq.s32.totalorder %s44, 3
      %p417 = por %p415, %p416
      %p418 = scmp.ne.s32.totalorder %s409, %s410
      %p419 = scmp.eq.s32.totalorder %s44, 0
      %p420 = por %p418, %p419
      %p421 = scmp.ne.s32.totalorder %s409, %s410
      %p422 = scmp.eq.s32.totalorder %s45, 3
      %p423 = por %p421, %p422
      %p425 = scmp.ne.s32.totalorder %s410, %s424
      %p426 = scmp.eq.s32.totalorder %s45, 0
      %p427 = por %p425, %p426
      %s429 = sadd.s32 %s428, 1
      %p432 = scmp.eq.s32.totalorder %s39, 3
      %p433 = scmp.ne.s32.totalorder %s428, %s430
      %p434 = scmp.eq.s32.totalorder %s39, 0
      %p435 = por %p433, %p434
      %p436 = scmp.ne.s32.totalorder %s428, %s430
      %p437 = scmp.eq.s32.totalorder %s44, 3
      %p438 = por %p436, %p437
      %p439 = scmp.ne.s32.totalorder %s430, %s431
      %p440 = scmp.eq.s32.totalorder %s44, 0
      %p441 = por %p439, %p440
      %p442 = scmp.ne.s32.totalorder %s430, %s431
      %p443 = scmp.eq.s32.totalorder %s45, 3
      %p444 = por %p442, %p443
      %p446 = scmp.ne.s32.totalorder %s431, %s445
      %p447 = scmp.eq.s32.totalorder %s45, 0
      %p448 = por %p446, %p447
      %s450 = sadd.s32 %s449, 1
      %p453 = scmp.eq.s32.totalorder %s39, 3
      %p454 = scmp.ne.s32.totalorder %s449, %s451
      %p455 = scmp.eq.s32.totalorder %s39, 0
      %p456 = por %p454, %p455
      %p457 = scmp.ne.s32.totalorder %s449, %s451
      %p458 = scmp.eq.s32.totalorder %s44, 3
      %p459 = por %p457, %p458
      %p460 = scmp.ne.s32.totalorder %s451, %s452
      %p461 = scmp.eq.s32.totalorder %s44, 0
      %p462 = por %p460, %p461
      %p463 = scmp.ne.s32.totalorder %s451, %s452
      %p464 = scmp.eq.s32.totalorder %s45, 3
      %p465 = por %p463, %p464
      %p467 = scmp.ne.s32.totalorder %s452, %s466
      %p468 = scmp.eq.s32.totalorder %s45, 0
      %p469 = por %p467, %p468
      %s471 = sadd.s32 %s470, 1
      %p474 = scmp.eq.s32.totalorder %s39, 3
      %p475 = scmp.ne.s32.totalorder %s470, %s472
      %p476 = scmp.eq.s32.totalorder %s39, 0
      %p477 = por %p475, %p476
      %p478 = scmp.ne.s32.totalorder %s470, %s472
      %p479 = scmp.eq.s32.totalorder %s44, 3
      %p480 = por %p478, %p479
      %p481 = scmp.ne.s32.totalorder %s472, %s473
      %p482 = scmp.eq.s32.totalorder %s44, 0
      %p483 = por %p481, %p482
      %p484 = scmp.ne.s32.totalorder %s472, %s473
      %p485 = scmp.eq.s32.totalorder %s45, 3
      %p486 = por %p484, %p485
      %p488 = scmp.ne.s32.totalorder %s473, %s487
      %p489 = scmp.eq.s32.totalorder %s45, 0
      %p490 = por %p488, %p489
      %s492 = sadd.s32 %s491, 1
      %p495 = scmp.eq.s32.totalorder %s39, 3
      %p496 = scmp.ne.s32.totalorder %s491, %s493
      %p497 = scmp.eq.s32.totalorder %s39, 0
      %p498 = por %p496, %p497
      %p499 = scmp.ne.s32.totalorder %s491, %s493
      %p500 = scmp.eq.s32.totalorder %s44, 3
      %p501 = por %p499, %p500
      %p502 = scmp.ne.s32.totalorder %s493, %s494
      %p503 = scmp.eq.s32.totalorder %s44, 0
      %p504 = por %p502, %p503
      %p505 = scmp.ne.s32.totalorder %s493, %s494
      %p506 = scmp.eq.s32.totalorder %s45, 3
      %p507 = por %p505, %p506
      %p509 = scmp.ne.s32.totalorder %s494, %s508
      %p510 = scmp.eq.s32.totalorder %s45, 0
      %p511 = por %p509, %p510
      %s513 = sadd.s32 %s512, 1
      %p516 = scmp.eq.s32.totalorder %s39, 3
      %p517 = scmp.ne.s32.totalorder %s512, %s514
      %p518 = scmp.eq.s32.totalorder %s39, 0
      %p519 = por %p517, %p518
      %p520 = scmp.ne.s32.totalorder %s512, %s514
      %p521 = scmp.eq.s32.totalorder %s44, 3
      %p522 = por %p520, %p521
      %p523 = scmp.ne.s32.totalorder %s514, %s515
      %p524 = scmp.eq.s32.totalorder %s44, 0
      %p525 = por %p523, %p524
      %p526 = scmp.ne.s32.totalorder %s514, %s515
      %p527 = scmp.eq.s32.totalorder %s45, 3
      %p528 = por %p526, %p527
      %p530 = scmp.ne.s32.totalorder %s515, %s529
      %p531 = scmp.eq.s32.totalorder %s45, 0
      %p532 = por %p530, %p531
      %s534 = sadd.s32 %s533, 1
      %p537 = scmp.eq.s32.totalorder %s39, 3
      %p538 = scmp.ne.s32.totalorder %s533, %s535
      %p539 = scmp.eq.s32.totalorder %s39, 0
      %p540 = por %p538, %p539
      %p541 = scmp.ne.s32.totalorder %s533, %s535
      %p542 = scmp.eq.s32.totalorder %s44, 3
      %p543 = por %p541, %p542
      %p544 = scmp.ne.s32.totalorder %s535, %s536
      %p545 = scmp.eq.s32.totalorder %s44, 0
      %p546 = por %p544, %p545
      %p547 = scmp.ne.s32.totalorder %s535, %s536
      %p548 = scmp.eq.s32.totalorder %s45, 3
      %p549 = por %p547, %p548
      %p551 = scmp.ne.s32.totalorder %s536, %s550
      %p552 = scmp.eq.s32.totalorder %s45, 0
      %p553 = por %p551, %p552
      %s555 = sadd.s32 %s554, 1
      %p558 = scmp.eq.s32.totalorder %s39, 3
      %p559 = scmp.ne.s32.totalorder %s554, %s556
      %p560 = scmp.eq.s32.totalorder %s39, 0
      %p561 = por %p559, %p560
      %p562 = scmp.ne.s32.totalorder %s554, %s556
      %p563 = scmp.eq.s32.totalorder %s44, 3
      %p564 = por %p562, %p563
      %p565 = scmp.ne.s32.totalorder %s556, %s557
      %p566 = scmp.eq.s32.totalorder %s44, 0
      %p567 = por %p565, %p566
      %p568 = scmp.ne.s32.totalorder %s556, %s557
      %p569 = scmp.eq.s32.totalorder %s45, 3
      %p570 = por %p568, %p569
      %p572 = scmp.ne.s32.totalorder %s557, %s571
      %p573 = scmp.eq.s32.totalorder %s45, 0
      %p574 = por %p572, %p573
      %s576 = sadd.s32 %s575, 1
      %p579 = scmp.eq.s32.totalorder %s39, 3
      %p580 = scmp.ne.s32.totalorder %s575, %s577
      %p581 = scmp.eq.s32.totalorder %s39, 0
      %p582 = por %p580, %p581
      %p583 = scmp.ne.s32.totalorder %s575, %s577
      %p584 = scmp.eq.s32.totalorder %s44, 3
      %p585 = por %p583, %p584
      %p586 = scmp.ne.s32.totalorder %s577, %s578
      %p587 = scmp.eq.s32.totalorder %s44, 0
      %p588 = por %p586, %p587
      %p589 = scmp.ne.s32.totalorder %s577, %s578
      %p590 = scmp.eq.s32.totalorder %s45, 3
      %p591 = por %p589, %p590
      %p593 = scmp.ne.s32.totalorder %s578, %s592
      %p594 = scmp.eq.s32.totalorder %s45, 0
      %p595 = por %p593, %p594
      %s597 = sadd.s32 %s596, 1
      %p600 = scmp.eq.s32.totalorder %s39, 3
      %p601 = scmp.ne.s32.totalorder %s596, %s598
      %p602 = scmp.eq.s32.totalorder %s39, 0
      %p603 = por %p601, %p602
      %p604 = scmp.ne.s32.totalorder %s596, %s598
      %p605 = scmp.eq.s32.totalorder %s44, 3
      %p606 = por %p604, %p605
      %p607 = scmp.ne.s32.totalorder %s598, %s599
      %p608 = scmp.eq.s32.totalorder %s44, 0
      %p609 = por %p607, %p608
      %p610 = scmp.ne.s32.totalorder %s598, %s599
      %p611 = scmp.eq.s32.totalorder %s45, 3
      %p612 = por %p610, %p611
      %p614 = scmp.ne.s32.totalorder %s599, %s613
      %p615 = scmp.eq.s32.totalorder %s45, 0
      %p616 = por %p614, %p615
      %s618 = sadd.s32 %s617, 1
      %p621 = scmp.eq.s32.totalorder %s39, 3
      %p622 = scmp.ne.s32.totalorder %s617, %s619
      %p623 = scmp.eq.s32.totalorder %s39, 0
      %p624 = por %p622, %p623
      %p625 = scmp.ne.s32.totalorder %s617, %s619
      %p626 = scmp.eq.s32.totalorder %s44, 3
      %p627 = por %p625, %p626
      %p628 = scmp.ne.s32.totalorder %s619, %s620
      %p629 = scmp.eq.s32.totalorder %s44, 0
      %p630 = por %p628, %p629
      %p631 = scmp.ne.s32.totalorder %s619, %s620
      %p632 = scmp.eq.s32.totalorder %s45, 3
      %p633 = por %p631, %p632
      %p635 = scmp.ne.s32.totalorder %s620, %s634
      %p636 = scmp.eq.s32.totalorder %s45, 0
      %p637 = por %p635, %p636
      %s639 = sadd.s32 %s638, 1
      %p642 = scmp.eq.s32.totalorder %s39, 3
      %p643 = scmp.ne.s32.totalorder %s638, %s640
      %p644 = scmp.eq.s32.totalorder %s39, 0
      %p645 = por %p643, %p644
      %p646 = scmp.ne.s32.totalorder %s638, %s640
      %p647 = scmp.eq.s32.totalorder %s44, 3
      %p648 = por %p646, %p647
      %p649 = scmp.ne.s32.totalorder %s640, %s641
      %p650 = scmp.eq.s32.totalorder %s44, 0
      %p651 = por %p649, %p650
      %p652 = scmp.ne.s32.totalorder %s640, %s641
      %p653 = scmp.eq.s32.totalorder %s45, 3
      %p654 = por %p652, %p653
      %p656 = scmp.ne.s32.totalorder %s641, %s655
      %p657 = scmp.eq.s32.totalorder %s45, 0
      %p658 = por %p656, %p657
      %s659 = ssub.s32 %s46, %s58
      %s660 = ssub.s32 %s47, %s54
      %s661 = sor.u32 %s659, %s660
      %p662 = scmp.eq.s32.totalorder %s661, 0
      %s664 = sadd.s32 %s663, 1
      %s665 = scalar_select %p662, %s663, %s664
      %p668 = pneg %p662
      %p669 = scmp.eq.s32.totalorder %s39, 3
      %p670 = por %p668, %p669
      %p671 = scmp.ne.s32.totalorder %s663, %s666
      %p672 = scmp.eq.s32.totalorder %s39, 0
      %p673 = por %p671, %p672
      %p674 = scmp.ne.s32.totalorder %s663, %s666
      %p675 = scmp.eq.s32.totalorder %s44, 3
      %p676 = por %p674, %p675
      %p677 = scmp.ne.s32.totalorder %s666, %s667
      %p678 = scmp.eq.s32.totalorder %s44, 0
      %p679 = por %p677, %p678
      %p680 = scmp.ne.s32.totalorder %s666, %s667
      %p681 = scmp.eq.s32.totalorder %s45, 3
      %p682 = por %p680, %p681
      %p684 = scmp.ne.s32.totalorder %s667, %s683
      %p685 = scmp.eq.s32.totalorder %s45, 0
      %p686 = por %p684, %p685
      %p687 = scmp.le.s32.totalorder 1, %s39
      %p688 = scmp.lt.s32.totalorder %s39, 5
      %p689 = pnand %p687, %p688
      %p690 = pneg %p689
      // Predicated region
      $region9: #{cross_attention_decoder.1} parent=5 // pred_check
        _
      $region10: #{cross_attention_decoder.1} parent=5 // pred_check_branch
        %692 = sbr.rel (%p689) target = $region12
      $region11: #{cross_attention_decoder.1} parent=5 // pred_region
        %s693 = ssub.s32 %s39, 1
        // Predicated region
        $region13: #{cross_attention_decoder.1} parent=11 // pred_check
          %p694 = pneg %p126
        $region14: #{cross_attention_decoder.1} parent=11 // pred_check_branch
          %696 = sbr.rel (%p694) target = $region16
        $region15: #{cross_attention_decoder.1} parent=11 // pred_region
          _
        $region16: #{cross_attention_decoder.1} parent=11 // pred_fallthru
          _
        // Predicated region
        $region17: #{cross_attention_decoder.1} parent=11 // pred_check
          %p697 = pneg %p147
        $region18: #{cross_attention_decoder.1} parent=11 // pred_check_branch
          %699 = sbr.rel (%p697) target = $region20
        $region19: #{cross_attention_decoder.1} parent=11 // pred_region
          _
        $region20: #{cross_attention_decoder.1} parent=11 // pred_fallthru
          _
        // Predicated region
        $region21: #{cross_attention_decoder.1} parent=11 // pred_check
          %p700 = pneg %p168
        $region22: #{cross_attention_decoder.1} parent=11 // pred_check_branch
          %702 = sbr.rel (%p700) target = $region24
        $region23: #{cross_attention_decoder.1} parent=11 // pred_region
          _
        $region24: #{cross_attention_decoder.1} parent=11 // pred_fallthru
          _
        // Predicated region
        $region25: #{cross_attention_decoder.1} parent=11 // pred_check
          %p703 = pneg %p189
        $region26: #{cross_attention_decoder.1} parent=11 // pred_check_branch
          %705 = sbr.rel (%p703) target = $region28
        $region27: #{cross_attention_decoder.1} parent=11 // pred_region
          _
        $region28: #{cross_attention_decoder.1} parent=11 // pred_fallthru
          _
        // Predicated region
        $region29: #{cross_attention_decoder.1} parent=11 // pred_check
          %p706 = pneg %p210
        $region30: #{cross_attention_decoder.1} parent=11 // pred_check_branch
          %708 = sbr.rel (%p706) target = $region32
        $region31: #{cross_attention_decoder.1} parent=11 // pred_region
          _
        $region32: #{cross_attention_decoder.1} parent=11 // pred_fallthru
          _
        // Predicated region
        $region33: #{cross_attention_decoder.1} parent=11 // pred_check
          %p709 = pneg %p231
        $region34: #{cross_attention_decoder.1} parent=11 // pred_check_branch
          %711 = sbr.rel (%p709) target = $region36
        $region35: #{cross_attention_decoder.1} parent=11 // pred_region
          _
        $region36: #{cross_attention_decoder.1} parent=11 // pred_fallthru
          _
        // Predicated region
        $region37: #{cross_attention_decoder.1} parent=11 // pred_check
          %p712 = pneg %p252
        $region38: #{cross_attention_decoder.1} parent=11 // pred_check_branch
          %714 = sbr.rel (%p712) target = $region40
        $region39: #{cross_attention_decoder.1} parent=11 // pred_region
          _
        $region40: #{cross_attention_decoder.1} parent=11 // pred_fallthru
          _
        // Predicated region
        $region41: #{cross_attention_decoder.1} parent=11 // pred_check
          %p715 = pneg %p273
        $region42: #{cross_attention_decoder.1} parent=11 // pred_check_branch
          %717 = sbr.rel (%p715) target = $region44
        $region43: #{cross_attention_decoder.1} parent=11 // pred_region
          _
        $region44: #{cross_attention_decoder.1} parent=11 // pred_fallthru
          _
        // Predicated region
        $region45: #{cross_attention_decoder.1} parent=11 // pred_check
          %p718 = pneg %p294
        $region46: #{cross_attention_decoder.1} parent=11 // pred_check_branch
          %720 = sbr.rel (%p718) target = $region48
        $region47: #{cross_attention_decoder.1} parent=11 // pred_region
          _
        $region48: #{cross_attention_decoder.1} parent=11 // pred_fallthru
          _
        // Predicated region
        $region49: #{cross_attention_decoder.1} parent=11 // pred_check
          %p721 = pneg %p315
        $region50: #{cross_attention_decoder.1} parent=11 // pred_check_branch
          %723 = sbr.rel (%p721) target = $region52
        $region51: #{cross_attention_decoder.1} parent=11 // pred_region
          _
        $region52: #{cross_attention_decoder.1} parent=11 // pred_fallthru
          _
        // Predicated region
        $region53: #{cross_attention_decoder.1} parent=11 // pred_check
          %p724 = pneg %p336
        $region54: #{cross_attention_decoder.1} parent=11 // pred_check_branch
          %726 = sbr.rel (%p724) target = $region56
        $region55: #{cross_attention_decoder.1} parent=11 // pred_region
          _
        $region56: #{cross_attention_decoder.1} parent=11 // pred_fallthru
          _
        // Predicated region
        $region57: #{cross_attention_decoder.1} parent=11 // pred_check
          %p727 = pneg %p357
        $region58: #{cross_attention_decoder.1} parent=11 // pred_check_branch
          %729 = sbr.rel (%p727) target = $region60
        $region59: #{cross_attention_decoder.1} parent=11 // pred_region
          _
        $region60: #{cross_attention_decoder.1} parent=11 // pred_fallthru
          _
        // Predicated region
        $region61: #{cross_attention_decoder.1} parent=11 // pred_check
          %p730 = pneg %p378
        $region62: #{cross_attention_decoder.1} parent=11 // pred_check_branch
          %732 = sbr.rel (%p730) target = $region64
        $region63: #{cross_attention_decoder.1} parent=11 // pred_region
          _
        $region64: #{cross_attention_decoder.1} parent=11 // pred_fallthru
          _
        // Predicated region
        $region65: #{cross_attention_decoder.1} parent=11 // pred_check
          %p733 = pneg %p399
        $region66: #{cross_attention_decoder.1} parent=11 // pred_check_branch
          %735 = sbr.rel (%p733) target = $region68
        $region67: #{cross_attention_decoder.1} parent=11 // pred_region
          _
        $region68: #{cross_attention_decoder.1} parent=11 // pred_fallthru
          _
        // Predicated region
        $region69: #{cross_attention_decoder.1} parent=11 // pred_check
          %p736 = pneg %p420
        $region70: #{cross_attention_decoder.1} parent=11 // pred_check_branch
          %738 = sbr.rel (%p736) target = $region72
        $region71: #{cross_attention_decoder.1} parent=11 // pred_region
          _
        $region72: #{cross_attention_decoder.1} parent=11 // pred_fallthru
          _
        // Predicated region
        $region73: #{cross_attention_decoder.1} parent=11 // pred_check
          %p739 = pneg %p441
        $region74: #{cross_attention_decoder.1} parent=11 // pred_check_branch
          %741 = sbr.rel (%p739) target = $region76
        $region75: #{cross_attention_decoder.1} parent=11 // pred_region
          _
        $region76: #{cross_attention_decoder.1} parent=11 // pred_fallthru
          _
        // Predicated region
        $region77: #{cross_attention_decoder.1} parent=11 // pred_check
          %p742 = pneg %p462
        $region78: #{cross_attention_decoder.1} parent=11 // pred_check_branch
          %744 = sbr.rel (%p742) target = $region80
        $region79: #{cross_attention_decoder.1} parent=11 // pred_region
          _
        $region80: #{cross_attention_decoder.1} parent=11 // pred_fallthru
          _
        // Predicated region
        $region81: #{cross_attention_decoder.1} parent=11 // pred_check
          %p745 = pneg %p483
        $region82: #{cross_attention_decoder.1} parent=11 // pred_check_branch
          %747 = sbr.rel (%p745) target = $region84
        $region83: #{cross_attention_decoder.1} parent=11 // pred_region
          _
        $region84: #{cross_attention_decoder.1} parent=11 // pred_fallthru
          _
        // Predicated region
        $region85: #{cross_attention_decoder.1} parent=11 // pred_check
          %p748 = pneg %p504
        $region86: #{cross_attention_decoder.1} parent=11 // pred_check_branch
          %750 = sbr.rel (%p748) target = $region88
        $region87: #{cross_attention_decoder.1} parent=11 // pred_region
          _
        $region88: #{cross_attention_decoder.1} parent=11 // pred_fallthru
          _
        // Predicated region
        $region89: #{cross_attention_decoder.1} parent=11 // pred_check
          %p751 = pneg %p525
        $region90: #{cross_attention_decoder.1} parent=11 // pred_check_branch
          %753 = sbr.rel (%p751) target = $region92
        $region91: #{cross_attention_decoder.1} parent=11 // pred_region
          _
        $region92: #{cross_attention_decoder.1} parent=11 // pred_fallthru
          _
        // Predicated region
        $region93: #{cross_attention_decoder.1} parent=11 // pred_check
          %p754 = pneg %p546
        $region94: #{cross_attention_decoder.1} parent=11 // pred_check_branch
          %756 = sbr.rel (%p754) target = $region96
        $region95: #{cross_attention_decoder.1} parent=11 // pred_region
          _
        $region96: #{cross_attention_decoder.1} parent=11 // pred_fallthru
          _
        // Predicated region
        $region97: #{cross_attention_decoder.1} parent=11 // pred_check
          %p757 = pneg %p567
        $region98: #{cross_attention_decoder.1} parent=11 // pred_check_branch
          %759 = sbr.rel (%p757) target = $region100
        $region99: #{cross_attention_decoder.1} parent=11 // pred_region
          _
        $region100: #{cross_attention_decoder.1} parent=11 // pred_fallthru
          _
        // Predicated region
        $region101: #{cross_attention_decoder.1} parent=11 // pred_check
          %p760 = pneg %p588
        $region102: #{cross_attention_decoder.1} parent=11 // pred_check_branch
          %762 = sbr.rel (%p760) target = $region104
        $region103: #{cross_attention_decoder.1} parent=11 // pred_region
          _
        $region104: #{cross_attention_decoder.1} parent=11 // pred_fallthru
          _
        // Predicated region
        $region105: #{cross_attention_decoder.1} parent=11 // pred_check
          %p763 = pneg %p609
        $region106: #{cross_attention_decoder.1} parent=11 // pred_check_branch
          %765 = sbr.rel (%p763) target = $region108
        $region107: #{cross_attention_decoder.1} parent=11 // pred_region
          _
        $region108: #{cross_attention_decoder.1} parent=11 // pred_fallthru
          _
        // Predicated region
        $region109: #{cross_attention_decoder.1} parent=11 // pred_check
          %p766 = pneg %p630
        $region110: #{cross_attention_decoder.1} parent=11 // pred_check_branch
          %768 = sbr.rel (%p766) target = $region112
        $region111: #{cross_attention_decoder.1} parent=11 // pred_region
          _
        $region112: #{cross_attention_decoder.1} parent=11 // pred_fallthru
          _
        // Predicated region
        $region113: #{cross_attention_decoder.1} parent=11 // pred_check
          %p769 = pneg %p651
        $region114: #{cross_attention_decoder.1} parent=11 // pred_check_branch
          %771 = sbr.rel (%p769) target = $region116
        $region115: #{cross_attention_decoder.1} parent=11 // pred_region
          _
        $region116: #{cross_attention_decoder.1} parent=11 // pred_fallthru
          _
      $region12: #{cross_attention_decoder.1} parent=5 // pred_fallthru
        _
      %p772 = scmp.lt.s32.totalorder %s39, 4
      // Predicated region
      $region117: #{cross_attention_decoder.1} parent=5 // pred_check
        %p773 = pneg %p772
      $region118: #{cross_attention_decoder.1} parent=5 // pred_check_branch
        %775 = sbr.rel (%p773) target = $region120
      $region119: #{cross_attention_decoder.1} parent=5 // pred_region
        // Predicated region
        $region121: #{cross_attention_decoder.1} parent=119 // pred_check
          %p776 = pneg %p73
        $region122: #{cross_attention_decoder.1} parent=119 // pred_check_branch
          %778 = sbr.rel (%p776) target = $region124
        $region123: #{cross_attention_decoder.1} parent=119 // pred_region
          %s779 = smul.u32 16, %s47
          %p780 = scmp.lt.s32.totalorder %s46, 1
          %s781 = scalar_select %p780, %s46, 1
          %p782 = scmp.lt.s32.totalorder %s779, 31
          %s783 = scalar_select %p782, %s779, 31
          %s784 = smul.addr %s781, 32
          %s785 = sadd.s32 %s783, %s784
          %s786 = smul.addr %s785, 8
          %s787 = scalar_lea.vmem %s0, %s786
          %s788 = smul.u32 16, %s47
        $region124: #{cross_attention_decoder.1} parent=119 // pred_fallthru
          _
        // Predicated region
        $region125: #{cross_attention_decoder.1} parent=119 // pred_check
          %p789 = pneg %p99
        $region126: #{cross_attention_decoder.1} parent=119 // pred_check_branch
          %791 = sbr.rel (%p789) target = $region128
        $region127: #{cross_attention_decoder.1} parent=119 // pred_region
          %p792 = scmp.lt.s32.totalorder %s46, 1
          %s793 = scalar_select %p792, %s46, 1
          %s794 = smul.addr %s793, 8
          %s795 = smul.addr %s794, 8
          %s796 = scalar_lea.vmem %s1, %s795
        $region128: #{cross_attention_decoder.1} parent=119 // pred_fallthru
          _
      $region120: #{cross_attention_decoder.1} parent=5 // pred_fallthru
        _
      %p797 = scmp.le.s32.totalorder 1, %s39
      %p798 = scmp.lt.s32.totalorder %s39, 5
      %p799 = pnand %p797, %p798
      %p800 = pneg %p799
      // Predicated region
      $region129: #{cross_attention_decoder.1} parent=5 // pred_check
        _
      $region130: #{cross_attention_decoder.1} parent=5 // pred_check_branch
        %802 = sbr.rel (%p799) target = $region132
      $region131: #{cross_attention_decoder.1} parent=5 // pred_region
        %s803 = ssub.s32 %s39, 1
        %s804 = smul.u32 16, %s49
        %p805 = scmp.lt.s32.totalorder %s48, 1
        %s806 = scalar_select %p805, %s48, 1
        %p807 = scmp.lt.s32.totalorder %s804, 31
        %s808 = scalar_select %p807, %s804, 31
        %s809 = smul.addr %s806, 32
        %s810 = sadd.s32 %s808, %s809
        %s811 = smul.addr %s810, 8
        %s812 = scalar_lea.vmem %s0, %s811
        %p813 = pneg %p79
        %p814 = pneg %p76
        %p815 = scmp.lt.s32.totalorder %s48, 1
        %s816 = scalar_select %p815, %s48, 1
        %s817 = smul.addr %s816, 8
        %s818 = smul.addr %s817, 8
        %s819 = scalar_lea.vmem %s1, %s818
        %p820 = pneg %p105
        %p821 = pneg %p102
        %p822 = pneg %p126
        %p823 = pneg %p123
        %p824 = pneg %p147
        %p825 = pneg %p144
        %p826 = pneg %p168
        %p827 = pneg %p165
        %p828 = pneg %p189
        %p829 = pneg %p186
        %p830 = pneg %p210
        %p831 = pneg %p207
        %p832 = pneg %p231
        %p833 = pneg %p228
        %p834 = pneg %p252
        %p835 = pneg %p249
        %p836 = pneg %p273
        %p837 = pneg %p270
        %p838 = pneg %p294
        %p839 = pneg %p291
        %p840 = pneg %p315
        %p841 = pneg %p312
        %p842 = pneg %p336
        %p843 = pneg %p333
        %p844 = pneg %p357
        %p845 = pneg %p354
        %p846 = pneg %p378
        %p847 = pneg %p375
        %p848 = pneg %p399
        %p849 = pneg %p396
        %p850 = pneg %p420
        %p851 = pneg %p417
        %p852 = pneg %p441
        %p853 = pneg %p438
        %p854 = pneg %p462
        %p855 = pneg %p459
        %p856 = pneg %p483
        %p857 = pneg %p480
        %p858 = pneg %p504
        %p859 = pneg %p501
        %p860 = pneg %p525
        %p861 = pneg %p522
        %p862 = pneg %p546
        %p863 = pneg %p543
        %p864 = pneg %p567
        %p865 = pneg %p564
        %p866 = pneg %p588
        %p867 = pneg %p585
        %p868 = pneg %p609
        %p869 = pneg %p606
        %p870 = pneg %p630
        %p871 = pneg %p627
        %p872 = pneg %p651
        %p873 = pneg %p648
        %p874 = pneg %p679
        %p875 = pneg %p676
        %s876 = sand.u32 %s666, 1
        %s877 = scalar_lea.sflag [#allocation6], %s876
        %s878 = sand.u32 %s666, 1
        %s879 = scalar_lea.vmem [#allocation5], %s878
        %s880 = smul.u32 16, %s49
        %p881 = scmp.lt.s32.totalorder %s48, 1
        %s882 = scalar_select %p881, %s48, 1
        %p883 = scmp.lt.s32.totalorder %s880, 31
        %s884 = scalar_select %p883, %s880, 31
        %s885 = smul.addr %s882, 32
        %s886 = sadd.s32 %s884, %s885
        %s887 = smul.addr %s886, 8
        %s888 = scalar_lea.vmem %s0, %s887
        %s889 = smul.u32 16, %s49
        %p890 = scmp.lt.s32.totalorder %s48, 1
        %s891 = scalar_select %p890, %s48, 1
        %s892 = smul.addr %s891, 8
        %s893 = smul.addr %s892, 8
        %s894 = scalar_lea.vmem %s1, %s893
        %p896 = scmp.eq.s32.totalorder %s49, 0
        // Predicated region
        $region133: #{cross_attention_decoder.1} parent=131 // pred_check
          %p897 = pneg %p896
        $region134: #{cross_attention_decoder.1} parent=131 // pred_check_branch
          %899 = sbr.rel (%p897) target = $region136
        $region135: #{cross_attention_decoder.1} parent=131 // pred_region
          %v900 = vld [vmem:[%s894] sm:$0xff]
          %v901 = vld [vmem:[%s894 + $0x8] sm:$0xff]
          %v902 = vld [vmem:[%s894 + $0x10] sm:$0xff]
          %v903 = vld [vmem:[%s894 + $0x18] sm:$0xff]
          %v904 = vld [vmem:[%s894 + $0x20] sm:$0xff]
          %v905 = vld [vmem:[%s894 + $0x28] sm:$0xff]
          %v906 = vld [vmem:[%s894 + $0x30] sm:$0xff]
          %v907 = vld [vmem:[%s894 + $0x38] sm:$0xff]
          %v908 = vld [vmem:[%s6] sm:$0x1]
          %v909 = vld [vmem:[%s7] sm:$0x1]
          %vm910 = vcmask 523264
          %v911 = vsel %vm910, %v900, 0.0
          %912 = vadd.xlane.f32.xlu0 %v911
          %v913 = vpop.xlane.xlu0 %912
          %v914 = vsel %vm910, %v901, 0.0
          %915 = vadd.xlane.f32.xlu0 %v914
          %v916 = vpop.xlane.xlu0 %915
          %v917 = vsel %vm910, %v902, 0.0
          %918 = vadd.xlane.f32.xlu0 %v917
          %v919 = vpop.xlane.xlu0 %918
          %v920 = vsel %vm910, %v903, 0.0
          %921 = vadd.xlane.f32.xlu0 %v920
          %v922 = vpop.xlane.xlu0 %921
          %v923 = vsel %vm910, %v904, 0.0
          %924 = vadd.xlane.f32.xlu0 %v923
          %v925 = vpop.xlane.xlu0 %924
          %v926 = vsel %vm910, %v905, 0.0
          %927 = vadd.xlane.f32.xlu0 %v926
          %v928 = vpop.xlane.xlu0 %927
          %v929 = vsel %vm910, %v906, 0.0
          %930 = vadd.xlane.f32.xlu0 %v929
          %v931 = vpop.xlane.xlu0 %930
          %v932 = vsel %vm910, %v907, 0.0
          %933 = vadd.xlane.f32.xlu0 %v932
          %v934 = vpop.xlane.xlu0 %933
          %v935 = vrcp.pop 64.0
          %v936 = vmul.f32 %v913, %v935
          %v937 = vmul.f32 %v916, %v935
          %v938 = vmul.f32 %v919, %v935
          %v939 = vmul.f32 %v922, %v935
          %v940 = vmul.f32 %v925, %v935
          %v941 = vmul.f32 %v928, %v935
          %v942 = vmul.f32 %v931, %v935
          %v943 = vmul.f32 %v934, %v935
          %v944 = vsub.f32 %v900, %v936
          %v945 = vsub.f32 %v901, %v937
          %v946 = vsub.f32 %v902, %v938
          %v947 = vsub.f32 %v903, %v939
          %v948 = vsub.f32 %v904, %v940
          %v949 = vsub.f32 %v905, %v941
          %v950 = vsub.f32 %v906, %v942
          %v951 = vsub.f32 %v907, %v943
          %v952 = vmul.f32 %v944, %v944
          %v953 = vmul.f32 %v945, %v945
          %v954 = vmul.f32 %v946, %v946
          %v955 = vmul.f32 %v947, %v947
          %v956 = vmul.f32 %v948, %v948
          %v957 = vmul.f32 %v949, %v949
          %v958 = vmul.f32 %v950, %v950
          %v959 = vmul.f32 %v951, %v951
          %v960 = vsel %vm910, %v952, 0.0
          %961 = vadd.xlane.f32.xlu0 %v960
          %v962 = vpop.xlane.xlu0 %961
          %v963 = vsel %vm910, %v953, 0.0
          %964 = vadd.xlane.f32.xlu0 %v963
          %v965 = vpop.xlane.xlu0 %964
          %v966 = vsel %vm910, %v954, 0.0
          %967 = vadd.xlane.f32.xlu0 %v966
          %v968 = vpop.xlane.xlu0 %967
          %v969 = vsel %vm910, %v955, 0.0
          %970 = vadd.xlane.f32.xlu0 %v969
          %v971 = vpop.xlane.xlu0 %970
          %v972 = vsel %vm910, %v956, 0.0
          %973 = vadd.xlane.f32.xlu0 %v972
          %v974 = vpop.xlane.xlu0 %973
          %v975 = vsel %vm910, %v957, 0.0
          %976 = vadd.xlane.f32.xlu0 %v975
          %v977 = vpop.xlane.xlu0 %976
          %v978 = vsel %vm910, %v958, 0.0
          %979 = vadd.xlane.f32.xlu0 %v978
          %v980 = vpop.xlane.xlu0 %979
          %v981 = vsel %vm910, %v959, 0.0
          %982 = vadd.xlane.f32.xlu0 %v981
          %v983 = vpop.xlane.xlu0 %982
          %v984 = vmul.f32 %v962, %v935
          %v985 = vmul.f32 %v965, %v935
          %v986 = vmul.f32 %v968, %v935
          %v987 = vmul.f32 %v971, %v935
          %v988 = vmul.f32 %v974, %v935
          %v989 = vmul.f32 %v977, %v935
          %v990 = vmul.f32 %v980, %v935
          %v991 = vmul.f32 %v983, %v935
          %v992 = vadd.f32 %v984, 1e-06
          %v993 = vadd.f32 %v985, 1e-06
          %v994 = vadd.f32 %v986, 1e-06
          %v995 = vadd.f32 %v987, 1e-06
          %v996 = vadd.f32 %v988, 1e-06
          %v997 = vadd.f32 %v989, 1e-06
          %v998 = vadd.f32 %v990, 1e-06
          %v999 = vadd.f32 %v991, 1e-06
          %v1000 = vrsqrt.pop %v992
          %v1001 = vrsqrt.pop %v993
          %v1002 = vrsqrt.pop %v994
          %v1003 = vrsqrt.pop %v995
          %v1004 = vrsqrt.pop %v996
          %v1005 = vrsqrt.pop %v997
          %v1006 = vrsqrt.pop %v998
          %v1007 = vrsqrt.pop %v999
          %v1008 = vmul.f32 %v944, %v1000
          %v1009 = vmul.f32 %v945, %v1001
          %v1010 = vmul.f32 %v946, %v1002
          %v1011 = vmul.f32 %v947, %v1003
          %v1012 = vmul.f32 %v948, %v1004
          %v1013 = vmul.f32 %v949, %v1005
          %v1014 = vmul.f32 %v950, %v1006
          %v1015 = vmul.f32 %v951, %v1007
          %v1017 = vlaneseq
          %v1018 = vshrl.u32 %v1017, 7
          %v1019 = vsub.s32 0, %v1018
          %v1020 = vrot.slane %v908, %v1019
          %v1022 = vmul.f32 %v1008, %v1020
          %v1023 = vmul.f32 %v1009, %v1020
          %v1024 = vmul.f32 %v1010, %v1020
          %v1025 = vmul.f32 %v1011, %v1020
          %v1026 = vmul.f32 %v1012, %v1020
          %v1027 = vmul.f32 %v1013, %v1020
          %v1028 = vmul.f32 %v1014, %v1020
          %v1029 = vmul.f32 %v1015, %v1020
          %v1031 = vlaneseq
          %v1032 = vshrl.u32 %v1031, 7
          %v1033 = vsub.s32 0, %v1032
          %v1034 = vrot.slane %v909, %v1033
          %v1036 = vadd.f32 %v1022, %v1034
          %v1037 = vadd.f32 %v1023, %v1034
          %v1038 = vadd.f32 %v1024, %v1034
          %v1039 = vadd.f32 %v1025, %v1034
          %v1040 = vadd.f32 %v1026, %v1034
          %v1041 = vadd.f32 %v1027, %v1034
          %v1042 = vadd.f32 %v1028, %v1034
          %v1043 = vadd.f32 %v1029, %v1034
          %v1044 = vpack.c.bf16 %v1037, %v1036
          %v1045 = vpack.c.bf16 %v1039, %v1038
          %v1046 = vpack.c.bf16 %v1041, %v1040
          %v1047 = vpack.c.bf16 %v1043, %v1042
          %v1048 = vld [vmem:[%s9] sm:$0xf]
          %v1049 = vld [vmem:[%s9 + $0x4] sm:$0xf]
          %v1050 = vld [vmem:[%s9 + $0x8] sm:$0xf]
          %v1051 = vld [vmem:[%s9 + $0xc] sm:$0xf]
          %v1052 = vld [vmem:[%s9 + $0x10] sm:$0xf]
          %v1053 = vld [vmem:[%s9 + $0x14] sm:$0xf]
          %v1054 = vld [vmem:[%s9 + $0x18] sm:$0xf]
          %v1055 = vld [vmem:[%s9 + $0x1c] sm:$0xf]
          %v1064 = vunpack.c.l.b16 %v1048
          %v1065 = vunpack.c.l.b16 %v1049
          %v1066 = vunpack.c.l.b16 %v1050
          %v1067 = vunpack.c.l.b16 %v1051
          %v1068 = vunpack.c.l.b16 %v1052
          %v1069 = vunpack.c.l.b16 %v1053
          %v1070 = vunpack.c.l.b16 %v1054
          %v1071 = vunpack.c.l.b16 %v1055
          %v1072 = vpack.c.b16 %v1065, %v1064
          %v1073 = vpack.c.b16 %v1067, %v1066
          %v1074 = vpack.c.b16 %v1069, %v1068
          %v1075 = vpack.c.b16 %v1071, %v1070
          %v1081 = vsel %vm910, %v1044, 0
          %v1084 = vsel %vm910, %v1045, 0
          %v1087 = vsel %vm910, %v1046, 0
          %v1090 = vsel %vm910, %v1047, 0
          %1092 = vmatprep.subr.bf16.mxu0 0
          %1093 = vmatpush1.bf16.msra.mxu0 %v1072
          %1094 = vmatprep.subr.bf16.mxu0 0
          %1095 = vmatpush1.bf16.msra.mxu0 %v1073
          %1096 = vmatprep.subr.bf16.mxu0 0
          %1097 = vmatpush1.bf16.msra.mxu0 %v1074
          %1098 = vmatprep.subr.bf16.mxu0 0
          %1099 = vmatpush1.bf16.msra.mxu0 %v1075
          %1100 = vmatprep.subr.bf16.mxu0 0
          %1101 = vmatpush1.bf16.msra.mxu0 0
          %1102 = vmatprep.subr.bf16.mxu0 0
          %1103 = vmatpush1.bf16.msra.mxu0 0
          %1104 = vmatprep.subr.bf16.mxu0 0
          %1105 = vmatpush1.bf16.msra.mxu0 0
          %1106 = vmatprep.subr.bf16.mxu0 0
          %1107 = vmatpush1.bf16.msra.mxu0 0
          %1108 = vmatprep.subr.bf16.mxu0 0
          %1109 = vmatpush1.bf16.msra.mxu0 0
          %1110 = vmatprep.subr.bf16.mxu0 0
          %1111 = vmatpush1.bf16.msra.mxu0 0
          %1112 = vmatprep.subr.bf16.mxu0 0
          %1113 = vmatpush1.bf16.msra.mxu0 0
          %1114 = vmatprep.subr.bf16.mxu0 0
          %1115 = vmatpush1.bf16.msra.mxu0 0
          %1116 = vmatprep.subr.bf16.mxu0 0
          %1117 = vmatpush1.bf16.msra.mxu0 0
          %1118 = vmatprep.subr.bf16.mxu0 0
          %1119 = vmatpush1.bf16.msra.mxu0 0
          %1120 = vmatprep.subr.bf16.mxu0 0
          %1121 = vmatpush1.bf16.msra.mxu0 0
          %1122 = vmatprep.subr.bf16.mxu0 0
          %1123 = vmatpush1.bf16.msra.mxu0 0
          %1124 = vmatprep.mubr.bf16.mxu0 0
          %1125 = vmatmul.mubr.bf16.gmra.mrb[0].mxu0 %v1081
          %v1126 = vpop.f32.mrb[0].mxu0
          %v1127 = vadd.f32 0.0, %v1126
          %v1128 = vpop.f32.mrb[0].mxu0
          %v1129 = vpop.f32.mrb[0].mxu0
          %v1130 = vadd.f32 0.0, %v1129
          %v1131 = vpop.f32.mrb[0].mxu0
          %1132 = vmatprep.mubr.bf16.mxu0 0
          %1133 = vmatmul.mubr.bf16.gmra.mrb[0].mxu0 %v1084
          %v1134 = vpop.f32.mrb[0].mxu0
          %v1135 = vadd.f32 0.0, %v1134
          %v1136 = vpop.f32.mrb[0].mxu0
          %v1137 = vpop.f32.mrb[0].mxu0
          %v1138 = vadd.f32 0.0, %v1137
          %v1139 = vpop.f32.mrb[0].mxu0
          %1140 = vmatprep.mubr.bf16.mxu0 0
          %1141 = vmatmul.mubr.bf16.gmra.mrb[0].mxu0 %v1087
          %v1142 = vpop.f32.mrb[0].mxu0
          %v1143 = vadd.f32 0.0, %v1142
          %v1144 = vpop.f32.mrb[0].mxu0
          %v1145 = vpop.f32.mrb[0].mxu0
          %v1146 = vadd.f32 0.0, %v1145
          %v1147 = vpop.f32.mrb[0].mxu0
          %1148 = vmatprep.mubr.bf16.mxu0 0
          %1149 = vmatmul.mubr.bf16.gmra.mrb[0].mxu0 %v1090
          %v1150 = vpop.f32.mrb[0].mxu0
          %v1151 = vadd.f32 0.0, %v1150
          %v1152 = vpop.f32.mrb[0].mxu0
          %v1153 = vpop.f32.mrb[0].mxu0
          %v1154 = vadd.f32 0.0, %v1153
          %v1155 = vpop.f32.mrb[0].mxu0
          %1156 = vdwg.mxu0
          %v1157 = vld [vmem:[%s10] sm:$0xf]
          %v1158 = vld [vmem:[%s10 + $0x4] sm:$0xf]
          %v1159 = vld [vmem:[%s10 + $0x8] sm:$0xf]
          %v1160 = vld [vmem:[%s10 + $0xc] sm:$0xf]
          %v1161 = vld [vmem:[%s10 + $0x10] sm:$0xf]
          %v1162 = vld [vmem:[%s10 + $0x14] sm:$0xf]
          %v1163 = vld [vmem:[%s10 + $0x18] sm:$0xf]
          %v1164 = vld [vmem:[%s10 + $0x1c] sm:$0xf]
          %v1173 = vunpack.c.l.b16 %v1157
          %v1174 = vunpack.c.l.b16 %v1158
          %v1175 = vunpack.c.l.b16 %v1159
          %v1176 = vunpack.c.l.b16 %v1160
          %v1177 = vunpack.c.l.b16 %v1161
          %v1178 = vunpack.c.l.b16 %v1162
          %v1179 = vunpack.c.l.b16 %v1163
          %v1180 = vunpack.c.l.b16 %v1164
          %v1181 = vpack.c.b16 %v1174, %v1173
          %v1182 = vpack.c.b16 %v1176, %v1175
          %v1183 = vpack.c.b16 %v1178, %v1177
          %v1184 = vpack.c.b16 %v1180, %v1179
          %1189 = vmatprep.subr.bf16.mxu0 0
          %1190 = vmatpush1.bf16.msra.mxu0 %v1181
          %1191 = vmatprep.subr.bf16.mxu0 0
          %1192 = vmatpush1.bf16.msra.mxu0 %v1182
          %1193 = vmatprep.subr.bf16.mxu0 0
          %1194 = vmatpush1.bf16.msra.mxu0 %v1183
          %1195 = vmatprep.subr.bf16.mxu0 0
          %1196 = vmatpush1.bf16.msra.mxu0 %v1184
          %1197 = vmatprep.subr.bf16.mxu0 0
          %1198 = vmatpush1.bf16.msra.mxu0 0
          %1199 = vmatprep.subr.bf16.mxu0 0
          %1200 = vmatpush1.bf16.msra.mxu0 0
          %1201 = vmatprep.subr.bf16.mxu0 0
          %1202 = vmatpush1.bf16.msra.mxu0 0
          %1203 = vmatprep.subr.bf16.mxu0 0
          %1204 = vmatpush1.bf16.msra.mxu0 0
          %1205 = vmatprep.subr.bf16.mxu0 0
          %1206 = vmatpush1.bf16.msra.mxu0 0
          %1207 = vmatprep.subr.bf16.mxu0 0
          %1208 = vmatpush1.bf16.msra.mxu0 0
          %1209 = vmatprep.subr.bf16.mxu0 0
          %1210 = vmatpush1.bf16.msra.mxu0 0
          %1211 = vmatprep.subr.bf16.mxu0 0
          %1212 = vmatpush1.bf16.msra.mxu0 0
          %1213 = vmatprep.subr.bf16.mxu0 0
          %1214 = vmatpush1.bf16.msra.mxu0 0
          %1215 = vmatprep.subr.bf16.mxu0 0
          %1216 = vmatpush1.bf16.msra.mxu0 0
          %1217 = vmatprep.subr.bf16.mxu0 0
          %1218 = vmatpush1.bf16.msra.mxu0 0
          %1219 = vmatprep.subr.bf16.mxu0 0
          %1220 = vmatpush1.bf16.msra.mxu0 0
          %1221 = vmatprep.mubr.bf16.mxu0 0
          %1222 = vmatmul.mubr.bf16.gmra.mrb[0].mxu0 %v1081
          %v1223 = vpop.f32.mrb[0].mxu0
          %v1224 = vadd.f32 0.0, %v1223
          %v1225 = vpop.f32.mrb[0].mxu0
          %v1226 = vpop.f32.mrb[0].mxu0
          %v1227 = vadd.f32 0.0, %v1226
          %v1228 = vpop.f32.mrb[0].mxu0
          %1229 = vmatprep.mubr.bf16.mxu0 0
          %1230 = vmatmul.mubr.bf16.gmra.mrb[0].mxu0 %v1084
          %v1231 = vpop.f32.mrb[0].mxu0
          %v1232 = vadd.f32 0.0, %v1231
          %v1233 = vpop.f32.mrb[0].mxu0
          %v1234 = vpop.f32.mrb[0].mxu0
          %v1235 = vadd.f32 0.0, %v1234
          %v1236 = vpop.f32.mrb[0].mxu0
          %1237 = vmatprep.mubr.bf16.mxu0 0
          %1238 = vmatmul.mubr.bf16.gmra.mrb[0].mxu0 %v1087
          %v1239 = vpop.f32.mrb[0].mxu0
          %v1240 = vadd.f32 0.0, %v1239
          %v1241 = vpop.f32.mrb[0].mxu0
          %v1242 = vpop.f32.mrb[0].mxu0
          %v1243 = vadd.f32 0.0, %v1242
          %v1244 = vpop.f32.mrb[0].mxu0
          %1245 = vmatprep.mubr.bf16.mxu0 0
          %1246 = vmatmul.mubr.bf16.gmra.mrb[0].mxu0 %v1090
          %v1247 = vpop.f32.mrb[0].mxu0
          %v1248 = vadd.f32 0.0, %v1247
          %v1249 = vpop.f32.mrb[0].mxu0
          %v1250 = vpop.f32.mrb[0].mxu0
          %v1251 = vadd.f32 0.0, %v1250
          %v1252 = vpop.f32.mrb[0].mxu0
          %1253 = vdwg.mxu0
          %v1254 = vld [vmem:[%s11] sm:$0xff]
          %v1255 = vld [vmem:[%s11 + $0x8] sm:$0xff]
          %v1256 = vld [vmem:[%s11 + $0x10] sm:$0xff]
          %v1257 = vld [vmem:[%s11 + $0x18] sm:$0xff]
          %v1258 = vld [vmem:[%s11 + $0x20] sm:$0xff]
          %v1259 = vld [vmem:[%s11 + $0x28] sm:$0xff]
          %v1260 = vld [vmem:[%s11 + $0x30] sm:$0xff]
          %v1261 = vld [vmem:[%s11 + $0x38] sm:$0xff]
          %v1262 = vld [vmem:[%s14] sm:$0x1]
          %v1263 = vld [vmem:[%s15] sm:$0x1]
          %v1265 = vsel %vm910, %v1127, 0
          %v1268 = vsel %vm910, %v1130, 0
          %v1271 = vsel %vm910, %v1135, 0
          %v1274 = vsel %vm910, %v1138, 0
          %v1277 = vsel %vm910, %v1143, 0
          %v1280 = vsel %vm910, %v1146, 0
          %v1283 = vsel %vm910, %v1151, 0
          %v1286 = vsel %vm910, %v1154, 0
          %1288 = vmatprep.subr.mxu0 0.0
          %1289 = vmatpush1.msra.mxu0 %v1254
          %1290 = vmatprep.subr.mxu0 0.0
          %1291 = vmatpush1.msra.mxu0 %v1255
          %1292 = vmatprep.subr.mxu0 0.0
          %1293 = vmatpush1.msra.mxu0 %v1256
          %1294 = vmatprep.subr.mxu0 0.0
          %1295 = vmatpush1.msra.mxu0 %v1257
          %1296 = vmatprep.subr.mxu0 0.0
          %1297 = vmatpush1.msra.mxu0 %v1258
          %1298 = vmatprep.subr.mxu0 0.0
          %1299 = vmatpush1.msra.mxu0 %v1259
          %1300 = vmatprep.subr.mxu0 0.0
          %1301 = vmatpush1.msra.mxu0 %v1260
          %1302 = vmatprep.subr.mxu0 0.0
          %1303 = vmatpush1.msra.mxu0 %v1261
          %1304 = vmatprep.subr.mxu0 0.0
          %1305 = vmatpush1.msra.mxu0 0.0
          %1306 = vmatprep.subr.mxu0 0.0
          %1307 = vmatpush1.msra.mxu0 0.0
          %1308 = vmatprep.subr.mxu0 0.0
          %1309 = vmatpush1.msra.mxu0 0.0
          %1310 = vmatprep.subr.mxu0 0.0
          %1311 = vmatpush1.msra.mxu0 0.0
          %1312 = vmatprep.subr.mxu0 0.0
          %1313 = vmatpush1.msra.mxu0 0.0
          %1314 = vmatprep.subr.mxu0 0.0
          %1315 = vmatpush1.msra.mxu0 0.0
          %1316 = vmatprep.subr.mxu0 0.0
          %1317 = vmatpush1.msra.mxu0 0.0
          %1318 = vmatprep.subr.mxu0 0.0
          %1319 = vmatpush1.msra.mxu0 0.0
          %1320 = vmatprep.subr.mxu0 0.0
          %1321 = vmatpush1.msra.mxu0 0.0
          %1322 = vmatprep.subr.mxu0 0.0
          %1323 = vmatpush1.msra.mxu0 0.0
          %1324 = vmatprep.subr.mxu0 0.0
          %1325 = vmatpush1.msra.mxu0 0.0
          %1326 = vmatprep.subr.mxu0 0.0
          %1327 = vmatpush1.msra.mxu0 0.0
          %1328 = vmatprep.subr.mxu0 0.0
          %1329 = vmatpush1.msra.mxu0 0.0
          %1330 = vmatprep.subr.mxu0 0.0
          %1331 = vmatpush1.msra.mxu0 0.0
          %1332 = vmatprep.subr.mxu0 0.0
          %1333 = vmatpush1.msra.mxu0 0.0
          %1334 = vmatprep.subr.mxu0 0.0
          %1335 = vmatpush1.msra.mxu0 0.0
          %1336 = vmatprep.subr.mxu0 0.0
          %1337 = vmatpush1.msra.mxu0 0.0
          %1338 = vmatprep.subr.mxu0 0.0
          %1339 = vmatpush1.msra.mxu0 0.0
          %1340 = vmatprep.subr.mxu0 0.0
          %1341 = vmatpush1.msra.mxu0 0.0
          %1342 = vmatprep.subr.mxu0 0.0
          %1343 = vmatpush1.msra.mxu0 0.0
          %1344 = vmatprep.subr.mxu0 0.0
          %1345 = vmatpush1.msra.mxu0 0.0
          %1346 = vmatprep.subr.mxu0 0.0
          %1347 = vmatpush1.msra.mxu0 0.0
          %1348 = vmatprep.subr.mxu0 0.0
          %1349 = vmatpush1.msra.mxu0 0.0
          %1350 = vmatprep.subr.mxu0 0.0
          %1351 = vmatpush1.msra.mxu0 0.0
          %1352 = vmatprep.mubr.f32.mxu0 0.0
          %1353 = vmatmul.mubr.f32.gmra.mrb[0].mxu0 %v1265
          %v1354 = vpop.f32.mrb[0].mxu0
          %v1355 = vadd.f32 0.0, %v1354
          %v1356 = vpop.f32.mrb[0].mxu0
          %1357 = vmatprep.mubr.f32.mxu0 0.0
          %1358 = vmatmul.mubr.f32.gmra.mrb[0].mxu0 %v1268
          %v1359 = vpop.f32.mrb[0].mxu0
          %v1360 = vadd.f32 0.0, %v1359
          %v1361 = vpop.f32.mrb[0].mxu0
          %1362 = vmatprep.mubr.f32.mxu0 0.0
          %1363 = vmatmul.mubr.f32.gmra.mrb[0].mxu0 %v1271
          %v1364 = vpop.f32.mrb[0].mxu0
          %v1365 = vadd.f32 0.0, %v1364
          %v1366 = vpop.f32.mrb[0].mxu0
          %1367 = vmatprep.mubr.f32.mxu0 0.0
          %1368 = vmatmul.mubr.f32.gmra.mrb[0].mxu0 %v1274
          %v1369 = vpop.f32.mrb[0].mxu0
          %v1370 = vadd.f32 0.0, %v1369
          %v1371 = vpop.f32.mrb[0].mxu0
          %1372 = vmatprep.mubr.f32.mxu0 0.0
          %1373 = vmatmul.mubr.f32.gmra.mrb[0].mxu0 %v1277
          %v1374 = vpop.f32.mrb[0].mxu0
          %v1375 = vadd.f32 0.0, %v1374
          %v1376 = vpop.f32.mrb[0].mxu0
          %1377 = vmatprep.mubr.f32.mxu0 0.0
          %1378 = vmatmul.mubr.f32.gmra.mrb[0].mxu0 %v1280
          %v1379 = vpop.f32.mrb[0].mxu0
          %v1380 = vadd.f32 0.0, %v1379
          %v1381 = vpop.f32.mrb[0].mxu0
          %1382 = vmatprep.mubr.f32.mxu0 0.0
          %1383 = vmatmul.mubr.f32.gmra.mrb[0].mxu0 %v1283
          %v1384 = vpop.f32.mrb[0].mxu0
          %v1385 = vadd.f32 0.0, %v1384
          %v1386 = vpop.f32.mrb[0].mxu0
          %1387 = vmatprep.mubr.f32.mxu0 0.0
          %1388 = vmatmul.mubr.f32.gmra.mrb[0].mxu0 %v1286
          %v1389 = vpop.f32.mrb[0].mxu0
          %v1390 = vadd.f32 0.0, %v1389
          %v1391 = vpop.f32.mrb[0].mxu0
          %1392 = vdwg.mxu0
          %v1393 = vsub.f32 %v1127, %v1355
          %v1394 = vsub.f32 %v1130, %v1360
          %v1395 = vsub.f32 %v1135, %v1365
          %v1396 = vsub.f32 %v1138, %v1370
          %v1397 = vsub.f32 %v1143, %v1375
          %v1398 = vsub.f32 %v1146, %v1380
          %v1399 = vsub.f32 %v1151, %v1385
          %v1400 = vsub.f32 %v1154, %v1390
          %v1401 = vmul.f32 %v1393, %v1393
          %v1402 = vmul.f32 %v1394, %v1394
          %v1403 = vmul.f32 %v1395, %v1395
          %v1404 = vmul.f32 %v1396, %v1396
          %v1405 = vmul.f32 %v1397, %v1397
          %v1406 = vmul.f32 %v1398, %v1398
          %v1407 = vmul.f32 %v1399, %v1399
          %v1408 = vmul.f32 %v1400, %v1400
          %v1410 = vsel %vm910, %v1401, 0
          %v1413 = vsel %vm910, %v1402, 0
          %v1416 = vsel %vm910, %v1403, 0
          %v1419 = vsel %vm910, %v1404, 0
          %v1422 = vsel %vm910, %v1405, 0
          %v1425 = vsel %vm910, %v1406, 0
          %v1428 = vsel %vm910, %v1407, 0
          %v1431 = vsel %vm910, %v1408, 0
          %1433 = vmatprep.subr.mxu0 0.0
          %1434 = vmatpush1.msra.mxu0 %v1254
          %1435 = vmatprep.subr.mxu0 0.0
          %1436 = vmatpush1.msra.mxu0 %v1255
          %1437 = vmatprep.subr.mxu0 0.0
          %1438 = vmatpush1.msra.mxu0 %v1256
          %1439 = vmatprep.subr.mxu0 0.0
          %1440 = vmatpush1.msra.mxu0 %v1257
          %1441 = vmatprep.subr.mxu0 0.0
          %1442 = vmatpush1.msra.mxu0 %v1258
          %1443 = vmatprep.subr.mxu0 0.0
          %1444 = vmatpush1.msra.mxu0 %v1259
          %1445 = vmatprep.subr.mxu0 0.0
          %1446 = vmatpush1.msra.mxu0 %v1260
          %1447 = vmatprep.subr.mxu0 0.0
          %1448 = vmatpush1.msra.mxu0 %v1261
          %1449 = vmatprep.subr.mxu0 0.0
          %1450 = vmatpush1.msra.mxu0 0.0
          %1451 = vmatprep.subr.mxu0 0.0
          %1452 = vmatpush1.msra.mxu0 0.0
          %1453 = vmatprep.subr.mxu0 0.0
          %1454 = vmatpush1.msra.mxu0 0.0
          %1455 = vmatprep.subr.mxu0 0.0
          %1456 = vmatpush1.msra.mxu0 0.0
          %1457 = vmatprep.subr.mxu0 0.0
          %1458 = vmatpush1.msra.mxu0 0.0
          %1459 = vmatprep.subr.mxu0 0.0
          %1460 = vmatpush1.msra.mxu0 0.0
          %1461 = vmatprep.subr.mxu0 0.0
          %1462 = vmatpush1.msra.mxu0 0.0
          %1463 = vmatprep.subr.mxu0 0.0
          %1464 = vmatpush1.msra.mxu0 0.0
          %1465 = vmatprep.subr.mxu0 0.0
          %1466 = vmatpush1.msra.mxu0 0.0
          %1467 = vmatprep.subr.mxu0 0.0
          %1468 = vmatpush1.msra.mxu0 0.0
          %1469 = vmatprep.subr.mxu0 0.0
          %1470 = vmatpush1.msra.mxu0 0.0
          %1471 = vmatprep.subr.mxu0 0.0
          %1472 = vmatpush1.msra.mxu0 0.0
          %1473 = vmatprep.subr.mxu0 0.0
          %1474 = vmatpush1.msra.mxu0 0.0
          %1475 = vmatprep.subr.mxu0 0.0
          %1476 = vmatpush1.msra.mxu0 0.0
          %1477 = vmatprep.subr.mxu0 0.0
          %1478 = vmatpush1.msra.mxu0 0.0
          %1479 = vmatprep.subr.mxu0 0.0
          %1480 = vmatpush1.msra.mxu0 0.0
          %1481 = vmatprep.subr.mxu0 0.0
          %1482 = vmatpush1.msra.mxu0 0.0
          %1483 = vmatprep.subr.mxu0 0.0
          %1484 = vmatpush1.msra.mxu0 0.0
          %1485 = vmatprep.subr.mxu0 0.0
          %1486 = vmatpush1.msra.mxu0 0.0
          %1487 = vmatprep.subr.mxu0 0.0
          %1488 = vmatpush1.msra.mxu0 0.0
          %1489 = vmatprep.subr.mxu0 0.0
          %1490 = vmatpush1.msra.mxu0 0.0
          %1491 = vmatprep.subr.mxu0 0.0
          %1492 = vmatpush1.msra.mxu0 0.0
          %1493 = vmatprep.subr.mxu0 0.0
          %1494 = vmatpush1.msra.mxu0 0.0
          %1495 = vmatprep.subr.mxu0 0.0
          %1496 = vmatpush1.msra.mxu0 0.0
          %1497 = vmatprep.mubr.f32.mxu0 0.0
          %1498 = vmatmul.mubr.f32.gmra.mrb[0].mxu0 %v1410
          %v1499 = vpop.f32.mrb[0].mxu0
          %v1500 = vadd.f32 1e-06, %v1499
          %v1501 = vpop.f32.mrb[0].mxu0
          %1502 = vmatprep.mubr.f32.mxu0 0.0
          %1503 = vmatmul.mubr.f32.gmra.mrb[0].mxu0 %v1413
          %v1504 = vpop.f32.mrb[0].mxu0
          %v1505 = vadd.f32 1e-06, %v1504
          %v1506 = vpop.f32.mrb[0].mxu0
          %1507 = vmatprep.mubr.f32.mxu0 0.0
          %1508 = vmatmul.mubr.f32.gmra.mrb[0].mxu0 %v1416
          %v1509 = vpop.f32.mrb[0].mxu0
          %v1510 = vadd.f32 1e-06, %v1509
          %v1511 = vpop.f32.mrb[0].mxu0
          %1512 = vmatprep.mubr.f32.mxu0 0.0
          %1513 = vmatmul.mubr.f32.gmra.mrb[0].mxu0 %v1419
          %v1514 = vpop.f32.mrb[0].mxu0
          %v1515 = vadd.f32 1e-06, %v1514
          %v1516 = vpop.f32.mrb[0].mxu0
          %1517 = vmatprep.mubr.f32.mxu0 0.0
          %1518 = vmatmul.mubr.f32.gmra.mrb[0].mxu0 %v1422
          %v1519 = vpop.f32.mrb[0].mxu0
          %v1520 = vadd.f32 1e-06, %v1519
          %v1521 = vpop.f32.mrb[0].mxu0
          %1522 = vmatprep.mubr.f32.mxu0 0.0
          %1523 = vmatmul.mubr.f32.gmra.mrb[0].mxu0 %v1425
          %v1524 = vpop.f32.mrb[0].mxu0
          %v1525 = vadd.f32 1e-06, %v1524
          %v1526 = vpop.f32.mrb[0].mxu0
          %1527 = vmatprep.mubr.f32.mxu0 0.0
          %1528 = vmatmul.mubr.f32.gmra.mrb[0].mxu0 %v1428
          %v1529 = vpop.f32.mrb[0].mxu0
          %v1530 = vadd.f32 1e-06, %v1529
          %v1531 = vpop.f32.mrb[0].mxu0
          %1532 = vmatprep.mubr.f32.mxu0 0.0
          %1533 = vmatmul.mubr.f32.gmra.mrb[0].mxu0 %v1431
          %v1534 = vpop.f32.mrb[0].mxu0
          %v1535 = vadd.f32 1e-06, %v1534
          %v1536 = vpop.f32.mrb[0].mxu0
          %1537 = vdwg.mxu0
          %v1538 = vrsqrt.pop %v1500
          %v1539 = vrsqrt.pop %v1505
          %v1540 = vrsqrt.pop %v1510
          %v1541 = vrsqrt.pop %v1515
          %v1542 = vrsqrt.pop %v1520
          %v1543 = vrsqrt.pop %v1525
          %v1544 = vrsqrt.pop %v1530
          %v1545 = vrsqrt.pop %v1535
          %v1546 = vmul.f32 %v1393, %v1538
          %v1547 = vmul.f32 %v1394, %v1539
          %v1548 = vmul.f32 %v1395, %v1540
          %v1549 = vmul.f32 %v1396, %v1541
          %v1550 = vmul.f32 %v1397, %v1542
          %v1551 = vmul.f32 %v1398, %v1543
          %v1552 = vmul.f32 %v1399, %v1544
          %v1553 = vmul.f32 %v1400, %v1545
          %v1555 = vlaneseq
          %v1556 = vshrl.u32 %v1555, 7
          %v1557 = vsub.s32 0, %v1556
          %v1558 = vrot.slane %v1262, %v1557
          %v1560 = vmul.f32 %v1546, %v1558
          %v1561 = vmul.f32 %v1547, %v1558
          %v1562 = vmul.f32 %v1548, %v1558
          %v1563 = vmul.f32 %v1549, %v1558
          %v1564 = vmul.f32 %v1550, %v1558
          %v1565 = vmul.f32 %v1551, %v1558
          %v1566 = vmul.f32 %v1552, %v1558
          %v1567 = vmul.f32 %v1553, %v1558
          %v1569 = vlaneseq
          %v1570 = vshrl.u32 %v1569, 7
          %v1571 = vsub.s32 0, %v1570
          %v1572 = vrot.slane %v1263, %v1571
          %v1574 = vadd.f32 %v1560, %v1572
          %v1575 = vadd.f32 %v1561, %v1572
          %v1576 = vadd.f32 %v1562, %v1572
          %v1577 = vadd.f32 %v1563, %v1572
          %v1578 = vadd.f32 %v1564, %v1572
          %v1579 = vadd.f32 %v1565, %v1572
          %v1580 = vadd.f32 %v1566, %v1572
          %v1581 = vadd.f32 %v1567, %v1572
          %v1582 = vpack.c.bf16 %v1575, %v1574
          %v1583 = vpack.c.bf16 %v1577, %v1576
          %v1584 = vpack.c.bf16 %v1579, %v1578
          %v1585 = vpack.c.bf16 %v1581, %v1580
          %1586 = vst.msk [vmem:[#allocation2] sm:$0xff] %vm910, %v1582
          %1587 = vst.msk [vmem:[#allocation2 + $0x8] sm:$0xff] %vm910, %v1583
          %1588 = vst.msk [vmem:[#allocation2 + $0x10] sm:$0xff] %vm910, %v1584
          %1589 = vst.msk [vmem:[#allocation2 + $0x18] sm:$0xff] %vm910, %v1585
          %v1590 = vpack.c.bf16 %v1227, %v1224
          %v1591 = vpack.c.bf16 %v1235, %v1232
          %v1592 = vpack.c.bf16 %v1243, %v1240
          %v1593 = vpack.c.bf16 %v1251, %v1248
          %1594 = vst.msk [vmem:[#allocation3] sm:$0xff] %vm910, %v1590
          %1595 = vst.msk [vmem:[#allocation3 + $0x8] sm:$0xff] %vm910, %v1591
          %1596 = vst.msk [vmem:[#allocation3 + $0x10] sm:$0xff] %vm910, %v1592
          %1597 = vst.msk [vmem:[#allocation3 + $0x18] sm:$0xff] %vm910, %v1593
        $region136: #{cross_attention_decoder.1} parent=131 // pred_fallthru
          _
        %v1598 = vld [vmem:[%s888] sm:$0xff]
        %v1599 = vld [vmem:[%s888 + $0x8] sm:$0xff]
        %v1600 = vld [vmem:[%s888 + $0x10] sm:$0xff]
        %v1601 = vld [vmem:[%s888 + $0x18] sm:$0xff]
        %v1602 = vld [vmem:[%s888 + $0x20] sm:$0xff]
        %v1603 = vld [vmem:[%s888 + $0x28] sm:$0xff]
        %v1604 = vld [vmem:[%s888 + $0x30] sm:$0xff]
        %v1605 = vld [vmem:[%s888 + $0x38] sm:$0xff]
        %v1606 = vld [vmem:[%s888 + $0x40] sm:$0xff]
        %v1607 = vld [vmem:[%s888 + $0x48] sm:$0xff]
        %v1608 = vld [vmem:[%s888 + $0x50] sm:$0xff]
        %v1609 = vld [vmem:[%s888 + $0x58] sm:$0xff]
        %v1610 = vld [vmem:[%s888 + $0x60] sm:$0xff]
        %v1611 = vld [vmem:[%s888 + $0x68] sm:$0xff]
        %v1612 = vld [vmem:[%s888 + $0x70] sm:$0xff]
        %v1613 = vld [vmem:[%s888 + $0x78] sm:$0xff]
        %v1614 = vpack.c.bf16 %v1599, %v1598
        %v1615 = vpack.c.bf16 %v1601, %v1600
        %v1616 = vpack.c.bf16 %v1603, %v1602
        %v1617 = vpack.c.bf16 %v1605, %v1604
        %v1618 = vpack.c.bf16 %v1607, %v1606
        %v1619 = vpack.c.bf16 %v1609, %v1608
        %v1620 = vpack.c.bf16 %v1611, %v1610
        %v1621 = vpack.c.bf16 %v1613, %v1612
        %v1622 = vld [vmem:[%s2] sm:$0xf]
        %v1623 = vld [vmem:[%s2 + $0x4] sm:$0xf]
        %v1624 = vld [vmem:[%s2 + $0x8] sm:$0xf]
        %v1625 = vld [vmem:[%s2 + $0xc] sm:$0xf]
        %v1626 = vld [vmem:[%s2 + $0x10] sm:$0xf]
        %v1627 = vld [vmem:[%s2 + $0x14] sm:$0xf]
        %v1628 = vld [vmem:[%s2 + $0x18] sm:$0xf]
        %v1629 = vld [vmem:[%s2 + $0x1c] sm:$0xf]
        %v1630 = vld [vmem:[%s3] sm:$0x1]
        %v1632 = vlaneseq
        %v1633 = vshrl.u32 %v1632, 7
        %v1634 = vsub.s32 0, %v1633
        %v1635 = vrot.slane %v1630, %v1634
        %v1645 = vunpack.c.l.b16 %v1622
        %v1646 = vunpack.c.l.b16 %v1623
        %v1647 = vunpack.c.l.b16 %v1624
        %v1648 = vunpack.c.l.b16 %v1625
        %v1649 = vunpack.c.l.b16 %v1626
        %v1650 = vunpack.c.l.b16 %v1627
        %v1651 = vunpack.c.l.b16 %v1628
        %v1652 = vunpack.c.l.b16 %v1629
        %v1653 = vpack.c.b16 %v1646, %v1645
        %v1654 = vpack.c.b16 %v1648, %v1647
        %v1655 = vpack.c.b16 %v1650, %v1649
        %v1656 = vpack.c.b16 %v1652, %v1651
        %vm1661 = vcmask 523264
        %v1663 = vsel %vm1661, %v1614, 0
        %v1666 = vsel %vm1661, %v1615, 0
        %v1669 = vsel %vm1661, %v1616, 0
        %v1672 = vsel %vm1661, %v1617, 0
        %v1675 = vsel %vm1661, %v1618, 0
        %v1678 = vsel %vm1661, %v1619, 0
        %v1681 = vsel %vm1661, %v1620, 0
        %v1684 = vsel %vm1661, %v1621, 0
        %1686 = vmatprep.subr.bf16.mxu0 0
        %1687 = vmatpush1.bf16.msra.mxu0 %v1653
        %1688 = vmatprep.subr.bf16.mxu0 0
        %1689 = vmatpush1.bf16.msra.mxu0 %v1654
        %1690 = vmatprep.subr.bf16.mxu0 0
        %1691 = vmatpush1.bf16.msra.mxu0 %v1655
        %1692 = vmatprep.subr.bf16.mxu0 0
        %1693 = vmatpush1.bf16.msra.mxu0 %v1656
        %1694 = vmatprep.subr.bf16.mxu0 0
        %1695 = vmatpush1.bf16.msra.mxu0 0
        %1696 = vmatprep.subr.bf16.mxu0 0
        %1697 = vmatpush1.bf16.msra.mxu0 0
        %1698 = vmatprep.subr.bf16.mxu0 0
        %1699 = vmatpush1.bf16.msra.mxu0 0
        %1700 = vmatprep.subr.bf16.mxu0 0
        %1701 = vmatpush1.bf16.msra.mxu0 0
        %1702 = vmatprep.subr.bf16.mxu0 0
        %1703 = vmatpush1.bf16.msra.mxu0 0
        %1704 = vmatprep.subr.bf16.mxu0 0
        %1705 = vmatpush1.bf16.msra.mxu0 0
        %1706 = vmatprep.subr.bf16.mxu0 0
        %1707 = vmatpush1.bf16.msra.mxu0 0
        %1708 = vmatprep.subr.bf16.mxu0 0
        %1709 = vmatpush1.bf16.msra.mxu0 0
        %1710 = vmatprep.subr.bf16.mxu0 0
        %1711 = vmatpush1.bf16.msra.mxu0 0
        %1712 = vmatprep.subr.bf16.mxu0 0
        %1713 = vmatpush1.bf16.msra.mxu0 0
        %1714 = vmatprep.subr.bf16.mxu0 0
        %1715 = vmatpush1.bf16.msra.mxu0 0
        %1716 = vmatprep.subr.bf16.mxu0 0
        %1717 = vmatpush1.bf16.msra.mxu0 0
        %1718 = vmatprep.mubr.bf16.mxu0 0
        %1719 = vmatmul.mubr.bf16.gmra.mrb[0].mxu0 %v1663
        %v1720 = vpop.f32.mrb[0].mxu0
        %v1721 = vadd.f32 %v1635, %v1720
        %v1722 = vpop.f32.mrb[0].mxu0
        %v1723 = vpop.f32.mrb[0].mxu0
        %v1724 = vadd.f32 %v1635, %v1723
        %v1725 = vpop.f32.mrb[0].mxu0
        %1726 = vmatprep.mubr.bf16.mxu0 0
        %1727 = vmatmul.mubr.bf16.gmra.mrb[0].mxu0 %v1666
        %v1728 = vpop.f32.mrb[0].mxu0
        %v1729 = vadd.f32 %v1635, %v1728
        %v1730 = vpop.f32.mrb[0].mxu0
        %v1731 = vpop.f32.mrb[0].mxu0
        %v1732 = vadd.f32 %v1635, %v1731
        %v1733 = vpop.f32.mrb[0].mxu0
        %1734 = vmatprep.mubr.bf16.mxu0 0
        %1735 = vmatmul.mubr.bf16.gmra.mrb[0].mxu0 %v1669
        %v1736 = vpop.f32.mrb[0].mxu0
        %v1737 = vadd.f32 %v1635, %v1736
        %v1738 = vpop.f32.mrb[0].mxu0
        %v1739 = vpop.f32.mrb[0].mxu0
        %v1740 = vadd.f32 %v1635, %v1739
        %v1741 = vpop.f32.mrb[0].mxu0
        %1742 = vmatprep.mubr.bf16.mxu0 0
        %1743 = vmatmul.mubr.bf16.gmra.mrb[0].mxu0 %v1672
        %v1744 = vpop.f32.mrb[0].mxu0
        %v1745 = vadd.f32 %v1635, %v1744
        %v1746 = vpop.f32.mrb[0].mxu0
        %v1747 = vpop.f32.mrb[0].mxu0
        %v1748 = vadd.f32 %v1635, %v1747
        %v1749 = vpop.f32.mrb[0].mxu0
        %1750 = vmatprep.mubr.bf16.mxu0 0
        %1751 = vmatmul.mubr.bf16.gmra.mrb[0].mxu0 %v1675
        %v1752 = vpop.f32.mrb[0].mxu0
        %v1753 = vadd.f32 %v1635, %v1752
        %v1754 = vpop.f32.mrb[0].mxu0
        %v1755 = vpop.f32.mrb[0].mxu0
        %v1756 = vadd.f32 %v1635, %v1755
        %v1757 = vpop.f32.mrb[0].mxu0
        %1758 = vmatprep.mubr.bf16.mxu0 0
        %1759 = vmatmul.mubr.bf16.gmra.mrb[0].mxu0 %v1678
        %v1760 = vpop.f32.mrb[0].mxu0
        %v1761 = vadd.f32 %v1635, %v1760
        %v1762 = vpop.f32.mrb[0].mxu0
        %v1763 = vpop.f32.mrb[0].mxu0
        %v1764 = vadd.f32 %v1635, %v1763
        %v1765 = vpop.f32.mrb[0].mxu0
        %1766 = vmatprep.mubr.bf16.mxu0 0
        %1767 = vmatmul.mubr.bf16.gmra.mrb[0].mxu0 %v1681
        %v1768 = vpop.f32.mrb[0].mxu0
        %v1769 = vadd.f32 %v1635, %v1768
        %v1770 = vpop.f32.mrb[0].mxu0
        %v1771 = vpop.f32.mrb[0].mxu0
        %v1772 = vadd.f32 %v1635, %v1771
        %v1773 = vpop.f32.mrb[0].mxu0
        %1774 = vmatprep.mubr.bf16.mxu0 0
        %1775 = vmatmul.mubr.bf16.gmra.mrb[0].mxu0 %v1684
        %v1776 = vpop.f32.mrb[0].mxu0
        %v1777 = vadd.f32 %v1635, %v1776
        %v1778 = vpop.f32.mrb[0].mxu0
        %v1779 = vpop.f32.mrb[0].mxu0
        %v1780 = vadd.f32 %v1635, %v1779
        %v1781 = vpop.f32.mrb[0].mxu0
        %1782 = vdwg.mxu0
        %v1783 = vld [vmem:[%s4] sm:$0x1]
        %v1784 = vld [vmem:[%s5] sm:$0x1]
        %v1785 = vsel %vm1661, %v1721, 0.0
        %1786 = vadd.xlane.f32.xlu0 %v1785
        %v1787 = vpop.xlane.xlu0 %1786
        %v1788 = vsel %vm1661, %v1724, 0.0
        %1789 = vadd.xlane.f32.xlu0 %v1788
        %v1790 = vpop.xlane.xlu0 %1789
        %v1791 = vsel %vm1661, %v1729, 0.0
        %1792 = vadd.xlane.f32.xlu0 %v1791
        %v1793 = vpop.xlane.xlu0 %1792
        %v1794 = vsel %vm1661, %v1732, 0.0
        %1795 = vadd.xlane.f32.xlu0 %v1794
        %v1796 = vpop.xlane.xlu0 %1795
        %v1797 = vsel %vm1661, %v1737, 0.0
        %1798 = vadd.xlane.f32.xlu0 %v1797
        %v1799 = vpop.xlane.xlu0 %1798
        %v1800 = vsel %vm1661, %v1740, 0.0
        %1801 = vadd.xlane.f32.xlu0 %v1800
        %v1802 = vpop.xlane.xlu0 %1801
        %v1803 = vsel %vm1661, %v1745, 0.0
        %1804 = vadd.xlane.f32.xlu0 %v1803
        %v1805 = vpop.xlane.xlu0 %1804
        %v1806 = vsel %vm1661, %v1748, 0.0
        %1807 = vadd.xlane.f32.xlu0 %v1806
        %v1808 = vpop.xlane.xlu0 %1807
        %v1809 = vsel %vm1661, %v1753, 0.0
        %1810 = vadd.xlane.f32.xlu0 %v1809
        %v1811 = vpop.xlane.xlu0 %1810
        %v1812 = vsel %vm1661, %v1756, 0.0
        %1813 = vadd.xlane.f32.xlu0 %v1812
        %v1814 = vpop.xlane.xlu0 %1813
        %v1815 = vsel %vm1661, %v1761, 0.0
        %1816 = vadd.xlane.f32.xlu0 %v1815
        %v1817 = vpop.xlane.xlu0 %1816
        %v1818 = vsel %vm1661, %v1764, 0.0
        %1819 = vadd.xlane.f32.xlu0 %v1818
        %v1820 = vpop.xlane.xlu0 %1819
        %v1821 = vsel %vm1661, %v1769, 0.0
        %1822 = vadd.xlane.f32.xlu0 %v1821
        %v1823 = vpop.xlane.xlu0 %1822
        %v1824 = vsel %vm1661, %v1772, 0.0
        %1825 = vadd.xlane.f32.xlu0 %v1824
        %v1826 = vpop.xlane.xlu0 %1825
        %v1827 = vsel %vm1661, %v1777, 0.0
        %1828 = vadd.xlane.f32.xlu0 %v1827
        %v1829 = vpop.xlane.xlu0 %1828
        %v1830 = vsel %vm1661, %v1780, 0.0
        %1831 = vadd.xlane.f32.xlu0 %v1830
        %v1832 = vpop.xlane.xlu0 %1831
        %v1833 = vrcp.pop 64.0
        %v1834 = vmul.f32 %v1787, %v1833
        %v1835 = vmul.f32 %v1790, %v1833
        %v1836 = vmul.f32 %v1793, %v1833
        %v1837 = vmul.f32 %v1796, %v1833
        %v1838 = vmul.f32 %v1799, %v1833
        %v1839 = vmul.f32 %v1802, %v1833
        %v1840 = vmul.f32 %v1805, %v1833
        %v1841 = vmul.f32 %v1808, %v1833
        %v1842 = vmul.f32 %v1811, %v1833
        %v1843 = vmul.f32 %v1814, %v1833
        %v1844 = vmul.f32 %v1817, %v1833
        %v1845 = vmul.f32 %v1820, %v1833
        %v1846 = vmul.f32 %v1823, %v1833
        %v1847 = vmul.f32 %v1826, %v1833
        %v1848 = vmul.f32 %v1829, %v1833
        %v1849 = vmul.f32 %v1832, %v1833
        %v1850 = vsub.f32 %v1721, %v1834
        %v1851 = vsub.f32 %v1724, %v1835
        %v1852 = vsub.f32 %v1729, %v1836
        %v1853 = vsub.f32 %v1732, %v1837
        %v1854 = vsub.f32 %v1737, %v1838
        %v1855 = vsub.f32 %v1740, %v1839
        %v1856 = vsub.f32 %v1745, %v1840
        %v1857 = vsub.f32 %v1748, %v1841
        %v1858 = vsub.f32 %v1753, %v1842
        %v1859 = vsub.f32 %v1756, %v1843
        %v1860 = vsub.f32 %v1761, %v1844
        %v1861 = vsub.f32 %v1764, %v1845
        %v1862 = vsub.f32 %v1769, %v1846
        %v1863 = vsub.f32 %v1772, %v1847
        %v1864 = vsub.f32 %v1777, %v1848
        %v1865 = vsub.f32 %v1780, %v1849
        %v1866 = vmul.f32 %v1850, %v1850
        %v1867 = vmul.f32 %v1851, %v1851
        %v1868 = vmul.f32 %v1852, %v1852
        %v1869 = vmul.f32 %v1853, %v1853
        %v1870 = vmul.f32 %v1854, %v1854
        %v1871 = vmul.f32 %v1855, %v1855
        %v1872 = vmul.f32 %v1856, %v1856
        %v1873 = vmul.f32 %v1857, %v1857
        %v1874 = vmul.f32 %v1858, %v1858
        %v1875 = vmul.f32 %v1859, %v1859
        %v1876 = vmul.f32 %v1860, %v1860
        %v1877 = vmul.f32 %v1861, %v1861
        %v1878 = vmul.f32 %v1862, %v1862
        %v1879 = vmul.f32 %v1863, %v1863
        %v1880 = vmul.f32 %v1864, %v1864
        %v1881 = vmul.f32 %v1865, %v1865
        %v1882 = vsel %vm1661, %v1866, 0.0
        %1883 = vadd.xlane.f32.xlu0 %v1882
        %v1884 = vpop.xlane.xlu0 %1883
        %v1885 = vsel %vm1661, %v1867, 0.0
        %1886 = vadd.xlane.f32.xlu0 %v1885
        %v1887 = vpop.xlane.xlu0 %1886
        %v1888 = vsel %vm1661, %v1868, 0.0
        %1889 = vadd.xlane.f32.xlu0 %v1888
        %v1890 = vpop.xlane.xlu0 %1889
        %v1891 = vsel %vm1661, %v1869, 0.0
        %1892 = vadd.xlane.f32.xlu0 %v1891
        %v1893 = vpop.xlane.xlu0 %1892
        %v1894 = vsel %vm1661, %v1870, 0.0
        %1895 = vadd.xlane.f32.xlu0 %v1894
        %v1896 = vpop.xlane.xlu0 %1895
        %v1897 = vsel %vm1661, %v1871, 0.0
        %1898 = vadd.xlane.f32.xlu0 %v1897
        %v1899 = vpop.xlane.xlu0 %1898
        %v1900 = vsel %vm1661, %v1872, 0.0
        %1901 = vadd.xlane.f32.xlu0 %v1900
        %v1902 = vpop.xlane.xlu0 %1901
        %v1903 = vsel %vm1661, %v1873, 0.0
        %1904 = vadd.xlane.f32.xlu0 %v1903
        %v1905 = vpop.xlane.xlu0 %1904
        %v1906 = vsel %vm1661, %v1874, 0.0
        %1907 = vadd.xlane.f32.xlu0 %v1906
        %v1908 = vpop.xlane.xlu0 %1907
        %v1909 = vsel %vm1661, %v1875, 0.0
        %1910 = vadd.xlane.f32.xlu0 %v1909
        %v1911 = vpop.xlane.xlu0 %1910
        %v1912 = vsel %vm1661, %v1876, 0.0
        %1913 = vadd.xlane.f32.xlu0 %v1912
        %v1914 = vpop.xlane.xlu0 %1913
        %v1915 = vsel %vm1661, %v1877, 0.0
        %1916 = vadd.xlane.f32.xlu0 %v1915
        %v1917 = vpop.xlane.xlu0 %1916
        %v1918 = vsel %vm1661, %v1878, 0.0
        %1919 = vadd.xlane.f32.xlu0 %v1918
        %v1920 = vpop.xlane.xlu0 %1919
        %v1921 = vsel %vm1661, %v1879, 0.0
        %1922 = vadd.xlane.f32.xlu0 %v1921
        %v1923 = vpop.xlane.xlu0 %1922
        %v1924 = vsel %vm1661, %v1880, 0.0
        %1925 = vadd.xlane.f32.xlu0 %v1924
        %v1926 = vpop.xlane.xlu0 %1925
        %v1927 = vsel %vm1661, %v1881, 0.0
        %1928 = vadd.xlane.f32.xlu0 %v1927
        %v1929 = vpop.xlane.xlu0 %1928
        %v1930 = vmul.f32 %v1884, %v1833
        %v1931 = vmul.f32 %v1887, %v1833
        %v1932 = vmul.f32 %v1890, %v1833
        %v1933 = vmul.f32 %v1893, %v1833
        %v1934 = vmul.f32 %v1896, %v1833
        %v1935 = vmul.f32 %v1899, %v1833
        %v1936 = vmul.f32 %v1902, %v1833
        %v1937 = vmul.f32 %v1905, %v1833
        %v1938 = vmul.f32 %v1908, %v1833
        %v1939 = vmul.f32 %v1911, %v1833
        %v1940 = vmul.f32 %v1914, %v1833
        %v1941 = vmul.f32 %v1917, %v1833
        %v1942 = vmul.f32 %v1920, %v1833
        %v1943 = vmul.f32 %v1923, %v1833
        %v1944 = vmul.f32 %v1926, %v1833
        %v1945 = vmul.f32 %v1929, %v1833
        %v1946 = vadd.f32 %v1930, 1e-06
        %v1947 = vadd.f32 %v1931, 1e-06
        %v1948 = vadd.f32 %v1932, 1e-06
        %v1949 = vadd.f32 %v1933, 1e-06
        %v1950 = vadd.f32 %v1934, 1e-06
        %v1951 = vadd.f32 %v1935, 1e-06
        %v1952 = vadd.f32 %v1936, 1e-06
        %v1953 = vadd.f32 %v1937, 1e-06
        %v1954 = vadd.f32 %v1938, 1e-06
        %v1955 = vadd.f32 %v1939, 1e-06
        %v1956 = vadd.f32 %v1940, 1e-06
        %v1957 = vadd.f32 %v1941, 1e-06
        %v1958 = vadd.f32 %v1942, 1e-06
        %v1959 = vadd.f32 %v1943, 1e-06
        %v1960 = vadd.f32 %v1944, 1e-06
        %v1961 = vadd.f32 %v1945, 1e-06
        %v1962 = vrsqrt.pop %v1946
        %v1963 = vrsqrt.pop %v1947
        %v1964 = vrsqrt.pop %v1948
        %v1965 = vrsqrt.pop %v1949
        %v1966 = vrsqrt.pop %v1950
        %v1967 = vrsqrt.pop %v1951
        %v1968 = vrsqrt.pop %v1952
        %v1969 = vrsqrt.pop %v1953
        %v1970 = vrsqrt.pop %v1954
        %v1971 = vrsqrt.pop %v1955
        %v1972 = vrsqrt.pop %v1956
        %v1973 = vrsqrt.pop %v1957
        %v1974 = vrsqrt.pop %v1958
        %v1975 = vrsqrt.pop %v1959
        %v1976 = vrsqrt.pop %v1960
        %v1977 = vrsqrt.pop %v1961
        %v1978 = vmul.f32 %v1850, %v1962
        %v1979 = vmul.f32 %v1851, %v1963
        %v1980 = vmul.f32 %v1852, %v1964
        %v1981 = vmul.f32 %v1853, %v1965
        %v1982 = vmul.f32 %v1854, %v1966
        %v1983 = vmul.f32 %v1855, %v1967
        %v1984 = vmul.f32 %v1856, %v1968
        %v1985 = vmul.f32 %v1857, %v1969
        %v1986 = vmul.f32 %v1858, %v1970
        %v1987 = vmul.f32 %v1859, %v1971
        %v1988 = vmul.f32 %v1860, %v1972
        %v1989 = vmul.f32 %v1861, %v1973
        %v1990 = vmul.f32 %v1862, %v1974
        %v1991 = vmul.f32 %v1863, %v1975
        %v1992 = vmul.f32 %v1864, %v1976
        %v1993 = vmul.f32 %v1865, %v1977
        %v1995 = vlaneseq
        %v1996 = vshrl.u32 %v1995, 7
        %v1997 = vsub.s32 0, %v1996
        %v1998 = vrot.slane %v1783, %v1997
        %v2000 = vmul.f32 %v1978, %v1998
        %v2001 = vmul.f32 %v1979, %v1998
        %v2002 = vmul.f32 %v1980, %v1998
        %v2003 = vmul.f32 %v1981, %v1998
        %v2004 = vmul.f32 %v1982, %v1998
        %v2005 = vmul.f32 %v1983, %v1998
        %v2006 = vmul.f32 %v1984, %v1998
        %v2007 = vmul.f32 %v1985, %v1998
        %v2008 = vmul.f32 %v1986, %v1998
        %v2009 = vmul.f32 %v1987, %v1998
        %v2010 = vmul.f32 %v1988, %v1998
        %v2011 = vmul.f32 %v1989, %v1998
        %v2012 = vmul.f32 %v1990, %v1998
        %v2013 = vmul.f32 %v1991, %v1998
        %v2014 = vmul.f32 %v1992, %v1998
        %v2015 = vmul.f32 %v1993, %v1998
        %v2017 = vlaneseq
        %v2018 = vshrl.u32 %v2017, 7
        %v2019 = vsub.s32 0, %v2018
        %v2020 = vrot.slane %v1784, %v2019
        %v2022 = vadd.f32 %v2000, %v2020
        %v2023 = vadd.f32 %v2001, %v2020
        %v2024 = vadd.f32 %v2002, %v2020
        %v2025 = vadd.f32 %v2003, %v2020
        %v2026 = vadd.f32 %v2004, %v2020
        %v2027 = vadd.f32 %v2005, %v2020
        %v2028 = vadd.f32 %v2006, %v2020
        %v2029 = vadd.f32 %v2007, %v2020
        %v2030 = vadd.f32 %v2008, %v2020
        %v2031 = vadd.f32 %v2009, %v2020
        %v2032 = vadd.f32 %v2010, %v2020
        %v2033 = vadd.f32 %v2011, %v2020
        %v2034 = vadd.f32 %v2012, %v2020
        %v2035 = vadd.f32 %v2013, %v2020
        %v2036 = vadd.f32 %v2014, %v2020
        %v2037 = vadd.f32 %v2015, %v2020
        %v2038 = vpack.c.bf16 %v2023, %v2022
        %v2039 = vpack.c.bf16 %v2025, %v2024
        %v2040 = vpack.c.bf16 %v2027, %v2026
        %v2041 = vpack.c.bf16 %v2029, %v2028
        %v2042 = vpack.c.bf16 %v2031, %v2030
        %v2043 = vpack.c.bf16 %v2033, %v2032
        %v2044 = vpack.c.bf16 %v2035, %v2034
        %v2045 = vpack.c.bf16 %v2037, %v2036
        %v2046 = vld [vmem:[%s8] sm:$0xf]
        %v2047 = vld [vmem:[%s8 + $0x4] sm:$0xf]
        %v2048 = vld [vmem:[%s8 + $0x8] sm:$0xf]
        %v2049 = vld [vmem:[%s8 + $0xc] sm:$0xf]
        %v2050 = vld [vmem:[%s8 + $0x10] sm:$0xf]
        %v2051 = vld [vmem:[%s8 + $0x14] sm:$0xf]
        %v2052 = vld [vmem:[%s8 + $0x18] sm:$0xf]
        %v2053 = vld [vmem:[%s8 + $0x1c] sm:$0xf]
        %v2062 = vunpack.c.l.b16 %v2046
        %v2063 = vunpack.c.l.b16 %v2047
        %v2064 = vunpack.c.l.b16 %v2048
        %v2065 = vunpack.c.l.b16 %v2049
        %v2066 = vunpack.c.l.b16 %v2050
        %v2067 = vunpack.c.l.b16 %v2051
        %v2068 = vunpack.c.l.b16 %v2052
        %v2069 = vunpack.c.l.b16 %v2053
        %v2070 = vpack.c.b16 %v2063, %v2062
        %v2071 = vpack.c.b16 %v2065, %v2064
        %v2072 = vpack.c.b16 %v2067, %v2066
        %v2073 = vpack.c.b16 %v2069, %v2068
        %v2079 = vsel %vm1661, %v2038, 0
        %v2082 = vsel %vm1661, %v2039, 0
        %v2085 = vsel %vm1661, %v2040, 0
        %v2088 = vsel %vm1661, %v2041, 0
        %v2091 = vsel %vm1661, %v2042, 0
        %v2094 = vsel %vm1661, %v2043, 0
        %v2097 = vsel %vm1661, %v2044, 0
        %v2100 = vsel %vm1661, %v2045, 0
        %2102 = vmatprep.subr.bf16.mxu0 0
        %2103 = vmatpush1.bf16.msra.mxu0 %v2070
        %2104 = vmatprep.subr.bf16.mxu0 0
        %2105 = vmatpush1.bf16.msra.mxu0 %v2071
        %2106 = vmatprep.subr.bf16.mxu0 0
        %2107 = vmatpush1.bf16.msra.mxu0 %v2072
        %2108 = vmatprep.subr.bf16.mxu0 0
        %2109 = vmatpush1.bf16.msra.mxu0 %v2073
        %2110 = vmatprep.subr.bf16.mxu0 0
        %2111 = vmatpush1.bf16.msra.mxu0 0
        %2112 = vmatprep.subr.bf16.mxu0 0
        %2113 = vmatpush1.bf16.msra.mxu0 0
        %2114 = vmatprep.subr.bf16.mxu0 0
        %2115 = vmatpush1.bf16.msra.mxu0 0
        %2116 = vmatprep.subr.bf16.mxu0 0
        %2117 = vmatpush1.bf16.msra.mxu0 0
        %2118 = vmatprep.subr.bf16.mxu0 0
        %2119 = vmatpush1.bf16.msra.mxu0 0
        %2120 = vmatprep.subr.bf16.mxu0 0
        %2121 = vmatpush1.bf16.msra.mxu0 0
        %2122 = vmatprep.subr.bf16.mxu0 0
        %2123 = vmatpush1.bf16.msra.mxu0 0
        %2124 = vmatprep.subr.bf16.mxu0 0
        %2125 = vmatpush1.bf16.msra.mxu0 0
        %2126 = vmatprep.subr.bf16.mxu0 0
        %2127 = vmatpush1.bf16.msra.mxu0 0
        %2128 = vmatprep.subr.bf16.mxu0 0
        %2129 = vmatpush1.bf16.msra.mxu0 0
        %2130 = vmatprep.subr.bf16.mxu0 0
        %2131 = vmatpush1.bf16.msra.mxu0 0
        %2132 = vmatprep.subr.bf16.mxu0 0
        %2133 = vmatpush1.bf16.msra.mxu0 0
        %2134 = vmatprep.mubr.bf16.mxu0 0
        %2135 = vmatmul.mubr.bf16.gmra.mrb[0].mxu0 %v2079
        %v2136 = vpop.f32.mrb[0].mxu0
        %v2137 = vadd.f32 0.0, %v2136
        %v2138 = vpop.f32.mrb[0].mxu0
        %v2139 = vpop.f32.mrb[0].mxu0
        %v2140 = vadd.f32 0.0, %v2139
        %v2141 = vpop.f32.mrb[0].mxu0
        %2142 = vmatprep.mubr.bf16.mxu0 0
        %2143 = vmatmul.mubr.bf16.gmra.mrb[0].mxu0 %v2082
        %v2144 = vpop.f32.mrb[0].mxu0
        %v2145 = vadd.f32 0.0, %v2144
        %v2146 = vpop.f32.mrb[0].mxu0
        %v2147 = vpop.f32.mrb[0].mxu0
        %v2148 = vadd.f32 0.0, %v2147
        %v2149 = vpop.f32.mrb[0].mxu0
        %2150 = vmatprep.mubr.bf16.mxu0 0
        %2151 = vmatmul.mubr.bf16.gmra.mrb[0].mxu0 %v2085
        %v2152 = vpop.f32.mrb[0].mxu0
        %v2153 = vadd.f32 0.0, %v2152
        %v2154 = vpop.f32.mrb[0].mxu0
        %v2155 = vpop.f32.mrb[0].mxu0
        %v2156 = vadd.f32 0.0, %v2155
        %v2157 = vpop.f32.mrb[0].mxu0
        %2158 = vmatprep.mubr.bf16.mxu0 0
        %2159 = vmatmul.mubr.bf16.gmra.mrb[0].mxu0 %v2088
        %v2160 = vpop.f32.mrb[0].mxu0
        %v2161 = vadd.f32 0.0, %v2160
        %v2162 = vpop.f32.mrb[0].mxu0
        %v2163 = vpop.f32.mrb[0].mxu0
        %v2164 = vadd.f32 0.0, %v2163
        %v2165 = vpop.f32.mrb[0].mxu0
        %2166 = vmatprep.mubr.bf16.mxu0 0
        %2167 = vmatmul.mubr.bf16.gmra.mrb[0].mxu0 %v2091
        %v2168 = vpop.f32.mrb[0].mxu0
        %v2169 = vadd.f32 0.0, %v2168
        %v2170 = vpop.f32.mrb[0].mxu0
        %v2171 = vpop.f32.mrb[0].mxu0
        %v2172 = vadd.f32 0.0, %v2171
        %v2173 = vpop.f32.mrb[0].mxu0
        %2174 = vmatprep.mubr.bf16.mxu0 0
        %2175 = vmatmul.mubr.bf16.gmra.mrb[0].mxu0 %v2094
        %v2176 = vpop.f32.mrb[0].mxu0
        %v2177 = vadd.f32 0.0, %v2176
        %v2178 = vpop.f32.mrb[0].mxu0
        %v2179 = vpop.f32.mrb[0].mxu0
        %v2180 = vadd.f32 0.0, %v2179
        %v2181 = vpop.f32.mrb[0].mxu0
        %2182 = vmatprep.mubr.bf16.mxu0 0
        %2183 = vmatmul.mubr.bf16.gmra.mrb[0].mxu0 %v2097
        %v2184 = vpop.f32.mrb[0].mxu0
        %v2185 = vadd.f32 0.0, %v2184
        %v2186 = vpop.f32.mrb[0].mxu0
        %v2187 = vpop.f32.mrb[0].mxu0
        %v2188 = vadd.f32 0.0, %v2187
        %v2189 = vpop.f32.mrb[0].mxu0
        %2190 = vmatprep.mubr.bf16.mxu0 0
        %2191 = vmatmul.mubr.bf16.gmra.mrb[0].mxu0 %v2100
        %v2192 = vpop.f32.mrb[0].mxu0
        %v2193 = vadd.f32 0.0, %v2192
        %v2194 = vpop.f32.mrb[0].mxu0
        %v2195 = vpop.f32.mrb[0].mxu0
        %v2196 = vadd.f32 0.0, %v2195
        %v2197 = vpop.f32.mrb[0].mxu0
        %2198 = vdwg.mxu0
        %v2199 = vld [vmem:[%s11] sm:$0xff]
        %v2200 = vld [vmem:[%s11 + $0x8] sm:$0xff]
        %v2201 = vld [vmem:[%s11 + $0x10] sm:$0xff]
        %v2202 = vld [vmem:[%s11 + $0x18] sm:$0xff]
        %v2203 = vld [vmem:[%s11 + $0x20] sm:$0xff]
        %v2204 = vld [vmem:[%s11 + $0x28] sm:$0xff]
        %v2205 = vld [vmem:[%s11 + $0x30] sm:$0xff]
        %v2206 = vld [vmem:[%s11 + $0x38] sm:$0xff]
        %v2207 = vld [vmem:[%s12] sm:$0x1]
        %v2208 = vld [vmem:[%s13] sm:$0x1]
        %v2210 = vsel %vm1661, %v2137, 0
        %v2213 = vsel %vm1661, %v2140, 0
        %v2216 = vsel %vm1661, %v2145, 0
        %v2219 = vsel %vm1661, %v2148, 0
        %v2222 = vsel %vm1661, %v2153, 0
        %v2225 = vsel %vm1661, %v2156, 0
        %v2228 = vsel %vm1661, %v2161, 0
        %v2231 = vsel %vm1661, %v2164, 0
        %v2234 = vsel %vm1661, %v2169, 0
        %v2237 = vsel %vm1661, %v2172, 0
        %v2240 = vsel %vm1661, %v2177, 0
        %v2243 = vsel %vm1661, %v2180, 0
        %v2246 = vsel %vm1661, %v2185, 0
        %v2249 = vsel %vm1661, %v2188, 0
        %v2252 = vsel %vm1661, %v2193, 0
        %v2255 = vsel %vm1661, %v2196, 0
        %2257 = vmatprep.subr.mxu0 0.0
        %2258 = vmatpush1.msra.mxu0 %v2199
        %2259 = vmatprep.subr.mxu0 0.0
        %2260 = vmatpush1.msra.mxu0 %v2200
        %2261 = vmatprep.subr.mxu0 0.0
        %2262 = vmatpush1.msra.mxu0 %v2201
        %2263 = vmatprep.subr.mxu0 0.0
        %2264 = vmatpush1.msra.mxu0 %v2202
        %2265 = vmatprep.subr.mxu0 0.0
        %2266 = vmatpush1.msra.mxu0 %v2203
        %2267 = vmatprep.subr.mxu0 0.0
        %2268 = vmatpush1.msra.mxu0 %v2204
        %2269 = vmatprep.subr.mxu0 0.0
        %2270 = vmatpush1.msra.mxu0 %v2205
        %2271 = vmatprep.subr.mxu0 0.0
        %2272 = vmatpush1.msra.mxu0 %v2206
        %2273 = vmatprep.subr.mxu0 0.0
        %2274 = vmatpush1.msra.mxu0 0.0
        %2275 = vmatprep.subr.mxu0 0.0
        %2276 = vmatpush1.msra.mxu0 0.0
        %2277 = vmatprep.subr.mxu0 0.0
        %2278 = vmatpush1.msra.mxu0 0.0
        %2279 = vmatprep.subr.mxu0 0.0
        %2280 = vmatpush1.msra.mxu0 0.0
        %2281 = vmatprep.subr.mxu0 0.0
        %2282 = vmatpush1.msra.mxu0 0.0
        %2283 = vmatprep.subr.mxu0 0.0
        %2284 = vmatpush1.msra.mxu0 0.0
        %2285 = vmatprep.subr.mxu0 0.0
        %2286 = vmatpush1.msra.mxu0 0.0
        %2287 = vmatprep.subr.mxu0 0.0
        %2288 = vmatpush1.msra.mxu0 0.0
        %2289 = vmatprep.subr.mxu0 0.0
        %2290 = vmatpush1.msra.mxu0 0.0
        %2291 = vmatprep.subr.mxu0 0.0
        %2292 = vmatpush1.msra.mxu0 0.0
        %2293 = vmatprep.subr.mxu0 0.0
        %2294 = vmatpush1.msra.mxu0 0.0
        %2295 = vmatprep.subr.mxu0 0.0
        %2296 = vmatpush1.msra.mxu0 0.0
        %2297 = vmatprep.subr.mxu0 0.0
        %2298 = vmatpush1.msra.mxu0 0.0
        %2299 = vmatprep.subr.mxu0 0.0
        %2300 = vmatpush1.msra.mxu0 0.0
        %2301 = vmatprep.subr.mxu0 0.0
        %2302 = vmatpush1.msra.mxu0 0.0
        %2303 = vmatprep.subr.mxu0 0.0
        %2304 = vmatpush1.msra.mxu0 0.0
        %2305 = vmatprep.subr.mxu0 0.0
        %2306 = vmatpush1.msra.mxu0 0.0
        %2307 = vmatprep.subr.mxu0 0.0
        %2308 = vmatpush1.msra.mxu0 0.0
        %2309 = vmatprep.subr.mxu0 0.0
        %2310 = vmatpush1.msra.mxu0 0.0
        %2311 = vmatprep.subr.mxu0 0.0
        %2312 = vmatpush1.msra.mxu0 0.0
        %2313 = vmatprep.subr.mxu0 0.0
        %2314 = vmatpush1.msra.mxu0 0.0
        %2315 = vmatprep.subr.mxu0 0.0
        %2316 = vmatpush1.msra.mxu0 0.0
        %2317 = vmatprep.subr.mxu0 0.0
        %2318 = vmatpush1.msra.mxu0 0.0
        %2319 = vmatprep.subr.mxu0 0.0
        %2320 = vmatpush1.msra.mxu0 0.0
        %2321 = vmatprep.mubr.f32.mxu0 0.0
        %2322 = vmatmul.mubr.f32.gmra.mrb[0].mxu0 %v2210
        %v2323 = vpop.f32.mrb[0].mxu0
        %v2324 = vadd.f32 0.0, %v2323
        %v2325 = vpop.f32.mrb[0].mxu0
        %2326 = vmatprep.mubr.f32.mxu0 0.0
        %2327 = vmatmul.mubr.f32.gmra.mrb[0].mxu0 %v2213
        %v2328 = vpop.f32.mrb[0].mxu0
        %v2329 = vadd.f32 0.0, %v2328
        %v2330 = vpop.f32.mrb[0].mxu0
        %2331 = vmatprep.mubr.f32.mxu0 0.0
        %2332 = vmatmul.mubr.f32.gmra.mrb[0].mxu0 %v2216
        %v2333 = vpop.f32.mrb[0].mxu0
        %v2334 = vadd.f32 0.0, %v2333
        %v2335 = vpop.f32.mrb[0].mxu0
        %2336 = vmatprep.mubr.f32.mxu0 0.0
        %2337 = vmatmul.mubr.f32.gmra.mrb[0].mxu0 %v2219
        %v2338 = vpop.f32.mrb[0].mxu0
        %v2339 = vadd.f32 0.0, %v2338
        %v2340 = vpop.f32.mrb[0].mxu0
        %2341 = vmatprep.mubr.f32.mxu0 0.0
        %2342 = vmatmul.mubr.f32.gmra.mrb[0].mxu0 %v2222
        %v2343 = vpop.f32.mrb[0].mxu0
        %v2344 = vadd.f32 0.0, %v2343
        %v2345 = vpop.f32.mrb[0].mxu0
        %2346 = vmatprep.mubr.f32.mxu0 0.0
        %2347 = vmatmul.mubr.f32.gmra.mrb[0].mxu0 %v2225
        %v2348 = vpop.f32.mrb[0].mxu0
        %v2349 = vadd.f32 0.0, %v2348
        %v2350 = vpop.f32.mrb[0].mxu0
        %2351 = vmatprep.mubr.f32.mxu0 0.0
        %2352 = vmatmul.mubr.f32.gmra.mrb[0].mxu0 %v2228
        %v2353 = vpop.f32.mrb[0].mxu0
        %v2354 = vadd.f32 0.0, %v2353
        %v2355 = vpop.f32.mrb[0].mxu0
        %2356 = vmatprep.mubr.f32.mxu0 0.0
        %2357 = vmatmul.mubr.f32.gmra.mrb[0].mxu0 %v2231
        %v2358 = vpop.f32.mrb[0].mxu0
        %v2359 = vadd.f32 0.0, %v2358
        %v2360 = vpop.f32.mrb[0].mxu0
        %2361 = vmatprep.mubr.f32.mxu0 0.0
        %2362 = vmatmul.mubr.f32.gmra.mrb[0].mxu0 %v2234
        %v2363 = vpop.f32.mrb[0].mxu0
        %v2364 = vadd.f32 0.0, %v2363
        %v2365 = vpop.f32.mrb[0].mxu0
        %2366 = vmatprep.mubr.f32.mxu0 0.0
        %2367 = vmatmul.mubr.f32.gmra.mrb[0].mxu0 %v2237
        %v2368 = vpop.f32.mrb[0].mxu0
        %v2369 = vadd.f32 0.0, %v2368
        %v2370 = vpop.f32.mrb[0].mxu0
        %2371 = vmatprep.mubr.f32.mxu0 0.0
        %2372 = vmatmul.mubr.f32.gmra.mrb[0].mxu0 %v2240
        %v2373 = vpop.f32.mrb[0].mxu0
        %v2374 = vadd.f32 0.0, %v2373
        %v2375 = vpop.f32.mrb[0].mxu0
        %2376 = vmatprep.mubr.f32.mxu0 0.0
        %2377 = vmatmul.mubr.f32.gmra.mrb[0].mxu0 %v2243
        %v2378 = vpop.f32.mrb[0].mxu0
        %v2379 = vadd.f32 0.0, %v2378
        %v2380 = vpop.f32.mrb[0].mxu0
        %2381 = vmatprep.mubr.f32.mxu0 0.0
        %2382 = vmatmul.mubr.f32.gmra.mrb[0].mxu0 %v2246
        %v2383 = vpop.f32.mrb[0].mxu0
        %v2384 = vadd.f32 0.0, %v2383
        %v2385 = vpop.f32.mrb[0].mxu0
        %2386 = vmatprep.mubr.f32.mxu0 0.0
        %2387 = vmatmul.mubr.f32.gmra.mrb[0].mxu0 %v2249
        %v2388 = vpop.f32.mrb[0].mxu0
        %v2389 = vadd.f32 0.0, %v2388
        %v2390 = vpop.f32.mrb[0].mxu0
        %2391 = vmatprep.mubr.f32.mxu0 0.0
        %2392 = vmatmul.mubr.f32.gmra.mrb[0].mxu0 %v2252
        %v2393 = vpop.f32.mrb[0].mxu0
        %v2394 = vadd.f32 0.0, %v2393
        %v2395 = vpop.f32.mrb[0].mxu0
        %2396 = vmatprep.mubr.f32.mxu0 0.0
        %2397 = vmatmul.mubr.f32.gmra.mrb[0].mxu0 %v2255
        %v2398 = vpop.f32.mrb[0].mxu0
        %v2399 = vadd.f32 0.0, %v2398
        %v2400 = vpop.f32.mrb[0].mxu0
        %2401 = vdwg.mxu0
        %v2402 = vsub.f32 %v2137, %v2324
        %v2403 = vsub.f32 %v2140, %v2329
        %v2404 = vsub.f32 %v2145, %v2334
        %v2405 = vsub.f32 %v2148, %v2339
        %v2406 = vsub.f32 %v2153, %v2344
        %v2407 = vsub.f32 %v2156, %v2349
        %v2408 = vsub.f32 %v2161, %v2354
        %v2409 = vsub.f32 %v2164, %v2359
        %v2410 = vsub.f32 %v2169, %v2364
        %v2411 = vsub.f32 %v2172, %v2369
        %v2412 = vsub.f32 %v2177, %v2374
        %v2413 = vsub.f32 %v2180, %v2379
        %v2414 = vsub.f32 %v2185, %v2384
        %v2415 = vsub.f32 %v2188, %v2389
        %v2416 = vsub.f32 %v2193, %v2394
        %v2417 = vsub.f32 %v2196, %v2399
        %v2418 = vmul.f32 %v2402, %v2402
        %v2419 = vmul.f32 %v2403, %v2403
        %v2420 = vmul.f32 %v2404, %v2404
        %v2421 = vmul.f32 %v2405, %v2405
        %v2422 = vmul.f32 %v2406, %v2406
        %v2423 = vmul.f32 %v2407, %v2407
        %v2424 = vmul.f32 %v2408, %v2408
        %v2425 = vmul.f32 %v2409, %v2409
        %v2426 = vmul.f32 %v2410, %v2410
        %v2427 = vmul.f32 %v2411, %v2411
        %v2428 = vmul.f32 %v2412, %v2412
        %v2429 = vmul.f32 %v2413, %v2413
        %v2430 = vmul.f32 %v2414, %v2414
        %v2431 = vmul.f32 %v2415, %v2415
        %v2432 = vmul.f32 %v2416, %v2416
        %v2433 = vmul.f32 %v2417, %v2417
        %v2435 = vsel %vm1661, %v2418, 0
        %v2438 = vsel %vm1661, %v2419, 0
        %v2441 = vsel %vm1661, %v2420, 0
        %v2444 = vsel %vm1661, %v2421, 0
        %v2447 = vsel %vm1661, %v2422, 0
        %v2450 = vsel %vm1661, %v2423, 0
        %v2453 = vsel %vm1661, %v2424, 0
        %v2456 = vsel %vm1661, %v2425, 0
        %v2459 = vsel %vm1661, %v2426, 0
        %v2462 = vsel %vm1661, %v2427, 0
        %v2465 = vsel %vm1661, %v2428, 0
        %v2468 = vsel %vm1661, %v2429, 0
        %v2471 = vsel %vm1661, %v2430, 0
        %v2474 = vsel %vm1661, %v2431, 0
        %v2477 = vsel %vm1661, %v2432, 0
        %v2480 = vsel %vm1661, %v2433, 0
        %2482 = vmatprep.subr.mxu0 0.0
        %2483 = vmatpush1.msra.mxu0 %v2199
        %2484 = vmatprep.subr.mxu0 0.0
        %2485 = vmatpush1.msra.mxu0 %v2200
        %2486 = vmatprep.subr.mxu0 0.0
        %2487 = vmatpush1.msra.mxu0 %v2201
        %2488 = vmatprep.subr.mxu0 0.0
        %2489 = vmatpush1.msra.mxu0 %v2202
        %2490 = vmatprep.subr.mxu0 0.0
        %2491 = vmatpush1.msra.mxu0 %v2203
        %2492 = vmatprep.subr.mxu0 0.0
        %2493 = vmatpush1.msra.mxu0 %v2204
        %2494 = vmatprep.subr.mxu0 0.0
        %2495 = vmatpush1.msra.mxu0 %v2205
        %2496 = vmatprep.subr.mxu0 0.0
        %2497 = vmatpush1.msra.mxu0 %v2206
        %2498 = vmatprep.subr.mxu0 0.0
        %2499 = vmatpush1.msra.mxu0 0.0
        %2500 = vmatprep.subr.mxu0 0.0
        %2501 = vmatpush1.msra.mxu0 0.0
        %2502 = vmatprep.subr.mxu0 0.0
        %2503 = vmatpush1.msra.mxu0 0.0
        %2504 = vmatprep.subr.mxu0 0.0
        %2505 = vmatpush1.msra.mxu0 0.0
        %2506 = vmatprep.subr.mxu0 0.0
        %2507 = vmatpush1.msra.mxu0 0.0
        %2508 = vmatprep.subr.mxu0 0.0
        %2509 = vmatpush1.msra.mxu0 0.0
        %2510 = vmatprep.subr.mxu0 0.0
        %2511 = vmatpush1.msra.mxu0 0.0
        %2512 = vmatprep.subr.mxu0 0.0
        %2513 = vmatpush1.msra.mxu0 0.0
        %2514 = vmatprep.subr.mxu0 0.0
        %2515 = vmatpush1.msra.mxu0 0.0
        %2516 = vmatprep.subr.mxu0 0.0
        %2517 = vmatpush1.msra.mxu0 0.0
        %2518 = vmatprep.subr.mxu0 0.0
        %2519 = vmatpush1.msra.mxu0 0.0
        %2520 = vmatprep.subr.mxu0 0.0
        %2521 = vmatpush1.msra.mxu0 0.0
        %2522 = vmatprep.subr.mxu0 0.0
        %2523 = vmatpush1.msra.mxu0 0.0
        %2524 = vmatprep.subr.mxu0 0.0
        %2525 = vmatpush1.msra.mxu0 0.0
        %2526 = vmatprep.subr.mxu0 0.0
        %2527 = vmatpush1.msra.mxu0 0.0
        %2528 = vmatprep.subr.mxu0 0.0
        %2529 = vmatpush1.msra.mxu0 0.0
        %2530 = vmatprep.subr.mxu0 0.0
        %2531 = vmatpush1.msra.mxu0 0.0
        %2532 = vmatprep.subr.mxu0 0.0
        %2533 = vmatpush1.msra.mxu0 0.0
        %2534 = vmatprep.subr.mxu0 0.0
        %2535 = vmatpush1.msra.mxu0 0.0
        %2536 = vmatprep.subr.mxu0 0.0
        %2537 = vmatpush1.msra.mxu0 0.0
        %2538 = vmatprep.subr.mxu0 0.0
        %2539 = vmatpush1.msra.mxu0 0.0
        %2540 = vmatprep.subr.mxu0 0.0
        %2541 = vmatpush1.msra.mxu0 0.0
        %2542 = vmatprep.subr.mxu0 0.0
        %2543 = vmatpush1.msra.mxu0 0.0
        %2544 = vmatprep.subr.mxu0 0.0
        %2545 = vmatpush1.msra.mxu0 0.0
        %2546 = vmatprep.mubr.f32.mxu0 0.0
        %2547 = vmatmul.mubr.f32.gmra.mrb[0].mxu0 %v2435
        %v2548 = vpop.f32.mrb[0].mxu0
        %v2549 = vadd.f32 1e-06, %v2548
        %v2550 = vpop.f32.mrb[0].mxu0
        %2551 = vmatprep.mubr.f32.mxu0 0.0
        %2552 = vmatmul.mubr.f32.gmra.mrb[0].mxu0 %v2438
        %v2553 = vpop.f32.mrb[0].mxu0
        %v2554 = vadd.f32 1e-06, %v2553
        %v2555 = vpop.f32.mrb[0].mxu0
        %2556 = vmatprep.mubr.f32.mxu0 0.0
        %2557 = vmatmul.mubr.f32.gmra.mrb[0].mxu0 %v2441
        %v2558 = vpop.f32.mrb[0].mxu0
        %v2559 = vadd.f32 1e-06, %v2558
        %v2560 = vpop.f32.mrb[0].mxu0
        %2561 = vmatprep.mubr.f32.mxu0 0.0
        %2562 = vmatmul.mubr.f32.gmra.mrb[0].mxu0 %v2444
        %v2563 = vpop.f32.mrb[0].mxu0
        %v2564 = vadd.f32 1e-06, %v2563
        %v2565 = vpop.f32.mrb[0].mxu0
        %2566 = vmatprep.mubr.f32.mxu0 0.0
        %2567 = vmatmul.mubr.f32.gmra.mrb[0].mxu0 %v2447
        %v2568 = vpop.f32.mrb[0].mxu0
        %v2569 = vadd.f32 1e-06, %v2568
        %v2570 = vpop.f32.mrb[0].mxu0
        %2571 = vmatprep.mubr.f32.mxu0 0.0
        %2572 = vmatmul.mubr.f32.gmra.mrb[0].mxu0 %v2450
        %v2573 = vpop.f32.mrb[0].mxu0
        %v2574 = vadd.f32 1e-06, %v2573
        %v2575 = vpop.f32.mrb[0].mxu0
        %2576 = vmatprep.mubr.f32.mxu0 0.0
        %2577 = vmatmul.mubr.f32.gmra.mrb[0].mxu0 %v2453
        %v2578 = vpop.f32.mrb[0].mxu0
        %v2579 = vadd.f32 1e-06, %v2578
        %v2580 = vpop.f32.mrb[0].mxu0
        %2581 = vmatprep.mubr.f32.mxu0 0.0
        %2582 = vmatmul.mubr.f32.gmra.mrb[0].mxu0 %v2456
        %v2583 = vpop.f32.mrb[0].mxu0
        %v2584 = vadd.f32 1e-06, %v2583
        %v2585 = vpop.f32.mrb[0].mxu0
        %2586 = vmatprep.mubr.f32.mxu0 0.0
        %2587 = vmatmul.mubr.f32.gmra.mrb[0].mxu0 %v2459
        %v2588 = vpop.f32.mrb[0].mxu0
        %v2589 = vadd.f32 1e-06, %v2588
        %v2590 = vpop.f32.mrb[0].mxu0
        %2591 = vmatprep.mubr.f32.mxu0 0.0
        %2592 = vmatmul.mubr.f32.gmra.mrb[0].mxu0 %v2462
        %v2593 = vpop.f32.mrb[0].mxu0
        %v2594 = vadd.f32 1e-06, %v2593
        %v2595 = vpop.f32.mrb[0].mxu0
        %2596 = vmatprep.mubr.f32.mxu0 0.0
        %2597 = vmatmul.mubr.f32.gmra.mrb[0].mxu0 %v2465
        %v2598 = vpop.f32.mrb[0].mxu0
        %v2599 = vadd.f32 1e-06, %v2598
        %v2600 = vpop.f32.mrb[0].mxu0
        %2601 = vmatprep.mubr.f32.mxu0 0.0
        %2602 = vmatmul.mubr.f32.gmra.mrb[0].mxu0 %v2468
        %v2603 = vpop.f32.mrb[0].mxu0
        %v2604 = vadd.f32 1e-06, %v2603
        %v2605 = vpop.f32.mrb[0].mxu0
        %2606 = vmatprep.mubr.f32.mxu0 0.0
        %2607 = vmatmul.mubr.f32.gmra.mrb[0].mxu0 %v2471
        %v2608 = vpop.f32.mrb[0].mxu0
        %v2609 = vadd.f32 1e-06, %v2608
        %v2610 = vpop.f32.mrb[0].mxu0
        %2611 = vmatprep.mubr.f32.mxu0 0.0
        %2612 = vmatmul.mubr.f32.gmra.mrb[0].mxu0 %v2474
        %v2613 = vpop.f32.mrb[0].mxu0
        %v2614 = vadd.f32 1e-06, %v2613
        %v2615 = vpop.f32.mrb[0].mxu0
        %2616 = vmatprep.mubr.f32.mxu0 0.0
        %2617 = vmatmul.mubr.f32.gmra.mrb[0].mxu0 %v2477
        %v2618 = vpop.f32.mrb[0].mxu0
        %v2619 = vadd.f32 1e-06, %v2618
        %v2620 = vpop.f32.mrb[0].mxu0
        %2621 = vmatprep.mubr.f32.mxu0 0.0
        %2622 = vmatmul.mubr.f32.gmra.mrb[0].mxu0 %v2480
        %v2623 = vpop.f32.mrb[0].mxu0
        %v2624 = vadd.f32 1e-06, %v2623
        %v2625 = vpop.f32.mrb[0].mxu0
        %2626 = vdwg.mxu0
        %v2627 = vrsqrt.pop %v2549
        %v2628 = vrsqrt.pop %v2554
        %v2629 = vrsqrt.pop %v2559
        %v2630 = vrsqrt.pop %v2564
        %v2631 = vrsqrt.pop %v2569
        %v2632 = vrsqrt.pop %v2574
        %v2633 = vrsqrt.pop %v2579
        %v2634 = vrsqrt.pop %v2584
        %v2635 = vrsqrt.pop %v2589
        %v2636 = vrsqrt.pop %v2594
        %v2637 = vrsqrt.pop %v2599
        %v2638 = vrsqrt.pop %v2604
        %v2639 = vrsqrt.pop %v2609
        %v2640 = vrsqrt.pop %v2614
        %v2641 = vrsqrt.pop %v2619
        %v2642 = vrsqrt.pop %v2624
        %v2643 = vmul.f32 %v2402, %v2627
        %v2644 = vmul.f32 %v2403, %v2628
        %v2645 = vmul.f32 %v2404, %v2629
        %v2646 = vmul.f32 %v2405, %v2630
        %v2647 = vmul.f32 %v2406, %v2631
        %v2648 = vmul.f32 %v2407, %v2632
        %v2649 = vmul.f32 %v2408, %v2633
        %v2650 = vmul.f32 %v2409, %v2634
        %v2651 = vmul.f32 %v2410, %v2635
        %v2652 = vmul.f32 %v2411, %v2636
        %v2653 = vmul.f32 %v2412, %v2637
        %v2654 = vmul.f32 %v2413, %v2638
        %v2655 = vmul.f32 %v2414, %v2639
        %v2656 = vmul.f32 %v2415, %v2640
        %v2657 = vmul.f32 %v2416, %v2641
        %v2658 = vmul.f32 %v2417, %v2642
        %v2660 = vlaneseq
        %v2661 = vshrl.u32 %v2660, 7
        %v2662 = vsub.s32 0, %v2661
        %v2663 = vrot.slane %v2207, %v2662
        %v2665 = vmul.f32 %v2643, %v2663
        %v2666 = vmul.f32 %v2644, %v2663
        %v2667 = vmul.f32 %v2645, %v2663
        %v2668 = vmul.f32 %v2646, %v2663
        %v2669 = vmul.f32 %v2647, %v2663
        %v2670 = vmul.f32 %v2648, %v2663
        %v2671 = vmul.f32 %v2649, %v2663
        %v2672 = vmul.f32 %v2650, %v2663
        %v2673 = vmul.f32 %v2651, %v2663
        %v2674 = vmul.f32 %v2652, %v2663
        %v2675 = vmul.f32 %v2653, %v2663
        %v2676 = vmul.f32 %v2654, %v2663
        %v2677 = vmul.f32 %v2655, %v2663
        %v2678 = vmul.f32 %v2656, %v2663
        %v2679 = vmul.f32 %v2657, %v2663
        %v2680 = vmul.f32 %v2658, %v2663
        %v2682 = vlaneseq
        %v2683 = vshrl.u32 %v2682, 7
        %v2684 = vsub.s32 0, %v2683
        %v2685 = vrot.slane %v2208, %v2684
        %v2687 = vadd.f32 %v2665, %v2685
        %v2688 = vadd.f32 %v2666, %v2685
        %v2689 = vadd.f32 %v2667, %v2685
        %v2690 = vadd.f32 %v2668, %v2685
        %v2691 = vadd.f32 %v2669, %v2685
        %v2692 = vadd.f32 %v2670, %v2685
        %v2693 = vadd.f32 %v2671, %v2685
        %v2694 = vadd.f32 %v2672, %v2685
        %v2695 = vadd.f32 %v2673, %v2685
        %v2696 = vadd.f32 %v2674, %v2685
        %v2697 = vadd.f32 %v2675, %v2685
        %v2698 = vadd.f32 %v2676, %v2685
        %v2699 = vadd.f32 %v2677, %v2685
        %v2700 = vadd.f32 %v2678, %v2685
        %v2701 = vadd.f32 %v2679, %v2685
        %v2702 = vadd.f32 %v2680, %v2685
        %v2703 = vpack.c.bf16 %v2688, %v2687
        %v2704 = vpack.c.bf16 %v2690, %v2689
        %v2705 = vpack.c.bf16 %v2692, %v2691
        %v2706 = vpack.c.bf16 %v2694, %v2693
        %v2707 = vpack.c.bf16 %v2696, %v2695
        %v2708 = vpack.c.bf16 %v2698, %v2697
        %v2709 = vpack.c.bf16 %v2700, %v2699
        %v2710 = vpack.c.bf16 %v2702, %v2701
        %v2711 = vld [vmem:[#allocation2] sm:$0xff]
        %v2712 = vld [vmem:[#allocation2 + $0x8] sm:$0xff]
        %v2713 = vld [vmem:[#allocation2 + $0x10] sm:$0xff]
        %v2714 = vld [vmem:[#allocation2 + $0x18] sm:$0xff]
        %v2715 = vld [vmem:[#allocation3] sm:$0xff]
        %v2716 = vld [vmem:[#allocation3 + $0x8] sm:$0xff]
        %v2717 = vld [vmem:[#allocation3 + $0x10] sm:$0xff]
        %v2718 = vld [vmem:[#allocation3 + $0x18] sm:$0xff]
        %vm2719 = vcmask 130048
        %v2721 = vsel %vm2719, %v2703, 0
        %v2724 = vsel %vm2719, %v2704, 0
        %v2727 = vsel %vm2719, %v2705, 0
        %v2730 = vsel %vm2719, %v2706, 0
        %v2733 = vsel %vm2719, %v2707, 0
        %v2736 = vsel %vm2719, %v2708, 0
        %v2739 = vsel %vm2719, %v2709, 0
        %v2742 = vsel %vm2719, %v2710, 0
        %v2745 = vsel %vm2719, %v2711, 0
        %v2748 = vsel %vm2719, %v2712, 0
        %v2751 = vsel %vm2719, %v2713, 0
        %v2754 = vsel %vm2719, %v2714, 0
        %2756 = vmatprep.subr.bf16.mxu0 0
        %2757 = vmatpush1.bf16.xpose.msra.mxu0 %v2745
        %2758 = vmatprep.subr.bf16.mxu0 0
        %2759 = vmatpush1.bf16.xpose.msra.mxu0 %v2748
        %2760 = vmatprep.subr.bf16.mxu0 0
        %2761 = vmatpush1.bf16.xpose.msra.mxu0 %v2751
        %2762 = vmatprep.subr.bf16.mxu0 0
        %2763 = vmatpush1.bf16.xpose.msra.mxu0 %v2754
        %2764 = vmatprep.subr.bf16.mxu0 0
        %2765 = vmatpush1.bf16.xpose.msra.mxu0 0
        %2766 = vmatprep.subr.bf16.mxu0 0
        %2767 = vmatpush1.bf16.xpose.msra.mxu0 0
        %2768 = vmatprep.subr.bf16.mxu0 0
        %2769 = vmatpush1.bf16.xpose.msra.mxu0 0
        %2770 = vmatprep.subr.bf16.mxu0 0
        %2771 = vmatpush1.bf16.xpose.msra.mxu0 0
        %2772 = vmatprep.subr.bf16.mxu0 0
        %2773 = vmatpush1.bf16.xpose.msra.mxu0 0
        %2774 = vmatprep.subr.bf16.mxu0 0
        %2775 = vmatpush1.bf16.xpose.msra.mxu0 0
        %2776 = vmatprep.subr.bf16.mxu0 0
        %2777 = vmatpush1.bf16.xpose.msra.mxu0 0
        %2778 = vmatprep.subr.bf16.mxu0 0
        %2779 = vmatpush1.bf16.xpose.msra.mxu0 0
        %2780 = vmatprep.subr.bf16.mxu0 0
        %2781 = vmatpush1.bf16.xpose.msra.mxu0 0
        %2782 = vmatprep.subr.bf16.mxu0 0
        %2783 = vmatpush1.bf16.xpose.msra.mxu0 0
        %2784 = vmatprep.subr.bf16.mxu0 0
        %2785 = vmatpush1.bf16.xpose.msra.mxu0 0
        %2786 = vmatprep.subr.bf16.mxu0 0
        %2787 = vmatpush1.bf16.xpose.msra.mxu0 0
        %2788 = vmatprep.mubr.bf16.mxu0 0
        %2789 = vmatmul.mubr.bf16.gmra.mrb[0].mxu0 %v2721
        %v2790 = vpop.f32.mrb[0].mxu0
        %v2791 = vadd.f32 0.0, %v2790
        %v2792 = vpop.f32.mrb[0].mxu0
        %v2793 = vpop.f32.mrb[0].mxu0
        %v2794 = vadd.f32 0.0, %v2793
        %v2795 = vpop.f32.mrb[0].mxu0
        %2796 = vmatprep.mubr.bf16.mxu0 0
        %2797 = vmatmul.mubr.bf16.gmra.mrb[0].mxu0 %v2724
        %v2798 = vpop.f32.mrb[0].mxu0
        %v2799 = vadd.f32 0.0, %v2798
        %v2800 = vpop.f32.mrb[0].mxu0
        %v2801 = vpop.f32.mrb[0].mxu0
        %v2802 = vadd.f32 0.0, %v2801
        %v2803 = vpop.f32.mrb[0].mxu0
        %2804 = vmatprep.mubr.bf16.mxu0 0
        %2805 = vmatmul.mubr.bf16.gmra.mrb[0].mxu0 %v2727
        %v2806 = vpop.f32.mrb[0].mxu0
        %v2807 = vadd.f32 0.0, %v2806
        %v2808 = vpop.f32.mrb[0].mxu0
        %v2809 = vpop.f32.mrb[0].mxu0
        %v2810 = vadd.f32 0.0, %v2809
        %v2811 = vpop.f32.mrb[0].mxu0
        %2812 = vmatprep.mubr.bf16.mxu0 0
        %2813 = vmatmul.mubr.bf16.gmra.mrb[0].mxu0 %v2730
        %v2814 = vpop.f32.mrb[0].mxu0
        %v2815 = vadd.f32 0.0, %v2814
        %v2816 = vpop.f32.mrb[0].mxu0
        %v2817 = vpop.f32.mrb[0].mxu0
        %v2818 = vadd.f32 0.0, %v2817
        %v2819 = vpop.f32.mrb[0].mxu0
        %2820 = vmatprep.mubr.bf16.mxu0 0
        %2821 = vmatmul.mubr.bf16.gmra.mrb[0].mxu0 %v2733
        %v2822 = vpop.f32.mrb[0].mxu0
        %v2823 = vadd.f32 0.0, %v2822
        %v2824 = vpop.f32.mrb[0].mxu0
        %v2825 = vpop.f32.mrb[0].mxu0
        %v2826 = vadd.f32 0.0, %v2825
        %v2827 = vpop.f32.mrb[0].mxu0
        %2828 = vmatprep.mubr.bf16.mxu0 0
        %2829 = vmatmul.mubr.bf16.gmra.mrb[0].mxu0 %v2736
        %v2830 = vpop.f32.mrb[0].mxu0
        %v2831 = vadd.f32 0.0, %v2830
        %v2832 = vpop.f32.mrb[0].mxu0
        %v2833 = vpop.f32.mrb[0].mxu0
        %v2834 = vadd.f32 0.0, %v2833
        %v2835 = vpop.f32.mrb[0].mxu0
        %2836 = vmatprep.mubr.bf16.mxu0 0
        %2837 = vmatmul.mubr.bf16.gmra.mrb[0].mxu0 %v2739
        %v2838 = vpop.f32.mrb[0].mxu0
        %v2839 = vadd.f32 0.0, %v2838
        %v2840 = vpop.f32.mrb[0].mxu0
        %v2841 = vpop.f32.mrb[0].mxu0
        %v2842 = vadd.f32 0.0, %v2841
        %v2843 = vpop.f32.mrb[0].mxu0
        %2844 = vmatprep.mubr.bf16.mxu0 0
        %2845 = vmatmul.mubr.bf16.gmra.mrb[0].mxu0 %v2742
        %v2846 = vpop.f32.mrb[0].mxu0
        %v2847 = vadd.f32 0.0, %v2846
        %v2848 = vpop.f32.mrb[0].mxu0
        %v2849 = vpop.f32.mrb[0].mxu0
        %v2850 = vadd.f32 0.0, %v2849
        %v2851 = vpop.f32.mrb[0].mxu0
        %2852 = vdwg.mxu0
        %v2853 = vsel %vm1661, %v2791, -inf
        %2854 = vmax.xlane.f32.xlu0 %v2853
        %v2855 = vpop.xlane.xlu0 %2854
        %v2856 = vsel %vm1661, %v2794, -inf
        %2857 = vmax.xlane.f32.xlu0 %v2856
        %v2858 = vpop.xlane.xlu0 %2857
        %v2859 = vsel %vm1661, %v2799, -inf
        %2860 = vmax.xlane.f32.xlu0 %v2859
        %v2861 = vpop.xlane.xlu0 %2860
        %v2862 = vsel %vm1661, %v2802, -inf
        %2863 = vmax.xlane.f32.xlu0 %v2862
        %v2864 = vpop.xlane.xlu0 %2863
        %v2865 = vsel %vm1661, %v2807, -inf
        %2866 = vmax.xlane.f32.xlu0 %v2865
        %v2867 = vpop.xlane.xlu0 %2866
        %v2868 = vsel %vm1661, %v2810, -inf
        %2869 = vmax.xlane.f32.xlu0 %v2868
        %v2870 = vpop.xlane.xlu0 %2869
        %v2871 = vsel %vm1661, %v2815, -inf
        %2872 = vmax.xlane.f32.xlu0 %v2871
        %v2873 = vpop.xlane.xlu0 %2872
        %v2874 = vsel %vm1661, %v2818, -inf
        %2875 = vmax.xlane.f32.xlu0 %v2874
        %v2876 = vpop.xlane.xlu0 %2875
        %v2877 = vsel %vm1661, %v2823, -inf
        %2878 = vmax.xlane.f32.xlu0 %v2877
        %v2879 = vpop.xlane.xlu0 %2878
        %v2880 = vsel %vm1661, %v2826, -inf
        %2881 = vmax.xlane.f32.xlu0 %v2880
        %v2882 = vpop.xlane.xlu0 %2881
        %v2883 = vsel %vm1661, %v2831, -inf
        %2884 = vmax.xlane.f32.xlu0 %v2883
        %v2885 = vpop.xlane.xlu0 %2884
        %v2886 = vsel %vm1661, %v2834, -inf
        %2887 = vmax.xlane.f32.xlu0 %v2886
        %v2888 = vpop.xlane.xlu0 %2887
        %v2889 = vsel %vm1661, %v2839, -inf
        %2890 = vmax.xlane.f32.xlu0 %v2889
        %v2891 = vpop.xlane.xlu0 %2890
        %v2892 = vsel %vm1661, %v2842, -inf
        %2893 = vmax.xlane.f32.xlu0 %v2892
        %v2894 = vpop.xlane.xlu0 %2893
        %v2895 = vsel %vm1661, %v2847, -inf
        %2896 = vmax.xlane.f32.xlu0 %v2895
        %v2897 = vpop.xlane.xlu0 %2896
        %v2898 = vsel %vm1661, %v2850, -inf
        %2899 = vmax.xlane.f32.xlu0 %v2898
        %v2900 = vpop.xlane.xlu0 %2899
        %v2901 = vsub.f32 %v2791, %v2855
        %v2902 = vsub.f32 %v2794, %v2858
        %v2903 = vsub.f32 %v2799, %v2861
        %v2904 = vsub.f32 %v2802, %v2864
        %v2905 = vsub.f32 %v2807, %v2867
        %v2906 = vsub.f32 %v2810, %v2870
        %v2907 = vsub.f32 %v2815, %v2873
        %v2908 = vsub.f32 %v2818, %v2876
        %v2909 = vsub.f32 %v2823, %v2879
        %v2910 = vsub.f32 %v2826, %v2882
        %v2911 = vsub.f32 %v2831, %v2885
        %v2912 = vsub.f32 %v2834, %v2888
        %v2913 = vsub.f32 %v2839, %v2891
        %v2914 = vsub.f32 %v2842, %v2894
        %v2915 = vsub.f32 %v2847, %v2897
        %v2916 = vsub.f32 %v2850, %v2900
        %v2917 = vmul.f32 %v2901, 1.442695
        %v2918 = vpow.pop %v2917
        %v2919 = vmul.f32 %v2902, 1.442695
        %v2920 = vpow.pop %v2919
        %v2921 = vmul.f32 %v2903, 1.442695
        %v2922 = vpow.pop %v2921
        %v2923 = vmul.f32 %v2904, 1.442695
        %v2924 = vpow.pop %v2923
        %v2925 = vmul.f32 %v2905, 1.442695
        %v2926 = vpow.pop %v2925
        %v2927 = vmul.f32 %v2906, 1.442695
        %v2928 = vpow.pop %v2927
        %v2929 = vmul.f32 %v2907, 1.442695
        %v2930 = vpow.pop %v2929
        %v2931 = vmul.f32 %v2908, 1.442695
        %v2932 = vpow.pop %v2931
        %v2933 = vmul.f32 %v2909, 1.442695
        %v2934 = vpow.pop %v2933
        %v2935 = vmul.f32 %v2910, 1.442695
        %v2936 = vpow.pop %v2935
        %v2937 = vmul.f32 %v2911, 1.442695
        %v2938 = vpow.pop %v2937
        %v2939 = vmul.f32 %v2912, 1.442695
        %v2940 = vpow.pop %v2939
        %v2941 = vmul.f32 %v2913, 1.442695
        %v2942 = vpow.pop %v2941
        %v2943 = vmul.f32 %v2914, 1.442695
        %v2944 = vpow.pop %v2943
        %v2945 = vmul.f32 %v2915, 1.442695
        %v2946 = vpow.pop %v2945
        %v2947 = vmul.f32 %v2916, 1.442695
        %v2948 = vpow.pop %v2947
        %v2949 = vsel %vm1661, %v2918, 0.0
        %2950 = vadd.xlane.f32.xlu0 %v2949
        %v2951 = vpop.xlane.xlu0 %2950
        %v2952 = vsel %vm1661, %v2920, 0.0
        %2953 = vadd.xlane.f32.xlu0 %v2952
        %v2954 = vpop.xlane.xlu0 %2953
        %v2955 = vsel %vm1661, %v2922, 0.0
        %2956 = vadd.xlane.f32.xlu0 %v2955
        %v2957 = vpop.xlane.xlu0 %2956
        %v2958 = vsel %vm1661, %v2924, 0.0
        %2959 = vadd.xlane.f32.xlu0 %v2958
        %v2960 = vpop.xlane.xlu0 %2959
        %v2961 = vsel %vm1661, %v2926, 0.0
        %2962 = vadd.xlane.f32.xlu0 %v2961
        %v2963 = vpop.xlane.xlu0 %2962
        %v2964 = vsel %vm1661, %v2928, 0.0
        %2965 = vadd.xlane.f32.xlu0 %v2964
        %v2966 = vpop.xlane.xlu0 %2965
        %v2967 = vsel %vm1661, %v2930, 0.0
        %2968 = vadd.xlane.f32.xlu0 %v2967
        %v2969 = vpop.xlane.xlu0 %2968
        %v2970 = vsel %vm1661, %v2932, 0.0
        %2971 = vadd.xlane.f32.xlu0 %v2970
        %v2972 = vpop.xlane.xlu0 %2971
        %v2973 = vsel %vm1661, %v2934, 0.0
        %2974 = vadd.xlane.f32.xlu0 %v2973
        %v2975 = vpop.xlane.xlu0 %2974
        %v2976 = vsel %vm1661, %v2936, 0.0
        %2977 = vadd.xlane.f32.xlu0 %v2976
        %v2978 = vpop.xlane.xlu0 %2977
        %v2979 = vsel %vm1661, %v2938, 0.0
        %2980 = vadd.xlane.f32.xlu0 %v2979
        %v2981 = vpop.xlane.xlu0 %2980
        %v2982 = vsel %vm1661, %v2940, 0.0
        %2983 = vadd.xlane.f32.xlu0 %v2982
        %v2984 = vpop.xlane.xlu0 %2983
        %v2985 = vsel %vm1661, %v2942, 0.0
        %2986 = vadd.xlane.f32.xlu0 %v2985
        %v2987 = vpop.xlane.xlu0 %2986
        %v2988 = vsel %vm1661, %v2944, 0.0
        %2989 = vadd.xlane.f32.xlu0 %v2988
        %v2990 = vpop.xlane.xlu0 %2989
        %v2991 = vsel %vm1661, %v2946, 0.0
        %2992 = vadd.xlane.f32.xlu0 %v2991
        %v2993 = vpop.xlane.xlu0 %2992
        %v2994 = vsel %vm1661, %v2948, 0.0
        %2995 = vadd.xlane.f32.xlu0 %v2994
        %v2996 = vpop.xlane.xlu0 %2995
        %v2997 = vrcp.pop %v2951
        %v2998 = vrcp.pop %v2954
        %v2999 = vrcp.pop %v2957
        %v3000 = vrcp.pop %v2960
        %v3001 = vrcp.pop %v2963
        %v3002 = vrcp.pop %v2966
        %v3003 = vrcp.pop %v2969
        %v3004 = vrcp.pop %v2972
        %v3005 = vrcp.pop %v2975
        %v3006 = vrcp.pop %v2978
        %v3007 = vrcp.pop %v2981
        %v3008 = vrcp.pop %v2984
        %v3009 = vrcp.pop %v2987
        %v3010 = vrcp.pop %v2990
        %v3011 = vrcp.pop %v2993
        %v3012 = vrcp.pop %v2996
        %v3013 = vmul.f32 %v2918, %v2997
        %v3014 = vmul.f32 %v2920, %v2998
        %v3015 = vmul.f32 %v2922, %v2999
        %v3016 = vmul.f32 %v2924, %v3000
        %v3017 = vmul.f32 %v2926, %v3001
        %v3018 = vmul.f32 %v2928, %v3002
        %v3019 = vmul.f32 %v2930, %v3003
        %v3020 = vmul.f32 %v2932, %v3004
        %v3021 = vmul.f32 %v2934, %v3005
        %v3022 = vmul.f32 %v2936, %v3006
        %v3023 = vmul.f32 %v2938, %v3007
        %v3024 = vmul.f32 %v2940, %v3008
        %v3025 = vmul.f32 %v2942, %v3009
        %v3026 = vmul.f32 %v2944, %v3010
        %v3027 = vmul.f32 %v2946, %v3011
        %v3028 = vmul.f32 %v2948, %v3012
        %v3029 = vpack.c.bf16 %v3014, %v3013
        %v3030 = vpack.c.bf16 %v3016, %v3015
        %v3031 = vpack.c.bf16 %v3018, %v3017
        %v3032 = vpack.c.bf16 %v3020, %v3019
        %v3033 = vpack.c.bf16 %v3022, %v3021
        %v3034 = vpack.c.bf16 %v3024, %v3023
        %v3035 = vpack.c.bf16 %v3026, %v3025
        %v3036 = vpack.c.bf16 %v3028, %v3027
        %v3038 = vsel %vm1661, %v3029, 0
        %v3041 = vsel %vm1661, %v3030, 0
        %v3044 = vsel %vm1661, %v3031, 0
        %v3047 = vsel %vm1661, %v3032, 0
        %v3050 = vsel %vm1661, %v3033, 0
        %v3053 = vsel %vm1661, %v3034, 0
        %v3056 = vsel %vm1661, %v3035, 0
        %v3059 = vsel %vm1661, %v3036, 0
        %3061 = vmatprep.subr.bf16.mxu0 0
        %3062 = vmatpush1.bf16.msra.mxu0 %v2715
        %3063 = vmatprep.subr.bf16.mxu0 0
        %3064 = vmatpush1.bf16.msra.mxu0 %v2716
        %3065 = vmatprep.subr.bf16.mxu0 0
        %3066 = vmatpush1.bf16.msra.mxu0 %v2717
        %3067 = vmatprep.subr.bf16.mxu0 0
        %3068 = vmatpush1.bf16.msra.mxu0 %v2718
        %3069 = vmatprep.subr.bf16.mxu0 0
        %3070 = vmatpush1.bf16.msra.mxu0 0
        %3071 = vmatprep.subr.bf16.mxu0 0
        %3072 = vmatpush1.bf16.msra.mxu0 0
        %3073 = vmatprep.subr.bf16.mxu0 0
        %3074 = vmatpush1.bf16.msra.mxu0 0
        %3075 = vmatprep.subr.bf16.mxu0 0
        %3076 = vmatpush1.bf16.msra.mxu0 0
        %3077 = vmatprep.subr.bf16.mxu0 0
        %3078 = vmatpush1.bf16.msra.mxu0 0
        %3079 = vmatprep.subr.bf16.mxu0 0
        %3080 = vmatpush1.bf16.msra.mxu0 0
        %3081 = vmatprep.subr.bf16.mxu0 0
        %3082 = vmatpush1.bf16.msra.mxu0 0
        %3083 = vmatprep.subr.bf16.mxu0 0
        %3084 = vmatpush1.bf16.msra.mxu0 0
        %3085 = vmatprep.subr.bf16.mxu0 0
        %3086 = vmatpush1.bf16.msra.mxu0 0
        %3087 = vmatprep.subr.bf16.mxu0 0
        %3088 = vmatpush1.bf16.msra.mxu0 0
        %3089 = vmatprep.subr.bf16.mxu0 0
        %3090 = vmatpush1.bf16.msra.mxu0 0
        %3091 = vmatprep.subr.bf16.mxu0 0
        %3092 = vmatpush1.bf16.msra.mxu0 0
        %3093 = vmatprep.mubr.bf16.mxu0 0
        %3094 = vmatmul.mubr.bf16.gmra.mrb[0].mxu0 %v3038
        %v3095 = vpop.f32.mrb[0].mxu0
        %v3096 = vadd.f32 0.0, %v3095
        %v3097 = vpop.f32.mrb[0].mxu0
        %v3098 = vpop.f32.mrb[0].mxu0
        %v3099 = vadd.f32 0.0, %v3098
        %v3100 = vpop.f32.mrb[0].mxu0
        %3101 = vmatprep.mubr.bf16.mxu0 0
        %3102 = vmatmul.mubr.bf16.gmra.mrb[0].mxu0 %v3041
        %v3103 = vpop.f32.mrb[0].mxu0
        %v3104 = vadd.f32 0.0, %v3103
        %v3105 = vpop.f32.mrb[0].mxu0
        %v3106 = vpop.f32.mrb[0].mxu0
        %v3107 = vadd.f32 0.0, %v3106
        %v3108 = vpop.f32.mrb[0].mxu0
        %3109 = vmatprep.mubr.bf16.mxu0 0
        %3110 = vmatmul.mubr.bf16.gmra.mrb[0].mxu0 %v3044
        %v3111 = vpop.f32.mrb[0].mxu0
        %v3112 = vadd.f32 0.0, %v3111
        %v3113 = vpop.f32.mrb[0].mxu0
        %v3114 = vpop.f32.mrb[0].mxu0
        %v3115 = vadd.f32 0.0, %v3114
        %v3116 = vpop.f32.mrb[0].mxu0
        %3117 = vmatprep.mubr.bf16.mxu0 0
        %3118 = vmatmul.mubr.bf16.gmra.mrb[0].mxu0 %v3047
        %v3119 = vpop.f32.mrb[0].mxu0
        %v3120 = vadd.f32 0.0, %v3119
        %v3121 = vpop.f32.mrb[0].mxu0
        %v3122 = vpop.f32.mrb[0].mxu0
        %v3123 = vadd.f32 0.0, %v3122
        %v3124 = vpop.f32.mrb[0].mxu0
        %3125 = vmatprep.mubr.bf16.mxu0 0
        %3126 = vmatmul.mubr.bf16.gmra.mrb[0].mxu0 %v3050
        %v3127 = vpop.f32.mrb[0].mxu0
        %v3128 = vadd.f32 0.0, %v3127
        %v3129 = vpop.f32.mrb[0].mxu0
        %v3130 = vpop.f32.mrb[0].mxu0
        %v3131 = vadd.f32 0.0, %v3130
        %v3132 = vpop.f32.mrb[0].mxu0
        %3133 = vmatprep.mubr.bf16.mxu0 0
        %3134 = vmatmul.mubr.bf16.gmra.mrb[0].mxu0 %v3053
        %v3135 = vpop.f32.mrb[0].mxu0
        %v3136 = vadd.f32 0.0, %v3135
        %v3137 = vpop.f32.mrb[0].mxu0
        %v3138 = vpop.f32.mrb[0].mxu0
        %v3139 = vadd.f32 0.0, %v3138
        %v3140 = vpop.f32.mrb[0].mxu0
        %3141 = vmatprep.mubr.bf16.mxu0 0
        %3142 = vmatmul.mubr.bf16.gmra.mrb[0].mxu0 %v3056
        %v3143 = vpop.f32.mrb[0].mxu0
        %v3144 = vadd.f32 0.0, %v3143
        %v3145 = vpop.f32.mrb[0].mxu0
        %v3146 = vpop.f32.mrb[0].mxu0
        %v3147 = vadd.f32 0.0, %v3146
        %v3148 = vpop.f32.mrb[0].mxu0
        %3149 = vmatprep.mubr.bf16.mxu0 0
        %3150 = vmatmul.mubr.bf16.gmra.mrb[0].mxu0 %v3059
        %v3151 = vpop.f32.mrb[0].mxu0
        %v3152 = vadd.f32 0.0, %v3151
        %v3153 = vpop.f32.mrb[0].mxu0
        %v3154 = vpop.f32.mrb[0].mxu0
        %v3155 = vadd.f32 0.0, %v3154
        %v3156 = vpop.f32.mrb[0].mxu0
        %3157 = vdwg.mxu0
        %v3158 = vpack.c.bf16 %v3099, %v3096
        %v3159 = vpack.c.bf16 %v3107, %v3104
        %v3160 = vpack.c.bf16 %v3115, %v3112
        %v3161 = vpack.c.bf16 %v3123, %v3120
        %v3162 = vpack.c.bf16 %v3131, %v3128
        %v3163 = vpack.c.bf16 %v3139, %v3136
        %v3164 = vpack.c.bf16 %v3147, %v3144
        %v3165 = vpack.c.bf16 %v3155, %v3152
        %v3166 = vld [vmem:[%s16] sm:$0xf]
        %v3167 = vld [vmem:[%s16 + $0x4] sm:$0xf]
        %3176 = vrot.lane.b32.xlu0 %v2703, 112
        %v3177 = vpop.permute.xlu0 %3176
        %3178 = vrot.lane.b32.xlu0 %v2704, 112
        %v3179 = vpop.permute.xlu0 %3178
        %3180 = vrot.lane.b32.xlu0 %v2705, 112
        %v3181 = vpop.permute.xlu0 %3180
        %3182 = vrot.lane.b32.xlu0 %v2706, 112
        %v3183 = vpop.permute.xlu0 %3182
        %3184 = vrot.lane.b32.xlu0 %v2707, 112
        %v3185 = vpop.permute.xlu0 %3184
        %3186 = vrot.lane.b32.xlu0 %v2708, 112
        %v3187 = vpop.permute.xlu0 %3186
        %3188 = vrot.lane.b32.xlu0 %v2709, 112
        %v3189 = vpop.permute.xlu0 %3188
        %3190 = vrot.lane.b32.xlu0 %v2710, 112
        %v3191 = vpop.permute.xlu0 %3190
        %3196 = vrot.lane.b32.xlu0 %v2711, 112
        %v3197 = vpop.permute.xlu0 %3196
        %3198 = vrot.lane.b32.xlu0 %v2712, 112
        %v3199 = vpop.permute.xlu0 %3198
        %3200 = vrot.lane.b32.xlu0 %v2713, 112
        %v3201 = vpop.permute.xlu0 %3200
        %3202 = vrot.lane.b32.xlu0 %v2714, 112
        %v3203 = vpop.permute.xlu0 %3202
        %v3205 = vsel %vm2719, %v3177, 0
        %v3208 = vsel %vm2719, %v3179, 0
        %v3211 = vsel %vm2719, %v3181, 0
        %v3214 = vsel %vm2719, %v3183, 0
        %v3217 = vsel %vm2719, %v3185, 0
        %v3220 = vsel %vm2719, %v3187, 0
        %v3223 = vsel %vm2719, %v3189, 0
        %v3226 = vsel %vm2719, %v3191, 0
        %v3229 = vsel %vm2719, %v3197, 0
        %v3232 = vsel %vm2719, %v3199, 0
        %v3235 = vsel %vm2719, %v3201, 0
        %v3238 = vsel %vm2719, %v3203, 0
        %3240 = vmatprep.subr.bf16.mxu0 0
        %3241 = vmatpush1.bf16.xpose.msra.mxu0 %v3229
        %3242 = vmatprep.subr.bf16.mxu0 0
        %3243 = vmatpush1.bf16.xpose.msra.mxu0 %v3232
        %3244 = vmatprep.subr.bf16.mxu0 0
        %3245 = vmatpush1.bf16.xpose.msra.mxu0 %v3235
        %3246 = vmatprep.subr.bf16.mxu0 0
        %3247 = vmatpush1.bf16.xpose.msra.mxu0 %v3238
        %3248 = vmatprep.subr.bf16.mxu0 0
        %3249 = vmatpush1.bf16.xpose.msra.mxu0 0
        %3250 = vmatprep.subr.bf16.mxu0 0
        %3251 = vmatpush1.bf16.xpose.msra.mxu0 0
        %3252 = vmatprep.subr.bf16.mxu0 0
        %3253 = vmatpush1.bf16.xpose.msra.mxu0 0
        %3254 = vmatprep.subr.bf16.mxu0 0
        %3255 = vmatpush1.bf16.xpose.msra.mxu0 0
        %3256 = vmatprep.subr.bf16.mxu0 0
        %3257 = vmatpush1.bf16.xpose.msra.mxu0 0
        %3258 = vmatprep.subr.bf16.mxu0 0
        %3259 = vmatpush1.bf16.xpose.msra.mxu0 0
        %3260 = vmatprep.subr.bf16.mxu0 0
        %3261 = vmatpush1.bf16.xpose.msra.mxu0 0
        %3262 = vmatprep.subr.bf16.mxu0 0
        %3263 = vmatpush1.bf16.xpose.msra.mxu0 0
        %3264 = vmatprep.subr.bf16.mxu0 0
        %3265 = vmatpush1.bf16.xpose.msra.mxu0 0
        %3266 = vmatprep.subr.bf16.mxu0 0
        %3267 = vmatpush1.bf16.xpose.msra.mxu0 0
        %3268 = vmatprep.subr.bf16.mxu0 0
        %3269 = vmatpush1.bf16.xpose.msra.mxu0 0
        %3270 = vmatprep.subr.bf16.mxu0 0
        %3271 = vmatpush1.bf16.xpose.msra.mxu0 0
        %3272 = vmatprep.mubr.bf16.mxu0 0
        %3273 = vmatmul.mubr.bf16.gmra.mrb[0].mxu0 %v3205
        %v3274 = vpop.f32.mrb[0].mxu0
        %v3275 = vadd.f32 0.0, %v3274
        %v3276 = vpop.f32.mrb[0].mxu0
        %v3277 = vpop.f32.mrb[0].mxu0
        %v3278 = vadd.f32 0.0, %v3277
        %v3279 = vpop.f32.mrb[0].mxu0
        %3280 = vmatprep.mubr.bf16.mxu0 0
        %3281 = vmatmul.mubr.bf16.gmra.mrb[0].mxu0 %v3208
        %v3282 = vpop.f32.mrb[0].mxu0
        %v3283 = vadd.f32 0.0, %v3282
        %v3284 = vpop.f32.mrb[0].mxu0
        %v3285 = vpop.f32.mrb[0].mxu0
        %v3286 = vadd.f32 0.0, %v3285
        %v3287 = vpop.f32.mrb[0].mxu0
        %3288 = vmatprep.mubr.bf16.mxu0 0
        %3289 = vmatmul.mubr.bf16.gmra.mrb[0].mxu0 %v3211
        %v3290 = vpop.f32.mrb[0].mxu0
        %v3291 = vadd.f32 0.0, %v3290
        %v3292 = vpop.f32.mrb[0].mxu0
        %v3293 = vpop.f32.mrb[0].mxu0
        %v3294 = vadd.f32 0.0, %v3293
        %v3295 = vpop.f32.mrb[0].mxu0
        %3296 = vmatprep.mubr.bf16.mxu0 0
        %3297 = vmatmul.mubr.bf16.gmra.mrb[0].mxu0 %v3214
        %v3298 = vpop.f32.mrb[0].mxu0
        %v3299 = vadd.f32 0.0, %v3298
        %v3300 = vpop.f32.mrb[0].mxu0
        %v3301 = vpop.f32.mrb[0].mxu0
        %v3302 = vadd.f32 0.0, %v3301
        %v3303 = vpop.f32.mrb[0].mxu0
        %3304 = vmatprep.mubr.bf16.mxu0 0
        %3305 = vmatmul.mubr.bf16.gmra.mrb[0].mxu0 %v3217
        %v3306 = vpop.f32.mrb[0].mxu0
        %v3307 = vadd.f32 0.0, %v3306
        %v3308 = vpop.f32.mrb[0].mxu0
        %v3309 = vpop.f32.mrb[0].mxu0
        %v3310 = vadd.f32 0.0, %v3309
        %v3311 = vpop.f32.mrb[0].mxu0
        %3312 = vmatprep.mubr.bf16.mxu0 0
        %3313 = vmatmul.mubr.bf16.gmra.mrb[0].mxu0 %v3220
        %v3314 = vpop.f32.mrb[0].mxu0
        %v3315 = vadd.f32 0.0, %v3314
        %v3316 = vpop.f32.mrb[0].mxu0
        %v3317 = vpop.f32.mrb[0].mxu0
        %v3318 = vadd.f32 0.0, %v3317
        %v3319 = vpop.f32.mrb[0].mxu0
        %3320 = vmatprep.mubr.bf16.mxu0 0
        %3321 = vmatmul.mubr.bf16.gmra.mrb[0].mxu0 %v3223
        %v3322 = vpop.f32.mrb[0].mxu0
        %v3323 = vadd.f32 0.0, %v3322
        %v3324 = vpop.f32.mrb[0].mxu0
        %v3325 = vpop.f32.mrb[0].mxu0
        %v3326 = vadd.f32 0.0, %v3325
        %v3327 = vpop.f32.mrb[0].mxu0
        %3328 = vmatprep.mubr.bf16.mxu0 0
        %3329 = vmatmul.mubr.bf16.gmra.mrb[0].mxu0 %v3226
        %v3330 = vpop.f32.mrb[0].mxu0
        %v3331 = vadd.f32 0.0, %v3330
        %v3332 = vpop.f32.mrb[0].mxu0
        %v3333 = vpop.f32.mrb[0].mxu0
        %v3334 = vadd.f32 0.0, %v3333
        %v3335 = vpop.f32.mrb[0].mxu0
        %3336 = vdwg.mxu0
        %v3337 = vsel %vm1661, %v3275, -inf
        %3338 = vmax.xlane.f32.xlu0 %v3337
        %v3339 = vpop.xlane.xlu0 %3338
        %v3340 = vsel %vm1661, %v3278, -inf
        %3341 = vmax.xlane.f32.xlu0 %v3340
        %v3342 = vpop.xlane.xlu0 %3341
        %v3343 = vsel %vm1661, %v3283, -inf
        %3344 = vmax.xlane.f32.xlu0 %v3343
        %v3345 = vpop.xlane.xlu0 %3344
        %v3346 = vsel %vm1661, %v3286, -inf
        %3347 = vmax.xlane.f32.xlu0 %v3346
        %v3348 = vpop.xlane.xlu0 %3347
        %v3349 = vsel %vm1661, %v3291, -inf
        %3350 = vmax.xlane.f32.xlu0 %v3349
        %v3351 = vpop.xlane.xlu0 %3350
        %v3352 = vsel %vm1661, %v3294, -inf
        %3353 = vmax.xlane.f32.xlu0 %v3352
        %v3354 = vpop.xlane.xlu0 %3353
        %v3355 = vsel %vm1661, %v3299, -inf
        %3356 = vmax.xlane.f32.xlu0 %v3355
        %v3357 = vpop.xlane.xlu0 %3356
        %v3358 = vsel %vm1661, %v3302, -inf
        %3359 = vmax.xlane.f32.xlu0 %v3358
        %v3360 = vpop.xlane.xlu0 %3359
        %v3361 = vsel %vm1661, %v3307, -inf
        %3362 = vmax.xlane.f32.xlu0 %v3361
        %v3363 = vpop.xlane.xlu0 %3362
        %v3364 = vsel %vm1661, %v3310, -inf
        %3365 = vmax.xlane.f32.xlu0 %v3364
        %v3366 = vpop.xlane.xlu0 %3365
        %v3367 = vsel %vm1661, %v3315, -inf
        %3368 = vmax.xlane.f32.xlu0 %v3367
        %v3369 = vpop.xlane.xlu0 %3368
        %v3370 = vsel %vm1661, %v3318, -inf
        %3371 = vmax.xlane.f32.xlu0 %v3370
        %v3372 = vpop.xlane.xlu0 %3371
        %v3373 = vsel %vm1661, %v3323, -inf
        %3374 = vmax.xlane.f32.xlu0 %v3373
        %v3375 = vpop.xlane.xlu0 %3374
        %v3376 = vsel %vm1661, %v3326, -inf
        %3377 = vmax.xlane.f32.xlu0 %v3376
        %v3378 = vpop.xlane.xlu0 %3377
        %v3379 = vsel %vm1661, %v3331, -inf
        %3380 = vmax.xlane.f32.xlu0 %v3379
        %v3381 = vpop.xlane.xlu0 %3380
        %v3382 = vsel %vm1661, %v3334, -inf
        %3383 = vmax.xlane.f32.xlu0 %v3382
        %v3384 = vpop.xlane.xlu0 %3383
        %v3385 = vsub.f32 %v3275, %v3339
        %v3386 = vsub.f32 %v3278, %v3342
        %v3387 = vsub.f32 %v3283, %v3345
        %v3388 = vsub.f32 %v3286, %v3348
        %v3389 = vsub.f32 %v3291, %v3351
        %v3390 = vsub.f32 %v3294, %v3354
        %v3391 = vsub.f32 %v3299, %v3357
        %v3392 = vsub.f32 %v3302, %v3360
        %v3393 = vsub.f32 %v3307, %v3363
        %v3394 = vsub.f32 %v3310, %v3366
        %v3395 = vsub.f32 %v3315, %v3369
        %v3396 = vsub.f32 %v3318, %v3372
        %v3397 = vsub.f32 %v3323, %v3375
        %v3398 = vsub.f32 %v3326, %v3378
        %v3399 = vsub.f32 %v3331, %v3381
        %v3400 = vsub.f32 %v3334, %v3384
        %v3401 = vmul.f32 %v3385, 1.442695
        %v3402 = vpow.pop %v3401
        %v3403 = vmul.f32 %v3386, 1.442695
        %v3404 = vpow.pop %v3403
        %v3405 = vmul.f32 %v3387, 1.442695
        %v3406 = vpow.pop %v3405
        %v3407 = vmul.f32 %v3388, 1.442695
        %v3408 = vpow.pop %v3407
        %v3409 = vmul.f32 %v3389, 1.442695
        %v3410 = vpow.pop %v3409
        %v3411 = vmul.f32 %v3390, 1.442695
        %v3412 = vpow.pop %v3411
        %v3413 = vmul.f32 %v3391, 1.442695
        %v3414 = vpow.pop %v3413
        %v3415 = vmul.f32 %v3392, 1.442695
        %v3416 = vpow.pop %v3415
        %v3417 = vmul.f32 %v3393, 1.442695
        %v3418 = vpow.pop %v3417
        %v3419 = vmul.f32 %v3394, 1.442695
        %v3420 = vpow.pop %v3419
        %v3421 = vmul.f32 %v3395, 1.442695
        %v3422 = vpow.pop %v3421
        %v3423 = vmul.f32 %v3396, 1.442695
        %v3424 = vpow.pop %v3423
        %v3425 = vmul.f32 %v3397, 1.442695
        %v3426 = vpow.pop %v3425
        %v3427 = vmul.f32 %v3398, 1.442695
        %v3428 = vpow.pop %v3427
        %v3429 = vmul.f32 %v3399, 1.442695
        %v3430 = vpow.pop %v3429
        %v3431 = vmul.f32 %v3400, 1.442695
        %v3432 = vpow.pop %v3431
        %v3433 = vsel %vm1661, %v3402, 0.0
        %3434 = vadd.xlane.f32.xlu0 %v3433
        %v3435 = vpop.xlane.xlu0 %3434
        %v3436 = vsel %vm1661, %v3404, 0.0
        %3437 = vadd.xlane.f32.xlu0 %v3436
        %v3438 = vpop.xlane.xlu0 %3437
        %v3439 = vsel %vm1661, %v3406, 0.0
        %3440 = vadd.xlane.f32.xlu0 %v3439
        %v3441 = vpop.xlane.xlu0 %3440
        %v3442 = vsel %vm1661, %v3408, 0.0
        %3443 = vadd.xlane.f32.xlu0 %v3442
        %v3444 = vpop.xlane.xlu0 %3443
        %v3445 = vsel %vm1661, %v3410, 0.0
        %3446 = vadd.xlane.f32.xlu0 %v3445
        %v3447 = vpop.xlane.xlu0 %3446
        %v3448 = vsel %vm1661, %v3412, 0.0
        %3449 = vadd.xlane.f32.xlu0 %v3448
        %v3450 = vpop.xlane.xlu0 %3449
        %v3451 = vsel %vm1661, %v3414, 0.0
        %3452 = vadd.xlane.f32.xlu0 %v3451
        %v3453 = vpop.xlane.xlu0 %3452
        %v3454 = vsel %vm1661, %v3416, 0.0
        %3455 = vadd.xlane.f32.xlu0 %v3454
        %v3456 = vpop.xlane.xlu0 %3455
        %v3457 = vsel %vm1661, %v3418, 0.0
        %3458 = vadd.xlane.f32.xlu0 %v3457
        %v3459 = vpop.xlane.xlu0 %3458
        %v3460 = vsel %vm1661, %v3420, 0.0
        %3461 = vadd.xlane.f32.xlu0 %v3460
        %v3462 = vpop.xlane.xlu0 %3461
        %v3463 = vsel %vm1661, %v3422, 0.0
        %3464 = vadd.xlane.f32.xlu0 %v3463
        %v3465 = vpop.xlane.xlu0 %3464
        %v3466 = vsel %vm1661, %v3424, 0.0
        %3467 = vadd.xlane.f32.xlu0 %v3466
        %v3468 = vpop.xlane.xlu0 %3467
        %v3469 = vsel %vm1661, %v3426, 0.0
        %3470 = vadd.xlane.f32.xlu0 %v3469
        %v3471 = vpop.xlane.xlu0 %3470
        %v3472 = vsel %vm1661, %v3428, 0.0
        %3473 = vadd.xlane.f32.xlu0 %v3472
        %v3474 = vpop.xlane.xlu0 %3473
        %v3475 = vsel %vm1661, %v3430, 0.0
        %3476 = vadd.xlane.f32.xlu0 %v3475
        %v3477 = vpop.xlane.xlu0 %3476
        %v3478 = vsel %vm1661, %v3432, 0.0
        %3479 = vadd.xlane.f32.xlu0 %v3478
        %v3480 = vpop.xlane.xlu0 %3479
        %v3481 = vrcp.pop %v3435
        %v3482 = vrcp.pop %v3438
        %v3483 = vrcp.pop %v3441
        %v3484 = vrcp.pop %v3444
        %v3485 = vrcp.pop %v3447
        %v3486 = vrcp.pop %v3450
        %v3487 = vrcp.pop %v3453
        %v3488 = vrcp.pop %v3456
        %v3489 = vrcp.pop %v3459
        %v3490 = vrcp.pop %v3462
        %v3491 = vrcp.pop %v3465
        %v3492 = vrcp.pop %v3468
        %v3493 = vrcp.pop %v3471
        %v3494 = vrcp.pop %v3474
        %v3495 = vrcp.pop %v3477
        %v3496 = vrcp.pop %v3480
        %v3497 = vmul.f32 %v3402, %v3481
        %v3498 = vmul.f32 %v3404, %v3482
        %v3499 = vmul.f32 %v3406, %v3483
        %v3500 = vmul.f32 %v3408, %v3484
        %v3501 = vmul.f32 %v3410, %v3485
        %v3502 = vmul.f32 %v3412, %v3486
        %v3503 = vmul.f32 %v3414, %v3487
        %v3504 = vmul.f32 %v3416, %v3488
        %v3505 = vmul.f32 %v3418, %v3489
        %v3506 = vmul.f32 %v3420, %v3490
        %v3507 = vmul.f32 %v3422, %v3491
        %v3508 = vmul.f32 %v3424, %v3492
        %v3509 = vmul.f32 %v3426, %v3493
        %v3510 = vmul.f32 %v3428, %v3494
        %v3511 = vmul.f32 %v3430, %v3495
        %v3512 = vmul.f32 %v3432, %v3496
        %v3513 = vpack.c.bf16 %v3498, %v3497
        %v3514 = vpack.c.bf16 %v3500, %v3499
        %v3515 = vpack.c.bf16 %v3502, %v3501
        %v3516 = vpack.c.bf16 %v3504, %v3503
        %v3517 = vpack.c.bf16 %v3506, %v3505
        %v3518 = vpack.c.bf16 %v3508, %v3507
        %v3519 = vpack.c.bf16 %v3510, %v3509
        %v3520 = vpack.c.bf16 %v3512, %v3511
        %3525 = vrot.lane.b32.xlu0 %v2715, 112
        %v3526 = vpop.permute.xlu0 %3525
        %3527 = vrot.lane.b32.xlu0 %v2716, 112
        %v3528 = vpop.permute.xlu0 %3527
        %3529 = vrot.lane.b32.xlu0 %v2717, 112
        %v3530 = vpop.permute.xlu0 %3529
        %3531 = vrot.lane.b32.xlu0 %v2718, 112
        %v3532 = vpop.permute.xlu0 %3531
        %v3538 = vsel %vm1661, %v3513, 0
        %v3541 = vsel %vm1661, %v3514, 0
        %v3544 = vsel %vm1661, %v3515, 0
        %v3547 = vsel %vm1661, %v3516, 0
        %v3550 = vsel %vm1661, %v3517, 0
        %v3553 = vsel %vm1661, %v3518, 0
        %v3556 = vsel %vm1661, %v3519, 0
        %v3559 = vsel %vm1661, %v3520, 0
        %3561 = vmatprep.subr.bf16.mxu0 0
        %3562 = vmatpush1.bf16.msra.mxu0 %v3526
        %3563 = vmatprep.subr.bf16.mxu0 0
        %3564 = vmatpush1.bf16.msra.mxu0 %v3528
        %3565 = vmatprep.subr.bf16.mxu0 0
        %3566 = vmatpush1.bf16.msra.mxu0 %v3530
        %3567 = vmatprep.subr.bf16.mxu0 0
        %3568 = vmatpush1.bf16.msra.mxu0 %v3532
        %3569 = vmatprep.subr.bf16.mxu0 0
        %3570 = vmatpush1.bf16.msra.mxu0 0
        %3571 = vmatprep.subr.bf16.mxu0 0
        %3572 = vmatpush1.bf16.msra.mxu0 0
        %3573 = vmatprep.subr.bf16.mxu0 0
        %3574 = vmatpush1.bf16.msra.mxu0 0
        %3575 = vmatprep.subr.bf16.mxu0 0
        %3576 = vmatpush1.bf16.msra.mxu0 0
        %3577 = vmatprep.subr.bf16.mxu0 0
        %3578 = vmatpush1.bf16.msra.mxu0 0
        %3579 = vmatprep.subr.bf16.mxu0 0
        %3580 = vmatpush1.bf16.msra.mxu0 0
        %3581 = vmatprep.subr.bf16.mxu0 0
        %3582 = vmatpush1.bf16.msra.mxu0 0
        %3583 = vmatprep.subr.bf16.mxu0 0
        %3584 = vmatpush1.bf16.msra.mxu0 0
        %3585 = vmatprep.subr.bf16.mxu0 0
        %3586 = vmatpush1.bf16.msra.mxu0 0
        %3587 = vmatprep.subr.bf16.mxu0 0
        %3588 = vmatpush1.bf16.msra.mxu0 0
        %3589 = vmatprep.subr.bf16.mxu0 0
        %3590 = vmatpush1.bf16.msra.mxu0 0
        %3591 = vmatprep.subr.bf16.mxu0 0
        %3592 = vmatpush1.bf16.msra.mxu0 0
        %3593 = vmatprep.mubr.bf16.mxu0 0
        %3594 = vmatmul.mubr.bf16.gmra.mrb[0].mxu0 %v3538
        %v3595 = vpop.f32.mrb[0].mxu0
        %v3596 = vadd.f32 0.0, %v3595
        %v3597 = vpop.f32.mrb[0].mxu0
        %v3598 = vpop.f32.mrb[0].mxu0
        %v3599 = vadd.f32 0.0, %v3598
        %v3600 = vpop.f32.mrb[0].mxu0
        %3601 = vmatprep.mubr.bf16.mxu0 0
        %3602 = vmatmul.mubr.bf16.gmra.mrb[0].mxu0 %v3541
        %v3603 = vpop.f32.mrb[0].mxu0
        %v3604 = vadd.f32 0.0, %v3603
        %v3605 = vpop.f32.mrb[0].mxu0
        %v3606 = vpop.f32.mrb[0].mxu0
        %v3607 = vadd.f32 0.0, %v3606
        %v3608 = vpop.f32.mrb[0].mxu0
        %3609 = vmatprep.mubr.bf16.mxu0 0
        %3610 = vmatmul.mubr.bf16.gmra.mrb[0].mxu0 %v3544
        %v3611 = vpop.f32.mrb[0].mxu0
        %v3612 = vadd.f32 0.0, %v3611
        %v3613 = vpop.f32.mrb[0].mxu0
        %v3614 = vpop.f32.mrb[0].mxu0
        %v3615 = vadd.f32 0.0, %v3614
        %v3616 = vpop.f32.mrb[0].mxu0
        %3617 = vmatprep.mubr.bf16.mxu0 0
        %3618 = vmatmul.mubr.bf16.gmra.mrb[0].mxu0 %v3547
        %v3619 = vpop.f32.mrb[0].mxu0
        %v3620 = vadd.f32 0.0, %v3619
        %v3621 = vpop.f32.mrb[0].mxu0
        %v3622 = vpop.f32.mrb[0].mxu0
        %v3623 = vadd.f32 0.0, %v3622
        %v3624 = vpop.f32.mrb[0].mxu0
        %3625 = vmatprep.mubr.bf16.mxu0 0
        %3626 = vmatmul.mubr.bf16.gmra.mrb[0].mxu0 %v3550
        %v3627 = vpop.f32.mrb[0].mxu0
        %v3628 = vadd.f32 0.0, %v3627
        %v3629 = vpop.f32.mrb[0].mxu0
        %v3630 = vpop.f32.mrb[0].mxu0
        %v3631 = vadd.f32 0.0, %v3630
        %v3632 = vpop.f32.mrb[0].mxu0
        %3633 = vmatprep.mubr.bf16.mxu0 0
        %3634 = vmatmul.mubr.bf16.gmra.mrb[0].mxu0 %v3553
        %v3635 = vpop.f32.mrb[0].mxu0
        %v3636 = vadd.f32 0.0, %v3635
        %v3637 = vpop.f32.mrb[0].mxu0
        %v3638 = vpop.f32.mrb[0].mxu0
        %v3639 = vadd.f32 0.0, %v3638
        %v3640 = vpop.f32.mrb[0].mxu0
        %3641 = vmatprep.mubr.bf16.mxu0 0
        %3642 = vmatmul.mubr.bf16.gmra.mrb[0].mxu0 %v3556
        %v3643 = vpop.f32.mrb[0].mxu0
        %v3644 = vadd.f32 0.0, %v3643
        %v3645 = vpop.f32.mrb[0].mxu0
        %v3646 = vpop.f32.mrb[0].mxu0
        %v3647 = vadd.f32 0.0, %v3646
        %v3648 = vpop.f32.mrb[0].mxu0
        %3649 = vmatprep.mubr.bf16.mxu0 0
        %3650 = vmatmul.mubr.bf16.gmra.mrb[0].mxu0 %v3559
        %v3651 = vpop.f32.mrb[0].mxu0
        %v3652 = vadd.f32 0.0, %v3651
        %v3653 = vpop.f32.mrb[0].mxu0
        %v3654 = vpop.f32.mrb[0].mxu0
        %v3655 = vadd.f32 0.0, %v3654
        %v3656 = vpop.f32.mrb[0].mxu0
        %3657 = vdwg.mxu0
        %v3658 = vpack.c.bf16 %v3599, %v3596
        %v3659 = vpack.c.bf16 %v3607, %v3604
        %v3660 = vpack.c.bf16 %v3615, %v3612
        %v3661 = vpack.c.bf16 %v3623, %v3620
        %v3662 = vpack.c.bf16 %v3631, %v3628
        %v3663 = vpack.c.bf16 %v3639, %v3636
        %v3664 = vpack.c.bf16 %v3647, %v3644
        %v3665 = vpack.c.bf16 %v3655, %v3652
        %v3666 = vld [vmem:[%s16 + $0x8] sm:$0xf]
        %v3667 = vld [vmem:[%s16 + $0xc] sm:$0xf]
        %v3670 = vunpack.c.l.b16 %v3666
        %v3671 = vunpack.c.l.b16 %v3667
        %v3672 = vpack.c.b16 %v3671, %v3670
        %v3675 = vsel %vm2719, %v3658, 0
        %v3678 = vsel %vm2719, %v3659, 0
        %v3681 = vsel %vm2719, %v3660, 0
        %v3684 = vsel %vm2719, %v3661, 0
        %v3687 = vsel %vm2719, %v3662, 0
        %v3690 = vsel %vm2719, %v3663, 0
        %v3693 = vsel %vm2719, %v3664, 0
        %v3696 = vsel %vm2719, %v3665, 0
        %3698 = vmatprep.subr.bf16.mxu0 0
        %3699 = vmatpush1.bf16.msra.mxu0 %v3672
        %3700 = vmatprep.subr.bf16.mxu0 0
        %3701 = vmatpush1.bf16.msra.mxu0 0
        %3702 = vmatprep.subr.bf16.mxu0 0
        %3703 = vmatpush1.bf16.msra.mxu0 0
        %3704 = vmatprep.subr.bf16.mxu0 0
        %3705 = vmatpush1.bf16.msra.mxu0 0
        %3706 = vmatprep.subr.bf16.mxu0 0
        %3707 = vmatpush1.bf16.msra.mxu0 0
        %3708 = vmatprep.subr.bf16.mxu0 0
        %3709 = vmatpush1.bf16.msra.mxu0 0
        %3710 = vmatprep.subr.bf16.mxu0 0
        %3711 = vmatpush1.bf16.msra.mxu0 0
        %3712 = vmatprep.subr.bf16.mxu0 0
        %3713 = vmatpush1.bf16.msra.mxu0 0
        %3714 = vmatprep.subr.bf16.mxu0 0
        %3715 = vmatpush1.bf16.msra.mxu0 0
        %3716 = vmatprep.subr.bf16.mxu0 0
        %3717 = vmatpush1.bf16.msra.mxu0 0
        %3718 = vmatprep.subr.bf16.mxu0 0
        %3719 = vmatpush1.bf16.msra.mxu0 0
        %3720 = vmatprep.subr.bf16.mxu0 0
        %3721 = vmatpush1.bf16.msra.mxu0 0
        %3722 = vmatprep.subr.bf16.mxu0 0
        %3723 = vmatpush1.bf16.msra.mxu0 0
        %3724 = vmatprep.subr.bf16.mxu0 0
        %3725 = vmatpush1.bf16.msra.mxu0 0
        %3726 = vmatprep.subr.bf16.mxu0 0
        %3727 = vmatpush1.bf16.msra.mxu0 0
        %3728 = vmatprep.subr.bf16.mxu0 0
        %3729 = vmatpush1.bf16.msra.mxu0 0
        %3730 = vmatprep.mubr.bf16.mxu0 0
        %3731 = vmatmul.mubr.bf16.gmra.mrb[0].mxu0 %v3675
        %v3732 = vpop.f32.mrb[0].mxu0
        %v3733 = vadd.f32 0.0, %v3732
        %v3734 = vpop.f32.mrb[0].mxu0
        %v3735 = vpop.f32.mrb[0].mxu0
        %v3736 = vadd.f32 0.0, %v3735
        %v3737 = vpop.f32.mrb[0].mxu0
        %3738 = vmatprep.mubr.bf16.mxu0 0
        %3739 = vmatmul.mubr.bf16.gmra.mrb[0].mxu0 %v3678
        %v3740 = vpop.f32.mrb[0].mxu0
        %v3741 = vadd.f32 0.0, %v3740
        %v3742 = vpop.f32.mrb[0].mxu0
        %v3743 = vpop.f32.mrb[0].mxu0
        %v3744 = vadd.f32 0.0, %v3743
        %v3745 = vpop.f32.mrb[0].mxu0
        %3746 = vmatprep.mubr.bf16.mxu0 0
        %3747 = vmatmul.mubr.bf16.gmra.mrb[0].mxu0 %v3681
        %v3748 = vpop.f32.mrb[0].mxu0
        %v3749 = vadd.f32 0.0, %v3748
        %v3750 = vpop.f32.mrb[0].mxu0
        %v3751 = vpop.f32.mrb[0].mxu0
        %v3752 = vadd.f32 0.0, %v3751
        %v3753 = vpop.f32.mrb[0].mxu0
        %3754 = vmatprep.mubr.bf16.mxu0 0
        %3755 = vmatmul.mubr.bf16.gmra.mrb[0].mxu0 %v3684
        %v3756 = vpop.f32.mrb[0].mxu0
        %v3757 = vadd.f32 0.0, %v3756
        %v3758 = vpop.f32.mrb[0].mxu0
        %v3759 = vpop.f32.mrb[0].mxu0
        %v3760 = vadd.f32 0.0, %v3759
        %v3761 = vpop.f32.mrb[0].mxu0
        %3762 = vmatprep.mubr.bf16.mxu0 0
        %3763 = vmatmul.mubr.bf16.gmra.mrb[0].mxu0 %v3687
        %v3764 = vpop.f32.mrb[0].mxu0
        %v3765 = vadd.f32 0.0, %v3764
        %v3766 = vpop.f32.mrb[0].mxu0
        %v3767 = vpop.f32.mrb[0].mxu0
        %v3768 = vadd.f32 0.0, %v3767
        %v3769 = vpop.f32.mrb[0].mxu0
        %3770 = vmatprep.mubr.bf16.mxu0 0
        %3771 = vmatmul.mubr.bf16.gmra.mrb[0].mxu0 %v3690
        %v3772 = vpop.f32.mrb[0].mxu0
        %v3773 = vadd.f32 0.0, %v3772
        %v3774 = vpop.f32.mrb[0].mxu0
        %v3775 = vpop.f32.mrb[0].mxu0
        %v3776 = vadd.f32 0.0, %v3775
        %v3777 = vpop.f32.mrb[0].mxu0
        %3778 = vmatprep.mubr.bf16.mxu0 0
        %3779 = vmatmul.mubr.bf16.gmra.mrb[0].mxu0 %v3693
        %v3780 = vpop.f32.mrb[0].mxu0
        %v3781 = vadd.f32 0.0, %v3780
        %v3782 = vpop.f32.mrb[0].mxu0
        %v3783 = vpop.f32.mrb[0].mxu0
        %v3784 = vadd.f32 0.0, %v3783
        %v3785 = vpop.f32.mrb[0].mxu0
        %3786 = vmatprep.mubr.bf16.mxu0 0
        %3787 = vmatmul.mubr.bf16.gmra.mrb[0].mxu0 %v3696
        %v3788 = vpop.f32.mrb[0].mxu0
        %v3789 = vadd.f32 0.0, %v3788
        %v3790 = vpop.f32.mrb[0].mxu0
        %v3791 = vpop.f32.mrb[0].mxu0
        %v3792 = vadd.f32 0.0, %v3791
        %v3793 = vpop.f32.mrb[0].mxu0
        %3794 = vdwg.mxu0
        %v3797 = vunpack.c.l.b16 %v3166
        %v3798 = vunpack.c.l.b16 %v3167
        %v3799 = vpack.c.b16 %v3798, %v3797
        %v3802 = vsel %vm2719, %v3158, 0
        %v3805 = vsel %vm2719, %v3159, 0
        %v3808 = vsel %vm2719, %v3160, 0
        %v3811 = vsel %vm2719, %v3161, 0
        %v3814 = vsel %vm2719, %v3162, 0
        %v3817 = vsel %vm2719, %v3163, 0
        %v3820 = vsel %vm2719, %v3164, 0
        %v3823 = vsel %vm2719, %v3165, 0
        %3825 = vmatprep.subr.bf16.mxu0 0
        %3826 = vmatpush1.bf16.msra.mxu0 %v3799
        %3827 = vmatprep.subr.bf16.mxu0 0
        %3828 = vmatpush1.bf16.msra.mxu0 0
        %3829 = vmatprep.subr.bf16.mxu0 0
        %3830 = vmatpush1.bf16.msra.mxu0 0
        %3831 = vmatprep.subr.bf16.mxu0 0
        %3832 = vmatpush1.bf16.msra.mxu0 0
        %3833 = vmatprep.subr.bf16.mxu0 0
        %3834 = vmatpush1.bf16.msra.mxu0 0
        %3835 = vmatprep.subr.bf16.mxu0 0
        %3836 = vmatpush1.bf16.msra.mxu0 0
        %3837 = vmatprep.subr.bf16.mxu0 0
        %3838 = vmatpush1.bf16.msra.mxu0 0
        %3839 = vmatprep.subr.bf16.mxu0 0
        %3840 = vmatpush1.bf16.msra.mxu0 0
        %3841 = vmatprep.subr.bf16.mxu0 0
        %3842 = vmatpush1.bf16.msra.mxu0 0
        %3843 = vmatprep.subr.bf16.mxu0 0
        %3844 = vmatpush1.bf16.msra.mxu0 0
        %3845 = vmatprep.subr.bf16.mxu0 0
        %3846 = vmatpush1.bf16.msra.mxu0 0
        %3847 = vmatprep.subr.bf16.mxu0 0
        %3848 = vmatpush1.bf16.msra.mxu0 0
        %3849 = vmatprep.subr.bf16.mxu0 0
        %3850 = vmatpush1.bf16.msra.mxu0 0
        %3851 = vmatprep.subr.bf16.mxu0 0
        %3852 = vmatpush1.bf16.msra.mxu0 0
        %3853 = vmatprep.subr.bf16.mxu0 0
        %3854 = vmatpush1.bf16.msra.mxu0 0
        %3855 = vmatprep.subr.bf16.mxu0 0
        %3856 = vmatpush1.bf16.msra.mxu0 0
        %3857 = vmatprep.mubr.bf16.mxu0 0
        %3858 = vmatmul.mubr.bf16.gmra.mrb[0].mxu0 %v3802
        %v3859 = vpop.f32.mrb[0].mxu0
        %v3860 = vadd.f32 %v3733, %v3859
        %v3861 = vpop.f32.mrb[0].mxu0
        %v3862 = vpop.f32.mrb[0].mxu0
        %v3863 = vadd.f32 %v3736, %v3862
        %v3864 = vpop.f32.mrb[0].mxu0
        %3865 = vmatprep.mubr.bf16.mxu0 0
        %3866 = vmatmul.mubr.bf16.gmra.mrb[0].mxu0 %v3805
        %v3867 = vpop.f32.mrb[0].mxu0
        %v3868 = vadd.f32 %v3741, %v3867
        %v3869 = vpop.f32.mrb[0].mxu0
        %v3870 = vpop.f32.mrb[0].mxu0
        %v3871 = vadd.f32 %v3744, %v3870
        %v3872 = vpop.f32.mrb[0].mxu0
        %3873 = vmatprep.mubr.bf16.mxu0 0
        %3874 = vmatmul.mubr.bf16.gmra.mrb[0].mxu0 %v3808
        %v3875 = vpop.f32.mrb[0].mxu0
        %v3876 = vadd.f32 %v3749, %v3875
        %v3877 = vpop.f32.mrb[0].mxu0
        %v3878 = vpop.f32.mrb[0].mxu0
        %v3879 = vadd.f32 %v3752, %v3878
        %v3880 = vpop.f32.mrb[0].mxu0
        %3881 = vmatprep.mubr.bf16.mxu0 0
        %3882 = vmatmul.mubr.bf16.gmra.mrb[0].mxu0 %v3811
        %v3883 = vpop.f32.mrb[0].mxu0
        %v3884 = vadd.f32 %v3757, %v3883
        %v3885 = vpop.f32.mrb[0].mxu0
        %v3886 = vpop.f32.mrb[0].mxu0
        %v3887 = vadd.f32 %v3760, %v3886
        %v3888 = vpop.f32.mrb[0].mxu0
        %3889 = vmatprep.mubr.bf16.mxu0 0
        %3890 = vmatmul.mubr.bf16.gmra.mrb[0].mxu0 %v3814
        %v3891 = vpop.f32.mrb[0].mxu0
        %v3892 = vadd.f32 %v3765, %v3891
        %v3893 = vpop.f32.mrb[0].mxu0
        %v3894 = vpop.f32.mrb[0].mxu0
        %v3895 = vadd.f32 %v3768, %v3894
        %v3896 = vpop.f32.mrb[0].mxu0
        %3897 = vmatprep.mubr.bf16.mxu0 0
        %3898 = vmatmul.mubr.bf16.gmra.mrb[0].mxu0 %v3817
        %v3899 = vpop.f32.mrb[0].mxu0
        %v3900 = vadd.f32 %v3773, %v3899
        %v3901 = vpop.f32.mrb[0].mxu0
        %v3902 = vpop.f32.mrb[0].mxu0
        %v3903 = vadd.f32 %v3776, %v3902
        %v3904 = vpop.f32.mrb[0].mxu0
        %3905 = vmatprep.mubr.bf16.mxu0 0
        %3906 = vmatmul.mubr.bf16.gmra.mrb[0].mxu0 %v3820
        %v3907 = vpop.f32.mrb[0].mxu0
        %v3908 = vadd.f32 %v3781, %v3907
        %v3909 = vpop.f32.mrb[0].mxu0
        %v3910 = vpop.f32.mrb[0].mxu0
        %v3911 = vadd.f32 %v3784, %v3910
        %v3912 = vpop.f32.mrb[0].mxu0
        %3913 = vmatprep.mubr.bf16.mxu0 0
        %3914 = vmatmul.mubr.bf16.gmra.mrb[0].mxu0 %v3823
        %v3915 = vpop.f32.mrb[0].mxu0
        %v3916 = vadd.f32 %v3789, %v3915
        %v3917 = vpop.f32.mrb[0].mxu0
        %v3918 = vpop.f32.mrb[0].mxu0
        %v3919 = vadd.f32 %v3792, %v3918
        %v3920 = vpop.f32.mrb[0].mxu0
        %3921 = vdwg.mxu0
        %3922 = vrot.lane.b32.xlu0 %v2703, 96
        %v3923 = vpop.permute.xlu0 %3922
        %3924 = vrot.lane.b32.xlu0 %v2704, 96
        %v3925 = vpop.permute.xlu0 %3924
        %3926 = vrot.lane.b32.xlu0 %v2705, 96
        %v3927 = vpop.permute.xlu0 %3926
        %3928 = vrot.lane.b32.xlu0 %v2706, 96
        %v3929 = vpop.permute.xlu0 %3928
        %3930 = vrot.lane.b32.xlu0 %v2707, 96
        %v3931 = vpop.permute.xlu0 %3930
        %3932 = vrot.lane.b32.xlu0 %v2708, 96
        %v3933 = vpop.permute.xlu0 %3932
        %3934 = vrot.lane.b32.xlu0 %v2709, 96
        %v3935 = vpop.permute.xlu0 %3934
        %3936 = vrot.lane.b32.xlu0 %v2710, 96
        %v3937 = vpop.permute.xlu0 %3936
        %3938 = vrot.lane.b32.xlu0 %v2711, 96
        %v3939 = vpop.permute.xlu0 %3938
        %3940 = vrot.lane.b32.xlu0 %v2712, 96
        %v3941 = vpop.permute.xlu0 %3940
        %3942 = vrot.lane.b32.xlu0 %v2713, 96
        %v3943 = vpop.permute.xlu0 %3942
        %3944 = vrot.lane.b32.xlu0 %v2714, 96
        %v3945 = vpop.permute.xlu0 %3944
        %v3947 = vsel %vm2719, %v3923, 0
        %v3950 = vsel %vm2719, %v3925, 0
        %v3953 = vsel %vm2719, %v3927, 0
        %v3956 = vsel %vm2719, %v3929, 0
        %v3959 = vsel %vm2719, %v3931, 0
        %v3962 = vsel %vm2719, %v3933, 0
        %v3965 = vsel %vm2719, %v3935, 0
        %v3968 = vsel %vm2719, %v3937, 0
        %v3971 = vsel %vm2719, %v3939, 0
        %v3974 = vsel %vm2719, %v3941, 0
        %v3977 = vsel %vm2719, %v3943, 0
        %v3980 = vsel %vm2719, %v3945, 0
        %3982 = vmatprep.subr.bf16.mxu0 0
        %3983 = vmatpush1.bf16.xpose.msra.mxu0 %v3971
        %3984 = vmatprep.subr.bf16.mxu0 0
        %3985 = vmatpush1.bf16.xpose.msra.mxu0 %v3974
        %3986 = vmatprep.subr.bf16.mxu0 0
        %3987 = vmatpush1.bf16.xpose.msra.mxu0 %v3977
        %3988 = vmatprep.subr.bf16.mxu0 0
        %3989 = vmatpush1.bf16.xpose.msra.mxu0 %v3980
        %3990 = vmatprep.subr.bf16.mxu0 0
        %3991 = vmatpush1.bf16.xpose.msra.mxu0 0
        %3992 = vmatprep.subr.bf16.mxu0 0
        %3993 = vmatpush1.bf16.xpose.msra.mxu0 0
        %3994 = vmatprep.subr.bf16.mxu0 0
        %3995 = vmatpush1.bf16.xpose.msra.mxu0 0
        %3996 = vmatprep.subr.bf16.mxu0 0
        %3997 = vmatpush1.bf16.xpose.msra.mxu0 0
        %3998 = vmatprep.subr.bf16.mxu0 0
        %3999 = vmatpush1.bf16.xpose.msra.mxu0 0
        %4000 = vmatprep.subr.bf16.mxu0 0
        %4001 = vmatpush1.bf16.xpose.msra.mxu0 0
        %4002 = vmatprep.subr.bf16.mxu0 0
        %4003 = vmatpush1.bf16.xpose.msra.mxu0 0
        %4004 = vmatprep.subr.bf16.mxu0 0
        %4005 = vmatpush1.bf16.xpose.msra.mxu0 0
        %4006 = vmatprep.subr.bf16.mxu0 0
        %4007 = vmatpush1.bf16.xpose.msra.mxu0 0
        %4008 = vmatprep.subr.bf16.mxu0 0
        %4009 = vmatpush1.bf16.xpose.msra.mxu0 0
        %4010 = vmatprep.subr.bf16.mxu0 0
        %4011 = vmatpush1.bf16.xpose.msra.mxu0 0
        %4012 = vmatprep.subr.bf16.mxu0 0
        %4013 = vmatpush1.bf16.xpose.msra.mxu0 0
        %4014 = vmatprep.mubr.bf16.mxu0 0
        %4015 = vmatmul.mubr.bf16.gmra.mrb[0].mxu0 %v3947
        %v4016 = vpop.f32.mrb[0].mxu0
        %v4017 = vadd.f32 0.0, %v4016
        %v4018 = vpop.f32.mrb[0].mxu0
        %v4019 = vpop.f32.mrb[0].mxu0
        %v4020 = vadd.f32 0.0, %v4019
        %v4021 = vpop.f32.mrb[0].mxu0
        %4022 = vmatprep.mubr.bf16.mxu0 0
        %4023 = vmatmul.mubr.bf16.gmra.mrb[0].mxu0 %v3950
        %v4024 = vpop.f32.mrb[0].mxu0
        %v4025 = vadd.f32 0.0, %v4024
        %v4026 = vpop.f32.mrb[0].mxu0
        %v4027 = vpop.f32.mrb[0].mxu0
        %v4028 = vadd.f32 0.0, %v4027
        %v4029 = vpop.f32.mrb[0].mxu0
        %4030 = vmatprep.mubr.bf16.mxu0 0
        %4031 = vmatmul.mubr.bf16.gmra.mrb[0].mxu0 %v3953
        %v4032 = vpop.f32.mrb[0].mxu0
        %v4033 = vadd.f32 0.0, %v4032
        %v4034 = vpop.f32.mrb[0].mxu0
        %v4035 = vpop.f32.mrb[0].mxu0
        %v4036 = vadd.f32 0.0, %v4035
        %v4037 = vpop.f32.mrb[0].mxu0
        %4038 = vmatprep.mubr.bf16.mxu0 0
        %4039 = vmatmul.mubr.bf16.gmra.mrb[0].mxu0 %v3956
        %v4040 = vpop.f32.mrb[0].mxu0
        %v4041 = vadd.f32 0.0, %v4040
        %v4042 = vpop.f32.mrb[0].mxu0
        %v4043 = vpop.f32.mrb[0].mxu0
        %v4044 = vadd.f32 0.0, %v4043
        %v4045 = vpop.f32.mrb[0].mxu0
        %4046 = vmatprep.mubr.bf16.mxu0 0
        %4047 = vmatmul.mubr.bf16.gmra.mrb[0].mxu0 %v3959
        %v4048 = vpop.f32.mrb[0].mxu0
        %v4049 = vadd.f32 0.0, %v4048
        %v4050 = vpop.f32.mrb[0].mxu0
        %v4051 = vpop.f32.mrb[0].mxu0
        %v4052 = vadd.f32 0.0, %v4051
        %v4053 = vpop.f32.mrb[0].mxu0
        %4054 = vmatprep.mubr.bf16.mxu0 0
        %4055 = vmatmul.mubr.bf16.gmra.mrb[0].mxu0 %v3962
        %v4056 = vpop.f32.mrb[0].mxu0
        %v4057 = vadd.f32 0.0, %v4056
        %v4058 = vpop.f32.mrb[0].mxu0
        %v4059 = vpop.f32.mrb[0].mxu0
        %v4060 = vadd.f32 0.0, %v4059
        %v4061 = vpop.f32.mrb[0].mxu0
        %4062 = vmatprep.mubr.bf16.mxu0 0
        %4063 = vmatmul.mubr.bf16.gmra.mrb[0].mxu0 %v3965
        %v4064 = vpop.f32.mrb[0].mxu0
        %v4065 = vadd.f32 0.0, %v4064
        %v4066 = vpop.f32.mrb[0].mxu0
        %v4067 = vpop.f32.mrb[0].mxu0
        %v4068 = vadd.f32 0.0, %v4067
        %v4069 = vpop.f32.mrb[0].mxu0
        %4070 = vmatprep.mubr.bf16.mxu0 0
        %4071 = vmatmul.mubr.bf16.gmra.mrb[0].mxu0 %v3968
        %v4072 = vpop.f32.mrb[0].mxu0
        %v4073 = vadd.f32 0.0, %v4072
        %v4074 = vpop.f32.mrb[0].mxu0
        %v4075 = vpop.f32.mrb[0].mxu0
        %v4076 = vadd.f32 0.0, %v4075
        %v4077 = vpop.f32.mrb[0].mxu0
        %4078 = vdwg.mxu0
        %v4079 = vsel %vm1661, %v4017, -inf
        %4080 = vmax.xlane.f32.xlu0 %v4079
        %v4081 = vpop.xlane.xlu0 %4080
        %v4082 = vsel %vm1661, %v4020, -inf
        %4083 = vmax.xlane.f32.xlu0 %v4082
        %v4084 = vpop.xlane.xlu0 %4083
        %v4085 = vsel %vm1661, %v4025, -inf
        %4086 = vmax.xlane.f32.xlu0 %v4085
        %v4087 = vpop.xlane.xlu0 %4086
        %v4088 = vsel %vm1661, %v4028, -inf
        %4089 = vmax.xlane.f32.xlu0 %v4088
        %v4090 = vpop.xlane.xlu0 %4089
        %v4091 = vsel %vm1661, %v4033, -inf
        %4092 = vmax.xlane.f32.xlu0 %v4091
        %v4093 = vpop.xlane.xlu0 %4092
        %v4094 = vsel %vm1661, %v4036, -inf
        %4095 = vmax.xlane.f32.xlu0 %v4094
        %v4096 = vpop.xlane.xlu0 %4095
        %v4097 = vsel %vm1661, %v4041, -inf
        %4098 = vmax.xlane.f32.xlu0 %v4097
        %v4099 = vpop.xlane.xlu0 %4098
        %v4100 = vsel %vm1661, %v4044, -inf
        %4101 = vmax.xlane.f32.xlu0 %v4100
        %v4102 = vpop.xlane.xlu0 %4101
        %v4103 = vsel %vm1661, %v4049, -inf
        %4104 = vmax.xlane.f32.xlu0 %v4103
        %v4105 = vpop.xlane.xlu0 %4104
        %v4106 = vsel %vm1661, %v4052, -inf
        %4107 = vmax.xlane.f32.xlu0 %v4106
        %v4108 = vpop.xlane.xlu0 %4107
        %v4109 = vsel %vm1661, %v4057, -inf
        %4110 = vmax.xlane.f32.xlu0 %v4109
        %v4111 = vpop.xlane.xlu0 %4110
        %v4112 = vsel %vm1661, %v4060, -inf
        %4113 = vmax.xlane.f32.xlu0 %v4112
        %v4114 = vpop.xlane.xlu0 %4113
        %v4115 = vsel %vm1661, %v4065, -inf
        %4116 = vmax.xlane.f32.xlu0 %v4115
        %v4117 = vpop.xlane.xlu0 %4116
        %v4118 = vsel %vm1661, %v4068, -inf
        %4119 = vmax.xlane.f32.xlu0 %v4118
        %v4120 = vpop.xlane.xlu0 %4119
        %v4121 = vsel %vm1661, %v4073, -inf
        %4122 = vmax.xlane.f32.xlu0 %v4121
        %v4123 = vpop.xlane.xlu0 %4122
        %v4124 = vsel %vm1661, %v4076, -inf
        %4125 = vmax.xlane.f32.xlu0 %v4124
        %v4126 = vpop.xlane.xlu0 %4125
        %v4127 = vsub.f32 %v4017, %v4081
        %v4128 = vsub.f32 %v4020, %v4084
        %v4129 = vsub.f32 %v4025, %v4087
        %v4130 = vsub.f32 %v4028, %v4090
        %v4131 = vsub.f32 %v4033, %v4093
        %v4132 = vsub.f32 %v4036, %v4096
        %v4133 = vsub.f32 %v4041, %v4099
        %v4134 = vsub.f32 %v4044, %v4102
        %v4135 = vsub.f32 %v4049, %v4105
        %v4136 = vsub.f32 %v4052, %v4108
        %v4137 = vsub.f32 %v4057, %v4111
        %v4138 = vsub.f32 %v4060, %v4114
        %v4139 = vsub.f32 %v4065, %v4117
        %v4140 = vsub.f32 %v4068, %v4120
        %v4141 = vsub.f32 %v4073, %v4123
        %v4142 = vsub.f32 %v4076, %v4126
        %v4143 = vmul.f32 %v4127, 1.442695
        %v4144 = vpow.pop %v4143
        %v4145 = vmul.f32 %v4128, 1.442695
        %v4146 = vpow.pop %v4145
        %v4147 = vmul.f32 %v4129, 1.442695
        %v4148 = vpow.pop %v4147
        %v4149 = vmul.f32 %v4130, 1.442695
        %v4150 = vpow.pop %v4149
        %v4151 = vmul.f32 %v4131, 1.442695
        %v4152 = vpow.pop %v4151
        %v4153 = vmul.f32 %v4132, 1.442695
        %v4154 = vpow.pop %v4153
        %v4155 = vmul.f32 %v4133, 1.442695
        %v4156 = vpow.pop %v4155
        %v4157 = vmul.f32 %v4134, 1.442695
        %v4158 = vpow.pop %v4157
        %v4159 = vmul.f32 %v4135, 1.442695
        %v4160 = vpow.pop %v4159
        %v4161 = vmul.f32 %v4136, 1.442695
        %v4162 = vpow.pop %v4161
        %v4163 = vmul.f32 %v4137, 1.442695
        %v4164 = vpow.pop %v4163
        %v4165 = vmul.f32 %v4138, 1.442695
        %v4166 = vpow.pop %v4165
        %v4167 = vmul.f32 %v4139, 1.442695
        %v4168 = vpow.pop %v4167
        %v4169 = vmul.f32 %v4140, 1.442695
        %v4170 = vpow.pop %v4169
        %v4171 = vmul.f32 %v4141, 1.442695
        %v4172 = vpow.pop %v4171
        %v4173 = vmul.f32 %v4142, 1.442695
        %v4174 = vpow.pop %v4173
        %v4175 = vsel %vm1661, %v4144, 0.0
        %4176 = vadd.xlane.f32.xlu0 %v4175
        %v4177 = vpop.xlane.xlu0 %4176
        %v4178 = vsel %vm1661, %v4146, 0.0
        %4179 = vadd.xlane.f32.xlu0 %v4178
        %v4180 = vpop.xlane.xlu0 %4179
        %v4181 = vsel %vm1661, %v4148, 0.0
        %4182 = vadd.xlane.f32.xlu0 %v4181
        %v4183 = vpop.xlane.xlu0 %4182
        %v4184 = vsel %vm1661, %v4150, 0.0
        %4185 = vadd.xlane.f32.xlu0 %v4184
        %v4186 = vpop.xlane.xlu0 %4185
        %v4187 = vsel %vm1661, %v4152, 0.0
        %4188 = vadd.xlane.f32.xlu0 %v4187
        %v4189 = vpop.xlane.xlu0 %4188
        %v4190 = vsel %vm1661, %v4154, 0.0
        %4191 = vadd.xlane.f32.xlu0 %v4190
        %v4192 = vpop.xlane.xlu0 %4191
        %v4193 = vsel %vm1661, %v4156, 0.0
        %4194 = vadd.xlane.f32.xlu0 %v4193
        %v4195 = vpop.xlane.xlu0 %4194
        %v4196 = vsel %vm1661, %v4158, 0.0
        %4197 = vadd.xlane.f32.xlu0 %v4196
        %v4198 = vpop.xlane.xlu0 %4197
        %v4199 = vsel %vm1661, %v4160, 0.0
        %4200 = vadd.xlane.f32.xlu0 %v4199
        %v4201 = vpop.xlane.xlu0 %4200
        %v4202 = vsel %vm1661, %v4162, 0.0
        %4203 = vadd.xlane.f32.xlu0 %v4202
        %v4204 = vpop.xlane.xlu0 %4203
        %v4205 = vsel %vm1661, %v4164, 0.0
        %4206 = vadd.xlane.f32.xlu0 %v4205
        %v4207 = vpop.xlane.xlu0 %4206
        %v4208 = vsel %vm1661, %v4166, 0.0
        %4209 = vadd.xlane.f32.xlu0 %v4208
        %v4210 = vpop.xlane.xlu0 %4209
        %v4211 = vsel %vm1661, %v4168, 0.0
        %4212 = vadd.xlane.f32.xlu0 %v4211
        %v4213 = vpop.xlane.xlu0 %4212
        %v4214 = vsel %vm1661, %v4170, 0.0
        %4215 = vadd.xlane.f32.xlu0 %v4214
        %v4216 = vpop.xlane.xlu0 %4215
        %v4217 = vsel %vm1661, %v4172, 0.0
        %4218 = vadd.xlane.f32.xlu0 %v4217
        %v4219 = vpop.xlane.xlu0 %4218
        %v4220 = vsel %vm1661, %v4174, 0.0
        %4221 = vadd.xlane.f32.xlu0 %v4220
        %v4222 = vpop.xlane.xlu0 %4221
        %v4223 = vrcp.pop %v4177
        %v4224 = vrcp.pop %v4180
        %v4225 = vrcp.pop %v4183
        %v4226 = vrcp.pop %v4186
        %v4227 = vrcp.pop %v4189
        %v4228 = vrcp.pop %v4192
        %v4229 = vrcp.pop %v4195
        %v4230 = vrcp.pop %v4198
        %v4231 = vrcp.pop %v4201
        %v4232 = vrcp.pop %v4204
        %v4233 = vrcp.pop %v4207
        %v4234 = vrcp.pop %v4210
        %v4235 = vrcp.pop %v4213
        %v4236 = vrcp.pop %v4216
        %v4237 = vrcp.pop %v4219
        %v4238 = vrcp.pop %v4222
        %v4239 = vmul.f32 %v4144, %v4223
        %v4240 = vmul.f32 %v4146, %v4224
        %v4241 = vmul.f32 %v4148, %v4225
        %v4242 = vmul.f32 %v4150, %v4226
        %v4243 = vmul.f32 %v4152, %v4227
        %v4244 = vmul.f32 %v4154, %v4228
        %v4245 = vmul.f32 %v4156, %v4229
        %v4246 = vmul.f32 %v4158, %v4230
        %v4247 = vmul.f32 %v4160, %v4231
        %v4248 = vmul.f32 %v4162, %v4232
        %v4249 = vmul.f32 %v4164, %v4233
        %v4250 = vmul.f32 %v4166, %v4234
        %v4251 = vmul.f32 %v4168, %v4235
        %v4252 = vmul.f32 %v4170, %v4236
        %v4253 = vmul.f32 %v4172, %v4237
        %v4254 = vmul.f32 %v4174, %v4238
        %v4255 = vpack.c.bf16 %v4240, %v4239
        %v4256 = vpack.c.bf16 %v4242, %v4241
        %v4257 = vpack.c.bf16 %v4244, %v4243
        %v4258 = vpack.c.bf16 %v4246, %v4245
        %v4259 = vpack.c.bf16 %v4248, %v4247
        %v4260 = vpack.c.bf16 %v4250, %v4249
        %v4261 = vpack.c.bf16 %v4252, %v4251
        %v4262 = vpack.c.bf16 %v4254, %v4253
        %4263 = vrot.lane.b32.xlu0 %v2715, 96
        %v4264 = vpop.permute.xlu0 %4263
        %4265 = vrot.lane.b32.xlu0 %v2716, 96
        %v4266 = vpop.permute.xlu0 %4265
        %4267 = vrot.lane.b32.xlu0 %v2717, 96
        %v4268 = vpop.permute.xlu0 %4267
        %4269 = vrot.lane.b32.xlu0 %v2718, 96
        %v4270 = vpop.permute.xlu0 %4269
        %v4276 = vsel %vm1661, %v4255, 0
        %v4279 = vsel %vm1661, %v4256, 0
        %v4282 = vsel %vm1661, %v4257, 0
        %v4285 = vsel %vm1661, %v4258, 0
        %v4288 = vsel %vm1661, %v4259, 0
        %v4291 = vsel %vm1661, %v4260, 0
        %v4294 = vsel %vm1661, %v4261, 0
        %v4297 = vsel %vm1661, %v4262, 0
        %4299 = vmatprep.subr.bf16.mxu0 0
        %4300 = vmatpush1.bf16.msra.mxu0 %v4264
        %4301 = vmatprep.subr.bf16.mxu0 0
        %4302 = vmatpush1.bf16.msra.mxu0 %v4266
        %4303 = vmatprep.subr.bf16.mxu0 0
        %4304 = vmatpush1.bf16.msra.mxu0 %v4268
        %4305 = vmatprep.subr.bf16.mxu0 0
        %4306 = vmatpush1.bf16.msra.mxu0 %v4270
        %4307 = vmatprep.subr.bf16.mxu0 0
        %4308 = vmatpush1.bf16.msra.mxu0 0
        %4309 = vmatprep.subr.bf16.mxu0 0
        %4310 = vmatpush1.bf16.msra.mxu0 0
        %4311 = vmatprep.subr.bf16.mxu0 0
        %4312 = vmatpush1.bf16.msra.mxu0 0
        %4313 = vmatprep.subr.bf16.mxu0 0
        %4314 = vmatpush1.bf16.msra.mxu0 0
        %4315 = vmatprep.subr.bf16.mxu0 0
        %4316 = vmatpush1.bf16.msra.mxu0 0
        %4317 = vmatprep.subr.bf16.mxu0 0
        %4318 = vmatpush1.bf16.msra.mxu0 0
        %4319 = vmatprep.subr.bf16.mxu0 0
        %4320 = vmatpush1.bf16.msra.mxu0 0
        %4321 = vmatprep.subr.bf16.mxu0 0
        %4322 = vmatpush1.bf16.msra.mxu0 0
        %4323 = vmatprep.subr.bf16.mxu0 0
        %4324 = vmatpush1.bf16.msra.mxu0 0
        %4325 = vmatprep.subr.bf16.mxu0 0
        %4326 = vmatpush1.bf16.msra.mxu0 0
        %4327 = vmatprep.subr.bf16.mxu0 0
        %4328 = vmatpush1.bf16.msra.mxu0 0
        %4329 = vmatprep.subr.bf16.mxu0 0
        %4330 = vmatpush1.bf16.msra.mxu0 0
        %4331 = vmatprep.mubr.bf16.mxu0 0
        %4332 = vmatmul.mubr.bf16.gmra.mrb[0].mxu0 %v4276
        %v4333 = vpop.f32.mrb[0].mxu0
        %v4334 = vadd.f32 0.0, %v4333
        %v4335 = vpop.f32.mrb[0].mxu0
        %v4336 = vpop.f32.mrb[0].mxu0
        %v4337 = vadd.f32 0.0, %v4336
        %v4338 = vpop.f32.mrb[0].mxu0
        %4339 = vmatprep.mubr.bf16.mxu0 0
        %4340 = vmatmul.mubr.bf16.gmra.mrb[0].mxu0 %v4279
        %v4341 = vpop.f32.mrb[0].mxu0
        %v4342 = vadd.f32 0.0, %v4341
        %v4343 = vpop.f32.mrb[0].mxu0
        %v4344 = vpop.f32.mrb[0].mxu0
        %v4345 = vadd.f32 0.0, %v4344
        %v4346 = vpop.f32.mrb[0].mxu0
        %4347 = vmatprep.mubr.bf16.mxu0 0
        %4348 = vmatmul.mubr.bf16.gmra.mrb[0].mxu0 %v4282
        %v4349 = vpop.f32.mrb[0].mxu0
        %v4350 = vadd.f32 0.0, %v4349
        %v4351 = vpop.f32.mrb[0].mxu0
        %v4352 = vpop.f32.mrb[0].mxu0
        %v4353 = vadd.f32 0.0, %v4352
        %v4354 = vpop.f32.mrb[0].mxu0
        %4355 = vmatprep.mubr.bf16.mxu0 0
        %4356 = vmatmul.mubr.bf16.gmra.mrb[0].mxu0 %v4285
        %v4357 = vpop.f32.mrb[0].mxu0
        %v4358 = vadd.f32 0.0, %v4357
        %v4359 = vpop.f32.mrb[0].mxu0
        %v4360 = vpop.f32.mrb[0].mxu0
        %v4361 = vadd.f32 0.0, %v4360
        %v4362 = vpop.f32.mrb[0].mxu0
        %4363 = vmatprep.mubr.bf16.mxu0 0
        %4364 = vmatmul.mubr.bf16.gmra.mrb[0].mxu0 %v4288
        %v4365 = vpop.f32.mrb[0].mxu0
        %v4366 = vadd.f32 0.0, %v4365
        %v4367 = vpop.f32.mrb[0].mxu0
        %v4368 = vpop.f32.mrb[0].mxu0
        %v4369 = vadd.f32 0.0, %v4368
        %v4370 = vpop.f32.mrb[0].mxu0
        %4371 = vmatprep.mubr.bf16.mxu0 0
        %4372 = vmatmul.mubr.bf16.gmra.mrb[0].mxu0 %v4291
        %v4373 = vpop.f32.mrb[0].mxu0
        %v4374 = vadd.f32 0.0, %v4373
        %v4375 = vpop.f32.mrb[0].mxu0
        %v4376 = vpop.f32.mrb[0].mxu0
        %v4377 = vadd.f32 0.0, %v4376
        %v4378 = vpop.f32.mrb[0].mxu0
        %4379 = vmatprep.mubr.bf16.mxu0 0
        %4380 = vmatmul.mubr.bf16.gmra.mrb[0].mxu0 %v4294
        %v4381 = vpop.f32.mrb[0].mxu0
        %v4382 = vadd.f32 0.0, %v4381
        %v4383 = vpop.f32.mrb[0].mxu0
        %v4384 = vpop.f32.mrb[0].mxu0
        %v4385 = vadd.f32 0.0, %v4384
        %v4386 = vpop.f32.mrb[0].mxu0
        %4387 = vmatprep.mubr.bf16.mxu0 0
        %4388 = vmatmul.mubr.bf16.gmra.mrb[0].mxu0 %v4297
        %v4389 = vpop.f32.mrb[0].mxu0
        %v4390 = vadd.f32 0.0, %v4389
        %v4391 = vpop.f32.mrb[0].mxu0
        %v4392 = vpop.f32.mrb[0].mxu0
        %v4393 = vadd.f32 0.0, %v4392
        %v4394 = vpop.f32.mrb[0].mxu0
        %4395 = vdwg.mxu0
        %v4396 = vpack.c.bf16 %v4337, %v4334
        %v4397 = vpack.c.bf16 %v4345, %v4342
        %v4398 = vpack.c.bf16 %v4353, %v4350
        %v4399 = vpack.c.bf16 %v4361, %v4358
        %v4400 = vpack.c.bf16 %v4369, %v4366
        %v4401 = vpack.c.bf16 %v4377, %v4374
        %v4402 = vpack.c.bf16 %v4385, %v4382
        %v4403 = vpack.c.bf16 %v4393, %v4390
        %v4404 = vld [vmem:[%s16 + $0x10] sm:$0xf]
        %v4405 = vld [vmem:[%s16 + $0x14] sm:$0xf]
        %v4408 = vunpack.c.l.b16 %v4404
        %v4409 = vunpack.c.l.b16 %v4405
        %v4410 = vpack.c.b16 %v4409, %v4408
        %v4413 = vsel %vm2719, %v4396, 0
        %v4416 = vsel %vm2719, %v4397, 0
        %v4419 = vsel %vm2719, %v4398, 0
        %v4422 = vsel %vm2719, %v4399, 0
        %v4425 = vsel %vm2719, %v4400, 0
        %v4428 = vsel %vm2719, %v4401, 0
        %v4431 = vsel %vm2719, %v4402, 0
        %v4434 = vsel %vm2719, %v4403, 0
        %4436 = vmatprep.subr.bf16.mxu0 0
        %4437 = vmatpush1.bf16.msra.mxu0 %v4410
        %4438 = vmatprep.subr.bf16.mxu0 0
        %4439 = vmatpush1.bf16.msra.mxu0 0
        %4440 = vmatprep.subr.bf16.mxu0 0
        %4441 = vmatpush1.bf16.msra.mxu0 0
        %4442 = vmatprep.subr.bf16.mxu0 0
        %4443 = vmatpush1.bf16.msra.mxu0 0
        %4444 = vmatprep.subr.bf16.mxu0 0
        %4445 = vmatpush1.bf16.msra.mxu0 0
        %4446 = vmatprep.subr.bf16.mxu0 0
        %4447 = vmatpush1.bf16.msra.mxu0 0
        %4448 = vmatprep.subr.bf16.mxu0 0
        %4449 = vmatpush1.bf16.msra.mxu0 0
        %4450 = vmatprep.subr.bf16.mxu0 0
        %4451 = vmatpush1.bf16.msra.mxu0 0
        %4452 = vmatprep.subr.bf16.mxu0 0
        %4453 = vmatpush1.bf16.msra.mxu0 0
        %4454 = vmatprep.subr.bf16.mxu0 0
        %4455 = vmatpush1.bf16.msra.mxu0 0
        %4456 = vmatprep.subr.bf16.mxu0 0
        %4457 = vmatpush1.bf16.msra.mxu0 0
        %4458 = vmatprep.subr.bf16.mxu0 0
        %4459 = vmatpush1.bf16.msra.mxu0 0
        %4460 = vmatprep.subr.bf16.mxu0 0
        %4461 = vmatpush1.bf16.msra.mxu0 0
        %4462 = vmatprep.subr.bf16.mxu0 0
        %4463 = vmatpush1.bf16.msra.mxu0 0
        %4464 = vmatprep.subr.bf16.mxu0 0
        %4465 = vmatpush1.bf16.msra.mxu0 0
        %4466 = vmatprep.subr.bf16.mxu0 0
        %4467 = vmatpush1.bf16.msra.mxu0 0
        %4468 = vmatprep.mubr.bf16.mxu0 0
        %4469 = vmatmul.mubr.bf16.gmra.mrb[0].mxu0 %v4413
        %v4470 = vpop.f32.mrb[0].mxu0
        %v4471 = vadd.f32 0.0, %v4470
        %v4472 = vpop.f32.mrb[0].mxu0
        %v4473 = vpop.f32.mrb[0].mxu0
        %v4474 = vadd.f32 0.0, %v4473
        %v4475 = vpop.f32.mrb[0].mxu0
        %4476 = vmatprep.mubr.bf16.mxu0 0
        %4477 = vmatmul.mubr.bf16.gmra.mrb[0].mxu0 %v4416
        %v4478 = vpop.f32.mrb[0].mxu0
        %v4479 = vadd.f32 0.0, %v4478
        %v4480 = vpop.f32.mrb[0].mxu0
        %v4481 = vpop.f32.mrb[0].mxu0
        %v4482 = vadd.f32 0.0, %v4481
        %v4483 = vpop.f32.mrb[0].mxu0
        %4484 = vmatprep.mubr.bf16.mxu0 0
        %4485 = vmatmul.mubr.bf16.gmra.mrb[0].mxu0 %v4419
        %v4486 = vpop.f32.mrb[0].mxu0
        %v4487 = vadd.f32 0.0, %v4486
        %v4488 = vpop.f32.mrb[0].mxu0
        %v4489 = vpop.f32.mrb[0].mxu0
        %v4490 = vadd.f32 0.0, %v4489
        %v4491 = vpop.f32.mrb[0].mxu0
        %4492 = vmatprep.mubr.bf16.mxu0 0
        %4493 = vmatmul.mubr.bf16.gmra.mrb[0].mxu0 %v4422
        %v4494 = vpop.f32.mrb[0].mxu0
        %v4495 = vadd.f32 0.0, %v4494
        %v4496 = vpop.f32.mrb[0].mxu0
        %v4497 = vpop.f32.mrb[0].mxu0
        %v4498 = vadd.f32 0.0, %v4497
        %v4499 = vpop.f32.mrb[0].mxu0
        %4500 = vmatprep.mubr.bf16.mxu0 0
        %4501 = vmatmul.mubr.bf16.gmra.mrb[0].mxu0 %v4425
        %v4502 = vpop.f32.mrb[0].mxu0
        %v4503 = vadd.f32 0.0, %v4502
        %v4504 = vpop.f32.mrb[0].mxu0
        %v4505 = vpop.f32.mrb[0].mxu0
        %v4506 = vadd.f32 0.0, %v4505
        %v4507 = vpop.f32.mrb[0].mxu0
        %4508 = vmatprep.mubr.bf16.mxu0 0
        %4509 = vmatmul.mubr.bf16.gmra.mrb[0].mxu0 %v4428
        %v4510 = vpop.f32.mrb[0].mxu0
        %v4511 = vadd.f32 0.0, %v4510
        %v4512 = vpop.f32.mrb[0].mxu0
        %v4513 = vpop.f32.mrb[0].mxu0
        %v4514 = vadd.f32 0.0, %v4513
        %v4515 = vpop.f32.mrb[0].mxu0
        %4516 = vmatprep.mubr.bf16.mxu0 0
        %4517 = vmatmul.mubr.bf16.gmra.mrb[0].mxu0 %v4431
        %v4518 = vpop.f32.mrb[0].mxu0
        %v4519 = vadd.f32 0.0, %v4518
        %v4520 = vpop.f32.mrb[0].mxu0
        %v4521 = vpop.f32.mrb[0].mxu0
        %v4522 = vadd.f32 0.0, %v4521
        %v4523 = vpop.f32.mrb[0].mxu0
        %4524 = vmatprep.mubr.bf16.mxu0 0
        %4525 = vmatmul.mubr.bf16.gmra.mrb[0].mxu0 %v4434
        %v4526 = vpop.f32.mrb[0].mxu0
        %v4527 = vadd.f32 0.0, %v4526
        %v4528 = vpop.f32.mrb[0].mxu0
        %v4529 = vpop.f32.mrb[0].mxu0
        %v4530 = vadd.f32 0.0, %v4529
        %v4531 = vpop.f32.mrb[0].mxu0
        %4532 = vdwg.mxu0
        %v4533 = vadd.f32 %v3860, %v4471
        %v4534 = vadd.f32 %v3863, %v4474
        %v4535 = vadd.f32 %v3868, %v4479
        %v4536 = vadd.f32 %v3871, %v4482
        %v4537 = vadd.f32 %v3876, %v4487
        %v4538 = vadd.f32 %v3879, %v4490
        %v4539 = vadd.f32 %v3884, %v4495
        %v4540 = vadd.f32 %v3887, %v4498
        %v4541 = vadd.f32 %v3892, %v4503
        %v4542 = vadd.f32 %v3895, %v4506
        %v4543 = vadd.f32 %v3900, %v4511
        %v4544 = vadd.f32 %v3903, %v4514
        %v4545 = vadd.f32 %v3908, %v4519
        %v4546 = vadd.f32 %v3911, %v4522
        %v4547 = vadd.f32 %v3916, %v4527
        %v4548 = vadd.f32 %v3919, %v4530
        %4549 = vrot.lane.b32.xlu0 %v2703, 80
        %v4550 = vpop.permute.xlu0 %4549
        %4551 = vrot.lane.b32.xlu0 %v2704, 80
        %v4552 = vpop.permute.xlu0 %4551
        %4553 = vrot.lane.b32.xlu0 %v2705, 80
        %v4554 = vpop.permute.xlu0 %4553
        %4555 = vrot.lane.b32.xlu0 %v2706, 80
        %v4556 = vpop.permute.xlu0 %4555
        %4557 = vrot.lane.b32.xlu0 %v2707, 80
        %v4558 = vpop.permute.xlu0 %4557
        %4559 = vrot.lane.b32.xlu0 %v2708, 80
        %v4560 = vpop.permute.xlu0 %4559
        %4561 = vrot.lane.b32.xlu0 %v2709, 80
        %v4562 = vpop.permute.xlu0 %4561
        %4563 = vrot.lane.b32.xlu0 %v2710, 80
        %v4564 = vpop.permute.xlu0 %4563
        %4565 = vrot.lane.b32.xlu0 %v2711, 80
        %v4566 = vpop.permute.xlu0 %4565
        %4567 = vrot.lane.b32.xlu0 %v2712, 80
        %v4568 = vpop.permute.xlu0 %4567
        %4569 = vrot.lane.b32.xlu0 %v2713, 80
        %v4570 = vpop.permute.xlu0 %4569
        %4571 = vrot.lane.b32.xlu0 %v2714, 80
        %v4572 = vpop.permute.xlu0 %4571
        %v4574 = vsel %vm2719, %v4550, 0
        %v4577 = vsel %vm2719, %v4552, 0
        %v4580 = vsel %vm2719, %v4554, 0
        %v4583 = vsel %vm2719, %v4556, 0
        %v4586 = vsel %vm2719, %v4558, 0
        %v4589 = vsel %vm2719, %v4560, 0
        %v4592 = vsel %vm2719, %v4562, 0
        %v4595 = vsel %vm2719, %v4564, 0
        %v4598 = vsel %vm2719, %v4566, 0
        %v4601 = vsel %vm2719, %v4568, 0
        %v4604 = vsel %vm2719, %v4570, 0
        %v4607 = vsel %vm2719, %v4572, 0
        %4609 = vmatprep.subr.bf16.mxu0 0
        %4610 = vmatpush1.bf16.xpose.msra.mxu0 %v4598
        %4611 = vmatprep.subr.bf16.mxu0 0
        %4612 = vmatpush1.bf16.xpose.msra.mxu0 %v4601
        %4613 = vmatprep.subr.bf16.mxu0 0
        %4614 = vmatpush1.bf16.xpose.msra.mxu0 %v4604
        %4615 = vmatprep.subr.bf16.mxu0 0
        %4616 = vmatpush1.bf16.xpose.msra.mxu0 %v4607
        %4617 = vmatprep.subr.bf16.mxu0 0
        %4618 = vmatpush1.bf16.xpose.msra.mxu0 0
        %4619 = vmatprep.subr.bf16.mxu0 0
        %4620 = vmatpush1.bf16.xpose.msra.mxu0 0
        %4621 = vmatprep.subr.bf16.mxu0 0
        %4622 = vmatpush1.bf16.xpose.msra.mxu0 0
        %4623 = vmatprep.subr.bf16.mxu0 0
        %4624 = vmatpush1.bf16.xpose.msra.mxu0 0
        %4625 = vmatprep.subr.bf16.mxu0 0
        %4626 = vmatpush1.bf16.xpose.msra.mxu0 0
        %4627 = vmatprep.subr.bf16.mxu0 0
        %4628 = vmatpush1.bf16.xpose.msra.mxu0 0
        %4629 = vmatprep.subr.bf16.mxu0 0
        %4630 = vmatpush1.bf16.xpose.msra.mxu0 0
        %4631 = vmatprep.subr.bf16.mxu0 0
        %4632 = vmatpush1.bf16.xpose.msra.mxu0 0
        %4633 = vmatprep.subr.bf16.mxu0 0
        %4634 = vmatpush1.bf16.xpose.msra.mxu0 0
        %4635 = vmatprep.subr.bf16.mxu0 0
        %4636 = vmatpush1.bf16.xpose.msra.mxu0 0
        %4637 = vmatprep.subr.bf16.mxu0 0
        %4638 = vmatpush1.bf16.xpose.msra.mxu0 0
        %4639 = vmatprep.subr.bf16.mxu0 0
        %4640 = vmatpush1.bf16.xpose.msra.mxu0 0
        %4641 = vmatprep.mubr.bf16.mxu0 0
        %4642 = vmatmul.mubr.bf16.gmra.mrb[0].mxu0 %v4574
        %v4643 = vpop.f32.mrb[0].mxu0
        %v4644 = vadd.f32 0.0, %v4643
        %v4645 = vpop.f32.mrb[0].mxu0
        %v4646 = vpop.f32.mrb[0].mxu0
        %v4647 = vadd.f32 0.0, %v4646
        %v4648 = vpop.f32.mrb[0].mxu0
        %4649 = vmatprep.mubr.bf16.mxu0 0
        %4650 = vmatmul.mubr.bf16.gmra.mrb[0].mxu0 %v4577
        %v4651 = vpop.f32.mrb[0].mxu0
        %v4652 = vadd.f32 0.0, %v4651
        %v4653 = vpop.f32.mrb[0].mxu0
        %v4654 = vpop.f32.mrb[0].mxu0
        %v4655 = vadd.f32 0.0, %v4654
        %v4656 = vpop.f32.mrb[0].mxu0
        %4657 = vmatprep.mubr.bf16.mxu0 0
        %4658 = vmatmul.mubr.bf16.gmra.mrb[0].mxu0 %v4580
        %v4659 = vpop.f32.mrb[0].mxu0
        %v4660 = vadd.f32 0.0, %v4659
        %v4661 = vpop.f32.mrb[0].mxu0
        %v4662 = vpop.f32.mrb[0].mxu0
        %v4663 = vadd.f32 0.0, %v4662
        %v4664 = vpop.f32.mrb[0].mxu0
        %4665 = vmatprep.mubr.bf16.mxu0 0
        %4666 = vmatmul.mubr.bf16.gmra.mrb[0].mxu0 %v4583
        %v4667 = vpop.f32.mrb[0].mxu0
        %v4668 = vadd.f32 0.0, %v4667
        %v4669 = vpop.f32.mrb[0].mxu0
        %v4670 = vpop.f32.mrb[0].mxu0
        %v4671 = vadd.f32 0.0, %v4670
        %v4672 = vpop.f32.mrb[0].mxu0
        %4673 = vmatprep.mubr.bf16.mxu0 0
        %4674 = vmatmul.mubr.bf16.gmra.mrb[0].mxu0 %v4586
        %v4675 = vpop.f32.mrb[0].mxu0
        %v4676 = vadd.f32 0.0, %v4675
        %v4677 = vpop.f32.mrb[0].mxu0
        %v4678 = vpop.f32.mrb[0].mxu0
        %v4679 = vadd.f32 0.0, %v4678
        %v4680 = vpop.f32.mrb[0].mxu0
        %4681 = vmatprep.mubr.bf16.mxu0 0
        %4682 = vmatmul.mubr.bf16.gmra.mrb[0].mxu0 %v4589
        %v4683 = vpop.f32.mrb[0].mxu0
        %v4684 = vadd.f32 0.0, %v4683
        %v4685 = vpop.f32.mrb[0].mxu0
        %v4686 = vpop.f32.mrb[0].mxu0
        %v4687 = vadd.f32 0.0, %v4686
        %v4688 = vpop.f32.mrb[0].mxu0
        %4689 = vmatprep.mubr.bf16.mxu0 0
        %4690 = vmatmul.mubr.bf16.gmra.mrb[0].mxu0 %v4592
        %v4691 = vpop.f32.mrb[0].mxu0
        %v4692 = vadd.f32 0.0, %v4691
        %v4693 = vpop.f32.mrb[0].mxu0
        %v4694 = vpop.f32.mrb[0].mxu0
        %v4695 = vadd.f32 0.0, %v4694
        %v4696 = vpop.f32.mrb[0].mxu0
        %4697 = vmatprep.mubr.bf16.mxu0 0
        %4698 = vmatmul.mubr.bf16.gmra.mrb[0].mxu0 %v4595
        %v4699 = vpop.f32.mrb[0].mxu0
        %v4700 = vadd.f32 0.0, %v4699
        %v4701 = vpop.f32.mrb[0].mxu0
        %v4702 = vpop.f32.mrb[0].mxu0
        %v4703 = vadd.f32 0.0, %v4702
        %v4704 = vpop.f32.mrb[0].mxu0
        %4705 = vdwg.mxu0
        %v4706 = vsel %vm1661, %v4644, -inf
        %4707 = vmax.xlane.f32.xlu0 %v4706
        %v4708 = vpop.xlane.xlu0 %4707
        %v4709 = vsel %vm1661, %v4647, -inf
        %4710 = vmax.xlane.f32.xlu0 %v4709
        %v4711 = vpop.xlane.xlu0 %4710
        %v4712 = vsel %vm1661, %v4652, -inf
        %4713 = vmax.xlane.f32.xlu0 %v4712
        %v4714 = vpop.xlane.xlu0 %4713
        %v4715 = vsel %vm1661, %v4655, -inf
        %4716 = vmax.xlane.f32.xlu0 %v4715
        %v4717 = vpop.xlane.xlu0 %4716
        %v4718 = vsel %vm1661, %v4660, -inf
        %4719 = vmax.xlane.f32.xlu0 %v4718
        %v4720 = vpop.xlane.xlu0 %4719
        %v4721 = vsel %vm1661, %v4663, -inf
        %4722 = vmax.xlane.f32.xlu0 %v4721
        %v4723 = vpop.xlane.xlu0 %4722
        %v4724 = vsel %vm1661, %v4668, -inf
        %4725 = vmax.xlane.f32.xlu0 %v4724
        %v4726 = vpop.xlane.xlu0 %4725
        %v4727 = vsel %vm1661, %v4671, -inf
        %4728 = vmax.xlane.f32.xlu0 %v4727
        %v4729 = vpop.xlane.xlu0 %4728
        %v4730 = vsel %vm1661, %v4676, -inf
        %4731 = vmax.xlane.f32.xlu0 %v4730
        %v4732 = vpop.xlane.xlu0 %4731
        %v4733 = vsel %vm1661, %v4679, -inf
        %4734 = vmax.xlane.f32.xlu0 %v4733
        %v4735 = vpop.xlane.xlu0 %4734
        %v4736 = vsel %vm1661, %v4684, -inf
        %4737 = vmax.xlane.f32.xlu0 %v4736
        %v4738 = vpop.xlane.xlu0 %4737
        %v4739 = vsel %vm1661, %v4687, -inf
        %4740 = vmax.xlane.f32.xlu0 %v4739
        %v4741 = vpop.xlane.xlu0 %4740
        %v4742 = vsel %vm1661, %v4692, -inf
        %4743 = vmax.xlane.f32.xlu0 %v4742
        %v4744 = vpop.xlane.xlu0 %4743
        %v4745 = vsel %vm1661, %v4695, -inf
        %4746 = vmax.xlane.f32.xlu0 %v4745
        %v4747 = vpop.xlane.xlu0 %4746
        %v4748 = vsel %vm1661, %v4700, -inf
        %4749 = vmax.xlane.f32.xlu0 %v4748
        %v4750 = vpop.xlane.xlu0 %4749
        %v4751 = vsel %vm1661, %v4703, -inf
        %4752 = vmax.xlane.f32.xlu0 %v4751
        %v4753 = vpop.xlane.xlu0 %4752
        %v4754 = vsub.f32 %v4644, %v4708
        %v4755 = vsub.f32 %v4647, %v4711
        %v4756 = vsub.f32 %v4652, %v4714
        %v4757 = vsub.f32 %v4655, %v4717
        %v4758 = vsub.f32 %v4660, %v4720
        %v4759 = vsub.f32 %v4663, %v4723
        %v4760 = vsub.f32 %v4668, %v4726
        %v4761 = vsub.f32 %v4671, %v4729
        %v4762 = vsub.f32 %v4676, %v4732
        %v4763 = vsub.f32 %v4679, %v4735
        %v4764 = vsub.f32 %v4684, %v4738
        %v4765 = vsub.f32 %v4687, %v4741
        %v4766 = vsub.f32 %v4692, %v4744
        %v4767 = vsub.f32 %v4695, %v4747
        %v4768 = vsub.f32 %v4700, %v4750
        %v4769 = vsub.f32 %v4703, %v4753
        %v4770 = vmul.f32 %v4754, 1.442695
        %v4771 = vpow.pop %v4770
        %v4772 = vmul.f32 %v4755, 1.442695
        %v4773 = vpow.pop %v4772
        %v4774 = vmul.f32 %v4756, 1.442695
        %v4775 = vpow.pop %v4774
        %v4776 = vmul.f32 %v4757, 1.442695
        %v4777 = vpow.pop %v4776
        %v4778 = vmul.f32 %v4758, 1.442695
        %v4779 = vpow.pop %v4778
        %v4780 = vmul.f32 %v4759, 1.442695
        %v4781 = vpow.pop %v4780
        %v4782 = vmul.f32 %v4760, 1.442695
        %v4783 = vpow.pop %v4782
        %v4784 = vmul.f32 %v4761, 1.442695
        %v4785 = vpow.pop %v4784
        %v4786 = vmul.f32 %v4762, 1.442695
        %v4787 = vpow.pop %v4786
        %v4788 = vmul.f32 %v4763, 1.442695
        %v4789 = vpow.pop %v4788
        %v4790 = vmul.f32 %v4764, 1.442695
        %v4791 = vpow.pop %v4790
        %v4792 = vmul.f32 %v4765, 1.442695
        %v4793 = vpow.pop %v4792
        %v4794 = vmul.f32 %v4766, 1.442695
        %v4795 = vpow.pop %v4794
        %v4796 = vmul.f32 %v4767, 1.442695
        %v4797 = vpow.pop %v4796
        %v4798 = vmul.f32 %v4768, 1.442695
        %v4799 = vpow.pop %v4798
        %v4800 = vmul.f32 %v4769, 1.442695
        %v4801 = vpow.pop %v4800
        %v4802 = vsel %vm1661, %v4771, 0.0
        %4803 = vadd.xlane.f32.xlu0 %v4802
        %v4804 = vpop.xlane.xlu0 %4803
        %v4805 = vsel %vm1661, %v4773, 0.0
        %4806 = vadd.xlane.f32.xlu0 %v4805
        %v4807 = vpop.xlane.xlu0 %4806
        %v4808 = vsel %vm1661, %v4775, 0.0
        %4809 = vadd.xlane.f32.xlu0 %v4808
        %v4810 = vpop.xlane.xlu0 %4809
        %v4811 = vsel %vm1661, %v4777, 0.0
        %4812 = vadd.xlane.f32.xlu0 %v4811
        %v4813 = vpop.xlane.xlu0 %4812
        %v4814 = vsel %vm1661, %v4779, 0.0
        %4815 = vadd.xlane.f32.xlu0 %v4814
        %v4816 = vpop.xlane.xlu0 %4815
        %v4817 = vsel %vm1661, %v4781, 0.0
        %4818 = vadd.xlane.f32.xlu0 %v4817
        %v4819 = vpop.xlane.xlu0 %4818
        %v4820 = vsel %vm1661, %v4783, 0.0
        %4821 = vadd.xlane.f32.xlu0 %v4820
        %v4822 = vpop.xlane.xlu0 %4821
        %v4823 = vsel %vm1661, %v4785, 0.0
        %4824 = vadd.xlane.f32.xlu0 %v4823
        %v4825 = vpop.xlane.xlu0 %4824
        %v4826 = vsel %vm1661, %v4787, 0.0
        %4827 = vadd.xlane.f32.xlu0 %v4826
        %v4828 = vpop.xlane.xlu0 %4827
        %v4829 = vsel %vm1661, %v4789, 0.0
        %4830 = vadd.xlane.f32.xlu0 %v4829
        %v4831 = vpop.xlane.xlu0 %4830
        %v4832 = vsel %vm1661, %v4791, 0.0
        %4833 = vadd.xlane.f32.xlu0 %v4832
        %v4834 = vpop.xlane.xlu0 %4833
        %v4835 = vsel %vm1661, %v4793, 0.0
        %4836 = vadd.xlane.f32.xlu0 %v4835
        %v4837 = vpop.xlane.xlu0 %4836
        %v4838 = vsel %vm1661, %v4795, 0.0
        %4839 = vadd.xlane.f32.xlu0 %v4838
        %v4840 = vpop.xlane.xlu0 %4839
        %v4841 = vsel %vm1661, %v4797, 0.0
        %4842 = vadd.xlane.f32.xlu0 %v4841
        %v4843 = vpop.xlane.xlu0 %4842
        %v4844 = vsel %vm1661, %v4799, 0.0
        %4845 = vadd.xlane.f32.xlu0 %v4844
        %v4846 = vpop.xlane.xlu0 %4845
        %v4847 = vsel %vm1661, %v4801, 0.0
        %4848 = vadd.xlane.f32.xlu0 %v4847
        %v4849 = vpop.xlane.xlu0 %4848
        %v4850 = vrcp.pop %v4804
        %v4851 = vrcp.pop %v4807
        %v4852 = vrcp.pop %v4810
        %v4853 = vrcp.pop %v4813
        %v4854 = vrcp.pop %v4816
        %v4855 = vrcp.pop %v4819
        %v4856 = vrcp.pop %v4822
        %v4857 = vrcp.pop %v4825
        %v4858 = vrcp.pop %v4828
        %v4859 = vrcp.pop %v4831
        %v4860 = vrcp.pop %v4834
        %v4861 = vrcp.pop %v4837
        %v4862 = vrcp.pop %v4840
        %v4863 = vrcp.pop %v4843
        %v4864 = vrcp.pop %v4846
        %v4865 = vrcp.pop %v4849
        %v4866 = vmul.f32 %v4771, %v4850
        %v4867 = vmul.f32 %v4773, %v4851
        %v4868 = vmul.f32 %v4775, %v4852
        %v4869 = vmul.f32 %v4777, %v4853
        %v4870 = vmul.f32 %v4779, %v4854
        %v4871 = vmul.f32 %v4781, %v4855
        %v4872 = vmul.f32 %v4783, %v4856
        %v4873 = vmul.f32 %v4785, %v4857
        %v4874 = vmul.f32 %v4787, %v4858
        %v4875 = vmul.f32 %v4789, %v4859
        %v4876 = vmul.f32 %v4791, %v4860
        %v4877 = vmul.f32 %v4793, %v4861
        %v4878 = vmul.f32 %v4795, %v4862
        %v4879 = vmul.f32 %v4797, %v4863
        %v4880 = vmul.f32 %v4799, %v4864
        %v4881 = vmul.f32 %v4801, %v4865
        %v4882 = vpack.c.bf16 %v4867, %v4866
        %v4883 = vpack.c.bf16 %v4869, %v4868
        %v4884 = vpack.c.bf16 %v4871, %v4870
        %v4885 = vpack.c.bf16 %v4873, %v4872
        %v4886 = vpack.c.bf16 %v4875, %v4874
        %v4887 = vpack.c.bf16 %v4877, %v4876
        %v4888 = vpack.c.bf16 %v4879, %v4878
        %v4889 = vpack.c.bf16 %v4881, %v4880
        %4890 = vrot.lane.b32.xlu0 %v2715, 80
        %v4891 = vpop.permute.xlu0 %4890
        %4892 = vrot.lane.b32.xlu0 %v2716, 80
        %v4893 = vpop.permute.xlu0 %4892
        %4894 = vrot.lane.b32.xlu0 %v2717, 80
        %v4895 = vpop.permute.xlu0 %4894
        %4896 = vrot.lane.b32.xlu0 %v2718, 80
        %v4897 = vpop.permute.xlu0 %4896
        %v4903 = vsel %vm1661, %v4882, 0
        %v4906 = vsel %vm1661, %v4883, 0
        %v4909 = vsel %vm1661, %v4884, 0
        %v4912 = vsel %vm1661, %v4885, 0
        %v4915 = vsel %vm1661, %v4886, 0
        %v4918 = vsel %vm1661, %v4887, 0
        %v4921 = vsel %vm1661, %v4888, 0
        %v4924 = vsel %vm1661, %v4889, 0
        %4926 = vmatprep.subr.bf16.mxu0 0
        %4927 = vmatpush1.bf16.msra.mxu0 %v4891
        %4928 = vmatprep.subr.bf16.mxu0 0
        %4929 = vmatpush1.bf16.msra.mxu0 %v4893
        %4930 = vmatprep.subr.bf16.mxu0 0
        %4931 = vmatpush1.bf16.msra.mxu0 %v4895
        %4932 = vmatprep.subr.bf16.mxu0 0
        %4933 = vmatpush1.bf16.msra.mxu0 %v4897
        %4934 = vmatprep.subr.bf16.mxu0 0
        %4935 = vmatpush1.bf16.msra.mxu0 0
        %4936 = vmatprep.subr.bf16.mxu0 0
        %4937 = vmatpush1.bf16.msra.mxu0 0
        %4938 = vmatprep.subr.bf16.mxu0 0
        %4939 = vmatpush1.bf16.msra.mxu0 0
        %4940 = vmatprep.subr.bf16.mxu0 0
        %4941 = vmatpush1.bf16.msra.mxu0 0
        %4942 = vmatprep.subr.bf16.mxu0 0
        %4943 = vmatpush1.bf16.msra.mxu0 0
        %4944 = vmatprep.subr.bf16.mxu0 0
        %4945 = vmatpush1.bf16.msra.mxu0 0
        %4946 = vmatprep.subr.bf16.mxu0 0
        %4947 = vmatpush1.bf16.msra.mxu0 0
        %4948 = vmatprep.subr.bf16.mxu0 0
        %4949 = vmatpush1.bf16.msra.mxu0 0
        %4950 = vmatprep.subr.bf16.mxu0 0
        %4951 = vmatpush1.bf16.msra.mxu0 0
        %4952 = vmatprep.subr.bf16.mxu0 0
        %4953 = vmatpush1.bf16.msra.mxu0 0
        %4954 = vmatprep.subr.bf16.mxu0 0
        %4955 = vmatpush1.bf16.msra.mxu0 0
        %4956 = vmatprep.subr.bf16.mxu0 0
        %4957 = vmatpush1.bf16.msra.mxu0 0
        %4958 = vmatprep.mubr.bf16.mxu0 0
        %4959 = vmatmul.mubr.bf16.gmra.mrb[0].mxu0 %v4903
        %v4960 = vpop.f32.mrb[0].mxu0
        %v4961 = vadd.f32 0.0, %v4960
        %v4962 = vpop.f32.mrb[0].mxu0
        %v4963 = vpop.f32.mrb[0].mxu0
        %v4964 = vadd.f32 0.0, %v4963
        %v4965 = vpop.f32.mrb[0].mxu0
        %4966 = vmatprep.mubr.bf16.mxu0 0
        %4967 = vmatmul.mubr.bf16.gmra.mrb[0].mxu0 %v4906
        %v4968 = vpop.f32.mrb[0].mxu0
        %v4969 = vadd.f32 0.0, %v4968
        %v4970 = vpop.f32.mrb[0].mxu0
        %v4971 = vpop.f32.mrb[0].mxu0
        %v4972 = vadd.f32 0.0, %v4971
        %v4973 = vpop.f32.mrb[0].mxu0
        %4974 = vmatprep.mubr.bf16.mxu0 0
        %4975 = vmatmul.mubr.bf16.gmra.mrb[0].mxu0 %v4909
        %v4976 = vpop.f32.mrb[0].mxu0
        %v4977 = vadd.f32 0.0, %v4976
        %v4978 = vpop.f32.mrb[0].mxu0
        %v4979 = vpop.f32.mrb[0].mxu0
        %v4980 = vadd.f32 0.0, %v4979
        %v4981 = vpop.f32.mrb[0].mxu0
        %4982 = vmatprep.mubr.bf16.mxu0 0
        %4983 = vmatmul.mubr.bf16.gmra.mrb[0].mxu0 %v4912
        %v4984 = vpop.f32.mrb[0].mxu0
        %v4985 = vadd.f32 0.0, %v4984
        %v4986 = vpop.f32.mrb[0].mxu0
        %v4987 = vpop.f32.mrb[0].mxu0
        %v4988 = vadd.f32 0.0, %v4987
        %v4989 = vpop.f32.mrb[0].mxu0
        %4990 = vmatprep.mubr.bf16.mxu0 0
        %4991 = vmatmul.mubr.bf16.gmra.mrb[0].mxu0 %v4915
        %v4992 = vpop.f32.mrb[0].mxu0
        %v4993 = vadd.f32 0.0, %v4992
        %v4994 = vpop.f32.mrb[0].mxu0
        %v4995 = vpop.f32.mrb[0].mxu0
        %v4996 = vadd.f32 0.0, %v4995
        %v4997 = vpop.f32.mrb[0].mxu0
        %4998 = vmatprep.mubr.bf16.mxu0 0
        %4999 = vmatmul.mubr.bf16.gmra.mrb[0].mxu0 %v4918
        %v5000 = vpop.f32.mrb[0].mxu0
        %v5001 = vadd.f32 0.0, %v5000
        %v5002 = vpop.f32.mrb[0].mxu0
        %v5003 = vpop.f32.mrb[0].mxu0
        %v5004 = vadd.f32 0.0, %v5003
        %v5005 = vpop.f32.mrb[0].mxu0
        %5006 = vmatprep.mubr.bf16.mxu0 0
        %5007 = vmatmul.mubr.bf16.gmra.mrb[0].mxu0 %v4921
        %v5008 = vpop.f32.mrb[0].mxu0
        %v5009 = vadd.f32 0.0, %v5008
        %v5010 = vpop.f32.mrb[0].mxu0
        %v5011 = vpop.f32.mrb[0].mxu0
        %v5012 = vadd.f32 0.0, %v5011
        %v5013 = vpop.f32.mrb[0].mxu0
        %5014 = vmatprep.mubr.bf16.mxu0 0
        %5015 = vmatmul.mubr.bf16.gmra.mrb[0].mxu0 %v4924
        %v5016 = vpop.f32.mrb[0].mxu0
        %v5017 = vadd.f32 0.0, %v5016
        %v5018 = vpop.f32.mrb[0].mxu0
        %v5019 = vpop.f32.mrb[0].mxu0
        %v5020 = vadd.f32 0.0, %v5019
        %v5021 = vpop.f32.mrb[0].mxu0
        %5022 = vdwg.mxu0
        %v5023 = vpack.c.bf16 %v4964, %v4961
        %v5024 = vpack.c.bf16 %v4972, %v4969
        %v5025 = vpack.c.bf16 %v4980, %v4977
        %v5026 = vpack.c.bf16 %v4988, %v4985
        %v5027 = vpack.c.bf16 %v4996, %v4993
        %v5028 = vpack.c.bf16 %v5004, %v5001
        %v5029 = vpack.c.bf16 %v5012, %v5009
        %v5030 = vpack.c.bf16 %v5020, %v5017
        %v5031 = vld [vmem:[%s16 + $0x18] sm:$0xf]
        %v5032 = vld [vmem:[%s16 + $0x1c] sm:$0xf]
        %v5035 = vunpack.c.l.b16 %v5031
        %v5036 = vunpack.c.l.b16 %v5032
        %v5037 = vpack.c.b16 %v5036, %v5035
        %v5040 = vsel %vm2719, %v5023, 0
        %v5043 = vsel %vm2719, %v5024, 0
        %v5046 = vsel %vm2719, %v5025, 0
        %v5049 = vsel %vm2719, %v5026, 0
        %v5052 = vsel %vm2719, %v5027, 0
        %v5055 = vsel %vm2719, %v5028, 0
        %v5058 = vsel %vm2719, %v5029, 0
        %v5061 = vsel %vm2719, %v5030, 0
        %5063 = vmatprep.subr.bf16.mxu0 0
        %5064 = vmatpush1.bf16.msra.mxu0 %v5037
        %5065 = vmatprep.subr.bf16.mxu0 0
        %5066 = vmatpush1.bf16.msra.mxu0 0
        %5067 = vmatprep.subr.bf16.mxu0 0
        %5068 = vmatpush1.bf16.msra.mxu0 0
        %5069 = vmatprep.subr.bf16.mxu0 0
        %5070 = vmatpush1.bf16.msra.mxu0 0
        %5071 = vmatprep.subr.bf16.mxu0 0
        %5072 = vmatpush1.bf16.msra.mxu0 0
        %5073 = vmatprep.subr.bf16.mxu0 0
        %5074 = vmatpush1.bf16.msra.mxu0 0
        %5075 = vmatprep.subr.bf16.mxu0 0
        %5076 = vmatpush1.bf16.msra.mxu0 0
        %5077 = vmatprep.subr.bf16.mxu0 0
        %5078 = vmatpush1.bf16.msra.mxu0 0
        %5079 = vmatprep.subr.bf16.mxu0 0
        %5080 = vmatpush1.bf16.msra.mxu0 0
        %5081 = vmatprep.subr.bf16.mxu0 0
        %5082 = vmatpush1.bf16.msra.mxu0 0
        %5083 = vmatprep.subr.bf16.mxu0 0
        %5084 = vmatpush1.bf16.msra.mxu0 0
        %5085 = vmatprep.subr.bf16.mxu0 0
        %5086 = vmatpush1.bf16.msra.mxu0 0
        %5087 = vmatprep.subr.bf16.mxu0 0
        %5088 = vmatpush1.bf16.msra.mxu0 0
        %5089 = vmatprep.subr.bf16.mxu0 0
        %5090 = vmatpush1.bf16.msra.mxu0 0
        %5091 = vmatprep.subr.bf16.mxu0 0
        %5092 = vmatpush1.bf16.msra.mxu0 0
        %5093 = vmatprep.subr.bf16.mxu0 0
        %5094 = vmatpush1.bf16.msra.mxu0 0
        %5095 = vmatprep.mubr.bf16.mxu0 0
        %5096 = vmatmul.mubr.bf16.gmra.mrb[0].mxu0 %v5040
        %v5097 = vpop.f32.mrb[0].mxu0
        %v5098 = vadd.f32 0.0, %v5097
        %v5099 = vpop.f32.mrb[0].mxu0
        %v5100 = vpop.f32.mrb[0].mxu0
        %v5101 = vadd.f32 0.0, %v5100
        %v5102 = vpop.f32.mrb[0].mxu0
        %5103 = vmatprep.mubr.bf16.mxu0 0
        %5104 = vmatmul.mubr.bf16.gmra.mrb[0].mxu0 %v5043
        %v5105 = vpop.f32.mrb[0].mxu0
        %v5106 = vadd.f32 0.0, %v5105
        %v5107 = vpop.f32.mrb[0].mxu0
        %v5108 = vpop.f32.mrb[0].mxu0
        %v5109 = vadd.f32 0.0, %v5108
        %v5110 = vpop.f32.mrb[0].mxu0
        %5111 = vmatprep.mubr.bf16.mxu0 0
        %5112 = vmatmul.mubr.bf16.gmra.mrb[0].mxu0 %v5046
        %v5113 = vpop.f32.mrb[0].mxu0
        %v5114 = vadd.f32 0.0, %v5113
        %v5115 = vpop.f32.mrb[0].mxu0
        %v5116 = vpop.f32.mrb[0].mxu0
        %v5117 = vadd.f32 0.0, %v5116
        %v5118 = vpop.f32.mrb[0].mxu0
        %5119 = vmatprep.mubr.bf16.mxu0 0
        %5120 = vmatmul.mubr.bf16.gmra.mrb[0].mxu0 %v5049
        %v5121 = vpop.f32.mrb[0].mxu0
        %v5122 = vadd.f32 0.0, %v5121
        %v5123 = vpop.f32.mrb[0].mxu0
        %v5124 = vpop.f32.mrb[0].mxu0
        %v5125 = vadd.f32 0.0, %v5124
        %v5126 = vpop.f32.mrb[0].mxu0
        %5127 = vmatprep.mubr.bf16.mxu0 0
        %5128 = vmatmul.mubr.bf16.gmra.mrb[0].mxu0 %v5052
        %v5129 = vpop.f32.mrb[0].mxu0
        %v5130 = vadd.f32 0.0, %v5129
        %v5131 = vpop.f32.mrb[0].mxu0
        %v5132 = vpop.f32.mrb[0].mxu0
        %v5133 = vadd.f32 0.0, %v5132
        %v5134 = vpop.f32.mrb[0].mxu0
        %5135 = vmatprep.mubr.bf16.mxu0 0
        %5136 = vmatmul.mubr.bf16.gmra.mrb[0].mxu0 %v5055
        %v5137 = vpop.f32.mrb[0].mxu0
        %v5138 = vadd.f32 0.0, %v5137
        %v5139 = vpop.f32.mrb[0].mxu0
        %v5140 = vpop.f32.mrb[0].mxu0
        %v5141 = vadd.f32 0.0, %v5140
        %v5142 = vpop.f32.mrb[0].mxu0
        %5143 = vmatprep.mubr.bf16.mxu0 0
        %5144 = vmatmul.mubr.bf16.gmra.mrb[0].mxu0 %v5058
        %v5145 = vpop.f32.mrb[0].mxu0
        %v5146 = vadd.f32 0.0, %v5145
        %v5147 = vpop.f32.mrb[0].mxu0
        %v5148 = vpop.f32.mrb[0].mxu0
        %v5149 = vadd.f32 0.0, %v5148
        %v5150 = vpop.f32.mrb[0].mxu0
        %5151 = vmatprep.mubr.bf16.mxu0 0
        %5152 = vmatmul.mubr.bf16.gmra.mrb[0].mxu0 %v5061
        %v5153 = vpop.f32.mrb[0].mxu0
        %v5154 = vadd.f32 0.0, %v5153
        %v5155 = vpop.f32.mrb[0].mxu0
        %v5156 = vpop.f32.mrb[0].mxu0
        %v5157 = vadd.f32 0.0, %v5156
        %v5158 = vpop.f32.mrb[0].mxu0
        %5159 = vdwg.mxu0
        %v5160 = vadd.f32 %v4533, %v5098
        %v5161 = vadd.f32 %v4534, %v5101
        %v5162 = vadd.f32 %v4535, %v5106
        %v5163 = vadd.f32 %v4536, %v5109
        %v5164 = vadd.f32 %v4537, %v5114
        %v5165 = vadd.f32 %v4538, %v5117
        %v5166 = vadd.f32 %v4539, %v5122
        %v5167 = vadd.f32 %v4540, %v5125
        %v5168 = vadd.f32 %v4541, %v5130
        %v5169 = vadd.f32 %v4542, %v5133
        %v5170 = vadd.f32 %v4543, %v5138
        %v5171 = vadd.f32 %v4544, %v5141
        %v5172 = vadd.f32 %v4545, %v5146
        %v5173 = vadd.f32 %v4546, %v5149
        %v5174 = vadd.f32 %v4547, %v5154
        %v5175 = vadd.f32 %v4548, %v5157
        %v5176 = vadd.f32 %v1721, %v5160
        %v5177 = vadd.f32 %v1724, %v5161
        %v5178 = vadd.f32 %v1729, %v5162
        %v5179 = vadd.f32 %v1732, %v5163
        %v5180 = vadd.f32 %v1737, %v5164
        %v5181 = vadd.f32 %v1740, %v5165
        %v5182 = vadd.f32 %v1745, %v5166
        %v5183 = vadd.f32 %v1748, %v5167
        %v5184 = vadd.f32 %v1753, %v5168
        %v5185 = vadd.f32 %v1756, %v5169
        %v5186 = vadd.f32 %v1761, %v5170
        %v5187 = vadd.f32 %v1764, %v5171
        %v5188 = vadd.f32 %v1769, %v5172
        %v5189 = vadd.f32 %v1772, %v5173
        %v5190 = vadd.f32 %v1777, %v5174
        %v5191 = vadd.f32 %v1780, %v5175
        %v5192 = vld [vmem:[%s17] sm:$0x1]
        %v5194 = vlaneseq
        %v5195 = vshrl.u32 %v5194, 7
        %v5196 = vsub.s32 0, %v5195
        %v5197 = vrot.slane %v5192, %v5196
        %v5199 = vadd.f32 %v5176, %v5197
        %v5200 = vadd.f32 %v5177, %v5197
        %v5201 = vadd.f32 %v5178, %v5197
        %v5202 = vadd.f32 %v5179, %v5197
        %v5203 = vadd.f32 %v5180, %v5197
        %v5204 = vadd.f32 %v5181, %v5197
        %v5205 = vadd.f32 %v5182, %v5197
        %v5206 = vadd.f32 %v5183, %v5197
        %v5207 = vadd.f32 %v5184, %v5197
        %v5208 = vadd.f32 %v5185, %v5197
        %v5209 = vadd.f32 %v5186, %v5197
        %v5210 = vadd.f32 %v5187, %v5197
        %v5211 = vadd.f32 %v5188, %v5197
        %v5212 = vadd.f32 %v5189, %v5197
        %v5213 = vadd.f32 %v5190, %v5197
        %v5214 = vadd.f32 %v5191, %v5197
        %v5215 = vld [vmem:[%s18] sm:$0x1]
        %v5216 = vld [vmem:[%s19] sm:$0x1]
        %v5217 = vsel %vm1661, %v5199, 0.0
        %5218 = vadd.xlane.f32.xlu0 %v5217
        %v5219 = vpop.xlane.xlu0 %5218
        %v5220 = vsel %vm1661, %v5200, 0.0
        %5221 = vadd.xlane.f32.xlu0 %v5220
        %v5222 = vpop.xlane.xlu0 %5221
        %v5223 = vsel %vm1661, %v5201, 0.0
        %5224 = vadd.xlane.f32.xlu0 %v5223
        %v5225 = vpop.xlane.xlu0 %5224
        %v5226 = vsel %vm1661, %v5202, 0.0
        %5227 = vadd.xlane.f32.xlu0 %v5226
        %v5228 = vpop.xlane.xlu0 %5227
        %v5229 = vsel %vm1661, %v5203, 0.0
        %5230 = vadd.xlane.f32.xlu0 %v5229
        %v5231 = vpop.xlane.xlu0 %5230
        %v5232 = vsel %vm1661, %v5204, 0.0
        %5233 = vadd.xlane.f32.xlu0 %v5232
        %v5234 = vpop.xlane.xlu0 %5233
        %v5235 = vsel %vm1661, %v5205, 0.0
        %5236 = vadd.xlane.f32.xlu0 %v5235
        %v5237 = vpop.xlane.xlu0 %5236
        %v5238 = vsel %vm1661, %v5206, 0.0
        %5239 = vadd.xlane.f32.xlu0 %v5238
        %v5240 = vpop.xlane.xlu0 %5239
        %v5241 = vsel %vm1661, %v5207, 0.0
        %5242 = vadd.xlane.f32.xlu0 %v5241
        %v5243 = vpop.xlane.xlu0 %5242
        %v5244 = vsel %vm1661, %v5208, 0.0
        %5245 = vadd.xlane.f32.xlu0 %v5244
        %v5246 = vpop.xlane.xlu0 %5245
        %v5247 = vsel %vm1661, %v5209, 0.0
        %5248 = vadd.xlane.f32.xlu0 %v5247
        %v5249 = vpop.xlane.xlu0 %5248
        %v5250 = vsel %vm1661, %v5210, 0.0
        %5251 = vadd.xlane.f32.xlu0 %v5250
        %v5252 = vpop.xlane.xlu0 %5251
        %v5253 = vsel %vm1661, %v5211, 0.0
        %5254 = vadd.xlane.f32.xlu0 %v5253
        %v5255 = vpop.xlane.xlu0 %5254
        %v5256 = vsel %vm1661, %v5212, 0.0
        %5257 = vadd.xlane.f32.xlu0 %v5256
        %v5258 = vpop.xlane.xlu0 %5257
        %v5259 = vsel %vm1661, %v5213, 0.0
        %5260 = vadd.xlane.f32.xlu0 %v5259
        %v5261 = vpop.xlane.xlu0 %5260
        %v5262 = vsel %vm1661, %v5214, 0.0
        %5263 = vadd.xlane.f32.xlu0 %v5262
        %v5264 = vpop.xlane.xlu0 %5263
        %v5265 = vmul.f32 %v5219, %v1833
        %v5266 = vmul.f32 %v5222, %v1833
        %v5267 = vmul.f32 %v5225, %v1833
        %v5268 = vmul.f32 %v5228, %v1833
        %v5269 = vmul.f32 %v5231, %v1833
        %v5270 = vmul.f32 %v5234, %v1833
        %v5271 = vmul.f32 %v5237, %v1833
        %v5272 = vmul.f32 %v5240, %v1833
        %v5273 = vmul.f32 %v5243, %v1833
        %v5274 = vmul.f32 %v5246, %v1833
        %v5275 = vmul.f32 %v5249, %v1833
        %v5276 = vmul.f32 %v5252, %v1833
        %v5277 = vmul.f32 %v5255, %v1833
        %v5278 = vmul.f32 %v5258, %v1833
        %v5279 = vmul.f32 %v5261, %v1833
        %v5280 = vmul.f32 %v5264, %v1833
        %v5281 = vsub.f32 %v5199, %v5265
        %v5282 = vsub.f32 %v5200, %v5266
        %v5283 = vsub.f32 %v5201, %v5267
        %v5284 = vsub.f32 %v5202, %v5268
        %v5285 = vsub.f32 %v5203, %v5269
        %v5286 = vsub.f32 %v5204, %v5270
        %v5287 = vsub.f32 %v5205, %v5271
        %v5288 = vsub.f32 %v5206, %v5272
        %v5289 = vsub.f32 %v5207, %v5273
        %v5290 = vsub.f32 %v5208, %v5274
        %v5291 = vsub.f32 %v5209, %v5275
        %v5292 = vsub.f32 %v5210, %v5276
        %v5293 = vsub.f32 %v5211, %v5277
        %v5294 = vsub.f32 %v5212, %v5278
        %v5295 = vsub.f32 %v5213, %v5279
        %v5296 = vsub.f32 %v5214, %v5280
        %v5297 = vmul.f32 %v5281, %v5281
        %v5298 = vmul.f32 %v5282, %v5282
        %v5299 = vmul.f32 %v5283, %v5283
        %v5300 = vmul.f32 %v5284, %v5284
        %v5301 = vmul.f32 %v5285, %v5285
        %v5302 = vmul.f32 %v5286, %v5286
        %v5303 = vmul.f32 %v5287, %v5287
        %v5304 = vmul.f32 %v5288, %v5288
        %v5305 = vmul.f32 %v5289, %v5289
        %v5306 = vmul.f32 %v5290, %v5290
        %v5307 = vmul.f32 %v5291, %v5291
        %v5308 = vmul.f32 %v5292, %v5292
        %v5309 = vmul.f32 %v5293, %v5293
        %v5310 = vmul.f32 %v5294, %v5294
        %v5311 = vmul.f32 %v5295, %v5295
        %v5312 = vmul.f32 %v5296, %v5296
        %v5313 = vsel %vm1661, %v5297, 0.0
        %5314 = vadd.xlane.f32.xlu0 %v5313
        %v5315 = vpop.xlane.xlu0 %5314
        %v5316 = vsel %vm1661, %v5298, 0.0
        %5317 = vadd.xlane.f32.xlu0 %v5316
        %v5318 = vpop.xlane.xlu0 %5317
        %v5319 = vsel %vm1661, %v5299, 0.0
        %5320 = vadd.xlane.f32.xlu0 %v5319
        %v5321 = vpop.xlane.xlu0 %5320
        %v5322 = vsel %vm1661, %v5300, 0.0
        %5323 = vadd.xlane.f32.xlu0 %v5322
        %v5324 = vpop.xlane.xlu0 %5323
        %v5325 = vsel %vm1661, %v5301, 0.0
        %5326 = vadd.xlane.f32.xlu0 %v5325
        %v5327 = vpop.xlane.xlu0 %5326
        %v5328 = vsel %vm1661, %v5302, 0.0
        %5329 = vadd.xlane.f32.xlu0 %v5328
        %v5330 = vpop.xlane.xlu0 %5329
        %v5331 = vsel %vm1661, %v5303, 0.0
        %5332 = vadd.xlane.f32.xlu0 %v5331
        %v5333 = vpop.xlane.xlu0 %5332
        %v5334 = vsel %vm1661, %v5304, 0.0
        %5335 = vadd.xlane.f32.xlu0 %v5334
        %v5336 = vpop.xlane.xlu0 %5335
        %v5337 = vsel %vm1661, %v5305, 0.0
        %5338 = vadd.xlane.f32.xlu0 %v5337
        %v5339 = vpop.xlane.xlu0 %5338
        %v5340 = vsel %vm1661, %v5306, 0.0
        %5341 = vadd.xlane.f32.xlu0 %v5340
        %v5342 = vpop.xlane.xlu0 %5341
        %v5343 = vsel %vm1661, %v5307, 0.0
        %5344 = vadd.xlane.f32.xlu0 %v5343
        %v5345 = vpop.xlane.xlu0 %5344
        %v5346 = vsel %vm1661, %v5308, 0.0
        %5347 = vadd.xlane.f32.xlu0 %v5346
        %v5348 = vpop.xlane.xlu0 %5347
        %v5349 = vsel %vm1661, %v5309, 0.0
        %5350 = vadd.xlane.f32.xlu0 %v5349
        %v5351 = vpop.xlane.xlu0 %5350
        %v5352 = vsel %vm1661, %v5310, 0.0
        %5353 = vadd.xlane.f32.xlu0 %v5352
        %v5354 = vpop.xlane.xlu0 %5353
        %v5355 = vsel %vm1661, %v5311, 0.0
        %5356 = vadd.xlane.f32.xlu0 %v5355
        %v5357 = vpop.xlane.xlu0 %5356
        %v5358 = vsel %vm1661, %v5312, 0.0
        %5359 = vadd.xlane.f32.xlu0 %v5358
        %v5360 = vpop.xlane.xlu0 %5359
        %v5361 = vmul.f32 %v5315, %v1833
        %v5362 = vmul.f32 %v5318, %v1833
        %v5363 = vmul.f32 %v5321, %v1833
        %v5364 = vmul.f32 %v5324, %v1833
        %v5365 = vmul.f32 %v5327, %v1833
        %v5366 = vmul.f32 %v5330, %v1833
        %v5367 = vmul.f32 %v5333, %v1833
        %v5368 = vmul.f32 %v5336, %v1833
        %v5369 = vmul.f32 %v5339, %v1833
        %v5370 = vmul.f32 %v5342, %v1833
        %v5371 = vmul.f32 %v5345, %v1833
        %v5372 = vmul.f32 %v5348, %v1833
        %v5373 = vmul.f32 %v5351, %v1833
        %v5374 = vmul.f32 %v5354, %v1833
        %v5375 = vmul.f32 %v5357, %v1833
        %v5376 = vmul.f32 %v5360, %v1833
        %v5377 = vadd.f32 %v5361, 1e-06
        %v5378 = vadd.f32 %v5362, 1e-06
        %v5379 = vadd.f32 %v5363, 1e-06
        %v5380 = vadd.f32 %v5364, 1e-06
        %v5381 = vadd.f32 %v5365, 1e-06
        %v5382 = vadd.f32 %v5366, 1e-06
        %v5383 = vadd.f32 %v5367, 1e-06
        %v5384 = vadd.f32 %v5368, 1e-06
        %v5385 = vadd.f32 %v5369, 1e-06
        %v5386 = vadd.f32 %v5370, 1e-06
        %v5387 = vadd.f32 %v5371, 1e-06
        %v5388 = vadd.f32 %v5372, 1e-06
        %v5389 = vadd.f32 %v5373, 1e-06
        %v5390 = vadd.f32 %v5374, 1e-06
        %v5391 = vadd.f32 %v5375, 1e-06
        %v5392 = vadd.f32 %v5376, 1e-06
        %v5393 = vrsqrt.pop %v5377
        %v5394 = vrsqrt.pop %v5378
        %v5395 = vrsqrt.pop %v5379
        %v5396 = vrsqrt.pop %v5380
        %v5397 = vrsqrt.pop %v5381
        %v5398 = vrsqrt.pop %v5382
        %v5399 = vrsqrt.pop %v5383
        %v5400 = vrsqrt.pop %v5384
        %v5401 = vrsqrt.pop %v5385
        %v5402 = vrsqrt.pop %v5386
        %v5403 = vrsqrt.pop %v5387
        %v5404 = vrsqrt.pop %v5388
        %v5405 = vrsqrt.pop %v5389
        %v5406 = vrsqrt.pop %v5390
        %v5407 = vrsqrt.pop %v5391
        %v5408 = vrsqrt.pop %v5392
        %v5409 = vmul.f32 %v5281, %v5393
        %v5410 = vmul.f32 %v5282, %v5394
        %v5411 = vmul.f32 %v5283, %v5395
        %v5412 = vmul.f32 %v5284, %v5396
        %v5413 = vmul.f32 %v5285, %v5397
        %v5414 = vmul.f32 %v5286, %v5398
        %v5415 = vmul.f32 %v5287, %v5399
        %v5416 = vmul.f32 %v5288, %v5400
        %v5417 = vmul.f32 %v5289, %v5401
        %v5418 = vmul.f32 %v5290, %v5402
        %v5419 = vmul.f32 %v5291, %v5403
        %v5420 = vmul.f32 %v5292, %v5404
        %v5421 = vmul.f32 %v5293, %v5405
        %v5422 = vmul.f32 %v5294, %v5406
        %v5423 = vmul.f32 %v5295, %v5407
        %v5424 = vmul.f32 %v5296, %v5408
        %v5426 = vlaneseq
        %v5427 = vshrl.u32 %v5426, 7
        %v5428 = vsub.s32 0, %v5427
        %v5429 = vrot.slane %v5215, %v5428
        %v5431 = vmul.f32 %v5409, %v5429
        %v5432 = vmul.f32 %v5410, %v5429
        %v5433 = vmul.f32 %v5411, %v5429
        %v5434 = vmul.f32 %v5412, %v5429
        %v5435 = vmul.f32 %v5413, %v5429
        %v5436 = vmul.f32 %v5414, %v5429
        %v5437 = vmul.f32 %v5415, %v5429
        %v5438 = vmul.f32 %v5416, %v5429
        %v5439 = vmul.f32 %v5417, %v5429
        %v5440 = vmul.f32 %v5418, %v5429
        %v5441 = vmul.f32 %v5419, %v5429
        %v5442 = vmul.f32 %v5420, %v5429
        %v5443 = vmul.f32 %v5421, %v5429
        %v5444 = vmul.f32 %v5422, %v5429
        %v5445 = vmul.f32 %v5423, %v5429
        %v5446 = vmul.f32 %v5424, %v5429
        %v5448 = vlaneseq
        %v5449 = vshrl.u32 %v5448, 7
        %v5450 = vsub.s32 0, %v5449
        %v5451 = vrot.slane %v5216, %v5450
        %v5453 = vadd.f32 %v5431, %v5451
        %v5454 = vadd.f32 %v5432, %v5451
        %v5455 = vadd.f32 %v5433, %v5451
        %v5456 = vadd.f32 %v5434, %v5451
        %v5457 = vadd.f32 %v5435, %v5451
        %v5458 = vadd.f32 %v5436, %v5451
        %v5459 = vadd.f32 %v5437, %v5451
        %v5460 = vadd.f32 %v5438, %v5451
        %v5461 = vadd.f32 %v5439, %v5451
        %v5462 = vadd.f32 %v5440, %v5451
        %v5463 = vadd.f32 %v5441, %v5451
        %v5464 = vadd.f32 %v5442, %v5451
        %v5465 = vadd.f32 %v5443, %v5451
        %v5466 = vadd.f32 %v5444, %v5451
        %v5467 = vadd.f32 %v5445, %v5451
        %v5468 = vadd.f32 %v5446, %v5451
        %v5469 = vpack.c.bf16 %v5454, %v5453
        %v5470 = vpack.c.bf16 %v5456, %v5455
        %v5471 = vpack.c.bf16 %v5458, %v5457
        %v5472 = vpack.c.bf16 %v5460, %v5459
        %v5473 = vpack.c.bf16 %v5462, %v5461
        %v5474 = vpack.c.bf16 %v5464, %v5463
        %v5475 = vpack.c.bf16 %v5466, %v5465
        %v5476 = vpack.c.bf16 %v5468, %v5467
        %v5477 = vld [vmem:[%s20] sm:$0xff]
        %v5478 = vld [vmem:[%s20 + $0x8] sm:$0xff]
        %v5479 = vld [vmem:[%s20 + $0x10] sm:$0xff]
        %v5480 = vld [vmem:[%s20 + $0x18] sm:$0xff]
        %v5481 = vld [vmem:[%s20 + $0x20] sm:$0xff]
        %v5482 = vld [vmem:[%s20 + $0x28] sm:$0xff]
        %v5483 = vld [vmem:[%s20 + $0x30] sm:$0xff]
        %v5484 = vld [vmem:[%s20 + $0x38] sm:$0xff]
        %v5485 = vld [vmem:[%s21] sm:$0x3]
        %v5487 = vlaneseq
        %v5488 = vshrl.u32 %v5487, 7
        %v5489 = vsub.s32 0, %v5488
        %v5490 = vrot.slane %v5485, %v5489
        %v5491 = vlaneseq
        %v5492 = vshrl.u32 %v5491, 7
        %v5493 = vsub.s32 1, %v5492
        %v5494 = vrot.slane %v5485, %v5493
        %v5505 = vunpack.c.l.b16 %v5477
        %v5506 = vunpack.c.h.b16 %v5477
        %v5507 = vunpack.c.l.b16 %v5478
        %v5508 = vunpack.c.h.b16 %v5478
        %v5509 = vunpack.c.l.b16 %v5479
        %v5510 = vunpack.c.h.b16 %v5479
        %v5511 = vunpack.c.l.b16 %v5480
        %v5512 = vunpack.c.h.b16 %v5480
        %v5513 = vunpack.c.l.b16 %v5481
        %v5514 = vunpack.c.h.b16 %v5481
        %v5515 = vunpack.c.l.b16 %v5482
        %v5516 = vunpack.c.h.b16 %v5482
        %v5517 = vunpack.c.l.b16 %v5483
        %v5518 = vunpack.c.h.b16 %v5483
        %v5519 = vunpack.c.l.b16 %v5484
        %v5520 = vunpack.c.h.b16 %v5484
        %v5521 = vpack.c.b16 %v5507, %v5505
        %v5522 = vpack.c.b16 %v5508, %v5506
        %v5523 = vpack.c.b16 %v5511, %v5509
        %v5524 = vpack.c.b16 %v5512, %v5510
        %v5525 = vpack.c.b16 %v5515, %v5513
        %v5526 = vpack.c.b16 %v5516, %v5514
        %v5527 = vpack.c.b16 %v5519, %v5517
        %v5528 = vpack.c.b16 %v5520, %v5518
        %v5538 = vsel %vm1661, %v5469, 0
        %v5541 = vsel %vm1661, %v5470, 0
        %v5544 = vsel %vm1661, %v5471, 0
        %v5547 = vsel %vm1661, %v5472, 0
        %v5550 = vsel %vm1661, %v5473, 0
        %v5553 = vsel %vm1661, %v5474, 0
        %v5556 = vsel %vm1661, %v5475, 0
        %v5559 = vsel %vm1661, %v5476, 0
        %5561 = vmatprep.subr.bf16.mxu0 %v5522
        %5562 = vmatpush1.bf16.msra.mxu0 %v5521
        %5563 = vmatprep.subr.bf16.mxu0 %v5524
        %5564 = vmatpush1.bf16.msra.mxu0 %v5523
        %5565 = vmatprep.subr.bf16.mxu0 %v5526
        %5566 = vmatpush1.bf16.msra.mxu0 %v5525
        %5567 = vmatprep.subr.bf16.mxu0 %v5528
        %5568 = vmatpush1.bf16.msra.mxu0 %v5527
        %5569 = vmatprep.subr.bf16.mxu0 0
        %5570 = vmatpush1.bf16.msra.mxu0 0
        %5571 = vmatprep.subr.bf16.mxu0 0
        %5572 = vmatpush1.bf16.msra.mxu0 0
        %5573 = vmatprep.subr.bf16.mxu0 0
        %5574 = vmatpush1.bf16.msra.mxu0 0
        %5575 = vmatprep.subr.bf16.mxu0 0
        %5576 = vmatpush1.bf16.msra.mxu0 0
        %5577 = vmatprep.subr.bf16.mxu0 0
        %5578 = vmatpush1.bf16.msra.mxu0 0
        %5579 = vmatprep.subr.bf16.mxu0 0
        %5580 = vmatpush1.bf16.msra.mxu0 0
        %5581 = vmatprep.subr.bf16.mxu0 0
        %5582 = vmatpush1.bf16.msra.mxu0 0
        %5583 = vmatprep.subr.bf16.mxu0 0
        %5584 = vmatpush1.bf16.msra.mxu0 0
        %5585 = vmatprep.subr.bf16.mxu0 0
        %5586 = vmatpush1.bf16.msra.mxu0 0
        %5587 = vmatprep.subr.bf16.mxu0 0
        %5588 = vmatpush1.bf16.msra.mxu0 0
        %5589 = vmatprep.subr.bf16.mxu0 0
        %5590 = vmatpush1.bf16.msra.mxu0 0
        %5591 = vmatprep.subr.bf16.mxu0 0
        %5592 = vmatpush1.bf16.msra.mxu0 0
        %5593 = vmatprep.mubr.bf16.mxu0 0
        %5594 = vmatmul.mubr.bf16.gmra.mrb[0].mxu0 %v5538
        %v5595 = vpop.f32.mrb[0].mxu0
        %v5596 = vadd.f32 %v5490, %v5595
        %v5597 = vpop.f32.mrb[0].mxu0
        %v5598 = vadd.f32 %v5494, %v5597
        %v5599 = vpop.f32.mrb[0].mxu0
        %v5600 = vadd.f32 %v5490, %v5599
        %v5601 = vpop.f32.mrb[0].mxu0
        %v5602 = vadd.f32 %v5494, %v5601
        %5603 = vmatprep.mubr.bf16.mxu0 0
        %5604 = vmatmul.mubr.bf16.gmra.mrb[0].mxu0 %v5541
        %v5605 = vpop.f32.mrb[0].mxu0
        %v5606 = vadd.f32 %v5490, %v5605
        %v5607 = vpop.f32.mrb[0].mxu0
        %v5608 = vadd.f32 %v5494, %v5607
        %v5609 = vpop.f32.mrb[0].mxu0
        %v5610 = vadd.f32 %v5490, %v5609
        %v5611 = vpop.f32.mrb[0].mxu0
        %v5612 = vadd.f32 %v5494, %v5611
        %5613 = vmatprep.mubr.bf16.mxu0 0
        %5614 = vmatmul.mubr.bf16.gmra.mrb[0].mxu0 %v5544
        %v5615 = vpop.f32.mrb[0].mxu0
        %v5616 = vadd.f32 %v5490, %v5615
        %v5617 = vpop.f32.mrb[0].mxu0
        %v5618 = vadd.f32 %v5494, %v5617
        %v5619 = vpop.f32.mrb[0].mxu0
        %v5620 = vadd.f32 %v5490, %v5619
        %v5621 = vpop.f32.mrb[0].mxu0
        %v5622 = vadd.f32 %v5494, %v5621
        %5623 = vmatprep.mubr.bf16.mxu0 0
        %5624 = vmatmul.mubr.bf16.gmra.mrb[0].mxu0 %v5547
        %v5625 = vpop.f32.mrb[0].mxu0
        %v5626 = vadd.f32 %v5490, %v5625
        %v5627 = vpop.f32.mrb[0].mxu0
        %v5628 = vadd.f32 %v5494, %v5627
        %v5629 = vpop.f32.mrb[0].mxu0
        %v5630 = vadd.f32 %v5490, %v5629
        %v5631 = vpop.f32.mrb[0].mxu0
        %v5632 = vadd.f32 %v5494, %v5631
        %5633 = vmatprep.mubr.bf16.mxu0 0
        %5634 = vmatmul.mubr.bf16.gmra.mrb[0].mxu0 %v5550
        %v5635 = vpop.f32.mrb[0].mxu0
        %v5636 = vadd.f32 %v5490, %v5635
        %v5637 = vpop.f32.mrb[0].mxu0
        %v5638 = vadd.f32 %v5494, %v5637
        %v5639 = vpop.f32.mrb[0].mxu0
        %v5640 = vadd.f32 %v5490, %v5639
        %v5641 = vpop.f32.mrb[0].mxu0
        %v5642 = vadd.f32 %v5494, %v5641
        %5643 = vmatprep.mubr.bf16.mxu0 0
        %5644 = vmatmul.mubr.bf16.gmra.mrb[0].mxu0 %v5553
        %v5645 = vpop.f32.mrb[0].mxu0
        %v5646 = vadd.f32 %v5490, %v5645
        %v5647 = vpop.f32.mrb[0].mxu0
        %v5648 = vadd.f32 %v5494, %v5647
        %v5649 = vpop.f32.mrb[0].mxu0
        %v5650 = vadd.f32 %v5490, %v5649
        %v5651 = vpop.f32.mrb[0].mxu0
        %v5652 = vadd.f32 %v5494, %v5651
        %5653 = vmatprep.mubr.bf16.mxu0 0
        %5654 = vmatmul.mubr.bf16.gmra.mrb[0].mxu0 %v5556
        %v5655 = vpop.f32.mrb[0].mxu0
        %v5656 = vadd.f32 %v5490, %v5655
        %v5657 = vpop.f32.mrb[0].mxu0
        %v5658 = vadd.f32 %v5494, %v5657
        %v5659 = vpop.f32.mrb[0].mxu0
        %v5660 = vadd.f32 %v5490, %v5659
        %v5661 = vpop.f32.mrb[0].mxu0
        %v5662 = vadd.f32 %v5494, %v5661
        %5663 = vmatprep.mubr.bf16.mxu0 0
        %5664 = vmatmul.mubr.bf16.gmra.mrb[0].mxu0 %v5559
        %v5665 = vpop.f32.mrb[0].mxu0
        %v5666 = vadd.f32 %v5490, %v5665
        %v5667 = vpop.f32.mrb[0].mxu0
        %v5668 = vadd.f32 %v5494, %v5667
        %v5669 = vpop.f32.mrb[0].mxu0
        %v5670 = vadd.f32 %v5490, %v5669
        %v5671 = vpop.f32.mrb[0].mxu0
        %v5672 = vadd.f32 %v5494, %v5671
        %5673 = vdwg.mxu0
        %v5674 = vmul.f32 %v5596, 0.5
        %v5675 = vmul.f32 %v5598, 0.5
        %v5676 = vmul.f32 %v5600, 0.5
        %v5677 = vmul.f32 %v5602, 0.5
        %v5678 = vmul.f32 %v5606, 0.5
        %v5679 = vmul.f32 %v5608, 0.5
        %v5680 = vmul.f32 %v5610, 0.5
        %v5681 = vmul.f32 %v5612, 0.5
        %v5682 = vmul.f32 %v5616, 0.5
        %v5683 = vmul.f32 %v5618, 0.5
        %v5684 = vmul.f32 %v5620, 0.5
        %v5685 = vmul.f32 %v5622, 0.5
        %v5686 = vmul.f32 %v5626, 0.5
        %v5687 = vmul.f32 %v5628, 0.5
        %v5688 = vmul.f32 %v5630, 0.5
        %v5689 = vmul.f32 %v5632, 0.5
        %v5690 = vmul.f32 %v5636, 0.5
        %v5691 = vmul.f32 %v5638, 0.5
        %v5692 = vmul.f32 %v5640, 0.5
        %v5693 = vmul.f32 %v5642, 0.5
        %v5694 = vmul.f32 %v5646, 0.5
        %v5695 = vmul.f32 %v5648, 0.5
        %v5696 = vmul.f32 %v5650, 0.5
        %v5697 = vmul.f32 %v5652, 0.5
        %v5698 = vmul.f32 %v5656, 0.5
        %v5699 = vmul.f32 %v5658, 0.5
        %v5700 = vmul.f32 %v5660, 0.5
        %v5701 = vmul.f32 %v5662, 0.5
        %v5702 = vmul.f32 %v5666, 0.5
        %v5703 = vmul.f32 %v5668, 0.5
        %v5704 = vmul.f32 %v5670, 0.5
        %v5705 = vmul.f32 %v5672, 0.5
        %v5706 = vmul.f32 %v5596, 0.70710677
        %v5707 = vmul.f32 %v5598, 0.70710677
        %v5708 = vmul.f32 %v5600, 0.70710677
        %v5709 = vmul.f32 %v5602, 0.70710677
        %v5710 = vmul.f32 %v5606, 0.70710677
        %v5711 = vmul.f32 %v5608, 0.70710677
        %v5712 = vmul.f32 %v5610, 0.70710677
        %v5713 = vmul.f32 %v5612, 0.70710677
        %v5714 = vmul.f32 %v5616, 0.70710677
        %v5715 = vmul.f32 %v5618, 0.70710677
        %v5716 = vmul.f32 %v5620, 0.70710677
        %v5717 = vmul.f32 %v5622, 0.70710677
        %v5718 = vmul.f32 %v5626, 0.70710677
        %v5719 = vmul.f32 %v5628, 0.70710677
        %v5720 = vmul.f32 %v5630, 0.70710677
        %v5721 = vmul.f32 %v5632, 0.70710677
        %v5722 = vmul.f32 %v5636, 0.70710677
        %v5723 = vmul.f32 %v5638, 0.70710677
        %v5724 = vmul.f32 %v5640, 0.70710677
        %v5725 = vmul.f32 %v5642, 0.70710677
        %v5726 = vmul.f32 %v5646, 0.70710677
        %v5727 = vmul.f32 %v5648, 0.70710677
        %v5728 = vmul.f32 %v5650, 0.70710677
        %v5729 = vmul.f32 %v5652, 0.70710677
        %v5730 = vmul.f32 %v5656, 0.70710677
        %v5731 = vmul.f32 %v5658, 0.70710677
        %v5732 = vmul.f32 %v5660, 0.70710677
        %v5733 = vmul.f32 %v5662, 0.70710677
        %v5734 = vmul.f32 %v5666, 0.70710677
        %v5735 = vmul.f32 %v5668, 0.70710677
        %v5736 = vmul.f32 %v5670, 0.70710677
        %v5737 = vmul.f32 %v5672, 0.70710677
        %v5738 = verf.f32.pop %v5706
        %v5739 = verf.f32.pop %v5707
        %v5740 = verf.f32.pop %v5708
        %v5741 = verf.f32.pop %v5709
        %v5742 = verf.f32.pop %v5710
        %v5743 = verf.f32.pop %v5711
        %v5744 = verf.f32.pop %v5712
        %v5745 = verf.f32.pop %v5713
        %v5746 = verf.f32.pop %v5714
        %v5747 = verf.f32.pop %v5715
        %v5748 = verf.f32.pop %v5716
        %v5749 = verf.f32.pop %v5717
        %v5750 = verf.f32.pop %v5718
        %v5751 = verf.f32.pop %v5719
        %v5752 = verf.f32.pop %v5720
        %v5753 = verf.f32.pop %v5721
        %v5754 = verf.f32.pop %v5722
        %v5755 = verf.f32.pop %v5723
        %v5756 = verf.f32.pop %v5724
        %v5757 = verf.f32.pop %v5725
        %v5758 = verf.f32.pop %v5726
        %v5759 = verf.f32.pop %v5727
        %v5760 = verf.f32.pop %v5728
        %v5761 = verf.f32.pop %v5729
        %v5762 = verf.f32.pop %v5730
        %v5763 = verf.f32.pop %v5731
        %v5764 = verf.f32.pop %v5732
        %v5765 = verf.f32.pop %v5733
        %v5766 = verf.f32.pop %v5734
        %v5767 = verf.f32.pop %v5735
        %v5768 = verf.f32.pop %v5736
        %v5769 = verf.f32.pop %v5737
        %v5770 = vadd.f32 %v5738, 1.0
        %v5771 = vadd.f32 %v5739, 1.0
        %v5772 = vadd.f32 %v5740, 1.0
        %v5773 = vadd.f32 %v5741, 1.0
        %v5774 = vadd.f32 %v5742, 1.0
        %v5775 = vadd.f32 %v5743, 1.0
        %v5776 = vadd.f32 %v5744, 1.0
        %v5777 = vadd.f32 %v5745, 1.0
        %v5778 = vadd.f32 %v5746, 1.0
        %v5779 = vadd.f32 %v5747, 1.0
        %v5780 = vadd.f32 %v5748, 1.0
        %v5781 = vadd.f32 %v5749, 1.0
        %v5782 = vadd.f32 %v5750, 1.0
        %v5783 = vadd.f32 %v5751, 1.0
        %v5784 = vadd.f32 %v5752, 1.0
        %v5785 = vadd.f32 %v5753, 1.0
        %v5786 = vadd.f32 %v5754, 1.0
        %v5787 = vadd.f32 %v5755, 1.0
        %v5788 = vadd.f32 %v5756, 1.0
        %v5789 = vadd.f32 %v5757, 1.0
        %v5790 = vadd.f32 %v5758, 1.0
        %v5791 = vadd.f32 %v5759, 1.0
        %v5792 = vadd.f32 %v5760, 1.0
        %v5793 = vadd.f32 %v5761, 1.0
        %v5794 = vadd.f32 %v5762, 1.0
        %v5795 = vadd.f32 %v5763, 1.0
        %v5796 = vadd.f32 %v5764, 1.0
        %v5797 = vadd.f32 %v5765, 1.0
        %v5798 = vadd.f32 %v5766, 1.0
        %v5799 = vadd.f32 %v5767, 1.0
        %v5800 = vadd.f32 %v5768, 1.0
        %v5801 = vadd.f32 %v5769, 1.0
        %v5802 = vmul.f32 %v5674, %v5770
        %v5803 = vmul.f32 %v5675, %v5771
        %v5804 = vmul.f32 %v5676, %v5772
        %v5805 = vmul.f32 %v5677, %v5773
        %v5806 = vmul.f32 %v5678, %v5774
        %v5807 = vmul.f32 %v5679, %v5775
        %v5808 = vmul.f32 %v5680, %v5776
        %v5809 = vmul.f32 %v5681, %v5777
        %v5810 = vmul.f32 %v5682, %v5778
        %v5811 = vmul.f32 %v5683, %v5779
        %v5812 = vmul.f32 %v5684, %v5780
        %v5813 = vmul.f32 %v5685, %v5781
        %v5814 = vmul.f32 %v5686, %v5782
        %v5815 = vmul.f32 %v5687, %v5783
        %v5816 = vmul.f32 %v5688, %v5784
        %v5817 = vmul.f32 %v5689, %v5785
        %v5818 = vmul.f32 %v5690, %v5786
        %v5819 = vmul.f32 %v5691, %v5787
        %v5820 = vmul.f32 %v5692, %v5788
        %v5821 = vmul.f32 %v5693, %v5789
        %v5822 = vmul.f32 %v5694, %v5790
        %v5823 = vmul.f32 %v5695, %v5791
        %v5824 = vmul.f32 %v5696, %v5792
        %v5825 = vmul.f32 %v5697, %v5793
        %v5826 = vmul.f32 %v5698, %v5794
        %v5827 = vmul.f32 %v5699, %v5795
        %v5828 = vmul.f32 %v5700, %v5796
        %v5829 = vmul.f32 %v5701, %v5797
        %v5830 = vmul.f32 %v5702, %v5798
        %v5831 = vmul.f32 %v5703, %v5799
        %v5832 = vmul.f32 %v5704, %v5800
        %v5833 = vmul.f32 %v5705, %v5801
        %v5834 = vpack.c.bf16 %v5804, %v5802
        %v5835 = vpack.c.bf16 %v5805, %v5803
        %v5836 = vpack.c.bf16 %v5808, %v5806
        %v5837 = vpack.c.bf16 %v5809, %v5807
        %v5838 = vpack.c.bf16 %v5812, %v5810
        %v5839 = vpack.c.bf16 %v5813, %v5811
        %v5840 = vpack.c.bf16 %v5816, %v5814
        %v5841 = vpack.c.bf16 %v5817, %v5815
        %v5842 = vpack.c.bf16 %v5820, %v5818
        %v5843 = vpack.c.bf16 %v5821, %v5819
        %v5844 = vpack.c.bf16 %v5824, %v5822
        %v5845 = vpack.c.bf16 %v5825, %v5823
        %v5846 = vpack.c.bf16 %v5828, %v5826
        %v5847 = vpack.c.bf16 %v5829, %v5827
        %v5848 = vpack.c.bf16 %v5832, %v5830
        %v5849 = vpack.c.bf16 %v5833, %v5831
        %v5850 = vld [vmem:[%s22] sm:$0xf]
        %v5851 = vld [vmem:[%s22 + $0x4] sm:$0xf]
        %v5852 = vld [vmem:[%s22 + $0x8] sm:$0xf]
        %v5853 = vld [vmem:[%s22 + $0xc] sm:$0xf]
        %v5854 = vld [vmem:[%s22 + $0x10] sm:$0xf]
        %v5855 = vld [vmem:[%s22 + $0x14] sm:$0xf]
        %v5856 = vld [vmem:[%s22 + $0x18] sm:$0xf]
        %v5857 = vld [vmem:[%s22 + $0x1c] sm:$0xf]
        %v5858 = vld [vmem:[%s22 + $0x20] sm:$0xf]
        %v5859 = vld [vmem:[%s22 + $0x24] sm:$0xf]
        %v5860 = vld [vmem:[%s22 + $0x28] sm:$0xf]
        %v5861 = vld [vmem:[%s22 + $0x2c] sm:$0xf]
        %v5862 = vld [vmem:[%s22 + $0x30] sm:$0xf]
        %v5863 = vld [vmem:[%s22 + $0x34] sm:$0xf]
        %v5864 = vld [vmem:[%s22 + $0x38] sm:$0xf]
        %v5865 = vld [vmem:[%s22 + $0x3c] sm:$0xf]
        %v5866 = vld [vmem:[%s22 + $0x40] sm:$0xf]
        %v5867 = vld [vmem:[%s22 + $0x44] sm:$0xf]
        %v5868 = vld [vmem:[%s22 + $0x48] sm:$0xf]
        %v5869 = vld [vmem:[%s22 + $0x4c] sm:$0xf]
        %v5870 = vld [vmem:[%s22 + $0x50] sm:$0xf]
        %v5871 = vld [vmem:[%s22 + $0x54] sm:$0xf]
        %v5872 = vld [vmem:[%s22 + $0x58] sm:$0xf]
        %v5873 = vld [vmem:[%s22 + $0x5c] sm:$0xf]
        %v5874 = vld [vmem:[%s22 + $0x60] sm:$0xf]
        %v5875 = vld [vmem:[%s22 + $0x64] sm:$0xf]
        %v5876 = vld [vmem:[%s22 + $0x68] sm:$0xf]
        %v5877 = vld [vmem:[%s22 + $0x6c] sm:$0xf]
        %v5878 = vld [vmem:[%s22 + $0x70] sm:$0xf]
        %v5879 = vld [vmem:[%s22 + $0x74] sm:$0xf]
        %v5880 = vld [vmem:[%s22 + $0x78] sm:$0xf]
        %v5881 = vld [vmem:[%s22 + $0x7c] sm:$0xf]
        %v5914 = vunpack.c.l.b16 %v5850
        %v5915 = vunpack.c.l.b16 %v5851
        %v5916 = vunpack.c.l.b16 %v5852
        %v5917 = vunpack.c.l.b16 %v5853
        %v5918 = vunpack.c.l.b16 %v5854
        %v5919 = vunpack.c.l.b16 %v5855
        %v5920 = vunpack.c.l.b16 %v5856
        %v5921 = vunpack.c.l.b16 %v5857
        %v5922 = vunpack.c.l.b16 %v5858
        %v5923 = vunpack.c.l.b16 %v5859
        %v5924 = vunpack.c.l.b16 %v5860
        %v5925 = vunpack.c.l.b16 %v5861
        %v5926 = vunpack.c.l.b16 %v5862
        %v5927 = vunpack.c.l.b16 %v5863
        %v5928 = vunpack.c.l.b16 %v5864
        %v5929 = vunpack.c.l.b16 %v5865
        %v5930 = vunpack.c.l.b16 %v5866
        %v5931 = vunpack.c.l.b16 %v5867
        %v5932 = vunpack.c.l.b16 %v5868
        %v5933 = vunpack.c.l.b16 %v5869
        %v5934 = vunpack.c.l.b16 %v5870
        %v5935 = vunpack.c.l.b16 %v5871
        %v5936 = vunpack.c.l.b16 %v5872
        %v5937 = vunpack.c.l.b16 %v5873
        %v5938 = vunpack.c.l.b16 %v5874
        %v5939 = vunpack.c.l.b16 %v5875
        %v5940 = vunpack.c.l.b16 %v5876
        %v5941 = vunpack.c.l.b16 %v5877
        %v5942 = vunpack.c.l.b16 %v5878
        %v5943 = vunpack.c.l.b16 %v5879
        %v5944 = vunpack.c.l.b16 %v5880
        %v5945 = vunpack.c.l.b16 %v5881
        %v5946 = vpack.c.b16 %v5915, %v5914
        %v5947 = vpack.c.b16 %v5917, %v5916
        %v5948 = vpack.c.b16 %v5919, %v5918
        %v5949 = vpack.c.b16 %v5921, %v5920
        %v5950 = vpack.c.b16 %v5923, %v5922
        %v5951 = vpack.c.b16 %v5925, %v5924
        %v5952 = vpack.c.b16 %v5927, %v5926
        %v5953 = vpack.c.b16 %v5929, %v5928
        %v5954 = vpack.c.b16 %v5931, %v5930
        %v5955 = vpack.c.b16 %v5933, %v5932
        %v5956 = vpack.c.b16 %v5935, %v5934
        %v5957 = vpack.c.b16 %v5937, %v5936
        %v5958 = vpack.c.b16 %v5939, %v5938
        %v5959 = vpack.c.b16 %v5941, %v5940
        %v5960 = vpack.c.b16 %v5943, %v5942
        %v5961 = vpack.c.b16 %v5945, %v5944
        %5978 = vmatprep.subr.bf16.mxu0 0
        %5979 = vmatpush1.bf16.msra.mxu0 %v5946
        %5980 = vmatprep.subr.bf16.mxu0 0
        %5981 = vmatpush1.bf16.msra.mxu0 %v5947
        %5982 = vmatprep.subr.bf16.mxu0 0
        %5983 = vmatpush1.bf16.msra.mxu0 %v5948
        %5984 = vmatprep.subr.bf16.mxu0 0
        %5985 = vmatpush1.bf16.msra.mxu0 %v5949
        %5986 = vmatprep.subr.bf16.mxu0 0
        %5987 = vmatpush1.bf16.msra.mxu0 %v5950
        %5988 = vmatprep.subr.bf16.mxu0 0
        %5989 = vmatpush1.bf16.msra.mxu0 %v5951
        %5990 = vmatprep.subr.bf16.mxu0 0
        %5991 = vmatpush1.bf16.msra.mxu0 %v5952
        %5992 = vmatprep.subr.bf16.mxu0 0
        %5993 = vmatpush1.bf16.msra.mxu0 %v5953
        %5994 = vmatprep.subr.bf16.mxu0 0
        %5995 = vmatpush1.bf16.msra.mxu0 %v5954
        %5996 = vmatprep.subr.bf16.mxu0 0
        %5997 = vmatpush1.bf16.msra.mxu0 %v5955
        %5998 = vmatprep.subr.bf16.mxu0 0
        %5999 = vmatpush1.bf16.msra.mxu0 %v5956
        %6000 = vmatprep.subr.bf16.mxu0 0
        %6001 = vmatpush1.bf16.msra.mxu0 %v5957
        %6002 = vmatprep.subr.bf16.mxu0 0
        %6003 = vmatpush1.bf16.msra.mxu0 %v5958
        %6004 = vmatprep.subr.bf16.mxu0 0
        %6005 = vmatpush1.bf16.msra.mxu0 %v5959
        %6006 = vmatprep.subr.bf16.mxu0 0
        %6007 = vmatpush1.bf16.msra.mxu0 %v5960
        %6008 = vmatprep.subr.bf16.mxu0 0
        %6009 = vmatpush1.bf16.msra.mxu0 %v5961
        %6010 = vmatprep.mubr.bf16.mxu0 %v5835
        %6011 = vmatmul.mubr.bf16.gmra.mrb[0].mxu0 %v5834
        %v6012 = vpop.f32.mrb[0].mxu0
        %v6013 = vadd.f32 0.0, %v6012
        %v6014 = vpop.f32.mrb[0].mxu0
        %v6015 = vpop.f32.mrb[0].mxu0
        %v6016 = vadd.f32 0.0, %v6015
        %v6017 = vpop.f32.mrb[0].mxu0
        %6018 = vmatprep.mubr.bf16.mxu0 %v5837
        %6019 = vmatmul.mubr.bf16.gmra.mrb[0].mxu0 %v5836
        %v6020 = vpop.f32.mrb[0].mxu0
        %v6021 = vadd.f32 0.0, %v6020
        %v6022 = vpop.f32.mrb[0].mxu0
        %v6023 = vpop.f32.mrb[0].mxu0
        %v6024 = vadd.f32 0.0, %v6023
        %v6025 = vpop.f32.mrb[0].mxu0
        %6026 = vmatprep.mubr.bf16.mxu0 %v5839
        %6027 = vmatmul.mubr.bf16.gmra.mrb[0].mxu0 %v5838
        %v6028 = vpop.f32.mrb[0].mxu0
        %v6029 = vadd.f32 0.0, %v6028
        %v6030 = vpop.f32.mrb[0].mxu0
        %v6031 = vpop.f32.mrb[0].mxu0
        %v6032 = vadd.f32 0.0, %v6031
        %v6033 = vpop.f32.mrb[0].mxu0
        %6034 = vmatprep.mubr.bf16.mxu0 %v5841
        %6035 = vmatmul.mubr.bf16.gmra.mrb[0].mxu0 %v5840
        %v6036 = vpop.f32.mrb[0].mxu0
        %v6037 = vadd.f32 0.0, %v6036
        %v6038 = vpop.f32.mrb[0].mxu0
        %v6039 = vpop.f32.mrb[0].mxu0
        %v6040 = vadd.f32 0.0, %v6039
        %v6041 = vpop.f32.mrb[0].mxu0
        %6042 = vmatprep.mubr.bf16.mxu0 %v5843
        %6043 = vmatmul.mubr.bf16.gmra.mrb[0].mxu0 %v5842
        %v6044 = vpop.f32.mrb[0].mxu0
        %v6045 = vadd.f32 0.0, %v6044
        %v6046 = vpop.f32.mrb[0].mxu0
        %v6047 = vpop.f32.mrb[0].mxu0
        %v6048 = vadd.f32 0.0, %v6047
        %v6049 = vpop.f32.mrb[0].mxu0
        %6050 = vmatprep.mubr.bf16.mxu0 %v5845
        %6051 = vmatmul.mubr.bf16.gmra.mrb[0].mxu0 %v5844
        %v6052 = vpop.f32.mrb[0].mxu0
        %v6053 = vadd.f32 0.0, %v6052
        %v6054 = vpop.f32.mrb[0].mxu0
        %v6055 = vpop.f32.mrb[0].mxu0
        %v6056 = vadd.f32 0.0, %v6055
        %v6057 = vpop.f32.mrb[0].mxu0
        %6058 = vmatprep.mubr.bf16.mxu0 %v5847
        %6059 = vmatmul.mubr.bf16.gmra.mrb[0].mxu0 %v5846
        %v6060 = vpop.f32.mrb[0].mxu0
        %v6061 = vadd.f32 0.0, %v6060
        %v6062 = vpop.f32.mrb[0].mxu0
        %v6063 = vpop.f32.mrb[0].mxu0
        %v6064 = vadd.f32 0.0, %v6063
        %v6065 = vpop.f32.mrb[0].mxu0
        %6066 = vmatprep.mubr.bf16.mxu0 %v5849
        %6067 = vmatmul.mubr.bf16.gmra.mrb[0].mxu0 %v5848
        %v6068 = vpop.f32.mrb[0].mxu0
        %v6069 = vadd.f32 0.0, %v6068
        %v6070 = vpop.f32.mrb[0].mxu0
        %v6071 = vpop.f32.mrb[0].mxu0
        %v6072 = vadd.f32 0.0, %v6071
        %v6073 = vpop.f32.mrb[0].mxu0
        %6074 = vdwg.mxu0
        %v6075 = vadd.f32 %v5199, %v6013
        %v6076 = vadd.f32 %v5200, %v6016
        %v6077 = vadd.f32 %v5201, %v6021
        %v6078 = vadd.f32 %v5202, %v6024
        %v6079 = vadd.f32 %v5203, %v6029
        %v6080 = vadd.f32 %v5204, %v6032
        %v6081 = vadd.f32 %v5205, %v6037
        %v6082 = vadd.f32 %v5206, %v6040
        %v6083 = vadd.f32 %v5207, %v6045
        %v6084 = vadd.f32 %v5208, %v6048
        %v6085 = vadd.f32 %v5209, %v6053
        %v6086 = vadd.f32 %v5210, %v6056
        %v6087 = vadd.f32 %v5211, %v6061
        %v6088 = vadd.f32 %v5212, %v6064
        %v6089 = vadd.f32 %v5213, %v6069
        %v6090 = vadd.f32 %v5214, %v6072
        %v6091 = vld [vmem:[%s23] sm:$0x1]
        %v6093 = vlaneseq
        %v6094 = vshrl.u32 %v6093, 7
        %v6095 = vsub.s32 0, %v6094
        %v6096 = vrot.slane %v6091, %v6095
        %v6098 = vadd.f32 %v6075, %v6096
        %v6099 = vadd.f32 %v6076, %v6096
        %v6100 = vadd.f32 %v6077, %v6096
        %v6101 = vadd.f32 %v6078, %v6096
        %v6102 = vadd.f32 %v6079, %v6096
        %v6103 = vadd.f32 %v6080, %v6096
        %v6104 = vadd.f32 %v6081, %v6096
        %v6105 = vadd.f32 %v6082, %v6096
        %v6106 = vadd.f32 %v6083, %v6096
        %v6107 = vadd.f32 %v6084, %v6096
        %v6108 = vadd.f32 %v6085, %v6096
        %v6109 = vadd.f32 %v6086, %v6096
        %v6110 = vadd.f32 %v6087, %v6096
        %v6111 = vadd.f32 %v6088, %v6096
        %v6112 = vadd.f32 %v6089, %v6096
        %v6113 = vadd.f32 %v6090, %v6096
        %v6114 = vld [vmem:[%s24] sm:$0x1]
        %v6115 = vld [vmem:[%s25] sm:$0x1]
        %v6116 = vsel %vm1661, %v6098, 0.0
        %6117 = vadd.xlane.f32.xlu0 %v6116
        %v6118 = vpop.xlane.xlu0 %6117
        %v6119 = vsel %vm1661, %v6099, 0.0
        %6120 = vadd.xlane.f32.xlu0 %v6119
        %v6121 = vpop.xlane.xlu0 %6120
        %v6122 = vsel %vm1661, %v6100, 0.0
        %6123 = vadd.xlane.f32.xlu0 %v6122
        %v6124 = vpop.xlane.xlu0 %6123
        %v6125 = vsel %vm1661, %v6101, 0.0
        %6126 = vadd.xlane.f32.xlu0 %v6125
        %v6127 = vpop.xlane.xlu0 %6126
        %v6128 = vsel %vm1661, %v6102, 0.0
        %6129 = vadd.xlane.f32.xlu0 %v6128
        %v6130 = vpop.xlane.xlu0 %6129
        %v6131 = vsel %vm1661, %v6103, 0.0
        %6132 = vadd.xlane.f32.xlu0 %v6131
        %v6133 = vpop.xlane.xlu0 %6132
        %v6134 = vsel %vm1661, %v6104, 0.0
        %6135 = vadd.xlane.f32.xlu0 %v6134
        %v6136 = vpop.xlane.xlu0 %6135
        %v6137 = vsel %vm1661, %v6105, 0.0
        %6138 = vadd.xlane.f32.xlu0 %v6137
        %v6139 = vpop.xlane.xlu0 %6138
        %v6140 = vsel %vm1661, %v6106, 0.0
        %6141 = vadd.xlane.f32.xlu0 %v6140
        %v6142 = vpop.xlane.xlu0 %6141
        %v6143 = vsel %vm1661, %v6107, 0.0
        %6144 = vadd.xlane.f32.xlu0 %v6143
        %v6145 = vpop.xlane.xlu0 %6144
        %v6146 = vsel %vm1661, %v6108, 0.0
        %6147 = vadd.xlane.f32.xlu0 %v6146
        %v6148 = vpop.xlane.xlu0 %6147
        %v6149 = vsel %vm1661, %v6109, 0.0
        %6150 = vadd.xlane.f32.xlu0 %v6149
        %v6151 = vpop.xlane.xlu0 %6150
        %v6152 = vsel %vm1661, %v6110, 0.0
        %6153 = vadd.xlane.f32.xlu0 %v6152
        %v6154 = vpop.xlane.xlu0 %6153
        %v6155 = vsel %vm1661, %v6111, 0.0
        %6156 = vadd.xlane.f32.xlu0 %v6155
        %v6157 = vpop.xlane.xlu0 %6156
        %v6158 = vsel %vm1661, %v6112, 0.0
        %6159 = vadd.xlane.f32.xlu0 %v6158
        %v6160 = vpop.xlane.xlu0 %6159
        %v6161 = vsel %vm1661, %v6113, 0.0
        %6162 = vadd.xlane.f32.xlu0 %v6161
        %v6163 = vpop.xlane.xlu0 %6162
        %v6164 = vmul.f32 %v6118, %v1833
        %v6165 = vmul.f32 %v6121, %v1833
        %v6166 = vmul.f32 %v6124, %v1833
        %v6167 = vmul.f32 %v6127, %v1833
        %v6168 = vmul.f32 %v6130, %v1833
        %v6169 = vmul.f32 %v6133, %v1833
        %v6170 = vmul.f32 %v6136, %v1833
        %v6171 = vmul.f32 %v6139, %v1833
        %v6172 = vmul.f32 %v6142, %v1833
        %v6173 = vmul.f32 %v6145, %v1833
        %v6174 = vmul.f32 %v6148, %v1833
        %v6175 = vmul.f32 %v6151, %v1833
        %v6176 = vmul.f32 %v6154, %v1833
        %v6177 = vmul.f32 %v6157, %v1833
        %v6178 = vmul.f32 %v6160, %v1833
        %v6179 = vmul.f32 %v6163, %v1833
        %v6180 = vsub.f32 %v6098, %v6164
        %v6181 = vsub.f32 %v6099, %v6165
        %v6182 = vsub.f32 %v6100, %v6166
        %v6183 = vsub.f32 %v6101, %v6167
        %v6184 = vsub.f32 %v6102, %v6168
        %v6185 = vsub.f32 %v6103, %v6169
        %v6186 = vsub.f32 %v6104, %v6170
        %v6187 = vsub.f32 %v6105, %v6171
        %v6188 = vsub.f32 %v6106, %v6172
        %v6189 = vsub.f32 %v6107, %v6173
        %v6190 = vsub.f32 %v6108, %v6174
        %v6191 = vsub.f32 %v6109, %v6175
        %v6192 = vsub.f32 %v6110, %v6176
        %v6193 = vsub.f32 %v6111, %v6177
        %v6194 = vsub.f32 %v6112, %v6178
        %v6195 = vsub.f32 %v6113, %v6179
        %v6196 = vmul.f32 %v6180, %v6180
        %v6197 = vmul.f32 %v6181, %v6181
        %v6198 = vmul.f32 %v6182, %v6182
        %v6199 = vmul.f32 %v6183, %v6183
        %v6200 = vmul.f32 %v6184, %v6184
        %v6201 = vmul.f32 %v6185, %v6185
        %v6202 = vmul.f32 %v6186, %v6186
        %v6203 = vmul.f32 %v6187, %v6187
        %v6204 = vmul.f32 %v6188, %v6188
        %v6205 = vmul.f32 %v6189, %v6189
        %v6206 = vmul.f32 %v6190, %v6190
        %v6207 = vmul.f32 %v6191, %v6191
        %v6208 = vmul.f32 %v6192, %v6192
        %v6209 = vmul.f32 %v6193, %v6193
        %v6210 = vmul.f32 %v6194, %v6194
        %v6211 = vmul.f32 %v6195, %v6195
        %v6212 = vsel %vm1661, %v6196, 0.0
        %6213 = vadd.xlane.f32.xlu0 %v6212
        %v6214 = vpop.xlane.xlu0 %6213
        %v6215 = vsel %vm1661, %v6197, 0.0
        %6216 = vadd.xlane.f32.xlu0 %v6215
        %v6217 = vpop.xlane.xlu0 %6216
        %v6218 = vsel %vm1661, %v6198, 0.0
        %6219 = vadd.xlane.f32.xlu0 %v6218
        %v6220 = vpop.xlane.xlu0 %6219
        %v6221 = vsel %vm1661, %v6199, 0.0
        %6222 = vadd.xlane.f32.xlu0 %v6221
        %v6223 = vpop.xlane.xlu0 %6222
        %v6224 = vsel %vm1661, %v6200, 0.0
        %6225 = vadd.xlane.f32.xlu0 %v6224
        %v6226 = vpop.xlane.xlu0 %6225
        %v6227 = vsel %vm1661, %v6201, 0.0
        %6228 = vadd.xlane.f32.xlu0 %v6227
        %v6229 = vpop.xlane.xlu0 %6228
        %v6230 = vsel %vm1661, %v6202, 0.0
        %6231 = vadd.xlane.f32.xlu0 %v6230
        %v6232 = vpop.xlane.xlu0 %6231
        %v6233 = vsel %vm1661, %v6203, 0.0
        %6234 = vadd.xlane.f32.xlu0 %v6233
        %v6235 = vpop.xlane.xlu0 %6234
        %v6236 = vsel %vm1661, %v6204, 0.0
        %6237 = vadd.xlane.f32.xlu0 %v6236
        %v6238 = vpop.xlane.xlu0 %6237
        %v6239 = vsel %vm1661, %v6205, 0.0
        %6240 = vadd.xlane.f32.xlu0 %v6239
        %v6241 = vpop.xlane.xlu0 %6240
        %v6242 = vsel %vm1661, %v6206, 0.0
        %6243 = vadd.xlane.f32.xlu0 %v6242
        %v6244 = vpop.xlane.xlu0 %6243
        %v6245 = vsel %vm1661, %v6207, 0.0
        %6246 = vadd.xlane.f32.xlu0 %v6245
        %v6247 = vpop.xlane.xlu0 %6246
        %v6248 = vsel %vm1661, %v6208, 0.0
        %6249 = vadd.xlane.f32.xlu0 %v6248
        %v6250 = vpop.xlane.xlu0 %6249
        %v6251 = vsel %vm1661, %v6209, 0.0
        %6252 = vadd.xlane.f32.xlu0 %v6251
        %v6253 = vpop.xlane.xlu0 %6252
        %v6254 = vsel %vm1661, %v6210, 0.0
        %6255 = vadd.xlane.f32.xlu0 %v6254
        %v6256 = vpop.xlane.xlu0 %6255
        %v6257 = vsel %vm1661, %v6211, 0.0
        %6258 = vadd.xlane.f32.xlu0 %v6257
        %v6259 = vpop.xlane.xlu0 %6258
        %v6260 = vmul.f32 %v6214, %v1833
        %v6261 = vmul.f32 %v6217, %v1833
        %v6262 = vmul.f32 %v6220, %v1833
        %v6263 = vmul.f32 %v6223, %v1833
        %v6264 = vmul.f32 %v6226, %v1833
        %v6265 = vmul.f32 %v6229, %v1833
        %v6266 = vmul.f32 %v6232, %v1833
        %v6267 = vmul.f32 %v6235, %v1833
        %v6268 = vmul.f32 %v6238, %v1833
        %v6269 = vmul.f32 %v6241, %v1833
        %v6270 = vmul.f32 %v6244, %v1833
        %v6271 = vmul.f32 %v6247, %v1833
        %v6272 = vmul.f32 %v6250, %v1833
        %v6273 = vmul.f32 %v6253, %v1833
        %v6274 = vmul.f32 %v6256, %v1833
        %v6275 = vmul.f32 %v6259, %v1833
        %v6276 = vadd.f32 %v6260, 1e-05
        %v6277 = vadd.f32 %v6261, 1e-05
        %v6278 = vadd.f32 %v6262, 1e-05
        %v6279 = vadd.f32 %v6263, 1e-05
        %v6280 = vadd.f32 %v6264, 1e-05
        %v6281 = vadd.f32 %v6265, 1e-05
        %v6282 = vadd.f32 %v6266, 1e-05
        %v6283 = vadd.f32 %v6267, 1e-05
        %v6284 = vadd.f32 %v6268, 1e-05
        %v6285 = vadd.f32 %v6269, 1e-05
        %v6286 = vadd.f32 %v6270, 1e-05
        %v6287 = vadd.f32 %v6271, 1e-05
        %v6288 = vadd.f32 %v6272, 1e-05
        %v6289 = vadd.f32 %v6273, 1e-05
        %v6290 = vadd.f32 %v6274, 1e-05
        %v6291 = vadd.f32 %v6275, 1e-05
        %v6292 = vrsqrt.pop %v6276
        %v6293 = vrsqrt.pop %v6277
        %v6294 = vrsqrt.pop %v6278
        %v6295 = vrsqrt.pop %v6279
        %v6296 = vrsqrt.pop %v6280
        %v6297 = vrsqrt.pop %v6281
        %v6298 = vrsqrt.pop %v6282
        %v6299 = vrsqrt.pop %v6283
        %v6300 = vrsqrt.pop %v6284
        %v6301 = vrsqrt.pop %v6285
        %v6302 = vrsqrt.pop %v6286
        %v6303 = vrsqrt.pop %v6287
        %v6304 = vrsqrt.pop %v6288
        %v6305 = vrsqrt.pop %v6289
        %v6306 = vrsqrt.pop %v6290
        %v6307 = vrsqrt.pop %v6291
        %v6308 = vmul.f32 %v6180, %v6292
        %v6309 = vmul.f32 %v6181, %v6293
        %v6310 = vmul.f32 %v6182, %v6294
        %v6311 = vmul.f32 %v6183, %v6295
        %v6312 = vmul.f32 %v6184, %v6296
        %v6313 = vmul.f32 %v6185, %v6297
        %v6314 = vmul.f32 %v6186, %v6298
        %v6315 = vmul.f32 %v6187, %v6299
        %v6316 = vmul.f32 %v6188, %v6300
        %v6317 = vmul.f32 %v6189, %v6301
        %v6318 = vmul.f32 %v6190, %v6302
        %v6319 = vmul.f32 %v6191, %v6303
        %v6320 = vmul.f32 %v6192, %v6304
        %v6321 = vmul.f32 %v6193, %v6305
        %v6322 = vmul.f32 %v6194, %v6306
        %v6323 = vmul.f32 %v6195, %v6307
        %v6325 = vlaneseq
        %v6326 = vshrl.u32 %v6325, 7
        %v6327 = vsub.s32 0, %v6326
        %v6328 = vrot.slane %v6114, %v6327
        %v6330 = vmul.f32 %v6308, %v6328
        %v6331 = vmul.f32 %v6309, %v6328
        %v6332 = vmul.f32 %v6310, %v6328
        %v6333 = vmul.f32 %v6311, %v6328
        %v6334 = vmul.f32 %v6312, %v6328
        %v6335 = vmul.f32 %v6313, %v6328
        %v6336 = vmul.f32 %v6314, %v6328
        %v6337 = vmul.f32 %v6315, %v6328
        %v6338 = vmul.f32 %v6316, %v6328
        %v6339 = vmul.f32 %v6317, %v6328
        %v6340 = vmul.f32 %v6318, %v6328
        %v6341 = vmul.f32 %v6319, %v6328
        %v6342 = vmul.f32 %v6320, %v6328
        %v6343 = vmul.f32 %v6321, %v6328
        %v6344 = vmul.f32 %v6322, %v6328
        %v6345 = vmul.f32 %v6323, %v6328
        %v6347 = vlaneseq
        %v6348 = vshrl.u32 %v6347, 7
        %v6349 = vsub.s32 0, %v6348
        %v6350 = vrot.slane %v6115, %v6349
        %v6352 = vadd.f32 %v6330, %v6350
        %v6353 = vadd.f32 %v6331, %v6350
        %v6354 = vadd.f32 %v6332, %v6350
        %v6355 = vadd.f32 %v6333, %v6350
        %v6356 = vadd.f32 %v6334, %v6350
        %v6357 = vadd.f32 %v6335, %v6350
        %v6358 = vadd.f32 %v6336, %v6350
        %v6359 = vadd.f32 %v6337, %v6350
        %v6360 = vadd.f32 %v6338, %v6350
        %v6361 = vadd.f32 %v6339, %v6350
        %v6362 = vadd.f32 %v6340, %v6350
        %v6363 = vadd.f32 %v6341, %v6350
        %v6364 = vadd.f32 %v6342, %v6350
        %v6365 = vadd.f32 %v6343, %v6350
        %v6366 = vadd.f32 %v6344, %v6350
        %v6367 = vadd.f32 %v6345, %v6350
        %v6368 = vld [vmem:[%s26] sm:$0x1]
        %v6369 = vpack.c.bf16 %v6353, %v6352
        %v6370 = vpack.c.bf16 %v6355, %v6354
        %v6371 = vpack.c.bf16 %v6357, %v6356
        %v6372 = vpack.c.bf16 %v6359, %v6358
        %v6373 = vpack.c.bf16 %v6361, %v6360
        %v6374 = vpack.c.bf16 %v6363, %v6362
        %v6375 = vpack.c.bf16 %v6365, %v6364
        %v6376 = vpack.c.bf16 %v6367, %v6366
        %v6377 = vld [vmem:[#allocation4] sm:$0x1]
        %6379 = vset.pattern.permute.xlu0 0
        %6380 = vperm.xlu0 %6379, %v6377
        %v6381 = vpop.permute.xlu0 %6380
        %v6383 = vlaneseq
        %v6384 = vshrl.u32 %v6383, 7
        %v6385 = vsub.s32 0, %v6384
        %v6386 = vrot.slane %v6381, %v6385
        %v6388 = vsel %vm1661, %v6368, 0
        %v6391 = vsel %vm1661, %v6369, 0
        %v6394 = vsel %vm1661, %v6370, 0
        %v6397 = vsel %vm1661, %v6371, 0
        %v6400 = vsel %vm1661, %v6372, 0
        %v6403 = vsel %vm1661, %v6373, 0
        %v6406 = vsel %vm1661, %v6374, 0
        %v6409 = vsel %vm1661, %v6375, 0
        %v6412 = vsel %vm1661, %v6376, 0
        %6414 = vmatprep.subr.bf16.mxu0 0
        %6415 = vmatpush1.bf16.xpose.msra.mxu0 %v6391
        %6416 = vmatprep.subr.bf16.mxu0 0
        %6417 = vmatpush1.bf16.xpose.msra.mxu0 %v6394
        %6418 = vmatprep.subr.bf16.mxu0 0
        %6419 = vmatpush1.bf16.xpose.msra.mxu0 %v6397
        %6420 = vmatprep.subr.bf16.mxu0 0
        %6421 = vmatpush1.bf16.xpose.msra.mxu0 %v6400
        %6422 = vmatprep.subr.bf16.mxu0 0
        %6423 = vmatpush1.bf16.xpose.msra.mxu0 %v6403
        %6424 = vmatprep.subr.bf16.mxu0 0
        %6425 = vmatpush1.bf16.xpose.msra.mxu0 %v6406
        %6426 = vmatprep.subr.bf16.mxu0 0
        %6427 = vmatpush1.bf16.xpose.msra.mxu0 %v6409
        %6428 = vmatprep.subr.bf16.mxu0 0
        %6429 = vmatpush1.bf16.xpose.msra.mxu0 %v6412
        %6430 = vmatprep.subr.bf16.mxu0 0
        %6431 = vmatpush1.bf16.xpose.msra.mxu0 0
        %6432 = vmatprep.subr.bf16.mxu0 0
        %6433 = vmatpush1.bf16.xpose.msra.mxu0 0
        %6434 = vmatprep.subr.bf16.mxu0 0
        %6435 = vmatpush1.bf16.xpose.msra.mxu0 0
        %6436 = vmatprep.subr.bf16.mxu0 0
        %6437 = vmatpush1.bf16.xpose.msra.mxu0 0
        %6438 = vmatprep.subr.bf16.mxu0 0
        %6439 = vmatpush1.bf16.xpose.msra.mxu0 0
        %6440 = vmatprep.subr.bf16.mxu0 0
        %6441 = vmatpush1.bf16.xpose.msra.mxu0 0
        %6442 = vmatprep.subr.bf16.mxu0 0
        %6443 = vmatpush1.bf16.xpose.msra.mxu0 0
        %6444 = vmatprep.subr.bf16.mxu0 0
        %6445 = vmatpush1.bf16.xpose.msra.mxu0 0
        %6446 = vmatprep.mubr.bf16.mxu0 0
        %6447 = vmatmul.mubr.bf16.gmra.mrb[0].mxu0 %v6388
        %v6448 = vpop.f32.mrb[0].mxu0
        %v6449 = vadd.f32 %v6386, %v6448
        %v6450 = vpop.f32.mrb[0].mxu0
        %v6451 = vpop.f32.mrb[0].mxu0
        %v6452 = vpop.f32.mrb[0].mxu0
        %6453 = vdwg.mxu0
        %6454 = vst [vmem:[%s879] sm:$0x1] %v6449
        %s6455 = sand.u32 %s666, 1
        %s6456 = scalar_lea.sflag [#allocation6], %s6455
        %s6457 = sand.u32 %s666, 1
        %s6458 = scalar_lea.vmem [#allocation5], %s6457
        // Predicated region
        $region137: #{cross_attention_decoder.1} parent=131 // pred_check
          %p6459 = pneg %p676
        $region138: #{cross_attention_decoder.1} parent=131 // pred_check_branch
          %6461 = sbr.rel (%p6459) target = $region140
        $region139: #{cross_attention_decoder.1} parent=131 // pred_region
          %s6463 = ssub.s32 16, 16
          %6464 = vsyncadd %s6456, %s6463
          %s6465 = smul.addr %s48, 2
          %s6466 = sadd.s32 %s49, %s6465
          %s6467 = smul.addr %s6466, 16
          %s6468 = scalar_lea.hbm %s28, %s6467
          %s6470 = sshll.u32 %s6458, 4
          %s6471 = int_to_ptr.vmem [resolvable:$true] %s6470
          %6473 = dma.vmem_to_hbm [thread:$0]  %s6471, 16, %s6468, %s6456
        $region140: #{cross_attention_decoder.1} parent=131 // pred_fallthru
          _
      $region132: #{cross_attention_decoder.1} parent=5 // pred_fallthru
        _
      %p6474 = scmp.le.s32.totalorder 2, %s39
      // Predicated region
      $region141: #{cross_attention_decoder.1} parent=5 // pred_check
        %p6475 = pneg %p6474
      $region142: #{cross_attention_decoder.1} parent=5 // pred_check_branch
        %6477 = sbr.rel (%p6475) target = $region144
      $region143: #{cross_attention_decoder.1} parent=5 // pred_region
        %s6478 = ssub.s32 %s39, 2
        // Predicated region
        $region145: #{cross_attention_decoder.1} parent=143 // pred_check
          %p6479 = pneg %p682
        $region146: #{cross_attention_decoder.1} parent=143 // pred_check_branch
          %6481 = sbr.rel (%p6479) target = $region148
        $region147: #{cross_attention_decoder.1} parent=143 // pred_region
          %s6482 = sand.u32 %s667, 1
          %s6483 = scalar_lea.sflag [#allocation6], %s6482
          %s6484 = sand.u32 %s667, 1
          %s6485 = scalar_lea.vmem [#allocation5], %s6484
          %6486 = dma.done %s6483, 16
        $region148: #{cross_attention_decoder.1} parent=143 // pred_fallthru
          _
      $region144: #{cross_attention_decoder.1} parent=5 // pred_fallthru
        _
    $region6: #{cross_attention_decoder.1} parent=1 // loop_footer
      %s43 = sadd.s32 1, %s39
    $region7: #{cross_attention_decoder.1} parent=1 // loop_footer_branch
      %38 = sbr.rel target = $region3
    $region8: #{cross_attention_decoder.1} parent=1 // loop_exit
      _
    %6487 = vsyncpa [#allocation6], 1
    %s6488 = scalar_lea.sflag [#allocation6], 1
    %6489 = vsyncpa %s6488, 1

</llo_original>
